<compile_context>
chip_gen: v6e
topology: v6e:2x2x1
jax: 0.10.0
libtpu: 0.0.40
codegen_flags: <defaults>
</compile_context>

<pallas_src>
import functools

import jax
import jax.numpy as jnp
from jax import lax
from jax.experimental import pallas as pl
from jax.experimental.pallas import tpu as pltpu


# ----------------------------------------------------------------------------
# Fused kernel: bi-LSTM encoder -> first-order posterior sampler -> decoder
#               (C / stacked A_i / stacked R_i) -> ELBO.
# ----------------------------------------------------------------------------
def vrslds_fused_kernel(
        # inputs
        y_ref, gum_ref, eps_ref,
        w_in_ref, b_in_ref, w_rec_ref,          # merged/padded bi-LSTM weights
        w_h1_ref, b_h1_ref,                     # merged head first layer
        wd_zx_ref, wd2_ref, bd2_ref,            # discrete head (stacked [z;x])
        wc_zx_ref, wc2_ref, bc2_ref,            # continuous head
        cw_ref, cb_ref, awf_ref, ab_ref, rwf_ref, rb_ref,   # decoder weights
        # outputs
        slab_ref,          # (T, B, 2D+3C): [z_logits|z_sample|mean|logvar|x_sample]
        ypred_ref,         # (T, B, O)
        loss_ref,          # (1, 4): [nll, kld, elbo, loss]
        # scratch
        g_scr, hcat_scr, pd_scr, pc_scr,
        *, tau, beta, hidden):
    T, B, O = y_ref.shape
    D = gum_ref.shape[2]
    C = eps_ref.shape[2]
    H = hidden
    GP = hcat_scr.shape[2]          # 128-padded 2H (gate-group / h_cat width)
    Hm = wd2_ref.shape[0]           # MLP hidden width
    f32 = jnp.float32

    # --- hoisted input projections for BOTH directions: one bulk einsum,
    #     biases folded in (nothing bias-related left inside the serial loop).
    g_scr[...] = (jnp.einsum('tbo,og->tbg', y_ref[...], w_in_ref[...],
                             preferred_element_type=f32) + b_in_ref[...])

    w_rec = w_rec_ref[...]

    # lane mask selecting the backward-direction lanes of each gate group
    lane4 = lax.broadcasted_iota(jnp.int32, (B, 4 * GP), 1)
    lmod = lane4 % GP
    bwd_mask = jnp.logical_and(lmod >= H, lmod < 2 * H)

    h0 = jnp.zeros((B, GP), f32)
    c0 = jnp.zeros((B, GP), f32)
    loop_unroll = True if T <= 32 else 8     # partial unroll for large T

    # --- interleaved fwd/bwd recurrence: ONE block-diagonal dot per step,
    #     vreg-aligned gate slices, ONE unmasked 128-lane store per step.
    def lstm_body(t, carry):
        h, c = carry                                   # h = [hf(t-1)|hb(T-t)|0]
        tb = T - 1 - t
        pre = (jnp.where(bwd_mask, g_scr[tb], g_scr[t])
               + jnp.dot(h, w_rec, preferred_element_type=f32))   # (B, 4*GP)
        gi = jax.nn.sigmoid(pre[:, 0 * GP:1 * GP])
        gf = jax.nn.sigmoid(pre[:, 1 * GP:2 * GP])
        gg = jnp.tanh(pre[:, 2 * GP:3 * GP])
        go = jax.nn.sigmoid(pre[:, 3 * GP:4 * GP])
        c = gf * c + gi * gg
        h = go * jnp.tanh(c)                 # padding lanes stay exactly 0
        hcat_scr[t] = h                      # [hf(t) | hb(T-1-t) | 0...]
        return (h, c)

    lax.fori_loop(0, T, lstm_body, (h0, c0), unroll=loop_unroll)

    # --- time-align the backward half (static stack, off the critical path)
    #     and run ONE merged head first-layer matmul producing [pd | pc].
    hcat_all = hcat_scr[...]
    hcat_rev = jnp.concatenate(
        [hcat_all[i:i + 1] for i in range(T - 1, -1, -1)], axis=0)
    lane3 = lax.broadcasted_iota(jnp.int32, (T, B, GP), 2)
    emb = jnp.where(lane3 < H, hcat_all, hcat_rev)      # [hf(t) | hb(t) | 0]
    head = (jnp.einsum('tbg,gk->tbk', emb, w_h1_ref[...],
                       preferred_element_type=f32) + b_h1_ref[...])
    pd_scr[...] = head[:, :, :Hm]
    pc_scr[...] = head[:, :, Hm:]

    wd_zx, wd2 = wd_zx_ref[...], wd2_ref[...]
    wc_zx, wc2 = wc_zx_ref[...], wc2_ref[...]
    bd2 = jnp.broadcast_to(bd2_ref[...], (B, D))          # pre-broadcast once
    bc2 = jnp.broadcast_to(bc2_ref[...], (B, 2 * C))
    inv_tau = jnp.float32(1.0 / tau)

    def softmax_last(v):
        m = jnp.max(v, axis=-1, keepdims=True)
        e = jnp.exp(v - m)
        return e * pl.reciprocal(jnp.sum(e, axis=-1, keepdims=True), approx=True)

    zx0 = jnp.zeros((B, D + C), f32)

    # --- first-order autoregressive posterior sampling: 4 serial dots/step
    #     (fused carry dots) and ONE packed store per step.
    def post_body(t, zx):
        pre_d = pd_scr[t] + jnp.dot(zx, wd_zx, preferred_element_type=f32)
        hid_d = jnp.maximum(pre_d, 0.0)
        z_logits = jnp.dot(hid_d, wd2, preferred_element_type=f32) + bd2
        z_new = softmax_last((z_logits + gum_ref[t]) * inv_tau)   # soft gumbel
        zx_c = jnp.concatenate([z_new, zx[:, D:]], axis=-1)       # [z_new|x_prev]
        pre_c = pc_scr[t] + jnp.dot(zx_c, wc_zx, preferred_element_type=f32)
        hid_c = jnp.maximum(pre_c, 0.0)
        out = jnp.dot(hid_c, wc2, preferred_element_type=f32) + bc2   # [mean|logvar]
        mean = out[:, :C]
        logvar = out[:, C:]
        x_new = mean + jnp.exp(0.5 * logvar) * eps_ref[t]
        # single packed per-step store: [z_logits | z_sample | mean | logvar | x_sample]
        slab_ref[t] = jnp.concatenate([z_logits, z_new, out, x_new], axis=-1)
        return jnp.concatenate([z_new, x_new], axis=-1)

    lax.fori_loop(0, T, post_body, zx0, unroll=loop_unroll)

    # ===================== decoder + ELBO (slab stays in VMEM) ================
    slab = slab_ref[...]
    zlog = slab[:, :, 0:D]
    zs = slab[:, :, D:2 * D]
    xmean = slab[:, :, 2 * D:2 * D + C]
    xlvar = slab[:, :, 2 * D + C:2 * D + 2 * C]
    xs = slab[:, :, 2 * D + 2 * C:2 * D + 3 * C]

    cw, cb = cw_ref[...], cb_ref[...]
    awf, ab = awf_ref[...], ab_ref[...]       # awf: (C, D*C), ab: (D, C)
    rwf, rb = rwf_ref[...], rb_ref[...]       # rwf: (C, D*D), rb: (D, D)

    # y_pred = C(x_sample)
    y_pred = jnp.einsum('tbc,co->tbo', xs, cw, preferred_element_type=f32) + cb
    ypred_ref[...] = y_pred

    x_prev = xs[:T - 1]
    z_curr = zs[1:]
    z_prev = zs[:T - 1]

    # stacked per-mode dynamics / transitions: ONE matmul each instead of 2*D
    ax_flat = jnp.einsum('tbc,cm->tbm', x_prev, awf, preferred_element_type=f32)
    rx_flat = jnp.einsum('tbc,cm->tbm', x_prev, rwf, preferred_element_type=f32)
    x_next = jnp.einsum('tbd,dc->tbc', z_curr, ab, preferred_element_type=f32)
    z_next_logits = jnp.einsum('tbd,dk->tbk', z_prev, rb,
                               preferred_element_type=f32)
    for i in range(D):   # VPU-only weighted combine (no per-mode matmuls)
        x_next = x_next + ax_flat[:, :, i * C:(i + 1) * C] * z_curr[:, :, i:i + 1]
        z_next_logits = (z_next_logits
                         + rx_flat[:, :, i * D:(i + 1) * D] * z_prev[:, :, i:i + 1])

    z_next = softmax_last(z_next_logits)
    z_distr = softmax_last(zlog)              # my_softmax(z_distrib, -1)

    # TODO(synk): nll_gaussian_var_fixed / kl_categorical / kld_loss are not in
    # the provided source; NRI-style normalizations assumed below.
    variance = 1e-4
    neg_log_p = (y_pred - y_ref[...]) ** 2 / (2.0 * variance)
    nll = jnp.sum(neg_log_p) / float(B * T)

    eps16 = 1e-16
    zd = z_distr[1:]
    kl_cat = jnp.sum(zd * (jnp.log(zd + eps16) - jnp.log(z_next + eps16))) / float(B)

    lv_prior = jnp.log(jnp.float32(1e-4))
    mu1 = xmean[1:]
    lv1 = xlvar[1:]
    kld_g = -0.5 * jnp.sum(
        1.0 + lv1 - lv_prior
        - ((mu1 - x_next) ** 2 + jnp.exp(lv1)) * jnp.exp(-lv_prior)) / float(B)

    kld = kl_cat + kld_g
    elbo = nll + kld
    loss = nll + beta * kld

    lane = lax.broadcasted_iota(jnp.int32, (1, 4), 1)
    loss_ref[...] = (jnp.where(lane == 0, nll, 0.0)
                     + jnp.where(lane == 1, kld, 0.0)
                     + jnp.where(lane == 2, elbo, 0.0)
                     + jnp.where(lane == 3, loss, 0.0))


# ----------------------------------------------------------------------------
# Wrapper-side weight fusion / padding (pure XLA, off the kernel critical path)
# ----------------------------------------------------------------------------
def _round_up(x, m):
    return ((x + m - 1) // m) * m


def _prep_weights(params):
    H = params['whh_f'].shape[0]
    O = params['wih_f'].shape[0]
    D = params['rb'].shape[1]
    C = params['cw'].shape[0]
    Hm = params['wd2'].shape[0]
    GP = _round_up(2 * H, 128)          # gate-group / h_cat lane pad

    w_in = jnp.zeros((O, 4 * GP), jnp.float32)
    b_in = jnp.zeros((1, 4 * GP), jnp.float32)
    w_rec = jnp.zeros((GP, 4 * GP), jnp.float32)
    for k in range(4):                  # gate order: i, f, g, o
        sl_f = slice(k * GP, k * GP + H)
        sl_b = slice(k * GP + H, k * GP + 2 * H)
        gate = slice(k * H, (k + 1) * H)
        w_in = w_in.at[:, sl_f].set(params['wih_f'][:, gate])
        w_in = w_in.at[:, sl_b].set(params['wih_b'][:, gate])
        b_in = b_in.at[:, sl_f].set(params['b_f'][:, gate])
        b_in = b_in.at[:, sl_b].set(params['b_b'][:, gate])
        w_rec = w_rec.at[0:H, sl_f].set(params['whh_f'][:, gate])
        w_rec = w_rec.at[H:2 * H, sl_b].set(params['whh_b'][:, gate])

    # merged head first layer: emb(=[hf|hb|0], GP) @ w_h1 -> [pd | pc]
    w_h1 = jnp.zeros((GP, 2 * Hm), jnp.float32)
    w_h1 = w_h1.at[0:H, 0:Hm].set(params['wd1hf'])
    w_h1 = w_h1.at[H:2 * H, 0:Hm].set(params['wd1hb'])
    w_h1 = w_h1.at[0:H, Hm:].set(params['wc1hf'])
    w_h1 = w_h1.at[H:2 * H, Hm:].set(params['wc1hb'])
    b_h1 = jnp.concatenate([params['bd1'], params['bc1']], axis=-1)

    # stacked carry weights for the sampling loop: [z; x] @ (D+C, Hm)
    wd_zx = jnp.concatenate([params['wd1z'], params['wd1x']], axis=0)
    wc_zx = jnp.concatenate([params['wc1z'], params['wc1x']], axis=0)

    # pre-flatten per-mode decoder weights for the stacked matmuls
    awf = jnp.transpose(params['aw'], (1, 0, 2)).reshape(C, D * C)
    rwf = jnp.transpose(params['rw'], (1, 0, 2)).reshape(C, D * D)

    return dict(w_in=w_in, b_in=b_in, w_rec=w_rec, w_h1=w_h1, b_h1=b_h1,
                wd_zx=wd_zx, wc_zx=wc_zx, awf=awf, rwf=rwf,
                H=H, GP=GP, Hm=Hm, D=D, C=C)


def vrslds_forward(params, y, gumbel, eps, tau=1.0, beta=1.0):
    """y: (B, T, obs_dim) batch-major; gumbel/eps time-major (T, B, .)."""
    B, T, O = y.shape
    assert T >= 2, "decoder / ELBO need at least two timesteps"
    w = _prep_weights(params)
    H, GP, Hm, D, C = w['H'], w['GP'], w['Hm'], w['D'], w['C']

    y_tm = jnp.transpose(y, (1, 0, 2)).astype(jnp.float32)   # (T, B, O)
    PACK = 2 * D + 3 * C

    slab, y_pred_tm, losses_vec = pl.pallas_call(
        functools.partial(vrslds_fused_kernel,
                          tau=float(tau), beta=float(beta), hidden=H),
        out_shape=(jax.ShapeDtypeStruct((T, B, PACK), jnp.float32),
                   jax.ShapeDtypeStruct((T, B, O), jnp.float32),
                   jax.ShapeDtypeStruct((1, 4), jnp.float32)),
        scratch_shapes=[pltpu.VMEM((T, B, 4 * GP), jnp.float32),  # gate pre-acts
                        pltpu.VMEM((T, B, GP), jnp.float32),      # h_cat history
                        pltpu.VMEM((T, B, Hm), jnp.float32),      # discr head pre
                        pltpu.VMEM((T, B, Hm), jnp.float32)],     # cont head pre
        compiler_params=pltpu.CompilerParams(
            vmem_limit_bytes=48 * 1024 * 1024),
    )(y_tm, gumbel, eps,
      w['w_in'], w['b_in'], w['w_rec'], w['w_h1'], w['b_h1'],
      w['wd_zx'], params['wd2'], params['bd2'],
      w['wc_zx'], params['wc2'], params['bc2'],
      params['cw'], params['cb'], w['awf'], params['ab'],
      w['rwf'], params['rb'])

    y_pred = jnp.transpose(y_pred_tm, (1, 0, 2))
    z_sample = jnp.transpose(slab[:, :, D:2 * D], (1, 0, 2))
    x_sample = jnp.transpose(slab[:, :, 2 * D + 2 * C:], (1, 0, 2))
    losses = {'kld': losses_vec[0, 1], 'elbo': losses_vec[0, 2],
              'loss': losses_vec[0, 3]}
    return y_pred, x_sample, z_sample, losses


# ----------------------------------------------------------------------------
# Deterministic parameter init (shapes derived from VRSLDS.__init__)
# ----------------------------------------------------------------------------
def init_params(key, obs_dim, discr_dim, cont_dim, hidden_dim):
    H, D, C, O = hidden_dim, discr_dim, cont_dim, obs_dim
    ks = iter(jax.random.split(key, 32))

    def lin(fan_in, shape):
        return (jax.random.normal(next(ks), shape, jnp.float32)
                / jnp.sqrt(jnp.float32(fan_in)))

    p = {}
    # encoder: 1-layer bidirectional LSTM (gate order i, f, g, o)
    p['wih_f'] = lin(O, (O, 4 * H))
    p['whh_f'] = lin(H, (H, 4 * H))
    p['b_f'] = jnp.zeros((1, 4 * H), jnp.float32)
    p['wih_b'] = lin(O, (O, 4 * H))
    p['whh_b'] = lin(H, (H, 4 * H))
    p['b_b'] = jnp.zeros((1, 4 * H), jnp.float32)
    # out_discr MLP: in = 2H + D + C, hidden = H, out = D (W1 split hf/hb/z/x)
    fan1 = 2 * H + D + C
    p['wd1hf'] = lin(fan1, (H, H))
    p['wd1hb'] = lin(fan1, (H, H))
    p['wd1z'] = lin(fan1, (D, H))
    p['wd1x'] = lin(fan1, (C, H))
    p['bd1'] = jnp.zeros((1, H), jnp.float32)
    p['wd2'] = lin(H, (H, D))
    p['bd2'] = jnp.zeros((1, D), jnp.float32)
    # out_cont MLP: out = 2C
    p['wc1hf'] = lin(fan1, (H, H))
    p['wc1hb'] = lin(fan1, (H, H))
    p['wc1z'] = lin(fan1, (D, H))
    p['wc1x'] = lin(fan1, (C, H))
    p['bc1'] = jnp.zeros((1, H), jnp.float32)
    p['wc2'] = lin(H, (H, 2 * C))
    p['bc2'] = jnp.zeros((1, 2 * C), jnp.float32)
    # emission C: cont_dim -> obs_dim
    p['cw'] = lin(C, (C, O))
    p['cb'] = jnp.zeros((1, O), jnp.float32)
    # per-mode dynamics A_i: cont -> cont ; transitions R_i: cont -> discr
    p['aw'] = lin(C, (D, C, C))
    p['ab'] = jnp.zeros((D, C), jnp.float32)
    p['rw'] = lin(C, (D, C, D))
    p['rb'] = jnp.zeros((D, D), jnp.float32)
    return p


if __name__ == "__main__":
    key = jax.random.PRNGKey(0)
    B, T = 2, 8
    obs_dim, discr_dim, cont_dim, hidden_dim = 4, 3, 2, 32

    k_param, k_y, k_g, k_e = jax.random.split(key, 4)
    params = init_params(k_param, obs_dim, discr_dim, cont_dim, hidden_dim)

    y = jax.random.normal(k_y, (B, T, obs_dim), jnp.float32)
    # precomputed noise (time-major, matching kernel layout)
    u = jax.random.uniform(k_g, (T, B, discr_dim), jnp.float32)
    gumbel = -jnp.log(-jnp.log(u + 1e-20) + 1e-20)
    eps = jax.random.normal(k_e, (T, B, cont_dim), jnp.float32)

    y_pred, x_sample, z_sample, losses = vrslds_forward(
        params, y, gumbel, eps, tau=1.0, beta=1.0)
    jax.block_until_ready((y_pred, x_sample, z_sample, losses))

    assert y_pred.shape == (B, T, obs_dim)
    assert x_sample.shape == (B, T, cont_dim)
    assert z_sample.shape == (B, T, discr_dim)
    assert all(jnp.isfinite(v) for v in losses.values())
    print("KERNEL_OK")
</pallas_src>

<mosaic_0001>
module attributes {stable_mosaic.version = 11 : i64} {
  func.func @vrslds_fused_kernel(%arg0: memref<8x2x4xf32, #tpu.memory_space<vmem>>, %arg1: memref<8x2x3xf32, #tpu.memory_space<vmem>>, %arg2: memref<8x2x2xf32, #tpu.memory_space<vmem>>, %arg3: memref<4x512xf32, #tpu.memory_space<vmem>>, %arg4: memref<1x512xf32, #tpu.memory_space<vmem>>, %arg5: memref<128x512xf32, #tpu.memory_space<vmem>>, %arg6: memref<128x64xf32, #tpu.memory_space<vmem>>, %arg7: memref<1x64xf32, #tpu.memory_space<vmem>>, %arg8: memref<5x32xf32, #tpu.memory_space<vmem>>, %arg9: memref<32x3xf32, #tpu.memory_space<vmem>>, %arg10: memref<1x3xf32, #tpu.memory_space<vmem>>, %arg11: memref<5x32xf32, #tpu.memory_space<vmem>>, %arg12: memref<32x4xf32, #tpu.memory_space<vmem>>, %arg13: memref<1x4xf32, #tpu.memory_space<vmem>>, %arg14: memref<2x4xf32, #tpu.memory_space<vmem>>, %arg15: memref<1x4xf32, #tpu.memory_space<vmem>>, %arg16: memref<2x6xf32, #tpu.memory_space<vmem>>, %arg17: memref<3x2xf32, #tpu.memory_space<vmem>>, %arg18: memref<2x9xf32, #tpu.memory_space<vmem>>, %arg19: memref<3x3xf32, #tpu.memory_space<vmem>>, %arg20: memref<8x2x12xf32, #tpu.memory_space<vmem>>, %arg21: memref<8x2x4xf32, #tpu.memory_space<vmem>>, %arg22: memref<1x4xf32, #tpu.memory_space<vmem>>, %arg23: memref<8x2x512xf32, #tpu.memory_space<vmem>>, %arg24: memref<8x2x128xf32, #tpu.memory_space<vmem>>, %arg25: memref<8x2x32xf32, #tpu.memory_space<vmem>>, %arg26: memref<8x2x32xf32, #tpu.memory_space<vmem>>) attributes {dimension_semantics = [], scalar_prefetch = 0 : i64, scratch_operands = 4 : i64, tpu.core_type = #tpu.core_type<tc>} {
    %c0 = arith.constant 0 : index
    %c0_0 = arith.constant 0 : index
    %c0_1 = arith.constant 0 : index
    %0 = vector.load %arg0[%c0, %c0_0, %c0_1] : memref<8x2x4xf32, #tpu.memory_space<vmem>>, vector<8x2x4xf32>
    %c0_2 = arith.constant 0 : index
    %c0_3 = arith.constant 0 : index
    %1 = vector.load %arg3[%c0_2, %c0_3] : memref<4x512xf32, #tpu.memory_space<vmem>>, vector<4x512xf32>
    "tpu.trace_start"() <{level = 10 : i32, message = "tbo,og->tbg"}> : () -> ()
    %cst = arith.constant dense<0.000000e+00> : vector<8x2x512xf32>
    %2 = tpu.matmul %0, %1, %cst {dimension_numbers = #tpu.dot_dimension_numbers<[2], [0], [0, 1], [1], [0, 0, 0, 1, 1, 1], [], []>} : vector<8x2x4xf32>, vector<4x512xf32>, vector<8x2x512xf32> -> vector<8x2x512xf32>
    "tpu.trace_stop"() : () -> ()
    %c0_4 = arith.constant 0 : index
    %c0_5 = arith.constant 0 : index
    %3 = vector.load %arg4[%c0_4, %c0_5] : memref<1x512xf32, #tpu.memory_space<vmem>>, vector<1x512xf32>
    %4 = vector.shape_cast %3 : vector<1x512xf32> to vector<1x1x512xf32>
    %5 = vector.broadcast %4 : vector<1x1x512xf32> to vector<8x2x512xf32>
    %6 = arith.addf %2, %5 : vector<8x2x512xf32>
    %c0_6 = arith.constant 0 : index
    %c0_7 = arith.constant 0 : index
    %c0_8 = arith.constant 0 : index
    %7 = vector.load %arg23[%c0_6, %c0_7, %c0_8] : memref<8x2x512xf32, #tpu.memory_space<vmem>>, vector<8x2x512xf32>
    tpu.vector_store %arg23[%c0_6, %c0_7, %c0_8], %6 {strides = array<i32>} : memref<8x2x512xf32, #tpu.memory_space<vmem>>, vector<8x2x512xf32>,
    %c0_9 = arith.constant 0 : index
    %c0_10 = arith.constant 0 : index
    %8 = vector.load %arg5[%c0_9, %c0_10] : memref<128x512xf32, #tpu.memory_space<vmem>>, vector<128x512xf32>
    %9 = tpu.iota {dimensions = array<i32: 1>} : vector<2x512xi32>
    %c128_i32 = arith.constant 128 : i32
    %c0_i32 = arith.constant 0 : i32
    %10 = arith.cmpi eq, %c128_i32, %c0_i32 : i32
    %c1_i32 = arith.constant 1 : i32
    %11 = arith.select %10, %c1_i32, %c128_i32 : i32
    %12 = vector.broadcast %11 : i32 to vector<2x512xi32>
    %13 = arith.remsi %9, %12 : vector<2x512xi32>
    %c0_i32_11 = arith.constant 0 : i32
    %14 = vector.broadcast %c0_i32_11 : i32 to vector<2x512xi32>
    %15 = arith.cmpi ne, %13, %14 : vector<2x512xi32>
    %c0_i32_12 = arith.constant 0 : i32
    %16 = vector.broadcast %c0_i32_12 : i32 to vector<2x512xi32>
    %17 = arith.cmpi slt, %13, %16 : vector<2x512xi32>
    %c0_i32_13 = arith.constant 0 : i32
    %18 = arith.cmpi slt, %11, %c0_i32_13 : i32
    %19 = vector.broadcast %18 : i1 to vector<2x512xi1>
    %20 = vector.broadcast %19 : vector<2x512xi1> to vector<2x512xi1>
    %21 = arith.xori %17, %20 : vector<2x512xi1>
    %22 = arith.andi %21, %15 : vector<2x512xi1>
    %23 = vector.broadcast %11 : i32 to vector<2x512xi32>
    %24 = arith.addi %13, %23 : vector<2x512xi32>
    %25 = arith.select %22, %24, %13 : vector<2x512xi1>, vector<2x512xi32>
    %c32_i32 = arith.constant 32 : i32
    %26 = vector.broadcast %c32_i32 : i32 to vector<2x512xi32>
    %27 = arith.cmpi sge, %25, %26 : vector<2x512xi32>
    %c64_i32 = arith.constant 64 : i32
    %28 = vector.broadcast %c64_i32 : i32 to vector<2x512xi32>
    %29 = arith.cmpi slt, %25, %28 : vector<2x512xi32>
    %30 = arith.andi %27, %29 : vector<2x512xi1>
    %cst_14 = arith.constant 0.000000e+00 : f32
    %31 = vector.broadcast %cst_14 : f32 to vector<2x128xf32>
    %cst_15 = arith.constant 0.000000e+00 : f32
    %32 = vector.broadcast %cst_15 : f32 to vector<2x128xf32>
    %c0_i32_16 = arith.constant 0 : i32
    %c7_i32 = arith.constant 7 : i32
    %33 = arith.subi %c7_i32, %c0_i32_16 : i32
    %34 = arith.index_cast %33 : i32 to index
    %c0_17 = arith.constant 0 : index
    %c0_18 = arith.constant 0 : index
    %35 = vector.load %arg23[%34, %c0_17, %c0_18] : memref<8x2x512xf32, #tpu.memory_space<vmem>>, vector<1x2x512xf32>
    %36 = vector.shape_cast %35 : vector<1x2x512xf32> to vector<2x512xf32>
    %37 = arith.index_cast %c0_i32_16 : i32 to index
    %c0_19 = arith.constant 0 : index
    %c0_20 = arith.constant 0 : index
    %38 = vector.load %arg23[%37, %c0_19, %c0_20] : memref<8x2x512xf32, #tpu.memory_space<vmem>>, vector<1x2x512xf32>
    %39 = vector.shape_cast %38 : vector<1x2x512xf32> to vector<2x512xf32>
    %40 = arith.select %30, %36, %39 : vector<2x512xi1>, vector<2x512xf32>
    %cst_21 = arith.constant dense<0.000000e+00> : vector<2x512xf32>
    %41 = tpu.matmul %31, %8, %cst_21 {dimension_numbers = #tpu.dot_dimension_numbers<[1], [0], [0], [1], [0, 0, 1, 1], [], []>} : vector<2x128xf32>, vector<128x512xf32>, vector<2x512xf32> -> vector<2x512xf32>
    %42 = arith.addf %40, %41 : vector<2x512xf32>
    %43 = vector.extract_strided_slice %42 {offsets = [0, 0], sizes = [2, 128], strides = [1, 1]} : vector<2x512xf32> to vector<2x128xf32>
    %44 = arith.negf %43 : vector<2x128xf32>
    %45 = math.exp %44 : vector<2x128xf32>
    %cst_22 = arith.constant 1.000000e+00 : f32
    %46 = vector.broadcast %cst_22 : f32 to vector<2x128xf32>
    %47 = arith.addf %46, %45 : vector<2x128xf32>
    %48 = arith.divf %46, %47 : vector<2x128xf32>
    %49 = vector.extract_strided_slice %42 {offsets = [0, 128], sizes = [2, 128], strides = [1, 1]} : vector<2x512xf32> to vector<2x128xf32>
    %50 = arith.negf %49 : vector<2x128xf32>
    %51 = math.exp %50 : vector<2x128xf32>
    %cst_23 = arith.constant 1.000000e+00 : f32
    %52 = vector.broadcast %cst_23 : f32 to vector<2x128xf32>
    %53 = arith.addf %52, %51 : vector<2x128xf32>
    %54 = arith.divf %52, %53 : vector<2x128xf32>
    %55 = vector.extract_strided_slice %42 {offsets = [0, 256], sizes = [2, 128], strides = [1, 1]} : vector<2x512xf32> to vector<2x128xf32>
    %56 = math.tanh %55 : vector<2x128xf32>
    %57 = vector.extract_strided_slice %42 {offsets = [0, 384], sizes = [2, 128], strides = [1, 1]} : vector<2x512xf32> to vector<2x128xf32>
    %58 = arith.negf %57 : vector<2x128xf32>
    %59 = math.exp %58 : vector<2x128xf32>
    %cst_24 = arith.constant 1.000000e+00 : f32
    %60 = vector.broadcast %cst_24 : f32 to vector<2x128xf32>
    %61 = arith.addf %60, %59 : vector<2x128xf32>
    %62 = arith.divf %60, %61 : vector<2x128xf32>
    %63 = arith.mulf %54, %32 : vector<2x128xf32>
    %64 = arith.mulf %48, %56 : vector<2x128xf32>
    %65 = arith.addf %63, %64 : vector<2x128xf32>
    %66 = math.tanh %65 : vector<2x128xf32>
    %67 = arith.mulf %62, %66 : vector<2x128xf32>
    %68 = arith.index_cast %c0_i32_16 : i32 to index
    %c0_25 = arith.constant 0 : index
    %c0_26 = arith.constant 0 : index
    %69 = vector.load %arg24[%68, %c0_25, %c0_26] : memref<8x2x128xf32, #tpu.memory_space<vmem>>, vector<1x2x128xf32>
    %70 = vector.shape_cast %69 : vector<1x2x128xf32> to vector<2x128xf32>
    %71 = vector.shape_cast %67 : vector<2x128xf32> to vector<1x2x128xf32>
    tpu.vector_store %arg24[%68, %c0_25, %c0_26], %71 {strides = array<i32>} : memref<8x2x128xf32, #tpu.memory_space<vmem>>, vector<1x2x128xf32>,
    %c1_i32_27 = arith.constant 1 : i32
    %c7_i32_28 = arith.constant 7 : i32
    %72 = arith.subi %c7_i32_28, %c1_i32_27 : i32
    %73 = arith.index_cast %72 : i32 to index
    %c0_29 = arith.constant 0 : index
    %c0_30 = arith.constant 0 : index
    %74 = vector.load %arg23[%73, %c0_29, %c0_30] : memref<8x2x512xf32, #tpu.memory_space<vmem>>, vector<1x2x512xf32>
    %75 = vector.shape_cast %74 : vector<1x2x512xf32> to vector<2x512xf32>
    %76 = arith.index_cast %c1_i32_27 : i32 to index
    %c0_31 = arith.constant 0 : index
    %c0_32 = arith.constant 0 : index
    %77 = vector.load %arg23[%76, %c0_31, %c0_32] : memref<8x2x512xf32, #tpu.memory_space<vmem>>, vector<1x2x512xf32>
    %78 = vector.shape_cast %77 : vector<1x2x512xf32> to vector<2x512xf32>
    %79 = arith.select %30, %75, %78 : vector<2x512xi1>, vector<2x512xf32>
    %cst_33 = arith.constant dense<0.000000e+00> : vector<2x512xf32>
    %80 = tpu.matmul %67, %8, %cst_33 {dimension_numbers = #tpu.dot_dimension_numbers<[1], [0], [0], [1], [0, 0, 1, 1], [], []>} : vector<2x128xf32>, vector<128x512xf32>, vector<2x512xf32> -> vector<2x512xf32>
    %81 = arith.addf %79, %80 : vector<2x512xf32>
    %82 = vector.extract_strided_slice %81 {offsets = [0, 0], sizes = [2, 128], strides = [1, 1]} : vector<2x512xf32> to vector<2x128xf32>
    %83 = arith.negf %82 : vector<2x128xf32>
    %84 = math.exp %83 : vector<2x128xf32>
    %cst_34 = arith.constant 1.000000e+00 : f32
    %85 = vector.broadcast %cst_34 : f32 to vector<2x128xf32>
    %86 = arith.addf %85, %84 : vector<2x128xf32>
    %87 = arith.divf %85, %86 : vector<2x128xf32>
    %88 = vector.extract_strided_slice %81 {offsets = [0, 128], sizes = [2, 128], strides = [1, 1]} : vector<2x512xf32> to vector<2x128xf32>
    %89 = arith.negf %88 : vector<2x128xf32>
    %90 = math.exp %89 : vector<2x128xf32>
    %cst_35 = arith.constant 1.000000e+00 : f32
    %91 = vector.broadcast %cst_35 : f32 to vector<2x128xf32>
    %92 = arith.addf %91, %90 : vector<2x128xf32>
    %93 = arith.divf %91, %92 : vector<2x128xf32>
    %94 = vector.extract_strided_slice %81 {offsets = [0, 256], sizes = [2, 128], strides = [1, 1]} : vector<2x512xf32> to vector<2x128xf32>
    %95 = math.tanh %94 : vector<2x128xf32>
    %96 = vector.extract_strided_slice %81 {offsets = [0, 384], sizes = [2, 128], strides = [1, 1]} : vector<2x512xf32> to vector<2x128xf32>
    %97 = arith.negf %96 : vector<2x128xf32>
    %98 = math.exp %97 : vector<2x128xf32>
    %cst_36 = arith.constant 1.000000e+00 : f32
    %99 = vector.broadcast %cst_36 : f32 to vector<2x128xf32>
    %100 = arith.addf %99, %98 : vector<2x128xf32>
    %101 = arith.divf %99, %100 : vector<2x128xf32>
    %102 = arith.mulf %93, %65 : vector<2x128xf32>
    %103 = arith.mulf %87, %95 : vector<2x128xf32>
    %104 = arith.addf %102, %103 : vector<2x128xf32>
    %105 = math.tanh %104 : vector<2x128xf32>
    %106 = arith.mulf %101, %105 : vector<2x128xf32>
    %107 = arith.index_cast %c1_i32_27 : i32 to index
    %c0_37 = arith.constant 0 : index
    %c0_38 = arith.constant 0 : index
    %108 = vector.load %arg24[%107, %c0_37, %c0_38] : memref<8x2x128xf32, #tpu.memory_space<vmem>>, vector<1x2x128xf32>
    %109 = vector.shape_cast %108 : vector<1x2x128xf32> to vector<2x128xf32>
    %110 = vector.shape_cast %106 : vector<2x128xf32> to vector<1x2x128xf32>
    tpu.vector_store %arg24[%107, %c0_37, %c0_38], %110 {strides = array<i32>} : memref<8x2x128xf32, #tpu.memory_space<vmem>>, vector<1x2x128xf32>,
    %c2_i32 = arith.constant 2 : i32
    %c7_i32_39 = arith.constant 7 : i32
    %111 = arith.subi %c7_i32_39, %c2_i32 : i32
    %112 = arith.index_cast %111 : i32 to index
    %c0_40 = arith.constant 0 : index
    %c0_41 = arith.constant 0 : index
    %113 = vector.load %arg23[%112, %c0_40, %c0_41] : memref<8x2x512xf32, #tpu.memory_space<vmem>>, vector<1x2x512xf32>
    %114 = vector.shape_cast %113 : vector<1x2x512xf32> to vector<2x512xf32>
    %115 = arith.index_cast %c2_i32 : i32 to index
    %c0_42 = arith.constant 0 : index
    %c0_43 = arith.constant 0 : index
    %116 = vector.load %arg23[%115, %c0_42, %c0_43] : memref<8x2x512xf32, #tpu.memory_space<vmem>>, vector<1x2x512xf32>
    %117 = vector.shape_cast %116 : vector<1x2x512xf32> to vector<2x512xf32>
    %118 = arith.select %30, %114, %117 : vector<2x512xi1>, vector<2x512xf32>
    %cst_44 = arith.constant dense<0.000000e+00> : vector<2x512xf32>
    %119 = tpu.matmul %106, %8, %cst_44 {dimension_numbers = #tpu.dot_dimension_numbers<[1], [0], [0], [1], [0, 0, 1, 1], [], []>} : vector<2x128xf32>, vector<128x512xf32>, vector<2x512xf32> -> vector<2x512xf32>
    %120 = arith.addf %118, %119 : vector<2x512xf32>
    %121 = vector.extract_strided_slice %120 {offsets = [0, 0], sizes = [2, 128], strides = [1, 1]} : vector<2x512xf32> to vector<2x128xf32>
    %122 = arith.negf %121 : vector<2x128xf32>
    %123 = math.exp %122 : vector<2x128xf32>
    %cst_45 = arith.constant 1.000000e+00 : f32
    %124 = vector.broadcast %cst_45 : f32 to vector<2x128xf32>
    %125 = arith.addf %124, %123 : vector<2x128xf32>
    %126 = arith.divf %124, %125 : vector<2x128xf32>
    %127 = vector.extract_strided_slice %120 {offsets = [0, 128], sizes = [2, 128], strides = [1, 1]} : vector<2x512xf32> to vector<2x128xf32>
    %128 = arith.negf %127 : vector<2x128xf32>
    %129 = math.exp %128 : vector<2x128xf32>
    %cst_46 = arith.constant 1.000000e+00 : f32
    %130 = vector.broadcast %cst_46 : f32 to vector<2x128xf32>
    %131 = arith.addf %130, %129 : vector<2x128xf32>
    %132 = arith.divf %130, %131 : vector<2x128xf32>
    %133 = vector.extract_strided_slice %120 {offsets = [0, 256], sizes = [2, 128], strides = [1, 1]} : vector<2x512xf32> to vector<2x128xf32>
    %134 = math.tanh %133 : vector<2x128xf32>
    %135 = vector.extract_strided_slice %120 {offsets = [0, 384], sizes = [2, 128], strides = [1, 1]} : vector<2x512xf32> to vector<2x128xf32>
    %136 = arith.negf %135 : vector<2x128xf32>
    %137 = math.exp %136 : vector<2x128xf32>
    %cst_47 = arith.constant 1.000000e+00 : f32
    %138 = vector.broadcast %cst_47 : f32 to vector<2x128xf32>
    %139 = arith.addf %138, %137 : vector<2x128xf32>
    %140 = arith.divf %138, %139 : vector<2x128xf32>
    %141 = arith.mulf %132, %104 : vector<2x128xf32>
    %142 = arith.mulf %126, %134 : vector<2x128xf32>
    %143 = arith.addf %141, %142 : vector<2x128xf32>
    %144 = math.tanh %143 : vector<2x128xf32>
    %145 = arith.mulf %140, %144 : vector<2x128xf32>
    %146 = arith.index_cast %c2_i32 : i32 to index
    %c0_48 = arith.constant 0 : index
    %c0_49 = arith.constant 0 : index
    %147 = vector.load %arg24[%146, %c0_48, %c0_49] : memref<8x2x128xf32, #tpu.memory_space<vmem>>, vector<1x2x128xf32>
    %148 = vector.shape_cast %147 : vector<1x2x128xf32> to vector<2x128xf32>
    %149 = vector.shape_cast %145 : vector<2x128xf32> to vector<1x2x128xf32>
    tpu.vector_store %arg24[%146, %c0_48, %c0_49], %149 {strides = array<i32>} : memref<8x2x128xf32, #tpu.memory_space<vmem>>, vector<1x2x128xf32>,
    %c3_i32 = arith.constant 3 : i32
    %c7_i32_50 = arith.constant 7 : i32
    %150 = arith.subi %c7_i32_50, %c3_i32 : i32
    %151 = arith.index_cast %150 : i32 to index
    %c0_51 = arith.constant 0 : index
    %c0_52 = arith.constant 0 : index
    %152 = vector.load %arg23[%151, %c0_51, %c0_52] : memref<8x2x512xf32, #tpu.memory_space<vmem>>, vector<1x2x512xf32>
    %153 = vector.shape_cast %152 : vector<1x2x512xf32> to vector<2x512xf32>
    %154 = arith.index_cast %c3_i32 : i32 to index
    %c0_53 = arith.constant 0 : index
    %c0_54 = arith.constant 0 : index
    %155 = vector.load %arg23[%154, %c0_53, %c0_54] : memref<8x2x512xf32, #tpu.memory_space<vmem>>, vector<1x2x512xf32>
    %156 = vector.shape_cast %155 : vector<1x2x512xf32> to vector<2x512xf32>
    %157 = arith.select %30, %153, %156 : vector<2x512xi1>, vector<2x512xf32>
    %cst_55 = arith.constant dense<0.000000e+00> : vector<2x512xf32>
    %158 = tpu.matmul %145, %8, %cst_55 {dimension_numbers = #tpu.dot_dimension_numbers<[1], [0], [0], [1], [0, 0, 1, 1], [], []>} : vector<2x128xf32>, vector<128x512xf32>, vector<2x512xf32> -> vector<2x512xf32>
    %159 = arith.addf %157, %158 : vector<2x512xf32>
    %160 = vector.extract_strided_slice %159 {offsets = [0, 0], sizes = [2, 128], strides = [1, 1]} : vector<2x512xf32> to vector<2x128xf32>
    %161 = arith.negf %160 : vector<2x128xf32>
    %162 = math.exp %161 : vector<2x128xf32>
    %cst_56 = arith.constant 1.000000e+00 : f32
    %163 = vector.broadcast %cst_56 : f32 to vector<2x128xf32>
    %164 = arith.addf %163, %162 : vector<2x128xf32>
    %165 = arith.divf %163, %164 : vector<2x128xf32>
    %166 = vector.extract_strided_slice %159 {offsets = [0, 128], sizes = [2, 128], strides = [1, 1]} : vector<2x512xf32> to vector<2x128xf32>
    %167 = arith.negf %166 : vector<2x128xf32>
    %168 = math.exp %167 : vector<2x128xf32>
    %cst_57 = arith.constant 1.000000e+00 : f32
    %169 = vector.broadcast %cst_57 : f32 to vector<2x128xf32>
    %170 = arith.addf %169, %168 : vector<2x128xf32>
    %171 = arith.divf %169, %170 : vector<2x128xf32>
    %172 = vector.extract_strided_slice %159 {offsets = [0, 256], sizes = [2, 128], strides = [1, 1]} : vector<2x512xf32> to vector<2x128xf32>
    %173 = math.tanh %172 : vector<2x128xf32>
    %174 = vector.extract_strided_slice %159 {offsets = [0, 384], sizes = [2, 128], strides = [1, 1]} : vector<2x512xf32> to vector<2x128xf32>
    %175 = arith.negf %174 : vector<2x128xf32>
    %176 = math.exp %175 : vector<2x128xf32>
    %cst_58 = arith.constant 1.000000e+00 : f32
    %177 = vector.broadcast %cst_58 : f32 to vector<2x128xf32>
    %178 = arith.addf %177, %176 : vector<2x128xf32>
    %179 = arith.divf %177, %178 : vector<2x128xf32>
    %180 = arith.mulf %171, %143 : vector<2x128xf32>
    %181 = arith.mulf %165, %173 : vector<2x128xf32>
    %182 = arith.addf %180, %181 : vector<2x128xf32>
    %183 = math.tanh %182 : vector<2x128xf32>
    %184 = arith.mulf %179, %183 : vector<2x128xf32>
    %185 = arith.index_cast %c3_i32 : i32 to index
    %c0_59 = arith.constant 0 : index
    %c0_60 = arith.constant 0 : index
    %186 = vector.load %arg24[%185, %c0_59, %c0_60] : memref<8x2x128xf32, #tpu.memory_space<vmem>>, vector<1x2x128xf32>
    %187 = vector.shape_cast %186 : vector<1x2x128xf32> to vector<2x128xf32>
    %188 = vector.shape_cast %184 : vector<2x128xf32> to vector<1x2x128xf32>
    tpu.vector_store %arg24[%185, %c0_59, %c0_60], %188 {strides = array<i32>} : memref<8x2x128xf32, #tpu.memory_space<vmem>>, vector<1x2x128xf32>,
    %c4_i32 = arith.constant 4 : i32
    %c7_i32_61 = arith.constant 7 : i32
    %189 = arith.subi %c7_i32_61, %c4_i32 : i32
    %190 = arith.index_cast %189 : i32 to index
    %c0_62 = arith.constant 0 : index
    %c0_63 = arith.constant 0 : index
    %191 = vector.load %arg23[%190, %c0_62, %c0_63] : memref<8x2x512xf32, #tpu.memory_space<vmem>>, vector<1x2x512xf32>
    %192 = vector.shape_cast %191 : vector<1x2x512xf32> to vector<2x512xf32>
    %193 = arith.index_cast %c4_i32 : i32 to index
    %c0_64 = arith.constant 0 : index
    %c0_65 = arith.constant 0 : index
    %194 = vector.load %arg23[%193, %c0_64, %c0_65] : memref<8x2x512xf32, #tpu.memory_space<vmem>>, vector<1x2x512xf32>
    %195 = vector.shape_cast %194 : vector<1x2x512xf32> to vector<2x512xf32>
    %196 = arith.select %30, %192, %195 : vector<2x512xi1>, vector<2x512xf32>
    %cst_66 = arith.constant dense<0.000000e+00> : vector<2x512xf32>
    %197 = tpu.matmul %184, %8, %cst_66 {dimension_numbers = #tpu.dot_dimension_numbers<[1], [0], [0], [1], [0, 0, 1, 1], [], []>} : vector<2x128xf32>, vector<128x512xf32>, vector<2x512xf32> -> vector<2x512xf32>
    %198 = arith.addf %196, %197 : vector<2x512xf32>
    %199 = vector.extract_strided_slice %198 {offsets = [0, 0], sizes = [2, 128], strides = [1, 1]} : vector<2x512xf32> to vector<2x128xf32>
    %200 = arith.negf %199 : vector<2x128xf32>
    %201 = math.exp %200 : vector<2x128xf32>
    %cst_67 = arith.constant 1.000000e+00 : f32
    %202 = vector.broadcast %cst_67 : f32 to vector<2x128xf32>
    %203 = arith.addf %202, %201 : vector<2x128xf32>
    %204 = arith.divf %202, %203 : vector<2x128xf32>
    %205 = vector.extract_strided_slice %198 {offsets = [0, 128], sizes = [2, 128], strides = [1, 1]} : vector<2x512xf32> to vector<2x128xf32>
    %206 = arith.negf %205 : vector<2x128xf32>
    %207 = math.exp %206 : vector<2x128xf32>
    %cst_68 = arith.constant 1.000000e+00 : f32
    %208 = vector.broadcast %cst_68 : f32 to vector<2x128xf32>
    %209 = arith.addf %208, %207 : vector<2x128xf32>
    %210 = arith.divf %208, %209 : vector<2x128xf32>
    %211 = vector.extract_strided_slice %198 {offsets = [0, 256], sizes = [2, 128], strides = [1, 1]} : vector<2x512xf32> to vector<2x128xf32>
    %212 = math.tanh %211 : vector<2x128xf32>
    %213 = vector.extract_strided_slice %198 {offsets = [0, 384], sizes = [2, 128], strides = [1, 1]} : vector<2x512xf32> to vector<2x128xf32>
    %214 = arith.negf %213 : vector<2x128xf32>
    %215 = math.exp %214 : vector<2x128xf32>
    %cst_69 = arith.constant 1.000000e+00 : f32
    %216 = vector.broadcast %cst_69 : f32 to vector<2x128xf32>
    %217 = arith.addf %216, %215 : vector<2x128xf32>
    %218 = arith.divf %216, %217 : vector<2x128xf32>
    %219 = arith.mulf %210, %182 : vector<2x128xf32>
    %220 = arith.mulf %204, %212 : vector<2x128xf32>
    %221 = arith.addf %219, %220 : vector<2x128xf32>
    %222 = math.tanh %221 : vector<2x128xf32>
    %223 = arith.mulf %218, %222 : vector<2x128xf32>
    %224 = arith.index_cast %c4_i32 : i32 to index
    %c0_70 = arith.constant 0 : index
    %c0_71 = arith.constant 0 : index
    %225 = vector.load %arg24[%224, %c0_70, %c0_71] : memref<8x2x128xf32, #tpu.memory_space<vmem>>, vector<1x2x128xf32>
    %226 = vector.shape_cast %225 : vector<1x2x128xf32> to vector<2x128xf32>
    %227 = vector.shape_cast %223 : vector<2x128xf32> to vector<1x2x128xf32>
    tpu.vector_store %arg24[%224, %c0_70, %c0_71], %227 {strides = array<i32>} : memref<8x2x128xf32, #tpu.memory_space<vmem>>, vector<1x2x128xf32>,
    %c5_i32 = arith.constant 5 : i32
    %c7_i32_72 = arith.constant 7 : i32
    %228 = arith.subi %c7_i32_72, %c5_i32 : i32
    %229 = arith.index_cast %228 : i32 to index
    %c0_73 = arith.constant 0 : index
    %c0_74 = arith.constant 0 : index
    %230 = vector.load %arg23[%229, %c0_73, %c0_74] : memref<8x2x512xf32, #tpu.memory_space<vmem>>, vector<1x2x512xf32>
    %231 = vector.shape_cast %230 : vector<1x2x512xf32> to vector<2x512xf32>
    %232 = arith.index_cast %c5_i32 : i32 to index
    %c0_75 = arith.constant 0 : index
    %c0_76 = arith.constant 0 : index
    %233 = vector.load %arg23[%232, %c0_75, %c0_76] : memref<8x2x512xf32, #tpu.memory_space<vmem>>, vector<1x2x512xf32>
    %234 = vector.shape_cast %233 : vector<1x2x512xf32> to vector<2x512xf32>
    %235 = arith.select %30, %231, %234 : vector<2x512xi1>, vector<2x512xf32>
    %cst_77 = arith.constant dense<0.000000e+00> : vector<2x512xf32>
    %236 = tpu.matmul %223, %8, %cst_77 {dimension_numbers = #tpu.dot_dimension_numbers<[1], [0], [0], [1], [0, 0, 1, 1], [], []>} : vector<2x128xf32>, vector<128x512xf32>, vector<2x512xf32> -> vector<2x512xf32>
    %237 = arith.addf %235, %236 : vector<2x512xf32>
    %238 = vector.extract_strided_slice %237 {offsets = [0, 0], sizes = [2, 128], strides = [1, 1]} : vector<2x512xf32> to vector<2x128xf32>
    %239 = arith.negf %238 : vector<2x128xf32>
    %240 = math.exp %239 : vector<2x128xf32>
    %cst_78 = arith.constant 1.000000e+00 : f32
    %241 = vector.broadcast %cst_78 : f32 to vector<2x128xf32>
    %242 = arith.addf %241, %240 : vector<2x128xf32>
    %243 = arith.divf %241, %242 : vector<2x128xf32>
    %244 = vector.extract_strided_slice %237 {offsets = [0, 128], sizes = [2, 128], strides = [1, 1]} : vector<2x512xf32> to vector<2x128xf32>
    %245 = arith.negf %244 : vector<2x128xf32>
    %246 = math.exp %245 : vector<2x128xf32>
    %cst_79 = arith.constant 1.000000e+00 : f32
    %247 = vector.broadcast %cst_79 : f32 to vector<2x128xf32>
    %248 = arith.addf %247, %246 : vector<2x128xf32>
    %249 = arith.divf %247, %248 : vector<2x128xf32>
    %250 = vector.extract_strided_slice %237 {offsets = [0, 256], sizes = [2, 128], strides = [1, 1]} : vector<2x512xf32> to vector<2x128xf32>
    %251 = math.tanh %250 : vector<2x128xf32>
    %252 = vector.extract_strided_slice %237 {offsets = [0, 384], sizes = [2, 128], strides = [1, 1]} : vector<2x512xf32> to vector<2x128xf32>
    %253 = arith.negf %252 : vector<2x128xf32>
    %254 = math.exp %253 : vector<2x128xf32>
    %cst_80 = arith.constant 1.000000e+00 : f32
    %255 = vector.broadcast %cst_80 : f32 to vector<2x128xf32>
    %256 = arith.addf %255, %254 : vector<2x128xf32>
    %257 = arith.divf %255, %256 : vector<2x128xf32>
    %258 = arith.mulf %249, %221 : vector<2x128xf32>
    %259 = arith.mulf %243, %251 : vector<2x128xf32>
    %260 = arith.addf %258, %259 : vector<2x128xf32>
    %261 = math.tanh %260 : vector<2x128xf32>
    %262 = arith.mulf %257, %261 : vector<2x128xf32>
    %263 = arith.index_cast %c5_i32 : i32 to index
    %c0_81 = arith.constant 0 : index
    %c0_82 = arith.constant 0 : index
    %264 = vector.load %arg24[%263, %c0_81, %c0_82] : memref<8x2x128xf32, #tpu.memory_space<vmem>>, vector<1x2x128xf32>
    %265 = vector.shape_cast %264 : vector<1x2x128xf32> to vector<2x128xf32>
    %266 = vector.shape_cast %262 : vector<2x128xf32> to vector<1x2x128xf32>
    tpu.vector_store %arg24[%263, %c0_81, %c0_82], %266 {strides = array<i32>} : memref<8x2x128xf32, #tpu.memory_space<vmem>>, vector<1x2x128xf32>,
    %c6_i32 = arith.constant 6 : i32
    %c7_i32_83 = arith.constant 7 : i32
    %267 = arith.subi %c7_i32_83, %c6_i32 : i32
    %268 = arith.index_cast %267 : i32 to index
    %c0_84 = arith.constant 0 : index
    %c0_85 = arith.constant 0 : index
    %269 = vector.load %arg23[%268, %c0_84, %c0_85] : memref<8x2x512xf32, #tpu.memory_space<vmem>>, vector<1x2x512xf32>
    %270 = vector.shape_cast %269 : vector<1x2x512xf32> to vector<2x512xf32>
    %271 = arith.index_cast %c6_i32 : i32 to index
    %c0_86 = arith.constant 0 : index
    %c0_87 = arith.constant 0 : index
    %272 = vector.load %arg23[%271, %c0_86, %c0_87] : memref<8x2x512xf32, #tpu.memory_space<vmem>>, vector<1x2x512xf32>
    %273 = vector.shape_cast %272 : vector<1x2x512xf32> to vector<2x512xf32>
    %274 = arith.select %30, %270, %273 : vector<2x512xi1>, vector<2x512xf32>
    %cst_88 = arith.constant dense<0.000000e+00> : vector<2x512xf32>
    %275 = tpu.matmul %262, %8, %cst_88 {dimension_numbers = #tpu.dot_dimension_numbers<[1], [0], [0], [1], [0, 0, 1, 1], [], []>} : vector<2x128xf32>, vector<128x512xf32>, vector<2x512xf32> -> vector<2x512xf32>
    %276 = arith.addf %274, %275 : vector<2x512xf32>
    %277 = vector.extract_strided_slice %276 {offsets = [0, 0], sizes = [2, 128], strides = [1, 1]} : vector<2x512xf32> to vector<2x128xf32>
    %278 = arith.negf %277 : vector<2x128xf32>
    %279 = math.exp %278 : vector<2x128xf32>
    %cst_89 = arith.constant 1.000000e+00 : f32
    %280 = vector.broadcast %cst_89 : f32 to vector<2x128xf32>
    %281 = arith.addf %280, %279 : vector<2x128xf32>
    %282 = arith.divf %280, %281 : vector<2x128xf32>
    %283 = vector.extract_strided_slice %276 {offsets = [0, 128], sizes = [2, 128], strides = [1, 1]} : vector<2x512xf32> to vector<2x128xf32>
    %284 = arith.negf %283 : vector<2x128xf32>
    %285 = math.exp %284 : vector<2x128xf32>
    %cst_90 = arith.constant 1.000000e+00 : f32
    %286 = vector.broadcast %cst_90 : f32 to vector<2x128xf32>
    %287 = arith.addf %286, %285 : vector<2x128xf32>
    %288 = arith.divf %286, %287 : vector<2x128xf32>
    %289 = vector.extract_strided_slice %276 {offsets = [0, 256], sizes = [2, 128], strides = [1, 1]} : vector<2x512xf32> to vector<2x128xf32>
    %290 = math.tanh %289 : vector<2x128xf32>
    %291 = vector.extract_strided_slice %276 {offsets = [0, 384], sizes = [2, 128], strides = [1, 1]} : vector<2x512xf32> to vector<2x128xf32>
    %292 = arith.negf %291 : vector<2x128xf32>
    %293 = math.exp %292 : vector<2x128xf32>
    %cst_91 = arith.constant 1.000000e+00 : f32
    %294 = vector.broadcast %cst_91 : f32 to vector<2x128xf32>
    %295 = arith.addf %294, %293 : vector<2x128xf32>
    %296 = arith.divf %294, %295 : vector<2x128xf32>
    %297 = arith.mulf %288, %260 : vector<2x128xf32>
    %298 = arith.mulf %282, %290 : vector<2x128xf32>
    %299 = arith.addf %297, %298 : vector<2x128xf32>
    %300 = math.tanh %299 : vector<2x128xf32>
    %301 = arith.mulf %296, %300 : vector<2x128xf32>
    %302 = arith.index_cast %c6_i32 : i32 to index
    %c0_92 = arith.constant 0 : index
    %c0_93 = arith.constant 0 : index
    %303 = vector.load %arg24[%302, %c0_92, %c0_93] : memref<8x2x128xf32, #tpu.memory_space<vmem>>, vector<1x2x128xf32>
    %304 = vector.shape_cast %303 : vector<1x2x128xf32> to vector<2x128xf32>
    %305 = vector.shape_cast %301 : vector<2x128xf32> to vector<1x2x128xf32>
    tpu.vector_store %arg24[%302, %c0_92, %c0_93], %305 {strides = array<i32>} : memref<8x2x128xf32, #tpu.memory_space<vmem>>, vector<1x2x128xf32>,
    %c7_i32_94 = arith.constant 7 : i32
    %c7_i32_95 = arith.constant 7 : i32
    %306 = arith.subi %c7_i32_95, %c7_i32_94 : i32
    %307 = arith.index_cast %306 : i32 to index
    %c0_96 = arith.constant 0 : index
    %c0_97 = arith.constant 0 : index
    %308 = vector.load %arg23[%307, %c0_96, %c0_97] : memref<8x2x512xf32, #tpu.memory_space<vmem>>, vector<1x2x512xf32>
    %309 = vector.shape_cast %308 : vector<1x2x512xf32> to vector<2x512xf32>
    %310 = arith.index_cast %c7_i32_94 : i32 to index
    %c0_98 = arith.constant 0 : index
    %c0_99 = arith.constant 0 : index
    %311 = vector.load %arg23[%310, %c0_98, %c0_99] : memref<8x2x512xf32, #tpu.memory_space<vmem>>, vector<1x2x512xf32>
    %312 = vector.shape_cast %311 : vector<1x2x512xf32> to vector<2x512xf32>
    %313 = arith.select %30, %309, %312 : vector<2x512xi1>, vector<2x512xf32>
    %cst_100 = arith.constant dense<0.000000e+00> : vector<2x512xf32>
    %314 = tpu.matmul %301, %8, %cst_100 {dimension_numbers = #tpu.dot_dimension_numbers<[1], [0], [0], [1], [0, 0, 1, 1], [], []>} : vector<2x128xf32>, vector<128x512xf32>, vector<2x512xf32> -> vector<2x512xf32>
    %315 = arith.addf %313, %314 : vector<2x512xf32>
    %316 = vector.extract_strided_slice %315 {offsets = [0, 0], sizes = [2, 128], strides = [1, 1]} : vector<2x512xf32> to vector<2x128xf32>
    %317 = arith.negf %316 : vector<2x128xf32>
    %318 = math.exp %317 : vector<2x128xf32>
    %cst_101 = arith.constant 1.000000e+00 : f32
    %319 = vector.broadcast %cst_101 : f32 to vector<2x128xf32>
    %320 = arith.addf %319, %318 : vector<2x128xf32>
    %321 = arith.divf %319, %320 : vector<2x128xf32>
    %322 = vector.extract_strided_slice %315 {offsets = [0, 128], sizes = [2, 128], strides = [1, 1]} : vector<2x512xf32> to vector<2x128xf32>
    %323 = arith.negf %322 : vector<2x128xf32>
    %324 = math.exp %323 : vector<2x128xf32>
    %cst_102 = arith.constant 1.000000e+00 : f32
    %325 = vector.broadcast %cst_102 : f32 to vector<2x128xf32>
    %326 = arith.addf %325, %324 : vector<2x128xf32>
    %327 = arith.divf %325, %326 : vector<2x128xf32>
    %328 = vector.extract_strided_slice %315 {offsets = [0, 256], sizes = [2, 128], strides = [1, 1]} : vector<2x512xf32> to vector<2x128xf32>
    %329 = math.tanh %328 : vector<2x128xf32>
    %330 = vector.extract_strided_slice %315 {offsets = [0, 384], sizes = [2, 128], strides = [1, 1]} : vector<2x512xf32> to vector<2x128xf32>
    %331 = arith.negf %330 : vector<2x128xf32>
    %332 = math.exp %331 : vector<2x128xf32>
    %cst_103 = arith.constant 1.000000e+00 : f32
    %333 = vector.broadcast %cst_103 : f32 to vector<2x128xf32>
    %334 = arith.addf %333, %332 : vector<2x128xf32>
    %335 = arith.divf %333, %334 : vector<2x128xf32>
    %336 = arith.mulf %327, %299 : vector<2x128xf32>
    %337 = arith.mulf %321, %329 : vector<2x128xf32>
    %338 = arith.addf %336, %337 : vector<2x128xf32>
    %339 = math.tanh %338 : vector<2x128xf32>
    %340 = arith.mulf %335, %339 : vector<2x128xf32>
    %341 = arith.index_cast %c7_i32_94 : i32 to index
    %c0_104 = arith.constant 0 : index
    %c0_105 = arith.constant 0 : index
    %342 = vector.load %arg24[%341, %c0_104, %c0_105] : memref<8x2x128xf32, #tpu.memory_space<vmem>>, vector<1x2x128xf32>
    %343 = vector.shape_cast %342 : vector<1x2x128xf32> to vector<2x128xf32>
    %344 = vector.shape_cast %340 : vector<2x128xf32> to vector<1x2x128xf32>
    tpu.vector_store %arg24[%341, %c0_104, %c0_105], %344 {strides = array<i32>} : memref<8x2x128xf32, #tpu.memory_space<vmem>>, vector<1x2x128xf32>,
    %c8_i32 = arith.constant 8 : i32
    %c0_106 = arith.constant 0 : index
    %c0_107 = arith.constant 0 : index
    %c0_108 = arith.constant 0 : index
    %345 = vector.load %arg24[%c0_106, %c0_107, %c0_108] : memref<8x2x128xf32, #tpu.memory_space<vmem>>, vector<8x2x128xf32>
    %346 = vector.extract_strided_slice %345 {offsets = [7, 0, 0], sizes = [1, 2, 128], strides = [1, 1, 1]} : vector<8x2x128xf32> to vector<1x2x128xf32>
    %347 = vector.extract_strided_slice %345 {offsets = [6, 0, 0], sizes = [1, 2, 128], strides = [1, 1, 1]} : vector<8x2x128xf32> to vector<1x2x128xf32>
    %348 = vector.extract_strided_slice %345 {offsets = [5, 0, 0], sizes = [1, 2, 128], strides = [1, 1, 1]} : vector<8x2x128xf32> to vector<1x2x128xf32>
    %349 = vector.extract_strided_slice %345 {offsets = [4, 0, 0], sizes = [1, 2, 128], strides = [1, 1, 1]} : vector<8x2x128xf32> to vector<1x2x128xf32>
    %350 = vector.extract_strided_slice %345 {offsets = [3, 0, 0], sizes = [1, 2, 128], strides = [1, 1, 1]} : vector<8x2x128xf32> to vector<1x2x128xf32>
    %351 = vector.extract_strided_slice %345 {offsets = [2, 0, 0], sizes = [1, 2, 128], strides = [1, 1, 1]} : vector<8x2x128xf32> to vector<1x2x128xf32>
    %352 = vector.extract_strided_slice %345 {offsets = [1, 0, 0], sizes = [1, 2, 128], strides = [1, 1, 1]} : vector<8x2x128xf32> to vector<1x2x128xf32>
    %353 = vector.extract_strided_slice %345 {offsets = [0, 0, 0], sizes = [1, 2, 128], strides = [1, 1, 1]} : vector<8x2x128xf32> to vector<1x2x128xf32>
    %354 = tpu.concatenate %346, %347, %348, %349, %350, %351, %352, %353 in 0 : vector<1x2x128xf32>, vector<1x2x128xf32>, vector<1x2x128xf32>, vector<1x2x128xf32>, vector<1x2x128xf32>, vector<1x2x128xf32>, vector<1x2x128xf32>, vector<1x2x128xf32> -> vector<8x2x128xf32>
    %355 = tpu.iota {dimensions = array<i32: 2>} : vector<8x2x128xi32>
    %c32_i32_109 = arith.constant 32 : i32
    %356 = vector.broadcast %c32_i32_109 : i32 to vector<8x2x128xi32>
    %357 = arith.cmpi slt, %355, %356 : vector<8x2x128xi32>
    %358 = arith.select %357, %345, %354 : vector<8x2x128xi1>, vector<8x2x128xf32>
    %c0_110 = arith.constant 0 : index
    %c0_111 = arith.constant 0 : index
    %359 = vector.load %arg6[%c0_110, %c0_111] : memref<128x64xf32, #tpu.memory_space<vmem>>, vector<128x64xf32>
    "tpu.trace_start"() <{level = 10 : i32, message = "tbg,gk->tbk"}> : () -> ()
    %cst_112 = arith.constant dense<0.000000e+00> : vector<8x2x64xf32>
    %360 = tpu.matmul %358, %359, %cst_112 {dimension_numbers = #tpu.dot_dimension_numbers<[2], [0], [0, 1], [1], [0, 0, 0, 1, 1, 1], [], []>} : vector<8x2x128xf32>, vector<128x64xf32>, vector<8x2x64xf32> -> vector<8x2x64xf32>
    "tpu.trace_stop"() : () -> ()
    %c0_113 = arith.constant 0 : index
    %c0_114 = arith.constant 0 : index
    %361 = vector.load %arg7[%c0_113, %c0_114] : memref<1x64xf32, #tpu.memory_space<vmem>>, vector<1x64xf32>
    %362 = vector.shape_cast %361 : vector<1x64xf32> to vector<1x1x64xf32>
    %363 = vector.broadcast %362 : vector<1x1x64xf32> to vector<8x2x64xf32>
    %364 = arith.addf %360, %363 : vector<8x2x64xf32>
    %365 = vector.extract_strided_slice %364 {offsets = [0, 0, 0], sizes = [8, 2, 32], strides = [1, 1, 1]} : vector<8x2x64xf32> to vector<8x2x32xf32>
    %c0_115 = arith.constant 0 : index
    %c0_116 = arith.constant 0 : index
    %c0_117 = arith.constant 0 : index
    %366 = vector.load %arg25[%c0_115, %c0_116, %c0_117] : memref<8x2x32xf32, #tpu.memory_space<vmem>>, vector<8x2x32xf32>
    tpu.vector_store %arg25[%c0_115, %c0_116, %c0_117], %365 {strides = array<i32>} : memref<8x2x32xf32, #tpu.memory_space<vmem>>, vector<8x2x32xf32>,
    %367 = vector.extract_strided_slice %364 {offsets = [0, 0, 32], sizes = [8, 2, 32], strides = [1, 1, 1]} : vector<8x2x64xf32> to vector<8x2x32xf32>
    %c0_118 = arith.constant 0 : index
    %c0_119 = arith.constant 0 : index
    %c0_120 = arith.constant 0 : index
    %368 = vector.load %arg26[%c0_118, %c0_119, %c0_120] : memref<8x2x32xf32, #tpu.memory_space<vmem>>, vector<8x2x32xf32>
    tpu.vector_store %arg26[%c0_118, %c0_119, %c0_120], %367 {strides = array<i32>} : memref<8x2x32xf32, #tpu.memory_space<vmem>>, vector<8x2x32xf32>,
    %c0_121 = arith.constant 0 : index
    %c0_122 = arith.constant 0 : index
    %369 = vector.load %arg8[%c0_121, %c0_122] : memref<5x32xf32, #tpu.memory_space<vmem>>, vector<5x32xf32>
    %c0_123 = arith.constant 0 : index
    %c0_124 = arith.constant 0 : index
    %370 = vector.load %arg9[%c0_123, %c0_124] : memref<32x3xf32, #tpu.memory_space<vmem>>, vector<32x3xf32>
    %c0_125 = arith.constant 0 : index
    %c0_126 = arith.constant 0 : index
    %371 = vector.load %arg11[%c0_125, %c0_126] : memref<5x32xf32, #tpu.memory_space<vmem>>, vector<5x32xf32>
    %c0_127 = arith.constant 0 : index
    %c0_128 = arith.constant 0 : index
    %372 = vector.load %arg12[%c0_127, %c0_128] : memref<32x4xf32, #tpu.memory_space<vmem>>, vector<32x4xf32>
    %c0_129 = arith.constant 0 : index
    %c0_130 = arith.constant 0 : index
    %373 = vector.load %arg10[%c0_129, %c0_130] : memref<1x3xf32, #tpu.memory_space<vmem>>, vector<1x3xf32>
    %374 = vector.shape_cast %373 : vector<1x3xf32> to vector<1x3xf32>
    %375 = vector.broadcast %374 : vector<1x3xf32> to vector<2x3xf32>
    %c0_131 = arith.constant 0 : index
    %c0_132 = arith.constant 0 : index
    %376 = vector.load %arg13[%c0_131, %c0_132] : memref<1x4xf32, #tpu.memory_space<vmem>>, vector<1x4xf32>
    %377 = vector.shape_cast %376 : vector<1x4xf32> to vector<1x4xf32>
    %378 = vector.broadcast %377 : vector<1x4xf32> to vector<2x4xf32>
    %cst_133 = arith.constant 0.000000e+00 : f32
    %379 = vector.broadcast %cst_133 : f32 to vector<2x5xf32>
    %cst_134 = arith.constant 1.000000e+00 : f32
    %c0_i32_135 = arith.constant 0 : i32
    %380 = arith.index_cast %c0_i32_135 : i32 to index
    %c0_136 = arith.constant 0 : index
    %c0_137 = arith.constant 0 : index
    %381 = vector.load %arg25[%380, %c0_136, %c0_137] : memref<8x2x32xf32, #tpu.memory_space<vmem>>, vector<1x2x32xf32>
    %382 = vector.shape_cast %381 : vector<1x2x32xf32> to vector<2x32xf32>
    %cst_138 = arith.constant dense<0.000000e+00> : vector<2x32xf32>
    %383 = tpu.matmul %379, %369, %cst_138 {dimension_numbers = #tpu.dot_dimension_numbers<[1], [0], [0], [1], [0, 0, 1, 1], [], []>} : vector<2x5xf32>, vector<5x32xf32>, vector<2x32xf32> -> vector<2x32xf32>
    %384 = arith.addf %382, %383 : vector<2x32xf32>
    %cst_139 = arith.constant 0.000000e+00 : f32
    %385 = vector.broadcast %cst_139 : f32 to vector<2x32xf32>
    %386 = arith.maximumf %384, %385 : vector<2x32xf32>
    %cst_140 = arith.constant dense<0.000000e+00> : vector<2x3xf32>
    %387 = tpu.matmul %386, %370, %cst_140 {dimension_numbers = #tpu.dot_dimension_numbers<[1], [0], [0], [1], [0, 0, 1, 1], [], []>} : vector<2x32xf32>, vector<32x3xf32>, vector<2x3xf32> -> vector<2x3xf32>
    %388 = arith.addf %387, %375 : vector<2x3xf32>
    %389 = arith.index_cast %c0_i32_135 : i32 to index
    %c0_141 = arith.constant 0 : index
    %c0_142 = arith.constant 0 : index
    %390 = vector.load %arg1[%389, %c0_141, %c0_142] : memref<8x2x3xf32, #tpu.memory_space<vmem>>, vector<1x2x3xf32>
    %391 = vector.shape_cast %390 : vector<1x2x3xf32> to vector<2x3xf32>
    %392 = arith.addf %388, %391 : vector<2x3xf32>
    %393 = vector.broadcast %cst_134 : f32 to vector<2x3xf32>
    %394 = arith.mulf %392, %393 : vector<2x3xf32>
    %cst_143 = arith.constant dense<0xFF800000> : vector<2xf32>
    %395 = vector.multi_reduction <maximumf>, %394, %cst_143 [1] : vector<2x3xf32> to vector<2xf32>
    %396 = vector.shape_cast %395 : vector<2xf32> to vector<2x1xf32>
    %397 = vector.broadcast %396 : vector<2x1xf32> to vector<2x3xf32>
    %398 = arith.subf %394, %397 : vector<2x3xf32>
    %399 = math.exp %398 : vector<2x3xf32>
    %cst_144 = arith.constant dense<0.000000e+00> : vector<2xf32>
    %400 = vector.multi_reduction <add>, %399, %cst_144 [1] : vector<2x3xf32> to vector<2xf32>
    %401 = vector.shape_cast %400 : vector<2xf32> to vector<2x1xf32>
    %402 = tpu.reciprocal %401 {approx = true} : vector<2x1xf32> -> vector<2x1xf32>
    %403 = vector.broadcast %402 : vector<2x1xf32> to vector<2x3xf32>
    %404 = arith.mulf %399, %403 : vector<2x3xf32>
    %405 = vector.extract_strided_slice %379 {offsets = [0, 3], sizes = [2, 2], strides = [1, 1]} : vector<2x5xf32> to vector<2x2xf32>
    %406 = tpu.concatenate %404, %405 in 1 : vector<2x3xf32>, vector<2x2xf32> -> vector<2x5xf32>
    %407 = arith.index_cast %c0_i32_135 : i32 to index
    %c0_145 = arith.constant 0 : index
    %c0_146 = arith.constant 0 : index
    %408 = vector.load %arg26[%407, %c0_145, %c0_146] : memref<8x2x32xf32, #tpu.memory_space<vmem>>, vector<1x2x32xf32>
    %409 = vector.shape_cast %408 : vector<1x2x32xf32> to vector<2x32xf32>
    %cst_147 = arith.constant dense<0.000000e+00> : vector<2x32xf32>
    %410 = tpu.matmul %406, %371, %cst_147 {dimension_numbers = #tpu.dot_dimension_numbers<[1], [0], [0], [1], [0, 0, 1, 1], [], []>} : vector<2x5xf32>, vector<5x32xf32>, vector<2x32xf32> -> vector<2x32xf32>
    %411 = arith.addf %409, %410 : vector<2x32xf32>
    %cst_148 = arith.constant 0.000000e+00 : f32
    %412 = vector.broadcast %cst_148 : f32 to vector<2x32xf32>
    %413 = arith.maximumf %411, %412 : vector<2x32xf32>
    %cst_149 = arith.constant dense<0.000000e+00> : vector<2x4xf32>
    %414 = tpu.matmul %413, %372, %cst_149 {dimension_numbers = #tpu.dot_dimension_numbers<[1], [0], [0], [1], [0, 0, 1, 1], [], []>} : vector<2x32xf32>, vector<32x4xf32>, vector<2x4xf32> -> vector<2x4xf32>
    %415 = arith.addf %414, %378 : vector<2x4xf32>
    %416 = vector.extract_strided_slice %415 {offsets = [0, 0], sizes = [2, 2], strides = [1, 1]} : vector<2x4xf32> to vector<2x2xf32>
    %417 = vector.extract_strided_slice %415 {offsets = [0, 2], sizes = [2, 2], strides = [1, 1]} : vector<2x4xf32> to vector<2x2xf32>
    %cst_150 = arith.constant 5.000000e-01 : f32
    %418 = vector.broadcast %cst_150 : f32 to vector<2x2xf32>
    %419 = arith.mulf %418, %417 : vector<2x2xf32>
    %420 = math.exp %419 : vector<2x2xf32>
    %421 = arith.index_cast %c0_i32_135 : i32 to index
    %c0_151 = arith.constant 0 : index
    %c0_152 = arith.constant 0 : index
    %422 = vector.load %arg2[%421, %c0_151, %c0_152] : memref<8x2x2xf32, #tpu.memory_space<vmem>>, vector<1x2x2xf32>
    %423 = vector.shape_cast %422 : vector<1x2x2xf32> to vector<2x2xf32>
    %424 = arith.mulf %420, %423 : vector<2x2xf32>
    %425 = arith.addf %416, %424 : vector<2x2xf32>
    %426 = tpu.concatenate %388, %404, %415, %425 in 1 : vector<2x3xf32>, vector<2x3xf32>, vector<2x4xf32>, vector<2x2xf32> -> vector<2x12xf32>
    %427 = arith.index_cast %c0_i32_135 : i32 to index
    %c0_153 = arith.constant 0 : index
    %c0_154 = arith.constant 0 : index
    %428 = vector.load %arg20[%427, %c0_153, %c0_154] : memref<8x2x12xf32, #tpu.memory_space<vmem>>, vector<1x2x12xf32>
    %429 = vector.shape_cast %428 : vector<1x2x12xf32> to vector<2x12xf32>
    %430 = vector.shape_cast %426 : vector<2x12xf32> to vector<1x2x12xf32>
    tpu.vector_store %arg20[%427, %c0_153, %c0_154], %430 {strides = array<i32>} : memref<8x2x12xf32, #tpu.memory_space<vmem>>, vector<1x2x12xf32>,
    %431 = tpu.concatenate %404, %425 in 1 : vector<2x3xf32>, vector<2x2xf32> -> vector<2x5xf32>
    %c1_i32_155 = arith.constant 1 : i32
    %432 = arith.index_cast %c1_i32_155 : i32 to index
    %c0_156 = arith.constant 0 : index
    %c0_157 = arith.constant 0 : index
    %433 = vector.load %arg25[%432, %c0_156, %c0_157] : memref<8x2x32xf32, #tpu.memory_space<vmem>>, vector<1x2x32xf32>
    %434 = vector.shape_cast %433 : vector<1x2x32xf32> to vector<2x32xf32>
    %cst_158 = arith.constant dense<0.000000e+00> : vector<2x32xf32>
    %435 = tpu.matmul %431, %369, %cst_158 {dimension_numbers = #tpu.dot_dimension_numbers<[1], [0], [0], [1], [0, 0, 1, 1], [], []>} : vector<2x5xf32>, vector<5x32xf32>, vector<2x32xf32> -> vector<2x32xf32>
    %436 = arith.addf %434, %435 : vector<2x32xf32>
    %cst_159 = arith.constant 0.000000e+00 : f32
    %437 = vector.broadcast %cst_159 : f32 to vector<2x32xf32>
    %438 = arith.maximumf %436, %437 : vector<2x32xf32>
    %cst_160 = arith.constant dense<0.000000e+00> : vector<2x3xf32>
    %439 = tpu.matmul %438, %370, %cst_160 {dimension_numbers = #tpu.dot_dimension_numbers<[1], [0], [0], [1], [0, 0, 1, 1], [], []>} : vector<2x32xf32>, vector<32x3xf32>, vector<2x3xf32> -> vector<2x3xf32>
    %440 = arith.addf %439, %375 : vector<2x3xf32>
    %441 = arith.index_cast %c1_i32_155 : i32 to index
    %c0_161 = arith.constant 0 : index
    %c0_162 = arith.constant 0 : index
    %442 = vector.load %arg1[%441, %c0_161, %c0_162] : memref<8x2x3xf32, #tpu.memory_space<vmem>>, vector<1x2x3xf32>
    %443 = vector.shape_cast %442 : vector<1x2x3xf32> to vector<2x3xf32>
    %444 = arith.addf %440, %443 : vector<2x3xf32>
    %445 = vector.broadcast %cst_134 : f32 to vector<2x3xf32>
    %446 = arith.mulf %444, %445 : vector<2x3xf32>
    %cst_163 = arith.constant dense<0xFF800000> : vector<2xf32>
    %447 = vector.multi_reduction <maximumf>, %446, %cst_163 [1] : vector<2x3xf32> to vector<2xf32>
    %448 = vector.shape_cast %447 : vector<2xf32> to vector<2x1xf32>
    %449 = vector.broadcast %448 : vector<2x1xf32> to vector<2x3xf32>
    %450 = arith.subf %446, %449 : vector<2x3xf32>
    %451 = math.exp %450 : vector<2x3xf32>
    %cst_164 = arith.constant dense<0.000000e+00> : vector<2xf32>
    %452 = vector.multi_reduction <add>, %451, %cst_164 [1] : vector<2x3xf32> to vector<2xf32>
    %453 = vector.shape_cast %452 : vector<2xf32> to vector<2x1xf32>
    %454 = tpu.reciprocal %453 {approx = true} : vector<2x1xf32> -> vector<2x1xf32>
    %455 = vector.broadcast %454 : vector<2x1xf32> to vector<2x3xf32>
    %456 = arith.mulf %451, %455 : vector<2x3xf32>
    %457 = vector.extract_strided_slice %431 {offsets = [0, 3], sizes = [2, 2], strides = [1, 1]} : vector<2x5xf32> to vector<2x2xf32>
    %458 = tpu.concatenate %456, %457 in 1 : vector<2x3xf32>, vector<2x2xf32> -> vector<2x5xf32>
    %459 = arith.index_cast %c1_i32_155 : i32 to index
    %c0_165 = arith.constant 0 : index
    %c0_166 = arith.constant 0 : index
    %460 = vector.load %arg26[%459, %c0_165, %c0_166] : memref<8x2x32xf32, #tpu.memory_space<vmem>>, vector<1x2x32xf32>
    %461 = vector.shape_cast %460 : vector<1x2x32xf32> to vector<2x32xf32>
    %cst_167 = arith.constant dense<0.000000e+00> : vector<2x32xf32>
    %462 = tpu.matmul %458, %371, %cst_167 {dimension_numbers = #tpu.dot_dimension_numbers<[1], [0], [0], [1], [0, 0, 1, 1], [], []>} : vector<2x5xf32>, vector<5x32xf32>, vector<2x32xf32> -> vector<2x32xf32>
    %463 = arith.addf %461, %462 : vector<2x32xf32>
    %cst_168 = arith.constant 0.000000e+00 : f32
    %464 = vector.broadcast %cst_168 : f32 to vector<2x32xf32>
    %465 = arith.maximumf %463, %464 : vector<2x32xf32>
    %cst_169 = arith.constant dense<0.000000e+00> : vector<2x4xf32>
    %466 = tpu.matmul %465, %372, %cst_169 {dimension_numbers = #tpu.dot_dimension_numbers<[1], [0], [0], [1], [0, 0, 1, 1], [], []>} : vector<2x32xf32>, vector<32x4xf32>, vector<2x4xf32> -> vector<2x4xf32>
    %467 = arith.addf %466, %378 : vector<2x4xf32>
    %468 = vector.extract_strided_slice %467 {offsets = [0, 0], sizes = [2, 2], strides = [1, 1]} : vector<2x4xf32> to vector<2x2xf32>
    %469 = vector.extract_strided_slice %467 {offsets = [0, 2], sizes = [2, 2], strides = [1, 1]} : vector<2x4xf32> to vector<2x2xf32>
    %cst_170 = arith.constant 5.000000e-01 : f32
    %470 = vector.broadcast %cst_170 : f32 to vector<2x2xf32>
    %471 = arith.mulf %470, %469 : vector<2x2xf32>
    %472 = math.exp %471 : vector<2x2xf32>
    %473 = arith.index_cast %c1_i32_155 : i32 to index
    %c0_171 = arith.constant 0 : index
    %c0_172 = arith.constant 0 : index
    %474 = vector.load %arg2[%473, %c0_171, %c0_172] : memref<8x2x2xf32, #tpu.memory_space<vmem>>, vector<1x2x2xf32>
    %475 = vector.shape_cast %474 : vector<1x2x2xf32> to vector<2x2xf32>
    %476 = arith.mulf %472, %475 : vector<2x2xf32>
    %477 = arith.addf %468, %476 : vector<2x2xf32>
    %478 = tpu.concatenate %440, %456, %467, %477 in 1 : vector<2x3xf32>, vector<2x3xf32>, vector<2x4xf32>, vector<2x2xf32> -> vector<2x12xf32>
    %479 = arith.index_cast %c1_i32_155 : i32 to index
    %c0_173 = arith.constant 0 : index
    %c0_174 = arith.constant 0 : index
    %480 = vector.load %arg20[%479, %c0_173, %c0_174] : memref<8x2x12xf32, #tpu.memory_space<vmem>>, vector<1x2x12xf32>
    %481 = vector.shape_cast %480 : vector<1x2x12xf32> to vector<2x12xf32>
    %482 = vector.shape_cast %478 : vector<2x12xf32> to vector<1x2x12xf32>
    tpu.vector_store %arg20[%479, %c0_173, %c0_174], %482 {strides = array<i32>} : memref<8x2x12xf32, #tpu.memory_space<vmem>>, vector<1x2x12xf32>,
    %483 = tpu.concatenate %456, %477 in 1 : vector<2x3xf32>, vector<2x2xf32> -> vector<2x5xf32>
    %c2_i32_175 = arith.constant 2 : i32
    %484 = arith.index_cast %c2_i32_175 : i32 to index
    %c0_176 = arith.constant 0 : index
    %c0_177 = arith.constant 0 : index
    %485 = vector.load %arg25[%484, %c0_176, %c0_177] : memref<8x2x32xf32, #tpu.memory_space<vmem>>, vector<1x2x32xf32>
    %486 = vector.shape_cast %485 : vector<1x2x32xf32> to vector<2x32xf32>
    %cst_178 = arith.constant dense<0.000000e+00> : vector<2x32xf32>
    %487 = tpu.matmul %483, %369, %cst_178 {dimension_numbers = #tpu.dot_dimension_numbers<[1], [0], [0], [1], [0, 0, 1, 1], [], []>} : vector<2x5xf32>, vector<5x32xf32>, vector<2x32xf32> -> vector<2x32xf32>
    %488 = arith.addf %486, %487 : vector<2x32xf32>
    %cst_179 = arith.constant 0.000000e+00 : f32
    %489 = vector.broadcast %cst_179 : f32 to vector<2x32xf32>
    %490 = arith.maximumf %488, %489 : vector<2x32xf32>
    %cst_180 = arith.constant dense<0.000000e+00> : vector<2x3xf32>
    %491 = tpu.matmul %490, %370, %cst_180 {dimension_numbers = #tpu.dot_dimension_numbers<[1], [0], [0], [1], [0, 0, 1, 1], [], []>} : vector<2x32xf32>, vector<32x3xf32>, vector<2x3xf32> -> vector<2x3xf32>
    %492 = arith.addf %491, %375 : vector<2x3xf32>
    %493 = arith.index_cast %c2_i32_175 : i32 to index
    %c0_181 = arith.constant 0 : index
    %c0_182 = arith.constant 0 : index
    %494 = vector.load %arg1[%493, %c0_181, %c0_182] : memref<8x2x3xf32, #tpu.memory_space<vmem>>, vector<1x2x3xf32>
    %495 = vector.shape_cast %494 : vector<1x2x3xf32> to vector<2x3xf32>
    %496 = arith.addf %492, %495 : vector<2x3xf32>
    %497 = vector.broadcast %cst_134 : f32 to vector<2x3xf32>
    %498 = arith.mulf %496, %497 : vector<2x3xf32>
    %cst_183 = arith.constant dense<0xFF800000> : vector<2xf32>
    %499 = vector.multi_reduction <maximumf>, %498, %cst_183 [1] : vector<2x3xf32> to vector<2xf32>
    %500 = vector.shape_cast %499 : vector<2xf32> to vector<2x1xf32>
    %501 = vector.broadcast %500 : vector<2x1xf32> to vector<2x3xf32>
    %502 = arith.subf %498, %501 : vector<2x3xf32>
    %503 = math.exp %502 : vector<2x3xf32>
    %cst_184 = arith.constant dense<0.000000e+00> : vector<2xf32>
    %504 = vector.multi_reduction <add>, %503, %cst_184 [1] : vector<2x3xf32> to vector<2xf32>
    %505 = vector.shape_cast %504 : vector<2xf32> to vector<2x1xf32>
    %506 = tpu.reciprocal %505 {approx = true} : vector<2x1xf32> -> vector<2x1xf32>
    %507 = vector.broadcast %506 : vector<2x1xf32> to vector<2x3xf32>
    %508 = arith.mulf %503, %507 : vector<2x3xf32>
    %509 = vector.extract_strided_slice %483 {offsets = [0, 3], sizes = [2, 2], strides = [1, 1]} : vector<2x5xf32> to vector<2x2xf32>
    %510 = tpu.concatenate %508, %509 in 1 : vector<2x3xf32>, vector<2x2xf32> -> vector<2x5xf32>
    %511 = arith.index_cast %c2_i32_175 : i32 to index
    %c0_185 = arith.constant 0 : index
    %c0_186 = arith.constant 0 : index
    %512 = vector.load %arg26[%511, %c0_185, %c0_186] : memref<8x2x32xf32, #tpu.memory_space<vmem>>, vector<1x2x32xf32>
    %513 = vector.shape_cast %512 : vector<1x2x32xf32> to vector<2x32xf32>
    %cst_187 = arith.constant dense<0.000000e+00> : vector<2x32xf32>
    %514 = tpu.matmul %510, %371, %cst_187 {dimension_numbers = #tpu.dot_dimension_numbers<[1], [0], [0], [1], [0, 0, 1, 1], [], []>} : vector<2x5xf32>, vector<5x32xf32>, vector<2x32xf32> -> vector<2x32xf32>
    %515 = arith.addf %513, %514 : vector<2x32xf32>
    %cst_188 = arith.constant 0.000000e+00 : f32
    %516 = vector.broadcast %cst_188 : f32 to vector<2x32xf32>
    %517 = arith.maximumf %515, %516 : vector<2x32xf32>
    %cst_189 = arith.constant dense<0.000000e+00> : vector<2x4xf32>
    %518 = tpu.matmul %517, %372, %cst_189 {dimension_numbers = #tpu.dot_dimension_numbers<[1], [0], [0], [1], [0, 0, 1, 1], [], []>} : vector<2x32xf32>, vector<32x4xf32>, vector<2x4xf32> -> vector<2x4xf32>
    %519 = arith.addf %518, %378 : vector<2x4xf32>
    %520 = vector.extract_strided_slice %519 {offsets = [0, 0], sizes = [2, 2], strides = [1, 1]} : vector<2x4xf32> to vector<2x2xf32>
    %521 = vector.extract_strided_slice %519 {offsets = [0, 2], sizes = [2, 2], strides = [1, 1]} : vector<2x4xf32> to vector<2x2xf32>
    %cst_190 = arith.constant 5.000000e-01 : f32
    %522 = vector.broadcast %cst_190 : f32 to vector<2x2xf32>
    %523 = arith.mulf %522, %521 : vector<2x2xf32>
    %524 = math.exp %523 : vector<2x2xf32>
    %525 = arith.index_cast %c2_i32_175 : i32 to index
    %c0_191 = arith.constant 0 : index
    %c0_192 = arith.constant 0 : index
    %526 = vector.load %arg2[%525, %c0_191, %c0_192] : memref<8x2x2xf32, #tpu.memory_space<vmem>>, vector<1x2x2xf32>
    %527 = vector.shape_cast %526 : vector<1x2x2xf32> to vector<2x2xf32>
    %528 = arith.mulf %524, %527 : vector<2x2xf32>
    %529 = arith.addf %520, %528 : vector<2x2xf32>
    %530 = tpu.concatenate %492, %508, %519, %529 in 1 : vector<2x3xf32>, vector<2x3xf32>, vector<2x4xf32>, vector<2x2xf32> -> vector<2x12xf32>
    %531 = arith.index_cast %c2_i32_175 : i32 to index
    %c0_193 = arith.constant 0 : index
    %c0_194 = arith.constant 0 : index
    %532 = vector.load %arg20[%531, %c0_193, %c0_194] : memref<8x2x12xf32, #tpu.memory_space<vmem>>, vector<1x2x12xf32>
    %533 = vector.shape_cast %532 : vector<1x2x12xf32> to vector<2x12xf32>
    %534 = vector.shape_cast %530 : vector<2x12xf32> to vector<1x2x12xf32>
    tpu.vector_store %arg20[%531, %c0_193, %c0_194], %534 {strides = array<i32>} : memref<8x2x12xf32, #tpu.memory_space<vmem>>, vector<1x2x12xf32>,
    %535 = tpu.concatenate %508, %529 in 1 : vector<2x3xf32>, vector<2x2xf32> -> vector<2x5xf32>
    %c3_i32_195 = arith.constant 3 : i32
    %536 = arith.index_cast %c3_i32_195 : i32 to index
    %c0_196 = arith.constant 0 : index
    %c0_197 = arith.constant 0 : index
    %537 = vector.load %arg25[%536, %c0_196, %c0_197] : memref<8x2x32xf32, #tpu.memory_space<vmem>>, vector<1x2x32xf32>
    %538 = vector.shape_cast %537 : vector<1x2x32xf32> to vector<2x32xf32>
    %cst_198 = arith.constant dense<0.000000e+00> : vector<2x32xf32>
    %539 = tpu.matmul %535, %369, %cst_198 {dimension_numbers = #tpu.dot_dimension_numbers<[1], [0], [0], [1], [0, 0, 1, 1], [], []>} : vector<2x5xf32>, vector<5x32xf32>, vector<2x32xf32> -> vector<2x32xf32>
    %540 = arith.addf %538, %539 : vector<2x32xf32>
    %cst_199 = arith.constant 0.000000e+00 : f32
    %541 = vector.broadcast %cst_199 : f32 to vector<2x32xf32>
    %542 = arith.maximumf %540, %541 : vector<2x32xf32>
    %cst_200 = arith.constant dense<0.000000e+00> : vector<2x3xf32>
    %543 = tpu.matmul %542, %370, %cst_200 {dimension_numbers = #tpu.dot_dimension_numbers<[1], [0], [0], [1], [0, 0, 1, 1], [], []>} : vector<2x32xf32>, vector<32x3xf32>, vector<2x3xf32> -> vector<2x3xf32>
    %544 = arith.addf %543, %375 : vector<2x3xf32>
    %545 = arith.index_cast %c3_i32_195 : i32 to index
    %c0_201 = arith.constant 0 : index
    %c0_202 = arith.constant 0 : index
    %546 = vector.load %arg1[%545, %c0_201, %c0_202] : memref<8x2x3xf32, #tpu.memory_space<vmem>>, vector<1x2x3xf32>
    %547 = vector.shape_cast %546 : vector<1x2x3xf32> to vector<2x3xf32>
    %548 = arith.addf %544, %547 : vector<2x3xf32>
    %549 = vector.broadcast %cst_134 : f32 to vector<2x3xf32>
    %550 = arith.mulf %548, %549 : vector<2x3xf32>
    %cst_203 = arith.constant dense<0xFF800000> : vector<2xf32>
    %551 = vector.multi_reduction <maximumf>, %550, %cst_203 [1] : vector<2x3xf32> to vector<2xf32>
    %552 = vector.shape_cast %551 : vector<2xf32> to vector<2x1xf32>
    %553 = vector.broadcast %552 : vector<2x1xf32> to vector<2x3xf32>
    %554 = arith.subf %550, %553 : vector<2x3xf32>
    %555 = math.exp %554 : vector<2x3xf32>
    %cst_204 = arith.constant dense<0.000000e+00> : vector<2xf32>
    %556 = vector.multi_reduction <add>, %555, %cst_204 [1] : vector<2x3xf32> to vector<2xf32>
    %557 = vector.shape_cast %556 : vector<2xf32> to vector<2x1xf32>
    %558 = tpu.reciprocal %557 {approx = true} : vector<2x1xf32> -> vector<2x1xf32>
    %559 = vector.broadcast %558 : vector<2x1xf32> to vector<2x3xf32>
    %560 = arith.mulf %555, %559 : vector<2x3xf32>
    %561 = vector.extract_strided_slice %535 {offsets = [0, 3], sizes = [2, 2], strides = [1, 1]} : vector<2x5xf32> to vector<2x2xf32>
    %562 = tpu.concatenate %560, %561 in 1 : vector<2x3xf32>, vector<2x2xf32> -> vector<2x5xf32>
    %563 = arith.index_cast %c3_i32_195 : i32 to index
    %c0_205 = arith.constant 0 : index
    %c0_206 = arith.constant 0 : index
    %564 = vector.load %arg26[%563, %c0_205, %c0_206] : memref<8x2x32xf32, #tpu.memory_space<vmem>>, vector<1x2x32xf32>
    %565 = vector.shape_cast %564 : vector<1x2x32xf32> to vector<2x32xf32>
    %cst_207 = arith.constant dense<0.000000e+00> : vector<2x32xf32>
    %566 = tpu.matmul %562, %371, %cst_207 {dimension_numbers = #tpu.dot_dimension_numbers<[1], [0], [0], [1], [0, 0, 1, 1], [], []>} : vector<2x5xf32>, vector<5x32xf32>, vector<2x32xf32> -> vector<2x32xf32>
    %567 = arith.addf %565, %566 : vector<2x32xf32>
    %cst_208 = arith.constant 0.000000e+00 : f32
    %568 = vector.broadcast %cst_208 : f32 to vector<2x32xf32>
    %569 = arith.maximumf %567, %568 : vector<2x32xf32>
    %cst_209 = arith.constant dense<0.000000e+00> : vector<2x4xf32>
    %570 = tpu.matmul %569, %372, %cst_209 {dimension_numbers = #tpu.dot_dimension_numbers<[1], [0], [0], [1], [0, 0, 1, 1], [], []>} : vector<2x32xf32>, vector<32x4xf32>, vector<2x4xf32> -> vector<2x4xf32>
    %571 = arith.addf %570, %378 : vector<2x4xf32>
    %572 = vector.extract_strided_slice %571 {offsets = [0, 0], sizes = [2, 2], strides = [1, 1]} : vector<2x4xf32> to vector<2x2xf32>
    %573 = vector.extract_strided_slice %571 {offsets = [0, 2], sizes = [2, 2], strides = [1, 1]} : vector<2x4xf32> to vector<2x2xf32>
    %cst_210 = arith.constant 5.000000e-01 : f32
    %574 = vector.broadcast %cst_210 : f32 to vector<2x2xf32>
    %575 = arith.mulf %574, %573 : vector<2x2xf32>
    %576 = math.exp %575 : vector<2x2xf32>
    %577 = arith.index_cast %c3_i32_195 : i32 to index
    %c0_211 = arith.constant 0 : index
    %c0_212 = arith.constant 0 : index
    %578 = vector.load %arg2[%577, %c0_211, %c0_212] : memref<8x2x2xf32, #tpu.memory_space<vmem>>, vector<1x2x2xf32>
    %579 = vector.shape_cast %578 : vector<1x2x2xf32> to vector<2x2xf32>
    %580 = arith.mulf %576, %579 : vector<2x2xf32>
    %581 = arith.addf %572, %580 : vector<2x2xf32>
    %582 = tpu.concatenate %544, %560, %571, %581 in 1 : vector<2x3xf32>, vector<2x3xf32>, vector<2x4xf32>, vector<2x2xf32> -> vector<2x12xf32>
    %583 = arith.index_cast %c3_i32_195 : i32 to index
    %c0_213 = arith.constant 0 : index
    %c0_214 = arith.constant 0 : index
    %584 = vector.load %arg20[%583, %c0_213, %c0_214] : memref<8x2x12xf32, #tpu.memory_space<vmem>>, vector<1x2x12xf32>
    %585 = vector.shape_cast %584 : vector<1x2x12xf32> to vector<2x12xf32>
    %586 = vector.shape_cast %582 : vector<2x12xf32> to vector<1x2x12xf32>
    tpu.vector_store %arg20[%583, %c0_213, %c0_214], %586 {strides = array<i32>} : memref<8x2x12xf32, #tpu.memory_space<vmem>>, vector<1x2x12xf32>,
    %587 = tpu.concatenate %560, %581 in 1 : vector<2x3xf32>, vector<2x2xf32> -> vector<2x5xf32>
    %c4_i32_215 = arith.constant 4 : i32
    %588 = arith.index_cast %c4_i32_215 : i32 to index
    %c0_216 = arith.constant 0 : index
    %c0_217 = arith.constant 0 : index
    %589 = vector.load %arg25[%588, %c0_216, %c0_217] : memref<8x2x32xf32, #tpu.memory_space<vmem>>, vector<1x2x32xf32>
    %590 = vector.shape_cast %589 : vector<1x2x32xf32> to vector<2x32xf32>
    %cst_218 = arith.constant dense<0.000000e+00> : vector<2x32xf32>
    %591 = tpu.matmul %587, %369, %cst_218 {dimension_numbers = #tpu.dot_dimension_numbers<[1], [0], [0], [1], [0, 0, 1, 1], [], []>} : vector<2x5xf32>, vector<5x32xf32>, vector<2x32xf32> -> vector<2x32xf32>
    %592 = arith.addf %590, %591 : vector<2x32xf32>
    %cst_219 = arith.constant 0.000000e+00 : f32
    %593 = vector.broadcast %cst_219 : f32 to vector<2x32xf32>
    %594 = arith.maximumf %592, %593 : vector<2x32xf32>
    %cst_220 = arith.constant dense<0.000000e+00> : vector<2x3xf32>
    %595 = tpu.matmul %594, %370, %cst_220 {dimension_numbers = #tpu.dot_dimension_numbers<[1], [0], [0], [1], [0, 0, 1, 1], [], []>} : vector<2x32xf32>, vector<32x3xf32>, vector<2x3xf32> -> vector<2x3xf32>
    %596 = arith.addf %595, %375 : vector<2x3xf32>
    %597 = arith.index_cast %c4_i32_215 : i32 to index
    %c0_221 = arith.constant 0 : index
    %c0_222 = arith.constant 0 : index
    %598 = vector.load %arg1[%597, %c0_221, %c0_222] : memref<8x2x3xf32, #tpu.memory_space<vmem>>, vector<1x2x3xf32>
    %599 = vector.shape_cast %598 : vector<1x2x3xf32> to vector<2x3xf32>
    %600 = arith.addf %596, %599 : vector<2x3xf32>
    %601 = vector.broadcast %cst_134 : f32 to vector<2x3xf32>
    %602 = arith.mulf %600, %601 : vector<2x3xf32>
    %cst_223 = arith.constant dense<0xFF800000> : vector<2xf32>
    %603 = vector.multi_reduction <maximumf>, %602, %cst_223 [1] : vector<2x3xf32> to vector<2xf32>
    %604 = vector.shape_cast %603 : vector<2xf32> to vector<2x1xf32>
    %605 = vector.broadcast %604 : vector<2x1xf32> to vector<2x3xf32>
    %606 = arith.subf %602, %605 : vector<2x3xf32>
    %607 = math.exp %606 : vector<2x3xf32>
    %cst_224 = arith.constant dense<0.000000e+00> : vector<2xf32>
    %608 = vector.multi_reduction <add>, %607, %cst_224 [1] : vector<2x3xf32> to vector<2xf32>
    %609 = vector.shape_cast %608 : vector<2xf32> to vector<2x1xf32>
    %610 = tpu.reciprocal %609 {approx = true} : vector<2x1xf32> -> vector<2x1xf32>
    %611 = vector.broadcast %610 : vector<2x1xf32> to vector<2x3xf32>
    %612 = arith.mulf %607, %611 : vector<2x3xf32>
    %613 = vector.extract_strided_slice %587 {offsets = [0, 3], sizes = [2, 2], strides = [1, 1]} : vector<2x5xf32> to vector<2x2xf32>
    %614 = tpu.concatenate %612, %613 in 1 : vector<2x3xf32>, vector<2x2xf32> -> vector<2x5xf32>
    %615 = arith.index_cast %c4_i32_215 : i32 to index
    %c0_225 = arith.constant 0 : index
    %c0_226 = arith.constant 0 : index
    %616 = vector.load %arg26[%615, %c0_225, %c0_226] : memref<8x2x32xf32, #tpu.memory_space<vmem>>, vector<1x2x32xf32>
    %617 = vector.shape_cast %616 : vector<1x2x32xf32> to vector<2x32xf32>
    %cst_227 = arith.constant dense<0.000000e+00> : vector<2x32xf32>
    %618 = tpu.matmul %614, %371, %cst_227 {dimension_numbers = #tpu.dot_dimension_numbers<[1], [0], [0], [1], [0, 0, 1, 1], [], []>} : vector<2x5xf32>, vector<5x32xf32>, vector<2x32xf32> -> vector<2x32xf32>
    %619 = arith.addf %617, %618 : vector<2x32xf32>
    %cst_228 = arith.constant 0.000000e+00 : f32
    %620 = vector.broadcast %cst_228 : f32 to vector<2x32xf32>
    %621 = arith.maximumf %619, %620 : vector<2x32xf32>
    %cst_229 = arith.constant dense<0.000000e+00> : vector<2x4xf32>
    %622 = tpu.matmul %621, %372, %cst_229 {dimension_numbers = #tpu.dot_dimension_numbers<[1], [0], [0], [1], [0, 0, 1, 1], [], []>} : vector<2x32xf32>, vector<32x4xf32>, vector<2x4xf32> -> vector<2x4xf32>
    %623 = arith.addf %622, %378 : vector<2x4xf32>
    %624 = vector.extract_strided_slice %623 {offsets = [0, 0], sizes = [2, 2], strides = [1, 1]} : vector<2x4xf32> to vector<2x2xf32>
    %625 = vector.extract_strided_slice %623 {offsets = [0, 2], sizes = [2, 2], strides = [1, 1]} : vector<2x4xf32> to vector<2x2xf32>
    %cst_230 = arith.constant 5.000000e-01 : f32
    %626 = vector.broadcast %cst_230 : f32 to vector<2x2xf32>
    %627 = arith.mulf %626, %625 : vector<2x2xf32>
    %628 = math.exp %627 : vector<2x2xf32>
    %629 = arith.index_cast %c4_i32_215 : i32 to index
    %c0_231 = arith.constant 0 : index
    %c0_232 = arith.constant 0 : index
    %630 = vector.load %arg2[%629, %c0_231, %c0_232] : memref<8x2x2xf32, #tpu.memory_space<vmem>>, vector<1x2x2xf32>
    %631 = vector.shape_cast %630 : vector<1x2x2xf32> to vector<2x2xf32>
    %632 = arith.mulf %628, %631 : vector<2x2xf32>
    %633 = arith.addf %624, %632 : vector<2x2xf32>
    %634 = tpu.concatenate %596, %612, %623, %633 in 1 : vector<2x3xf32>, vector<2x3xf32>, vector<2x4xf32>, vector<2x2xf32> -> vector<2x12xf32>
    %635 = arith.index_cast %c4_i32_215 : i32 to index
    %c0_233 = arith.constant 0 : index
    %c0_234 = arith.constant 0 : index
    %636 = vector.load %arg20[%635, %c0_233, %c0_234] : memref<8x2x12xf32, #tpu.memory_space<vmem>>, vector<1x2x12xf32>
    %637 = vector.shape_cast %636 : vector<1x2x12xf32> to vector<2x12xf32>
    %638 = vector.shape_cast %634 : vector<2x12xf32> to vector<1x2x12xf32>
    tpu.vector_store %arg20[%635, %c0_233, %c0_234], %638 {strides = array<i32>} : memref<8x2x12xf32, #tpu.memory_space<vmem>>, vector<1x2x12xf32>,
    %639 = tpu.concatenate %612, %633 in 1 : vector<2x3xf32>, vector<2x2xf32> -> vector<2x5xf32>
    %c5_i32_235 = arith.constant 5 : i32
    %640 = arith.index_cast %c5_i32_235 : i32 to index
    %c0_236 = arith.constant 0 : index
    %c0_237 = arith.constant 0 : index
    %641 = vector.load %arg25[%640, %c0_236, %c0_237] : memref<8x2x32xf32, #tpu.memory_space<vmem>>, vector<1x2x32xf32>
    %642 = vector.shape_cast %641 : vector<1x2x32xf32> to vector<2x32xf32>
    %cst_238 = arith.constant dense<0.000000e+00> : vector<2x32xf32>
    %643 = tpu.matmul %639, %369, %cst_238 {dimension_numbers = #tpu.dot_dimension_numbers<[1], [0], [0], [1], [0, 0, 1, 1], [], []>} : vector<2x5xf32>, vector<5x32xf32>, vector<2x32xf32> -> vector<2x32xf32>
    %644 = arith.addf %642, %643 : vector<2x32xf32>
    %cst_239 = arith.constant 0.000000e+00 : f32
    %645 = vector.broadcast %cst_239 : f32 to vector<2x32xf32>
    %646 = arith.maximumf %644, %645 : vector<2x32xf32>
    %cst_240 = arith.constant dense<0.000000e+00> : vector<2x3xf32>
    %647 = tpu.matmul %646, %370, %cst_240 {dimension_numbers = #tpu.dot_dimension_numbers<[1], [0], [0], [1], [0, 0, 1, 1], [], []>} : vector<2x32xf32>, vector<32x3xf32>, vector<2x3xf32> -> vector<2x3xf32>
    %648 = arith.addf %647, %375 : vector<2x3xf32>
    %649 = arith.index_cast %c5_i32_235 : i32 to index
    %c0_241 = arith.constant 0 : index
    %c0_242 = arith.constant 0 : index
    %650 = vector.load %arg1[%649, %c0_241, %c0_242] : memref<8x2x3xf32, #tpu.memory_space<vmem>>, vector<1x2x3xf32>
    %651 = vector.shape_cast %650 : vector<1x2x3xf32> to vector<2x3xf32>
    %652 = arith.addf %648, %651 : vector<2x3xf32>
    %653 = vector.broadcast %cst_134 : f32 to vector<2x3xf32>
    %654 = arith.mulf %652, %653 : vector<2x3xf32>
    %cst_243 = arith.constant dense<0xFF800000> : vector<2xf32>
    %655 = vector.multi_reduction <maximumf>, %654, %cst_243 [1] : vector<2x3xf32> to vector<2xf32>
    %656 = vector.shape_cast %655 : vector<2xf32> to vector<2x1xf32>
    %657 = vector.broadcast %656 : vector<2x1xf32> to vector<2x3xf32>
    %658 = arith.subf %654, %657 : vector<2x3xf32>
    %659 = math.exp %658 : vector<2x3xf32>
    %cst_244 = arith.constant dense<0.000000e+00> : vector<2xf32>
    %660 = vector.multi_reduction <add>, %659, %cst_244 [1] : vector<2x3xf32> to vector<2xf32>
    %661 = vector.shape_cast %660 : vector<2xf32> to vector<2x1xf32>
    %662 = tpu.reciprocal %661 {approx = true} : vector<2x1xf32> -> vector<2x1xf32>
    %663 = vector.broadcast %662 : vector<2x1xf32> to vector<2x3xf32>
    %664 = arith.mulf %659, %663 : vector<2x3xf32>
    %665 = vector.extract_strided_slice %639 {offsets = [0, 3], sizes = [2, 2], strides = [1, 1]} : vector<2x5xf32> to vector<2x2xf32>
    %666 = tpu.concatenate %664, %665 in 1 : vector<2x3xf32>, vector<2x2xf32> -> vector<2x5xf32>
    %667 = arith.index_cast %c5_i32_235 : i32 to index
    %c0_245 = arith.constant 0 : index
    %c0_246 = arith.constant 0 : index
    %668 = vector.load %arg26[%667, %c0_245, %c0_246] : memref<8x2x32xf32, #tpu.memory_space<vmem>>, vector<1x2x32xf32>
    %669 = vector.shape_cast %668 : vector<1x2x32xf32> to vector<2x32xf32>
    %cst_247 = arith.constant dense<0.000000e+00> : vector<2x32xf32>
    %670 = tpu.matmul %666, %371, %cst_247 {dimension_numbers = #tpu.dot_dimension_numbers<[1], [0], [0], [1], [0, 0, 1, 1], [], []>} : vector<2x5xf32>, vector<5x32xf32>, vector<2x32xf32> -> vector<2x32xf32>
    %671 = arith.addf %669, %670 : vector<2x32xf32>
    %cst_248 = arith.constant 0.000000e+00 : f32
    %672 = vector.broadcast %cst_248 : f32 to vector<2x32xf32>
    %673 = arith.maximumf %671, %672 : vector<2x32xf32>
    %cst_249 = arith.constant dense<0.000000e+00> : vector<2x4xf32>
    %674 = tpu.matmul %673, %372, %cst_249 {dimension_numbers = #tpu.dot_dimension_numbers<[1], [0], [0], [1], [0, 0, 1, 1], [], []>} : vector<2x32xf32>, vector<32x4xf32>, vector<2x4xf32> -> vector<2x4xf32>
    %675 = arith.addf %674, %378 : vector<2x4xf32>
    %676 = vector.extract_strided_slice %675 {offsets = [0, 0], sizes = [2, 2], strides = [1, 1]} : vector<2x4xf32> to vector<2x2xf32>
    %677 = vector.extract_strided_slice %675 {offsets = [0, 2], sizes = [2, 2], strides = [1, 1]} : vector<2x4xf32> to vector<2x2xf32>
    %cst_250 = arith.constant 5.000000e-01 : f32
    %678 = vector.broadcast %cst_250 : f32 to vector<2x2xf32>
    %679 = arith.mulf %678, %677 : vector<2x2xf32>
    %680 = math.exp %679 : vector<2x2xf32>
    %681 = arith.index_cast %c5_i32_235 : i32 to index
    %c0_251 = arith.constant 0 : index
    %c0_252 = arith.constant 0 : index
    %682 = vector.load %arg2[%681, %c0_251, %c0_252] : memref<8x2x2xf32, #tpu.memory_space<vmem>>, vector<1x2x2xf32>
    %683 = vector.shape_cast %682 : vector<1x2x2xf32> to vector<2x2xf32>
    %684 = arith.mulf %680, %683 : vector<2x2xf32>
    %685 = arith.addf %676, %684 : vector<2x2xf32>
    %686 = tpu.concatenate %648, %664, %675, %685 in 1 : vector<2x3xf32>, vector<2x3xf32>, vector<2x4xf32>, vector<2x2xf32> -> vector<2x12xf32>
    %687 = arith.index_cast %c5_i32_235 : i32 to index
    %c0_253 = arith.constant 0 : index
    %c0_254 = arith.constant 0 : index
    %688 = vector.load %arg20[%687, %c0_253, %c0_254] : memref<8x2x12xf32, #tpu.memory_space<vmem>>, vector<1x2x12xf32>
    %689 = vector.shape_cast %688 : vector<1x2x12xf32> to vector<2x12xf32>
    %690 = vector.shape_cast %686 : vector<2x12xf32> to vector<1x2x12xf32>
    tpu.vector_store %arg20[%687, %c0_253, %c0_254], %690 {strides = array<i32>} : memref<8x2x12xf32, #tpu.memory_space<vmem>>, vector<1x2x12xf32>,
    %691 = tpu.concatenate %664, %685 in 1 : vector<2x3xf32>, vector<2x2xf32> -> vector<2x5xf32>
    %c6_i32_255 = arith.constant 6 : i32
    %692 = arith.index_cast %c6_i32_255 : i32 to index
    %c0_256 = arith.constant 0 : index
    %c0_257 = arith.constant 0 : index
    %693 = vector.load %arg25[%692, %c0_256, %c0_257] : memref<8x2x32xf32, #tpu.memory_space<vmem>>, vector<1x2x32xf32>
    %694 = vector.shape_cast %693 : vector<1x2x32xf32> to vector<2x32xf32>
    %cst_258 = arith.constant dense<0.000000e+00> : vector<2x32xf32>
    %695 = tpu.matmul %691, %369, %cst_258 {dimension_numbers = #tpu.dot_dimension_numbers<[1], [0], [0], [1], [0, 0, 1, 1], [], []>} : vector<2x5xf32>, vector<5x32xf32>, vector<2x32xf32> -> vector<2x32xf32>
    %696 = arith.addf %694, %695 : vector<2x32xf32>
    %cst_259 = arith.constant 0.000000e+00 : f32
    %697 = vector.broadcast %cst_259 : f32 to vector<2x32xf32>
    %698 = arith.maximumf %696, %697 : vector<2x32xf32>
    %cst_260 = arith.constant dense<0.000000e+00> : vector<2x3xf32>
    %699 = tpu.matmul %698, %370, %cst_260 {dimension_numbers = #tpu.dot_dimension_numbers<[1], [0], [0], [1], [0, 0, 1, 1], [], []>} : vector<2x32xf32>, vector<32x3xf32>, vector<2x3xf32> -> vector<2x3xf32>
    %700 = arith.addf %699, %375 : vector<2x3xf32>
    %701 = arith.index_cast %c6_i32_255 : i32 to index
    %c0_261 = arith.constant 0 : index
    %c0_262 = arith.constant 0 : index
    %702 = vector.load %arg1[%701, %c0_261, %c0_262] : memref<8x2x3xf32, #tpu.memory_space<vmem>>, vector<1x2x3xf32>
    %703 = vector.shape_cast %702 : vector<1x2x3xf32> to vector<2x3xf32>
    %704 = arith.addf %700, %703 : vector<2x3xf32>
    %705 = vector.broadcast %cst_134 : f32 to vector<2x3xf32>
    %706 = arith.mulf %704, %705 : vector<2x3xf32>
    %cst_263 = arith.constant dense<0xFF800000> : vector<2xf32>
    %707 = vector.multi_reduction <maximumf>, %706, %cst_263 [1] : vector<2x3xf32> to vector<2xf32>
    %708 = vector.shape_cast %707 : vector<2xf32> to vector<2x1xf32>
    %709 = vector.broadcast %708 : vector<2x1xf32> to vector<2x3xf32>
    %710 = arith.subf %706, %709 : vector<2x3xf32>
    %711 = math.exp %710 : vector<2x3xf32>
    %cst_264 = arith.constant dense<0.000000e+00> : vector<2xf32>
    %712 = vector.multi_reduction <add>, %711, %cst_264 [1] : vector<2x3xf32> to vector<2xf32>
    %713 = vector.shape_cast %712 : vector<2xf32> to vector<2x1xf32>
    %714 = tpu.reciprocal %713 {approx = true} : vector<2x1xf32> -> vector<2x1xf32>
    %715 = vector.broadcast %714 : vector<2x1xf32> to vector<2x3xf32>
    %716 = arith.mulf %711, %715 : vector<2x3xf32>
    %717 = vector.extract_strided_slice %691 {offsets = [0, 3], sizes = [2, 2], strides = [1, 1]} : vector<2x5xf32> to vector<2x2xf32>
    %718 = tpu.concatenate %716, %717 in 1 : vector<2x3xf32>, vector<2x2xf32> -> vector<2x5xf32>
    %719 = arith.index_cast %c6_i32_255 : i32 to index
    %c0_265 = arith.constant 0 : index
    %c0_266 = arith.constant 0 : index
    %720 = vector.load %arg26[%719, %c0_265, %c0_266] : memref<8x2x32xf32, #tpu.memory_space<vmem>>, vector<1x2x32xf32>
    %721 = vector.shape_cast %720 : vector<1x2x32xf32> to vector<2x32xf32>
    %cst_267 = arith.constant dense<0.000000e+00> : vector<2x32xf32>
    %722 = tpu.matmul %718, %371, %cst_267 {dimension_numbers = #tpu.dot_dimension_numbers<[1], [0], [0], [1], [0, 0, 1, 1], [], []>} : vector<2x5xf32>, vector<5x32xf32>, vector<2x32xf32> -> vector<2x32xf32>
    %723 = arith.addf %721, %722 : vector<2x32xf32>
    %cst_268 = arith.constant 0.000000e+00 : f32
    %724 = vector.broadcast %cst_268 : f32 to vector<2x32xf32>
    %725 = arith.maximumf %723, %724 : vector<2x32xf32>
    %cst_269 = arith.constant dense<0.000000e+00> : vector<2x4xf32>
    %726 = tpu.matmul %725, %372, %cst_269 {dimension_numbers = #tpu.dot_dimension_numbers<[1], [0], [0], [1], [0, 0, 1, 1], [], []>} : vector<2x32xf32>, vector<32x4xf32>, vector<2x4xf32> -> vector<2x4xf32>
    %727 = arith.addf %726, %378 : vector<2x4xf32>
    %728 = vector.extract_strided_slice %727 {offsets = [0, 0], sizes = [2, 2], strides = [1, 1]} : vector<2x4xf32> to vector<2x2xf32>
    %729 = vector.extract_strided_slice %727 {offsets = [0, 2], sizes = [2, 2], strides = [1, 1]} : vector<2x4xf32> to vector<2x2xf32>
    %cst_270 = arith.constant 5.000000e-01 : f32
    %730 = vector.broadcast %cst_270 : f32 to vector<2x2xf32>
    %731 = arith.mulf %730, %729 : vector<2x2xf32>
    %732 = math.exp %731 : vector<2x2xf32>
    %733 = arith.index_cast %c6_i32_255 : i32 to index
    %c0_271 = arith.constant 0 : index
    %c0_272 = arith.constant 0 : index
    %734 = vector.load %arg2[%733, %c0_271, %c0_272] : memref<8x2x2xf32, #tpu.memory_space<vmem>>, vector<1x2x2xf32>
    %735 = vector.shape_cast %734 : vector<1x2x2xf32> to vector<2x2xf32>
    %736 = arith.mulf %732, %735 : vector<2x2xf32>
    %737 = arith.addf %728, %736 : vector<2x2xf32>
    %738 = tpu.concatenate %700, %716, %727, %737 in 1 : vector<2x3xf32>, vector<2x3xf32>, vector<2x4xf32>, vector<2x2xf32> -> vector<2x12xf32>
    %739 = arith.index_cast %c6_i32_255 : i32 to index
    %c0_273 = arith.constant 0 : index
    %c0_274 = arith.constant 0 : index
    %740 = vector.load %arg20[%739, %c0_273, %c0_274] : memref<8x2x12xf32, #tpu.memory_space<vmem>>, vector<1x2x12xf32>
    %741 = vector.shape_cast %740 : vector<1x2x12xf32> to vector<2x12xf32>
    %742 = vector.shape_cast %738 : vector<2x12xf32> to vector<1x2x12xf32>
    tpu.vector_store %arg20[%739, %c0_273, %c0_274], %742 {strides = array<i32>} : memref<8x2x12xf32, #tpu.memory_space<vmem>>, vector<1x2x12xf32>,
    %743 = tpu.concatenate %716, %737 in 1 : vector<2x3xf32>, vector<2x2xf32> -> vector<2x5xf32>
    %c7_i32_275 = arith.constant 7 : i32
    %744 = arith.index_cast %c7_i32_275 : i32 to index
    %c0_276 = arith.constant 0 : index
    %c0_277 = arith.constant 0 : index
    %745 = vector.load %arg25[%744, %c0_276, %c0_277] : memref<8x2x32xf32, #tpu.memory_space<vmem>>, vector<1x2x32xf32>
    %746 = vector.shape_cast %745 : vector<1x2x32xf32> to vector<2x32xf32>
    %cst_278 = arith.constant dense<0.000000e+00> : vector<2x32xf32>
    %747 = tpu.matmul %743, %369, %cst_278 {dimension_numbers = #tpu.dot_dimension_numbers<[1], [0], [0], [1], [0, 0, 1, 1], [], []>} : vector<2x5xf32>, vector<5x32xf32>, vector<2x32xf32> -> vector<2x32xf32>
    %748 = arith.addf %746, %747 : vector<2x32xf32>
    %cst_279 = arith.constant 0.000000e+00 : f32
    %749 = vector.broadcast %cst_279 : f32 to vector<2x32xf32>
    %750 = arith.maximumf %748, %749 : vector<2x32xf32>
    %cst_280 = arith.constant dense<0.000000e+00> : vector<2x3xf32>
    %751 = tpu.matmul %750, %370, %cst_280 {dimension_numbers = #tpu.dot_dimension_numbers<[1], [0], [0], [1], [0, 0, 1, 1], [], []>} : vector<2x32xf32>, vector<32x3xf32>, vector<2x3xf32> -> vector<2x3xf32>
    %752 = arith.addf %751, %375 : vector<2x3xf32>
    %753 = arith.index_cast %c7_i32_275 : i32 to index
    %c0_281 = arith.constant 0 : index
    %c0_282 = arith.constant 0 : index
    %754 = vector.load %arg1[%753, %c0_281, %c0_282] : memref<8x2x3xf32, #tpu.memory_space<vmem>>, vector<1x2x3xf32>
    %755 = vector.shape_cast %754 : vector<1x2x3xf32> to vector<2x3xf32>
    %756 = arith.addf %752, %755 : vector<2x3xf32>
    %757 = vector.broadcast %cst_134 : f32 to vector<2x3xf32>
    %758 = arith.mulf %756, %757 : vector<2x3xf32>
    %cst_283 = arith.constant dense<0xFF800000> : vector<2xf32>
    %759 = vector.multi_reduction <maximumf>, %758, %cst_283 [1] : vector<2x3xf32> to vector<2xf32>
    %760 = vector.shape_cast %759 : vector<2xf32> to vector<2x1xf32>
    %761 = vector.broadcast %760 : vector<2x1xf32> to vector<2x3xf32>
    %762 = arith.subf %758, %761 : vector<2x3xf32>
    %763 = math.exp %762 : vector<2x3xf32>
    %cst_284 = arith.constant dense<0.000000e+00> : vector<2xf32>
    %764 = vector.multi_reduction <add>, %763, %cst_284 [1] : vector<2x3xf32> to vector<2xf32>
    %765 = vector.shape_cast %764 : vector<2xf32> to vector<2x1xf32>
    %766 = tpu.reciprocal %765 {approx = true} : vector<2x1xf32> -> vector<2x1xf32>
    %767 = vector.broadcast %766 : vector<2x1xf32> to vector<2x3xf32>
    %768 = arith.mulf %763, %767 : vector<2x3xf32>
    %769 = vector.extract_strided_slice %743 {offsets = [0, 3], sizes = [2, 2], strides = [1, 1]} : vector<2x5xf32> to vector<2x2xf32>
    %770 = tpu.concatenate %768, %769 in 1 : vector<2x3xf32>, vector<2x2xf32> -> vector<2x5xf32>
    %771 = arith.index_cast %c7_i32_275 : i32 to index
    %c0_285 = arith.constant 0 : index
    %c0_286 = arith.constant 0 : index
    %772 = vector.load %arg26[%771, %c0_285, %c0_286] : memref<8x2x32xf32, #tpu.memory_space<vmem>>, vector<1x2x32xf32>
    %773 = vector.shape_cast %772 : vector<1x2x32xf32> to vector<2x32xf32>
    %cst_287 = arith.constant dense<0.000000e+00> : vector<2x32xf32>
    %774 = tpu.matmul %770, %371, %cst_287 {dimension_numbers = #tpu.dot_dimension_numbers<[1], [0], [0], [1], [0, 0, 1, 1], [], []>} : vector<2x5xf32>, vector<5x32xf32>, vector<2x32xf32> -> vector<2x32xf32>
    %775 = arith.addf %773, %774 : vector<2x32xf32>
    %cst_288 = arith.constant 0.000000e+00 : f32
    %776 = vector.broadcast %cst_288 : f32 to vector<2x32xf32>
    %777 = arith.maximumf %775, %776 : vector<2x32xf32>
    %cst_289 = arith.constant dense<0.000000e+00> : vector<2x4xf32>
    %778 = tpu.matmul %777, %372, %cst_289 {dimension_numbers = #tpu.dot_dimension_numbers<[1], [0], [0], [1], [0, 0, 1, 1], [], []>} : vector<2x32xf32>, vector<32x4xf32>, vector<2x4xf32> -> vector<2x4xf32>
    %779 = arith.addf %778, %378 : vector<2x4xf32>
    %780 = vector.extract_strided_slice %779 {offsets = [0, 0], sizes = [2, 2], strides = [1, 1]} : vector<2x4xf32> to vector<2x2xf32>
    %781 = vector.extract_strided_slice %779 {offsets = [0, 2], sizes = [2, 2], strides = [1, 1]} : vector<2x4xf32> to vector<2x2xf32>
    %cst_290 = arith.constant 5.000000e-01 : f32
    %782 = vector.broadcast %cst_290 : f32 to vector<2x2xf32>
    %783 = arith.mulf %782, %781 : vector<2x2xf32>
    %784 = math.exp %783 : vector<2x2xf32>
    %785 = arith.index_cast %c7_i32_275 : i32 to index
    %c0_291 = arith.constant 0 : index
    %c0_292 = arith.constant 0 : index
    %786 = vector.load %arg2[%785, %c0_291, %c0_292] : memref<8x2x2xf32, #tpu.memory_space<vmem>>, vector<1x2x2xf32>
    %787 = vector.shape_cast %786 : vector<1x2x2xf32> to vector<2x2xf32>
    %788 = arith.mulf %784, %787 : vector<2x2xf32>
    %789 = arith.addf %780, %788 : vector<2x2xf32>
    %790 = tpu.concatenate %752, %768, %779, %789 in 1 : vector<2x3xf32>, vector<2x3xf32>, vector<2x4xf32>, vector<2x2xf32> -> vector<2x12xf32>
    %791 = arith.index_cast %c7_i32_275 : i32 to index
    %c0_293 = arith.constant 0 : index
    %c0_294 = arith.constant 0 : index
    %792 = vector.load %arg20[%791, %c0_293, %c0_294] : memref<8x2x12xf32, #tpu.memory_space<vmem>>, vector<1x2x12xf32>
    %793 = vector.shape_cast %792 : vector<1x2x12xf32> to vector<2x12xf32>
    %794 = vector.shape_cast %790 : vector<2x12xf32> to vector<1x2x12xf32>
    tpu.vector_store %arg20[%791, %c0_293, %c0_294], %794 {strides = array<i32>} : memref<8x2x12xf32, #tpu.memory_space<vmem>>, vector<1x2x12xf32>,
    %795 = tpu.concatenate %768, %789 in 1 : vector<2x3xf32>, vector<2x2xf32> -> vector<2x5xf32>
    %c8_i32_295 = arith.constant 8 : i32
    %c0_296 = arith.constant 0 : index
    %c0_297 = arith.constant 0 : index
    %c0_298 = arith.constant 0 : index
    %796 = vector.load %arg20[%c0_296, %c0_297, %c0_298] : memref<8x2x12xf32, #tpu.memory_space<vmem>>, vector<8x2x12xf32>
    %797 = vector.extract_strided_slice %796 {offsets = [0, 0, 0], sizes = [8, 2, 3], strides = [1, 1, 1]} : vector<8x2x12xf32> to vector<8x2x3xf32>
    %798 = vector.extract_strided_slice %796 {offsets = [0, 0, 3], sizes = [8, 2, 3], strides = [1, 1, 1]} : vector<8x2x12xf32> to vector<8x2x3xf32>
    %799 = vector.extract_strided_slice %796 {offsets = [0, 0, 6], sizes = [8, 2, 2], strides = [1, 1, 1]} : vector<8x2x12xf32> to vector<8x2x2xf32>
    %800 = vector.extract_strided_slice %796 {offsets = [0, 0, 8], sizes = [8, 2, 2], strides = [1, 1, 1]} : vector<8x2x12xf32> to vector<8x2x2xf32>
    %801 = vector.extract_strided_slice %796 {offsets = [0, 0, 10], sizes = [8, 2, 2], strides = [1, 1, 1]} : vector<8x2x12xf32> to vector<8x2x2xf32>
    %c0_299 = arith.constant 0 : index
    %c0_300 = arith.constant 0 : index
    %802 = vector.load %arg14[%c0_299, %c0_300] : memref<2x4xf32, #tpu.memory_space<vmem>>, vector<2x4xf32>
    %c0_301 = arith.constant 0 : index
    %c0_302 = arith.constant 0 : index
    %803 = vector.load %arg15[%c0_301, %c0_302] : memref<1x4xf32, #tpu.memory_space<vmem>>, vector<1x4xf32>
    %c0_303 = arith.constant 0 : index
    %c0_304 = arith.constant 0 : index
    %804 = vector.load %arg16[%c0_303, %c0_304] : memref<2x6xf32, #tpu.memory_space<vmem>>, vector<2x6xf32>
    %c0_305 = arith.constant 0 : index
    %c0_306 = arith.constant 0 : index
    %805 = vector.load %arg17[%c0_305, %c0_306] : memref<3x2xf32, #tpu.memory_space<vmem>>, vector<3x2xf32>
    %c0_307 = arith.constant 0 : index
    %c0_308 = arith.constant 0 : index
    %806 = vector.load %arg18[%c0_307, %c0_308] : memref<2x9xf32, #tpu.memory_space<vmem>>, vector<2x9xf32>
    %c0_309 = arith.constant 0 : index
    %c0_310 = arith.constant 0 : index
    %807 = vector.load %arg19[%c0_309, %c0_310] : memref<3x3xf32, #tpu.memory_space<vmem>>, vector<3x3xf32>
    "tpu.trace_start"() <{level = 10 : i32, message = "tbc,co->tbo"}> : () -> ()
    %cst_311 = arith.constant dense<0.000000e+00> : vector<8x2x4xf32>
    %808 = tpu.matmul %801, %802, %cst_311 {dimension_numbers = #tpu.dot_dimension_numbers<[2], [0], [0, 1], [1], [0, 0, 0, 1, 1, 1], [], []>} : vector<8x2x2xf32>, vector<2x4xf32>, vector<8x2x4xf32> -> vector<8x2x4xf32>
    "tpu.trace_stop"() : () -> ()
    %809 = vector.shape_cast %803 : vector<1x4xf32> to vector<1x1x4xf32>
    %810 = vector.broadcast %809 : vector<1x1x4xf32> to vector<8x2x4xf32>
    %811 = arith.addf %808, %810 : vector<8x2x4xf32>
    %c0_312 = arith.constant 0 : index
    %c0_313 = arith.constant 0 : index
    %c0_314 = arith.constant 0 : index
    %812 = vector.load %arg21[%c0_312, %c0_313, %c0_314] : memref<8x2x4xf32, #tpu.memory_space<vmem>>, vector<8x2x4xf32>
    tpu.vector_store %arg21[%c0_312, %c0_313, %c0_314], %811 {strides = array<i32>} : memref<8x2x4xf32, #tpu.memory_space<vmem>>, vector<8x2x4xf32>,
    %813 = vector.extract_strided_slice %801 {offsets = [0, 0, 0], sizes = [7, 2, 2], strides = [1, 1, 1]} : vector<8x2x2xf32> to vector<7x2x2xf32>
    %814 = vector.extract_strided_slice %798 {offsets = [1, 0, 0], sizes = [7, 2, 3], strides = [1, 1, 1]} : vector<8x2x3xf32> to vector<7x2x3xf32>
    %815 = vector.extract_strided_slice %798 {offsets = [0, 0, 0], sizes = [7, 2, 3], strides = [1, 1, 1]} : vector<8x2x3xf32> to vector<7x2x3xf32>
    "tpu.trace_start"() <{level = 10 : i32, message = "tbc,cm->tbm"}> : () -> ()
    %cst_315 = arith.constant dense<0.000000e+00> : vector<7x2x6xf32>
    %816 = tpu.matmul %813, %804, %cst_315 {dimension_numbers = #tpu.dot_dimension_numbers<[2], [0], [0, 1], [1], [0, 0, 0, 1, 1, 1], [], []>} : vector<7x2x2xf32>, vector<2x6xf32>, vector<7x2x6xf32> -> vector<7x2x6xf32>
    %cst_316 = arith.constant dense<0.000000e+00> : vector<7x2x9xf32>
    %817 = tpu.matmul %813, %806, %cst_316 {dimension_numbers = #tpu.dot_dimension_numbers<[2], [0], [0, 1], [1], [0, 0, 0, 1, 1, 1], [], []>} : vector<7x2x2xf32>, vector<2x9xf32>, vector<7x2x9xf32> -> vector<7x2x9xf32>
    "tpu.trace_stop"() : () -> ()
    "tpu.trace_start"() <{level = 10 : i32, message = "tbd,dc->tbc"}> : () -> ()
    %cst_317 = arith.constant dense<0.000000e+00> : vector<7x2x2xf32>
    %818 = tpu.matmul %814, %805, %cst_317 {dimension_numbers = #tpu.dot_dimension_numbers<[2], [0], [0, 1], [1], [0, 0, 0, 1, 1, 1], [], []>} : vector<7x2x3xf32>, vector<3x2xf32>, vector<7x2x2xf32> -> vector<7x2x2xf32>
    "tpu.trace_stop"() : () -> ()
    "tpu.trace_start"() <{level = 10 : i32, message = "tbd,dk->tbk"}> : () -> ()
    %cst_318 = arith.constant dense<0.000000e+00> : vector<7x2x3xf32>
    %819 = tpu.matmul %815, %807, %cst_318 {dimension_numbers = #tpu.dot_dimension_numbers<[2], [0], [0, 1], [1], [0, 0, 0, 1, 1, 1], [], []>} : vector<7x2x3xf32>, vector<3x3xf32>, vector<7x2x3xf32> -> vector<7x2x3xf32>
    "tpu.trace_stop"() : () -> ()
    %820 = vector.extract_strided_slice %816 {offsets = [0, 0, 0], sizes = [7, 2, 2], strides = [1, 1, 1]} : vector<7x2x6xf32> to vector<7x2x2xf32>
    %821 = vector.extract_strided_slice %814 {offsets = [0, 0, 0], sizes = [7, 2, 1], strides = [1, 1, 1]} : vector<7x2x3xf32> to vector<7x2x1xf32>
    %822 = vector.broadcast %821 : vector<7x2x1xf32> to vector<7x2x2xf32>
    %823 = arith.mulf %820, %822 : vector<7x2x2xf32>
    %824 = arith.addf %818, %823 : vector<7x2x2xf32>
    %825 = vector.extract_strided_slice %817 {offsets = [0, 0, 0], sizes = [7, 2, 3], strides = [1, 1, 1]} : vector<7x2x9xf32> to vector<7x2x3xf32>
    %826 = vector.extract_strided_slice %815 {offsets = [0, 0, 0], sizes = [7, 2, 1], strides = [1, 1, 1]} : vector<7x2x3xf32> to vector<7x2x1xf32>
    %827 = vector.broadcast %826 : vector<7x2x1xf32> to vector<7x2x3xf32>
    %828 = arith.mulf %825, %827 : vector<7x2x3xf32>
    %829 = arith.addf %819, %828 : vector<7x2x3xf32>
    %830 = vector.extract_strided_slice %816 {offsets = [0, 0, 2], sizes = [7, 2, 2], strides = [1, 1, 1]} : vector<7x2x6xf32> to vector<7x2x2xf32>
    %831 = vector.extract_strided_slice %814 {offsets = [0, 0, 1], sizes = [7, 2, 1], strides = [1, 1, 1]} : vector<7x2x3xf32> to vector<7x2x1xf32>
    %832 = vector.broadcast %831 : vector<7x2x1xf32> to vector<7x2x2xf32>
    %833 = arith.mulf %830, %832 : vector<7x2x2xf32>
    %834 = arith.addf %824, %833 : vector<7x2x2xf32>
    %835 = vector.extract_strided_slice %817 {offsets = [0, 0, 3], sizes = [7, 2, 3], strides = [1, 1, 1]} : vector<7x2x9xf32> to vector<7x2x3xf32>
    %836 = vector.extract_strided_slice %815 {offsets = [0, 0, 1], sizes = [7, 2, 1], strides = [1, 1, 1]} : vector<7x2x3xf32> to vector<7x2x1xf32>
    %837 = vector.broadcast %836 : vector<7x2x1xf32> to vector<7x2x3xf32>
    %838 = arith.mulf %835, %837 : vector<7x2x3xf32>
    %839 = arith.addf %829, %838 : vector<7x2x3xf32>
    %840 = vector.extract_strided_slice %816 {offsets = [0, 0, 4], sizes = [7, 2, 2], strides = [1, 1, 1]} : vector<7x2x6xf32> to vector<7x2x2xf32>
    %841 = vector.extract_strided_slice %814 {offsets = [0, 0, 2], sizes = [7, 2, 1], strides = [1, 1, 1]} : vector<7x2x3xf32> to vector<7x2x1xf32>
    %842 = vector.broadcast %841 : vector<7x2x1xf32> to vector<7x2x2xf32>
    %843 = arith.mulf %840, %842 : vector<7x2x2xf32>
    %844 = arith.addf %834, %843 : vector<7x2x2xf32>
    %845 = vector.extract_strided_slice %817 {offsets = [0, 0, 6], sizes = [7, 2, 3], strides = [1, 1, 1]} : vector<7x2x9xf32> to vector<7x2x3xf32>
    %846 = vector.extract_strided_slice %815 {offsets = [0, 0, 2], sizes = [7, 2, 1], strides = [1, 1, 1]} : vector<7x2x3xf32> to vector<7x2x1xf32>
    %847 = vector.broadcast %846 : vector<7x2x1xf32> to vector<7x2x3xf32>
    %848 = arith.mulf %845, %847 : vector<7x2x3xf32>
    %849 = arith.addf %839, %848 : vector<7x2x3xf32>
    %cst_319 = arith.constant dense<0xFF800000> : vector<7x2xf32>
    %850 = vector.multi_reduction <maximumf>, %849, %cst_319 [2] : vector<7x2x3xf32> to vector<7x2xf32>
    %851 = vector.shape_cast %850 : vector<7x2xf32> to vector<7x2x1xf32>
    %852 = vector.broadcast %851 : vector<7x2x1xf32> to vector<7x2x3xf32>
    %853 = arith.subf %849, %852 : vector<7x2x3xf32>
    %854 = math.exp %853 : vector<7x2x3xf32>
    %cst_320 = arith.constant dense<0.000000e+00> : vector<7x2xf32>
    %855 = vector.multi_reduction <add>, %854, %cst_320 [2] : vector<7x2x3xf32> to vector<7x2xf32>
    %856 = vector.shape_cast %855 : vector<7x2xf32> to vector<7x2x1xf32>
    %857 = tpu.reciprocal %856 {approx = true} : vector<7x2x1xf32> -> vector<7x2x1xf32>
    %858 = vector.broadcast %857 : vector<7x2x1xf32> to vector<7x2x3xf32>
    %859 = arith.mulf %854, %858 : vector<7x2x3xf32>
    %cst_321 = arith.constant dense<0xFF800000> : vector<8x2xf32>
    %860 = vector.multi_reduction <maximumf>, %797, %cst_321 [2] : vector<8x2x3xf32> to vector<8x2xf32>
    %861 = vector.shape_cast %860 : vector<8x2xf32> to vector<8x2x1xf32>
    %862 = vector.broadcast %861 : vector<8x2x1xf32> to vector<8x2x3xf32>
    %863 = arith.subf %797, %862 : vector<8x2x3xf32>
    %864 = math.exp %863 : vector<8x2x3xf32>
    %cst_322 = arith.constant dense<0.000000e+00> : vector<8x2xf32>
    %865 = vector.multi_reduction <add>, %864, %cst_322 [2] : vector<8x2x3xf32> to vector<8x2xf32>
    %866 = vector.shape_cast %865 : vector<8x2xf32> to vector<8x2x1xf32>
    %867 = tpu.reciprocal %866 {approx = true} : vector<8x2x1xf32> -> vector<8x2x1xf32>
    %868 = vector.broadcast %867 : vector<8x2x1xf32> to vector<8x2x3xf32>
    %869 = arith.mulf %864, %868 : vector<8x2x3xf32>
    %c0_323 = arith.constant 0 : index
    %c0_324 = arith.constant 0 : index
    %c0_325 = arith.constant 0 : index
    %870 = vector.load %arg0[%c0_323, %c0_324, %c0_325] : memref<8x2x4xf32, #tpu.memory_space<vmem>>, vector<8x2x4xf32>
    %871 = arith.subf %811, %870 : vector<8x2x4xf32>
    %872 = arith.mulf %871, %871 : vector<8x2x4xf32>
    %cst_326 = arith.constant 2.000000e-04 : f32
    %873 = vector.broadcast %cst_326 : f32 to vector<8x2x4xf32>
    %874 = arith.divf %872, %873 : vector<8x2x4xf32>
    %875 = vector.shape_cast %874 : vector<8x2x4xf32> to vector<1x8x2x4xf32>
    %cst_327 = arith.constant dense<0.000000e+00> : vector<1xf32>
    %876 = vector.multi_reduction <add>, %875, %cst_327 [1, 2, 3] : vector<1x8x2x4xf32> to vector<1xf32>
    %877 = vector.shape_cast %876 : vector<1xf32> to vector<1x1x1x1xf32>
    %878 = vector.extract %877[0, 0, 0, 0] : f32 from vector<1x1x1x1xf32>
    %cst_328 = arith.constant 1.600000e+01 : f32
    %879 = arith.divf %878, %cst_328 : f32
    %880 = vector.extract_strided_slice %869 {offsets = [1, 0, 0], sizes = [7, 2, 3], strides = [1, 1, 1]} : vector<8x2x3xf32> to vector<7x2x3xf32>
    %cst_329 = arith.constant 1.000000e-16 : f32
    %881 = vector.broadcast %cst_329 : f32 to vector<7x2x3xf32>
    %882 = arith.addf %880, %881 : vector<7x2x3xf32>
    %883 = math.log %882 : vector<7x2x3xf32>
    %cst_330 = arith.constant 1.000000e-16 : f32
    %884 = vector.broadcast %cst_330 : f32 to vector<7x2x3xf32>
    %885 = arith.addf %859, %884 : vector<7x2x3xf32>
    %886 = math.log %885 : vector<7x2x3xf32>
    %887 = arith.subf %883, %886 : vector<7x2x3xf32>
    %888 = arith.mulf %880, %887 : vector<7x2x3xf32>
    %889 = vector.shape_cast %888 : vector<7x2x3xf32> to vector<1x7x2x3xf32>
    %cst_331 = arith.constant dense<0.000000e+00> : vector<1xf32>
    %890 = vector.multi_reduction <add>, %889, %cst_331 [1, 2, 3] : vector<1x7x2x3xf32> to vector<1xf32>
    %891 = vector.shape_cast %890 : vector<1xf32> to vector<1x1x1x1xf32>
    %892 = vector.extract %891[0, 0, 0, 0] : f32 from vector<1x1x1x1xf32>
    %cst_332 = arith.constant 2.000000e+00 : f32
    %893 = arith.divf %892, %cst_332 : f32
    %cst_333 = arith.constant 9.99999974E-5 : f32
    %894 = math.log %cst_333 : f32
    %895 = vector.extract_strided_slice %799 {offsets = [1, 0, 0], sizes = [7, 2, 2], strides = [1, 1, 1]} : vector<8x2x2xf32> to vector<7x2x2xf32>
    %896 = vector.extract_strided_slice %800 {offsets = [1, 0, 0], sizes = [7, 2, 2], strides = [1, 1, 1]} : vector<8x2x2xf32> to vector<7x2x2xf32>
    %cst_334 = arith.constant 1.000000e+00 : f32
    %897 = vector.broadcast %cst_334 : f32 to vector<7x2x2xf32>
    %898 = arith.addf %897, %896 : vector<7x2x2xf32>
    %899 = vector.broadcast %894 : f32 to vector<7x2x2xf32>
    %900 = arith.subf %898, %899 : vector<7x2x2xf32>
    %901 = arith.subf %895, %844 : vector<7x2x2xf32>
    %902 = arith.mulf %901, %901 : vector<7x2x2xf32>
    %903 = math.exp %896 : vector<7x2x2xf32>
    %904 = arith.addf %902, %903 : vector<7x2x2xf32>
    %cst_335 = arith.constant 0.000000e+00 : f32
    %905 = arith.subf %cst_335, %894 : f32
    %906 = math.exp %905 : f32
    %907 = vector.broadcast %906 : f32 to vector<7x2x2xf32>
    %908 = arith.mulf %904, %907 : vector<7x2x2xf32>
    %909 = arith.subf %900, %908 : vector<7x2x2xf32>
    %910 = vector.shape_cast %909 : vector<7x2x2xf32> to vector<1x7x2x2xf32>
    %cst_336 = arith.constant dense<0.000000e+00> : vector<1xf32>
    %911 = vector.multi_reduction <add>, %910, %cst_336 [1, 2, 3] : vector<1x7x2x2xf32> to vector<1xf32>
    %912 = vector.shape_cast %911 : vector<1xf32> to vector<1x1x1x1xf32>
    %913 = vector.extract %912[0, 0, 0, 0] : f32 from vector<1x1x1x1xf32>
    %cst_337 = arith.constant -5.000000e-01 : f32
    %914 = arith.mulf %cst_337, %913 : f32
    %cst_338 = arith.constant 2.000000e+00 : f32
    %915 = arith.divf %914, %cst_338 : f32
    %916 = arith.addf %893, %915 : f32
    %917 = arith.addf %879, %916 : f32
    %cst_339 = arith.constant 1.000000e+00 : f32
    %918 = arith.mulf %cst_339, %916 : f32
    %919 = arith.addf %879, %918 : f32
    %920 = tpu.iota {dimensions = array<i32: 1>} : vector<1x4xi32>
    %c0_i32_340 = arith.constant 0 : i32
    %921 = vector.broadcast %c0_i32_340 : i32 to vector<1x4xi32>
    %922 = arith.cmpi eq, %920, %921 : vector<1x4xi32>
    %cst_341 = arith.constant 0.000000e+00 : f32
    %923 = vector.broadcast %879 : f32 to vector<1x4xf32>
    %924 = vector.broadcast %cst_341 : f32 to vector<1x4xf32>
    %925 = arith.select %922, %923, %924 : vector<1x4xi1>, vector<1x4xf32>
    %c1_i32_342 = arith.constant 1 : i32
    %926 = vector.broadcast %c1_i32_342 : i32 to vector<1x4xi32>
    %927 = arith.cmpi eq, %920, %926 : vector<1x4xi32>
    %cst_343 = arith.constant 0.000000e+00 : f32
    %928 = vector.broadcast %916 : f32 to vector<1x4xf32>
    %929 = vector.broadcast %cst_343 : f32 to vector<1x4xf32>
    %930 = arith.select %927, %928, %929 : vector<1x4xi1>, vector<1x4xf32>
    %931 = arith.addf %925, %930 : vector<1x4xf32>
    %c2_i32_344 = arith.constant 2 : i32
    %932 = vector.broadcast %c2_i32_344 : i32 to vector<1x4xi32>
    %933 = arith.cmpi eq, %920, %932 : vector<1x4xi32>
    %cst_345 = arith.constant 0.000000e+00 : f32
    %934 = vector.broadcast %917 : f32 to vector<1x4xf32>
    %935 = vector.broadcast %cst_345 : f32 to vector<1x4xf32>
    %936 = arith.select %933, %934, %935 : vector<1x4xi1>, vector<1x4xf32>
    %937 = arith.addf %931, %936 : vector<1x4xf32>
    %c3_i32_346 = arith.constant 3 : i32
    %938 = vector.broadcast %c3_i32_346 : i32 to vector<1x4xi32>
    %939 = arith.cmpi eq, %920, %938 : vector<1x4xi32>
    %cst_347 = arith.constant 0.000000e+00 : f32
    %940 = vector.broadcast %919 : f32 to vector<1x4xf32>
    %941 = vector.broadcast %cst_347 : f32 to vector<1x4xf32>
    %942 = arith.select %939, %940, %941 : vector<1x4xi1>, vector<1x4xf32>
    %943 = arith.addf %937, %942 : vector<1x4xf32>
    %c0_348 = arith.constant 0 : index
    %c0_349 = arith.constant 0 : index
    %944 = vector.load %arg22[%c0_348, %c0_349] : memref<1x4xf32, #tpu.memory_space<vmem>>, vector<1x4xf32>
    tpu.vector_store %arg22[%c0_348, %c0_349], %943 {strides = array<i32>} : memref<1x4xf32, #tpu.memory_space<vmem>>, vector<1x4xf32>,
    return
  }
}

</mosaic_0001>

<llo_original>
// kernel: tpu_custom_call.1
$region0: #{tpu_custom_call.1}
  #allocation0 [shape = 'u32[]', space=smem, size = 0x4, offset = 0x4, fixed_abs, tag = 'smem constant byte address 0x4 - core index']
  #allocation1 [shape = 'u32[144,128]{1,0:T(1,128)}', space=vmem, size = 0x12000, scoped, tag = 'internal scratch']
  #allocation2 [shape = 'f32[8,2,512]{2,1,0:T(2,128)}', space=vmem, size = 0x8000, scoped, tag = 'scratch operand']
  #allocation3 [shape = 'f32[8,2,128]{2,1,0:T(2,128)}', space=vmem, size = 0x2000, scoped, tag = 'scratch operand']
  #allocation4 [shape = 'f32[8,2,32]{2,1,0:T(2,128)}', space=vmem, size = 0x2000, scoped, tag = 'scratch operand']
  #allocation5 [shape = 'f32[8,2,32]{2,1,0:T(2,128)}', space=vmem, size = 0x2000, scoped, tag = 'scratch operand']
  %s0 = inlined_call_operand.vmem [shape: f32[8,2,4], index: 0, kind: input, shape index: {}]
  %s1 = inlined_call_operand.vmem [shape: f32[8,2,3], index: 1, kind: input, shape index: {}]
  %s2 = inlined_call_operand.vmem [shape: f32[8,2,2], index: 2, kind: input, shape index: {}]
  %s3 = inlined_call_operand.vmem [shape: f32[4,512], index: 3, kind: input, shape index: {}]
  %s4 = inlined_call_operand.vmem [shape: f32[1,512], index: 4, kind: input, shape index: {}]
  %s5 = inlined_call_operand.hbm [shape: f32[128,512], index: 5, kind: input, shape index: {}]
  %s6 = inlined_call_operand.vmem [shape: f32[128,64], index: 6, kind: input, shape index: {}]
  %s7 = inlined_call_operand.vmem [shape: f32[1,64], index: 7, kind: input, shape index: {}]
  %s8 = inlined_call_operand.vmem [shape: f32[5,32], index: 8, kind: input, shape index: {}]
  %s9 = inlined_call_operand.vmem [shape: f32[32,3], index: 9, kind: input, shape index: {}]
  %s10 = inlined_call_operand.vmem [shape: f32[1,3], index: 10, kind: input, shape index: {}]
  %s11 = inlined_call_operand.vmem [shape: f32[5,32], index: 11, kind: input, shape index: {}]
  %s12 = inlined_call_operand.vmem [shape: f32[32,4], index: 12, kind: input, shape index: {}]
  %s13 = inlined_call_operand.vmem [shape: f32[1,4], index: 13, kind: input, shape index: {}]
  %s14 = inlined_call_operand.vmem [shape: f32[2,4], index: 14, kind: input, shape index: {}]
  %s15 = inlined_call_operand.vmem [shape: f32[1,4], index: 15, kind: input, shape index: {}]
  %s16 = inlined_call_operand.vmem [shape: f32[2,6], index: 16, kind: input, shape index: {}]
  %s17 = inlined_call_operand.vmem [shape: f32[3,2], index: 17, kind: input, shape index: {}]
  %s18 = inlined_call_operand.vmem [shape: f32[2,9], index: 18, kind: input, shape index: {}]
  %s19 = inlined_call_operand.vmem [shape: f32[3,3], index: 19, kind: input, shape index: {}]
  %s20 = inlined_call_operand.hbm [shape: f32[8,2,12], index: 20, kind: output, shape index: {0}]
  %s21 = inlined_call_operand.vmem [shape: f32[8,2,4], index: 21, kind: output, shape index: {1}]
  %s22 = inlined_call_operand.hbm [shape: f32[1,4], index: 22, kind: output, shape index: {2}]
  %23 = xla_tuple %s20, %s21, %s22
  %s24 = sld [smem:[#allocation0]]
  $region110: #{tpu_custom_call.1} parent=0
    _
  %s26 = ssub.s32 1, %s24
  %s27 = scalar_select 0, %s26, %s24
  $region1: #{tpu_custom_call.1} parent=0
    #allocation6 [shape = 'u8[262144]{0}', space=vmem, size = 0x40000, scoped, tag = 'input window, operand 5, single buffered']
    #allocation7 [shape = 's32[1]{0}', space=sflag, size = 0x4, scoped, tag = 'scoped memory for tpu_custom_call.1']
    #allocation8 [shape = 's32[1]{0}', space=sflag, size = 0x4, scoped, tag = 'scoped memory for tpu_custom_call.1']
    #allocation9 [shape = 'u8[8192]{0}', space=vmem, size = 0x2000, scoped, tag = 'output window, operand 0, single buffered']
    #allocation10 [shape = 'u8[512]{0}', space=vmem, size = 0x400, scoped, tag = 'output window, operand 2, single buffered']
    #allocation11 [shape = 's32[1]{0}', space=sflag, size = 0x4, scoped, tag = 'scoped memory for tpu_custom_call.1']
    %28 = vsyncpa [#allocation7], 0
    %29 = vsyncpa [#allocation8], 0
    %30 = vsyncpa [#allocation11], 0
    // Predicated region
    $region2: #{tpu_custom_call.1} parent=1 // pred_check
      _
    $region3: #{tpu_custom_call.1} parent=1 // pred_check_branch
      %32 = sbr.rel (0) target = $region5
    $region4: #{tpu_custom_call.1} parent=1 // pred_region
      _
    $region5: #{tpu_custom_call.1} parent=1 // pred_fallthru
      _
    // Predicated region
    $region6: #{tpu_custom_call.1} parent=1 // pred_check
      _
    $region7: #{tpu_custom_call.1} parent=1 // pred_check_branch
      %34 = sbr.rel (0) target = $region9
    $region8: #{tpu_custom_call.1} parent=1 // pred_region
      _
    $region9: #{tpu_custom_call.1} parent=1 // pred_fallthru
      _
    // Predicated region
    $region10: #{tpu_custom_call.1} parent=1 // pred_check
      _
    $region11: #{tpu_custom_call.1} parent=1 // pred_check_branch
      %36 = sbr.rel (0) target = $region13
    $region12: #{tpu_custom_call.1} parent=1 // pred_region
      _
    $region13: #{tpu_custom_call.1} parent=1 // pred_fallthru
      _
    // Predicated region
    $region14: #{tpu_custom_call.1} parent=1 // pred_check
      _
    $region15: #{tpu_custom_call.1} parent=1 // pred_check_branch
      %38 = sbr.rel (0) target = $region17
    $region16: #{tpu_custom_call.1} parent=1 // pred_region
      _
    $region17: #{tpu_custom_call.1} parent=1 // pred_fallthru
      _
    // Predicated region
    $region18: #{tpu_custom_call.1} parent=1 // pred_check
      _
    $region19: #{tpu_custom_call.1} parent=1 // pred_check_branch
      %40 = sbr.rel (0) target = $region21
    $region20: #{tpu_custom_call.1} parent=1 // pred_region
      _
    $region21: #{tpu_custom_call.1} parent=1 // pred_fallthru
      _
    // Predicated region
    $region22: #{tpu_custom_call.1} parent=1 // pred_check
      _
    $region23: #{tpu_custom_call.1} parent=1 // pred_check_branch
      %42 = sbr.rel (0) target = $region25
    $region24: #{tpu_custom_call.1} parent=1 // pred_region
      %s44 = ssub.s32 8192, 8192
      %45 = vsyncadd [#allocation7], %s44
      %s46 = sshll.u32 [#allocation6], 4
      %s47 = int_to_ptr.vmem [resolvable:$true] %s46
      %52 = dma.hbm_to_vmem [thread:$0]  %s5, 8192, %s47, [#allocation7], 512, 512, 32
    $region25: #{tpu_custom_call.1} parent=1 // pred_fallthru
      _
    // Predicated region
    $region26: #{tpu_custom_call.1} parent=1 // pred_check
      _
    $region27: #{tpu_custom_call.1} parent=1 // pred_check_branch
      %54 = sbr.rel (0) target = $region29
    $region28: #{tpu_custom_call.1} parent=1 // pred_region
      _
    $region29: #{tpu_custom_call.1} parent=1 // pred_fallthru
      _
    // Predicated region
    $region30: #{tpu_custom_call.1} parent=1 // pred_check
      _
    $region31: #{tpu_custom_call.1} parent=1 // pred_check_branch
      %56 = sbr.rel (0) target = $region33
    $region32: #{tpu_custom_call.1} parent=1 // pred_region
      _
    $region33: #{tpu_custom_call.1} parent=1 // pred_fallthru
      _
    // Predicated region
    $region34: #{tpu_custom_call.1} parent=1 // pred_check
      _
    $region35: #{tpu_custom_call.1} parent=1 // pred_check_branch
      %58 = sbr.rel (0) target = $region37
    $region36: #{tpu_custom_call.1} parent=1 // pred_region
      _
    $region37: #{tpu_custom_call.1} parent=1 // pred_fallthru
      _
    // Predicated region
    $region38: #{tpu_custom_call.1} parent=1 // pred_check
      _
    $region39: #{tpu_custom_call.1} parent=1 // pred_check_branch
      %60 = sbr.rel (0) target = $region41
    $region40: #{tpu_custom_call.1} parent=1 // pred_region
      _
    $region41: #{tpu_custom_call.1} parent=1 // pred_fallthru
      _
    // Predicated region
    $region42: #{tpu_custom_call.1} parent=1 // pred_check
      _
    $region43: #{tpu_custom_call.1} parent=1 // pred_check_branch
      %62 = sbr.rel (0) target = $region45
    $region44: #{tpu_custom_call.1} parent=1 // pred_region
      _
    $region45: #{tpu_custom_call.1} parent=1 // pred_fallthru
      _
    // Predicated region
    $region46: #{tpu_custom_call.1} parent=1 // pred_check
      _
    $region47: #{tpu_custom_call.1} parent=1 // pred_check_branch
      %64 = sbr.rel (0) target = $region49
    $region48: #{tpu_custom_call.1} parent=1 // pred_region
      _
    $region49: #{tpu_custom_call.1} parent=1 // pred_fallthru
      _
    // Predicated region
    $region50: #{tpu_custom_call.1} parent=1 // pred_check
      _
    $region51: #{tpu_custom_call.1} parent=1 // pred_check_branch
      %66 = sbr.rel (0) target = $region53
    $region52: #{tpu_custom_call.1} parent=1 // pred_region
      _
    $region53: #{tpu_custom_call.1} parent=1 // pred_fallthru
      _
    // Predicated region
    $region54: #{tpu_custom_call.1} parent=1 // pred_check
      _
    $region55: #{tpu_custom_call.1} parent=1 // pred_check_branch
      %68 = sbr.rel (0) target = $region57
    $region56: #{tpu_custom_call.1} parent=1 // pred_region
      _
    $region57: #{tpu_custom_call.1} parent=1 // pred_fallthru
      _
    // Predicated region
    $region58: #{tpu_custom_call.1} parent=1 // pred_check
      _
    $region59: #{tpu_custom_call.1} parent=1 // pred_check_branch
      %70 = sbr.rel (0) target = $region61
    $region60: #{tpu_custom_call.1} parent=1 // pred_region
      _
    $region61: #{tpu_custom_call.1} parent=1 // pred_fallthru
      _
    // Predicated region
    $region62: #{tpu_custom_call.1} parent=1 // pred_check
      _
    $region63: #{tpu_custom_call.1} parent=1 // pred_check_branch
      %72 = sbr.rel (0) target = $region65
    $region64: #{tpu_custom_call.1} parent=1 // pred_region
      _
    $region65: #{tpu_custom_call.1} parent=1 // pred_fallthru
      _
    // Predicated region
    $region66: #{tpu_custom_call.1} parent=1 // pred_check
      _
    $region67: #{tpu_custom_call.1} parent=1 // pred_check_branch
      %74 = sbr.rel (0) target = $region69
    $region68: #{tpu_custom_call.1} parent=1 // pred_region
      _
    $region69: #{tpu_custom_call.1} parent=1 // pred_fallthru
      _
    // Predicated region
    $region70: #{tpu_custom_call.1} parent=1 // pred_check
      _
    $region71: #{tpu_custom_call.1} parent=1 // pred_check_branch
      %76 = sbr.rel (0) target = $region73
    $region72: #{tpu_custom_call.1} parent=1 // pred_region
      _
    $region73: #{tpu_custom_call.1} parent=1 // pred_fallthru
      _
    // Predicated region
    $region74: #{tpu_custom_call.1} parent=1 // pred_check
      _
    $region75: #{tpu_custom_call.1} parent=1 // pred_check_branch
      %78 = sbr.rel (0) target = $region77
    $region76: #{tpu_custom_call.1} parent=1 // pred_region
      _
    $region77: #{tpu_custom_call.1} parent=1 // pred_fallthru
      _
    // Predicated region
    $region78: #{tpu_custom_call.1} parent=1 // pred_check
      _
    $region79: #{tpu_custom_call.1} parent=1 // pred_check_branch
      %80 = sbr.rel (0) target = $region81
    $region80: #{tpu_custom_call.1} parent=1 // pred_region
      _
    $region81: #{tpu_custom_call.1} parent=1 // pred_fallthru
      _
    // Predicated region
    $region82: #{tpu_custom_call.1} parent=1 // pred_check
      _
    $region83: #{tpu_custom_call.1} parent=1 // pred_check_branch
      %82 = sbr.rel (0) target = $region85
    $region84: #{tpu_custom_call.1} parent=1 // pred_region
      %83 = dma.done [#allocation7], 8192
    $region85: #{tpu_custom_call.1} parent=1 // pred_fallthru
      _
    %v84 = vld [vmem:[%s0] sm:$0x3]
    %v85 = vld [vmem:[%s0 + $0x2] sm:$0x3]
    %v86 = vld [vmem:[%s0 + $0x4] sm:$0x3]
    %v87 = vld [vmem:[%s0 + $0x6] sm:$0x3]
    %v88 = vld [vmem:[%s0 + $0x8] sm:$0x3]
    %v89 = vld [vmem:[%s0 + $0xa] sm:$0x3]
    %v90 = vld [vmem:[%s0 + $0xc] sm:$0x3]
    %v91 = vld [vmem:[%s0 + $0xe] sm:$0x3]
    %v92 = vld [vmem:[%s3] sm:$0xff]
    %v93 = vld [vmem:[%s3 + $0x8] sm:$0xff]
    %v94 = vld [vmem:[%s4] sm:$0xf]
    %v96 = vlaneseq
    %v97 = vshrl.u32 %v96, 7
    %v98 = vsub.s32 0, %v97
    %v99 = vrot.slane %v94, %v98
    %v100 = vlaneseq
    %v101 = vshrl.u32 %v100, 7
    %v102 = vsub.s32 1, %v101
    %v103 = vrot.slane %v94, %v102
    %v104 = vlaneseq
    %v105 = vshrl.u32 %v104, 7
    %v106 = vsub.s32 2, %v105
    %v107 = vrot.slane %v94, %v106
    %v108 = vlaneseq
    %v109 = vshrl.u32 %v108, 7
    %v110 = vsub.s32 3, %v109
    %v111 = vrot.slane %v94, %v110
    %v112 = vcombine.low %v99, %v103
    %v113 = vcombine.low %v107, %v111
    %v115 = vunpack.c.l.s4 1983009808
    %v116 = vunpack.c.0.s8 %v115
    %v117 = vlaneseq
    %v118 = vshrl.u32 %v117, 7
    %v119 = vsub.s32 %v116, %v118
    %v120 = vrot.slane %v112, %v119
    %v122 = vunpack.c.l.s4 1983009808
    %v123 = vunpack.c.0.s8 %v122
    %v124 = vlaneseq
    %v125 = vshrl.u32 %v124, 7
    %v126 = vsub.s32 %v123, %v125
    %v127 = vrot.slane %v113, %v126
    %v128 = vcombine.low %v120, %v127
    %v137 = vcombine.low %v84, %v85
    %v138 = vcombine.low %v86, %v87
    %v140 = vunpack.c.l.s4 1983009808
    %v141 = vunpack.c.0.s8 %v140
    %v142 = vlaneseq
    %v143 = vshrl.u32 %v142, 7
    %v144 = vsub.s32 %v141, %v143
    %v145 = vrot.slane %v137, %v144
    %v147 = vunpack.c.l.s4 1983009808
    %v148 = vunpack.c.0.s8 %v147
    %v149 = vlaneseq
    %v150 = vshrl.u32 %v149, 7
    %v151 = vsub.s32 %v148, %v150
    %v152 = vrot.slane %v138, %v151
    %v153 = vcombine.low %v145, %v152
    %v154 = vcombine.low %v88, %v89
    %v155 = vcombine.low %v90, %v91
    %v157 = vunpack.c.l.s4 1983009808
    %v158 = vunpack.c.0.s8 %v157
    %v159 = vlaneseq
    %v160 = vshrl.u32 %v159, 7
    %v161 = vsub.s32 %v158, %v160
    %v162 = vrot.slane %v154, %v161
    %v164 = vunpack.c.l.s4 1983009808
    %v165 = vunpack.c.0.s8 %v164
    %v166 = vlaneseq
    %v167 = vshrl.u32 %v166, 7
    %v168 = vsub.s32 %v165, %v167
    %v169 = vrot.slane %v155, %v168
    %v170 = vcombine.low %v162, %v169
    %v173 = vcombine.high %v92, %v92
    %v174 = vcombine.high %v93, %v93
    %v175 = vcombine.low %v128, %v128
    %v176 = vcombine.high %v128, %v128
    %v178 = vunpack.c.l.s4 1983009808
    %v179 = vunpack.c.0.s8 %v178
    %v180 = vlaneseq
    %v181 = vshrl.u32 %v180, 7
    %v182 = vsub.s32 %v179, %v181
    %v183 = vrot.slane %v175, %v182
    %v185 = vunpack.c.l.s4 1983009808
    %v186 = vunpack.c.0.s8 %v185
    %v187 = vlaneseq
    %v188 = vshrl.u32 %v187, 7
    %v189 = vsub.s32 %v186, %v188
    %v190 = vrot.slane %v176, %v189
    %v191 = vcombine.low %v183, %v183
    %v192 = vcombine.high %v183, %v183
    %v193 = vcombine.low %v190, %v190
    %v194 = vcombine.high %v190, %v190
    %vm199 = vcmask 31744
    %v200 = vsel %vm199, %v153, 0
    %v202 = vsel %vm199, %v170, 0
    %vm204 = vcmask 1043456
    %v205 = vsel %vm204, %v92, 0
    %v207 = vsel %vm204, %v173, 0
    %v209 = vsel %vm204, %v93, 0
    %v211 = vsel %vm204, %v174, 0
    %213 = vmatprep.subr.mxu0 0.0
    %214 = vmatpush1.msra.mxu0 0.0
    %215 = vmatprep.subr.mxu0 0.0
    %216 = vmatpush1.msra.mxu0 0.0
    %217 = vmatprep.subr.mxu0 0.0
    %218 = vmatpush1.msra.mxu0 0.0
    %219 = vmatprep.subr.mxu0 0.0
    %220 = vmatpush1.msra.mxu0 0.0
    %221 = vmatprep.subr.mxu0 0.0
    %222 = vmatpush1.msra.mxu0 0.0
    %223 = vmatprep.subr.mxu0 0.0
    %224 = vmatpush1.msra.mxu0 0.0
    %225 = vmatprep.subr.mxu0 0.0
    %226 = vmatpush1.msra.mxu0 0.0
    %227 = vmatprep.subr.mxu0 0.0
    %228 = vmatpush1.msra.mxu0 0.0
    %229 = vmatprep.subr.mxu0 0.0
    %230 = vmatpush1.msra.mxu0 0.0
    %231 = vmatprep.subr.mxu0 0.0
    %232 = vmatpush1.msra.mxu0 0.0
    %233 = vmatprep.subr.mxu0 0.0
    %234 = vmatpush1.msra.mxu0 0.0
    %235 = vmatprep.subr.mxu0 0.0
    %236 = vmatpush1.msra.mxu0 0.0
    %237 = vmatprep.subr.mxu0 0.0
    %238 = vmatpush1.msra.mxu0 0.0
    %239 = vmatprep.subr.mxu0 0.0
    %240 = vmatpush1.msra.mxu0 0.0
    %241 = vmatprep.subr.mxu0 0.0
    %242 = vmatpush1.msra.mxu0 0.0
    %243 = vmatprep.subr.mxu0 %v207
    %244 = vmatpush1.msra.mxu0 %v205
    %245 = vmatprep.subr.mxu0 0.0
    %246 = vmatpush2.msra.mxu0 0.0
    %247 = vmatprep.subr.mxu0 0.0
    %248 = vmatpush2.msra.mxu0 0.0
    %249 = vmatprep.subr.mxu0 0.0
    %250 = vmatpush2.msra.mxu0 0.0
    %251 = vmatprep.subr.mxu0 0.0
    %252 = vmatpush2.msra.mxu0 0.0
    %253 = vmatprep.subr.mxu0 0.0
    %254 = vmatpush2.msra.mxu0 0.0
    %255 = vmatprep.subr.mxu0 0.0
    %256 = vmatpush2.msra.mxu0 0.0
    %257 = vmatprep.subr.mxu0 0.0
    %258 = vmatpush2.msra.mxu0 0.0
    %259 = vmatprep.subr.mxu0 0.0
    %260 = vmatpush2.msra.mxu0 0.0
    %261 = vmatprep.subr.mxu0 0.0
    %262 = vmatpush2.msra.mxu0 0.0
    %263 = vmatprep.subr.mxu0 0.0
    %264 = vmatpush2.msra.mxu0 0.0
    %265 = vmatprep.subr.mxu0 0.0
    %266 = vmatpush2.msra.mxu0 0.0
    %267 = vmatprep.subr.mxu0 0.0
    %268 = vmatpush2.msra.mxu0 0.0
    %269 = vmatprep.subr.mxu0 0.0
    %270 = vmatpush2.msra.mxu0 0.0
    %271 = vmatprep.subr.mxu0 0.0
    %272 = vmatpush2.msra.mxu0 0.0
    %273 = vmatprep.subr.mxu0 0.0
    %274 = vmatpush2.msra.mxu0 0.0
    %275 = vmatprep.subr.mxu0 0.0
    %276 = vmatpush2.msra.mxu0 0.0
    %277 = vmatprep.mubr.f32.mxu0 0.0
    %278 = vmatmul.mubr.f32.gmra.mxu0 %v200
    %v279 = vpop.f32.mrf.mxu0
    %v280 = vadd.f32 %v191, %v279
    %v281 = vpop.f32.mrf.mxu0
    %v282 = vadd.f32 %v192, %v281
    %283 = vmatprep.mubr.f32.mxu0 0.0
    %284 = vmatmul.mubr.f32.gmra.mxu0 %v202
    %v285 = vpop.f32.mrf.mxu0
    %v286 = vadd.f32 %v191, %v285
    %v287 = vpop.f32.mrf.mxu0
    %v288 = vadd.f32 %v192, %v287
    %289 = vdwg.mxu0
    %290 = vmatprep.subr.mxu0 0.0
    %291 = vmatpush1.msra.mxu0 0.0
    %292 = vmatprep.subr.mxu0 0.0
    %293 = vmatpush1.msra.mxu0 0.0
    %294 = vmatprep.subr.mxu0 0.0
    %295 = vmatpush1.msra.mxu0 0.0
    %296 = vmatprep.subr.mxu0 0.0
    %297 = vmatpush1.msra.mxu0 0.0
    %298 = vmatprep.subr.mxu0 0.0
    %299 = vmatpush1.msra.mxu0 0.0
    %300 = vmatprep.subr.mxu0 0.0
    %301 = vmatpush1.msra.mxu0 0.0
    %302 = vmatprep.subr.mxu0 0.0
    %303 = vmatpush1.msra.mxu0 0.0
    %304 = vmatprep.subr.mxu0 0.0
    %305 = vmatpush1.msra.mxu0 0.0
    %306 = vmatprep.subr.mxu0 0.0
    %307 = vmatpush1.msra.mxu0 0.0
    %308 = vmatprep.subr.mxu0 0.0
    %309 = vmatpush1.msra.mxu0 0.0
    %310 = vmatprep.subr.mxu0 0.0
    %311 = vmatpush1.msra.mxu0 0.0
    %312 = vmatprep.subr.mxu0 0.0
    %313 = vmatpush1.msra.mxu0 0.0
    %314 = vmatprep.subr.mxu0 0.0
    %315 = vmatpush1.msra.mxu0 0.0
    %316 = vmatprep.subr.mxu0 0.0
    %317 = vmatpush1.msra.mxu0 0.0
    %318 = vmatprep.subr.mxu0 0.0
    %319 = vmatpush1.msra.mxu0 0.0
    %320 = vmatprep.subr.mxu0 %v211
    %321 = vmatpush1.msra.mxu0 %v209
    %322 = vmatprep.subr.mxu0 0.0
    %323 = vmatpush2.msra.mxu0 0.0
    %324 = vmatprep.subr.mxu0 0.0
    %325 = vmatpush2.msra.mxu0 0.0
    %326 = vmatprep.subr.mxu0 0.0
    %327 = vmatpush2.msra.mxu0 0.0
    %328 = vmatprep.subr.mxu0 0.0
    %329 = vmatpush2.msra.mxu0 0.0
    %330 = vmatprep.subr.mxu0 0.0
    %331 = vmatpush2.msra.mxu0 0.0
    %332 = vmatprep.subr.mxu0 0.0
    %333 = vmatpush2.msra.mxu0 0.0
    %334 = vmatprep.subr.mxu0 0.0
    %335 = vmatpush2.msra.mxu0 0.0
    %336 = vmatprep.subr.mxu0 0.0
    %337 = vmatpush2.msra.mxu0 0.0
    %338 = vmatprep.subr.mxu0 0.0
    %339 = vmatpush2.msra.mxu0 0.0
    %340 = vmatprep.subr.mxu0 0.0
    %341 = vmatpush2.msra.mxu0 0.0
    %342 = vmatprep.subr.mxu0 0.0
    %343 = vmatpush2.msra.mxu0 0.0
    %344 = vmatprep.subr.mxu0 0.0
    %345 = vmatpush2.msra.mxu0 0.0
    %346 = vmatprep.subr.mxu0 0.0
    %347 = vmatpush2.msra.mxu0 0.0
    %348 = vmatprep.subr.mxu0 0.0
    %349 = vmatpush2.msra.mxu0 0.0
    %350 = vmatprep.subr.mxu0 0.0
    %351 = vmatpush2.msra.mxu0 0.0
    %352 = vmatprep.subr.mxu0 0.0
    %353 = vmatpush2.msra.mxu0 0.0
    %354 = vmatprep.mubr.f32.mxu0 0.0
    %355 = vmatmul.mubr.f32.gmra.mxu0 %v200
    %v356 = vpop.f32.mrf.mxu0
    %v357 = vadd.f32 %v193, %v356
    %v358 = vpop.f32.mrf.mxu0
    %v359 = vadd.f32 %v194, %v358
    %360 = vmatprep.mubr.f32.mxu0 0.0
    %361 = vmatmul.mubr.f32.gmra.mxu0 %v202
    %v362 = vpop.f32.mrf.mxu0
    %v363 = vadd.f32 %v193, %v362
    %v364 = vpop.f32.mrf.mxu0
    %v365 = vadd.f32 %v194, %v364
    %366 = vdwg.mxu0
    %v375 = vcombine.low %v280, %v282
    %v376 = vcombine.high %v280, %v282
    %v377 = vcombine.low %v357, %v359
    %v378 = vcombine.high %v357, %v359
    %v380 = vunpack.c.l.s4 1983009808
    %v381 = vunpack.c.0.s8 %v380
    %v382 = vlaneseq
    %v383 = vshrl.u32 %v382, 7
    %v384 = vsub.s32 %v381, %v383
    %v385 = vrot.slane %v375, %v384
    %v387 = vunpack.c.l.s4 1983009808
    %v388 = vunpack.c.0.s8 %v387
    %v389 = vlaneseq
    %v390 = vshrl.u32 %v389, 7
    %v391 = vsub.s32 %v388, %v390
    %v392 = vrot.slane %v376, %v391
    %v394 = vunpack.c.l.s4 1983009808
    %v395 = vunpack.c.0.s8 %v394
    %v396 = vlaneseq
    %v397 = vshrl.u32 %v396, 7
    %v398 = vsub.s32 %v395, %v397
    %v399 = vrot.slane %v377, %v398
    %v401 = vunpack.c.l.s4 1983009808
    %v402 = vunpack.c.0.s8 %v401
    %v403 = vlaneseq
    %v404 = vshrl.u32 %v403, 7
    %v405 = vsub.s32 %v402, %v404
    %v406 = vrot.slane %v378, %v405
    %v407 = vcombine.low %v385, %v399
    %v408 = vcombine.high %v385, %v399
    %v409 = vcombine.low %v392, %v406
    %v410 = vcombine.high %v392, %v406
    %v411 = vcombine.low %v286, %v288
    %v412 = vcombine.high %v286, %v288
    %v413 = vcombine.low %v363, %v365
    %v414 = vcombine.high %v363, %v365
    %v416 = vunpack.c.l.s4 1983009808
    %v417 = vunpack.c.0.s8 %v416
    %v418 = vlaneseq
    %v419 = vshrl.u32 %v418, 7
    %v420 = vsub.s32 %v417, %v419
    %v421 = vrot.slane %v411, %v420
    %v423 = vunpack.c.l.s4 1983009808
    %v424 = vunpack.c.0.s8 %v423
    %v425 = vlaneseq
    %v426 = vshrl.u32 %v425, 7
    %v427 = vsub.s32 %v424, %v426
    %v428 = vrot.slane %v412, %v427
    %v430 = vunpack.c.l.s4 1983009808
    %v431 = vunpack.c.0.s8 %v430
    %v432 = vlaneseq
    %v433 = vshrl.u32 %v432, 7
    %v434 = vsub.s32 %v431, %v433
    %v435 = vrot.slane %v413, %v434
    %v437 = vunpack.c.l.s4 1983009808
    %v438 = vunpack.c.0.s8 %v437
    %v439 = vlaneseq
    %v440 = vshrl.u32 %v439, 7
    %v441 = vsub.s32 %v438, %v440
    %v442 = vrot.slane %v414, %v441
    %v443 = vcombine.low %v421, %v435
    %v444 = vcombine.high %v421, %v435
    %v445 = vcombine.low %v428, %v442
    %v446 = vcombine.high %v428, %v442
    %455 = vst [vmem:[#allocation2] sm:$0xff] %v407
    %456 = vst [vmem:[#allocation2 + $0x8] sm:$0xff] %v408
    %457 = vst [vmem:[#allocation2 + $0x10] sm:$0xff] %v409
    %458 = vst [vmem:[#allocation2 + $0x18] sm:$0xff] %v410
    %459 = vst [vmem:[#allocation2 + $0x20] sm:$0xff] %v443
    %460 = vst [vmem:[#allocation2 + $0x28] sm:$0xff] %v444
    %461 = vst [vmem:[#allocation2 + $0x30] sm:$0xff] %v445
    %462 = vst [vmem:[#allocation2 + $0x38] sm:$0xff] %v446
    %v463 = vld [vmem:[#allocation6] sm:$0xff]
    %v464 = vld [vmem:[#allocation6 + $0x8] sm:$0xff]
    %v465 = vld [vmem:[#allocation6 + $0x10] sm:$0xff]
    %v466 = vld [vmem:[#allocation6 + $0x18] sm:$0xff]
    %v467 = vld [vmem:[#allocation6 + $0x20] sm:$0xff]
    %v468 = vld [vmem:[#allocation6 + $0x28] sm:$0xff]
    %v469 = vld [vmem:[#allocation6 + $0x30] sm:$0xff]
    %v470 = vld [vmem:[#allocation6 + $0x38] sm:$0xff]
    %v471 = vld [vmem:[#allocation6 + $0x40] sm:$0xff]
    %v472 = vld [vmem:[#allocation6 + $0x48] sm:$0xff]
    %v473 = vld [vmem:[#allocation6 + $0x50] sm:$0xff]
    %v474 = vld [vmem:[#allocation6 + $0x58] sm:$0xff]
    %v475 = vld [vmem:[#allocation6 + $0x60] sm:$0xff]
    %v476 = vld [vmem:[#allocation6 + $0x68] sm:$0xff]
    %v477 = vld [vmem:[#allocation6 + $0x70] sm:$0xff]
    %v478 = vld [vmem:[#allocation6 + $0x78] sm:$0xff]
    %v479 = vld [vmem:[#allocation6 + $0x80] sm:$0xff]
    %v480 = vld [vmem:[#allocation6 + $0x88] sm:$0xff]
    %v481 = vld [vmem:[#allocation6 + $0x90] sm:$0xff]
    %v482 = vld [vmem:[#allocation6 + $0x98] sm:$0xff]
    %v483 = vld [vmem:[#allocation6 + $0xa0] sm:$0xff]
    %v484 = vld [vmem:[#allocation6 + $0xa8] sm:$0xff]
    %v485 = vld [vmem:[#allocation6 + $0xb0] sm:$0xff]
    %v486 = vld [vmem:[#allocation6 + $0xb8] sm:$0xff]
    %v487 = vld [vmem:[#allocation6 + $0xc0] sm:$0xff]
    %v488 = vld [vmem:[#allocation6 + $0xc8] sm:$0xff]
    %v489 = vld [vmem:[#allocation6 + $0xd0] sm:$0xff]
    %v490 = vld [vmem:[#allocation6 + $0xd8] sm:$0xff]
    %v491 = vld [vmem:[#allocation6 + $0xe0] sm:$0xff]
    %v492 = vld [vmem:[#allocation6 + $0xe8] sm:$0xff]
    %v493 = vld [vmem:[#allocation6 + $0xf0] sm:$0xff]
    %v494 = vld [vmem:[#allocation6 + $0xf8] sm:$0xff]
    %v495 = vld [vmem:[#allocation6 + $0x100] sm:$0xff]
    %v496 = vld [vmem:[#allocation6 + $0x108] sm:$0xff]
    %v497 = vld [vmem:[#allocation6 + $0x110] sm:$0xff]
    %v498 = vld [vmem:[#allocation6 + $0x118] sm:$0xff]
    %v499 = vld [vmem:[#allocation6 + $0x120] sm:$0xff]
    %v500 = vld [vmem:[#allocation6 + $0x128] sm:$0xff]
    %v501 = vld [vmem:[#allocation6 + $0x130] sm:$0xff]
    %v502 = vld [vmem:[#allocation6 + $0x138] sm:$0xff]
    %v503 = vld [vmem:[#allocation6 + $0x140] sm:$0xff]
    %v504 = vld [vmem:[#allocation6 + $0x148] sm:$0xff]
    %v505 = vld [vmem:[#allocation6 + $0x150] sm:$0xff]
    %v506 = vld [vmem:[#allocation6 + $0x158] sm:$0xff]
    %v507 = vld [vmem:[#allocation6 + $0x160] sm:$0xff]
    %v508 = vld [vmem:[#allocation6 + $0x168] sm:$0xff]
    %v509 = vld [vmem:[#allocation6 + $0x170] sm:$0xff]
    %v510 = vld [vmem:[#allocation6 + $0x178] sm:$0xff]
    %v511 = vld [vmem:[#allocation6 + $0x180] sm:$0xff]
    %v512 = vld [vmem:[#allocation6 + $0x188] sm:$0xff]
    %v513 = vld [vmem:[#allocation6 + $0x190] sm:$0xff]
    %v514 = vld [vmem:[#allocation6 + $0x198] sm:$0xff]
    %v515 = vld [vmem:[#allocation6 + $0x1a0] sm:$0xff]
    %v516 = vld [vmem:[#allocation6 + $0x1a8] sm:$0xff]
    %v517 = vld [vmem:[#allocation6 + $0x1b0] sm:$0xff]
    %v518 = vld [vmem:[#allocation6 + $0x1b8] sm:$0xff]
    %v519 = vld [vmem:[#allocation6 + $0x1c0] sm:$0xff]
    %v520 = vld [vmem:[#allocation6 + $0x1c8] sm:$0xff]
    %v521 = vld [vmem:[#allocation6 + $0x1d0] sm:$0xff]
    %v522 = vld [vmem:[#allocation6 + $0x1d8] sm:$0xff]
    %v523 = vld [vmem:[#allocation6 + $0x1e0] sm:$0xff]
    %v524 = vld [vmem:[#allocation6 + $0x1e8] sm:$0xff]
    %v525 = vld [vmem:[#allocation6 + $0x1f0] sm:$0xff]
    %v526 = vld [vmem:[#allocation6 + $0x1f8] sm:$0xff]
    %v527 = vlaneseq
    %v528 = vand.u32 %v527, 127
    %v529 = vadd.s32 %v528, 128
    %v530 = vadd.s32 %v528, 256
    %v531 = vadd.s32 %v528, 384
    %vm532 = vcmp.lt.s32.totalorder %v528, 0
    %v533 = vsub.s32 0, %v528
    %v534 = vsel %vm532, %v533, %v528
    %v535 = vshrl.u32 %v534, 7
    %v536 = vand.u32 %v534, 127
    %v537 = vsub.s32 0, %v536
    %v538 = vsel %vm532, %v537, %v536
    %vm539 = vcmp.lt.s32.totalorder %v529, 0
    %v540 = vsub.s32 0, %v529
    %v541 = vsel %vm539, %v540, %v529
    %v542 = vshrl.u32 %v541, 7
    %v543 = vand.u32 %v541, 127
    %v544 = vsub.s32 0, %v543
    %v545 = vsel %vm539, %v544, %v543
    %vm546 = vcmp.lt.s32.totalorder %v530, 0
    %v547 = vsub.s32 0, %v530
    %v548 = vsel %vm546, %v547, %v530
    %v549 = vshrl.u32 %v548, 7
    %v550 = vand.u32 %v548, 127
    %v551 = vsub.s32 0, %v550
    %v552 = vsel %vm546, %v551, %v550
    %vm553 = vcmp.lt.s32.totalorder %v531, 0
    %v554 = vsub.s32 0, %v531
    %v555 = vsel %vm553, %v554, %v531
    %v556 = vshrl.u32 %v555, 7
    %v557 = vand.u32 %v555, 127
    %v558 = vsub.s32 0, %v557
    %v559 = vsel %vm553, %v558, %v557
    %vm560 = vcmp.ne.s32.totalorder %v538, 0
    %vm561 = vcmp.ne.s32.totalorder %v545, 0
    %vm562 = vcmp.ne.s32.totalorder %v552, 0
    %vm563 = vcmp.ne.s32.totalorder %v559, 0
    %vm564 = vcmp.lt.s32.totalorder %v538, 0
    %vm565 = vcmp.lt.s32.totalorder %v545, 0
    %vm566 = vcmp.lt.s32.totalorder %v552, 0
    %vm567 = vcmp.lt.s32.totalorder %v559, 0
    %vm568 = vmand %vm564, %vm560
    %vm569 = vmand %vm565, %vm561
    %vm570 = vmand %vm566, %vm562
    %vm571 = vmand %vm567, %vm563
    %v572 = vadd.s32 %v538, 128
    %v573 = vadd.s32 %v545, 128
    %v574 = vadd.s32 %v552, 128
    %v575 = vadd.s32 %v559, 128
    %v576 = vsel %vm568, %v572, %v538
    %v577 = vsel %vm569, %v573, %v545
    %v578 = vsel %vm570, %v574, %v552
    %v579 = vsel %vm571, %v575, %v559
    %vm580 = vcmp.ge.s32.totalorder %v576, 32
    %vm581 = vcmp.ge.s32.totalorder %v577, 32
    %vm582 = vcmp.ge.s32.totalorder %v578, 32
    %vm583 = vcmp.ge.s32.totalorder %v579, 32
    %vm584 = vcmp.lt.s32.totalorder %v576, 64
    %vm585 = vcmp.lt.s32.totalorder %v577, 64
    %vm586 = vcmp.lt.s32.totalorder %v578, 64
    %vm587 = vcmp.lt.s32.totalorder %v579, 64
    %vm588 = vmand %vm580, %vm584
    %vm589 = vmand %vm581, %vm585
    %vm590 = vmand %vm582, %vm586
    %vm591 = vmand %vm583, %vm587
    %s592 = scalar_lea.vmem [#allocation2], 56
    %v593 = vld [vmem:[%s592] sm:$0xff]
    %v594 = vld [vmem:[#allocation2] sm:$0xff]
    %v596 = vcombine.high %v593, %v593
    %v598 = vunpack.c.l.s4 1983009808
    %v599 = vunpack.c.0.s8 %v598
    %v600 = vlaneseq
    %v601 = vshrl.u32 %v600, 7
    %v602 = vsub.s32 %v599, %v601
    %v603 = vrot.slane %v593, %v602
    %v605 = vunpack.c.l.s4 1983009808
    %v606 = vunpack.c.0.s8 %v605
    %v607 = vlaneseq
    %v608 = vshrl.u32 %v607, 7
    %v609 = vsub.s32 %v606, %v608
    %v610 = vrot.slane %v596, %v609
    %v611 = vcombine.high %v603, %v603
    %v612 = vcombine.high %v610, %v610
    %v618 = vcombine.high %v594, %v594
    %v620 = vunpack.c.l.s4 1983009808
    %v621 = vunpack.c.0.s8 %v620
    %v622 = vlaneseq
    %v623 = vshrl.u32 %v622, 7
    %v624 = vsub.s32 %v621, %v623
    %v625 = vrot.slane %v594, %v624
    %v627 = vunpack.c.l.s4 1983009808
    %v628 = vunpack.c.0.s8 %v627
    %v629 = vlaneseq
    %v630 = vshrl.u32 %v629, 7
    %v631 = vsub.s32 %v628, %v630
    %v632 = vrot.slane %v618, %v631
    %v633 = vcombine.high %v625, %v625
    %v634 = vcombine.high %v632, %v632
    %v639 = vsel %vm588, %v603, %v625
    %v640 = vsel %vm589, %v611, %v633
    %v641 = vsel %vm590, %v610, %v632
    %v642 = vsel %vm591, %v612, %v634
    %643 = vmatprep.subr.mxu0 %v524
    %644 = vmatpush1.msra.mxu0 %v523
    %645 = vmatprep.subr.mxu0 %v520
    %646 = vmatpush1.msra.mxu0 %v519
    %647 = vmatprep.subr.mxu0 %v516
    %648 = vmatpush1.msra.mxu0 %v515
    %649 = vmatprep.subr.mxu0 %v512
    %650 = vmatpush1.msra.mxu0 %v511
    %651 = vmatprep.subr.mxu0 %v508
    %652 = vmatpush1.msra.mxu0 %v507
    %653 = vmatprep.subr.mxu0 %v504
    %654 = vmatpush1.msra.mxu0 %v503
    %655 = vmatprep.subr.mxu0 %v500
    %656 = vmatpush1.msra.mxu0 %v499
    %657 = vmatprep.subr.mxu0 %v496
    %658 = vmatpush1.msra.mxu0 %v495
    %659 = vmatprep.subr.mxu0 %v492
    %660 = vmatpush1.msra.mxu0 %v491
    %661 = vmatprep.subr.mxu0 %v488
    %662 = vmatpush1.msra.mxu0 %v487
    %663 = vmatprep.subr.mxu0 %v484
    %664 = vmatpush1.msra.mxu0 %v483
    %665 = vmatprep.subr.mxu0 %v480
    %666 = vmatpush1.msra.mxu0 %v479
    %667 = vmatprep.subr.mxu0 %v476
    %668 = vmatpush1.msra.mxu0 %v475
    %669 = vmatprep.subr.mxu0 %v472
    %670 = vmatpush1.msra.mxu0 %v471
    %671 = vmatprep.subr.mxu0 %v468
    %672 = vmatpush1.msra.mxu0 %v467
    %673 = vmatprep.subr.mxu0 %v464
    %674 = vmatpush1.msra.mxu0 %v463
    %675 = vmatprep.subr.mxu0 0.0
    %676 = vmatpush2.msra.mxu0 0.0
    %677 = vmatprep.subr.mxu0 0.0
    %678 = vmatpush2.msra.mxu0 0.0
    %679 = vmatprep.subr.mxu0 0.0
    %680 = vmatpush2.msra.mxu0 0.0
    %681 = vmatprep.subr.mxu0 0.0
    %682 = vmatpush2.msra.mxu0 0.0
    %683 = vmatprep.subr.mxu0 0.0
    %684 = vmatpush2.msra.mxu0 0.0
    %685 = vmatprep.subr.mxu0 0.0
    %686 = vmatpush2.msra.mxu0 0.0
    %687 = vmatprep.subr.mxu0 0.0
    %688 = vmatpush2.msra.mxu0 0.0
    %689 = vmatprep.subr.mxu0 0.0
    %690 = vmatpush2.msra.mxu0 0.0
    %691 = vmatprep.subr.mxu0 0.0
    %692 = vmatpush2.msra.mxu0 0.0
    %693 = vmatprep.subr.mxu0 0.0
    %694 = vmatpush2.msra.mxu0 0.0
    %695 = vmatprep.subr.mxu0 0.0
    %696 = vmatpush2.msra.mxu0 0.0
    %697 = vmatprep.subr.mxu0 0.0
    %698 = vmatpush2.msra.mxu0 0.0
    %699 = vmatprep.subr.mxu0 0.0
    %700 = vmatpush2.msra.mxu0 0.0
    %701 = vmatprep.subr.mxu0 0.0
    %702 = vmatpush2.msra.mxu0 0.0
    %703 = vmatprep.subr.mxu0 0.0
    %704 = vmatpush2.msra.mxu0 0.0
    %705 = vmatprep.subr.mxu0 0.0
    %706 = vmatpush2.msra.mxu0 0.0
    %707 = vmatprep.mubr.f32.mxu0 0.0
    %708 = vmatmul.mubr.f32.gmra.mxu0 0.0
    %v709 = vpop.f32.mrf.mxu0
    %v710 = vadd.f32 0.0, %v709
    %v711 = vpop.f32.mrf.mxu0
    %v712 = vadd.f32 0.0, %v711
    %713 = vdwg.mxu0
    %714 = vmatprep.subr.mxu0 %v526
    %715 = vmatpush1.msra.mxu0 %v525
    %716 = vmatprep.subr.mxu0 %v522
    %717 = vmatpush1.msra.mxu0 %v521
    %718 = vmatprep.subr.mxu0 %v518
    %719 = vmatpush1.msra.mxu0 %v517
    %720 = vmatprep.subr.mxu0 %v514
    %721 = vmatpush1.msra.mxu0 %v513
    %722 = vmatprep.subr.mxu0 %v510
    %723 = vmatpush1.msra.mxu0 %v509
    %724 = vmatprep.subr.mxu0 %v506
    %725 = vmatpush1.msra.mxu0 %v505
    %726 = vmatprep.subr.mxu0 %v502
    %727 = vmatpush1.msra.mxu0 %v501
    %728 = vmatprep.subr.mxu0 %v498
    %729 = vmatpush1.msra.mxu0 %v497
    %730 = vmatprep.subr.mxu0 %v494
    %731 = vmatpush1.msra.mxu0 %v493
    %732 = vmatprep.subr.mxu0 %v490
    %733 = vmatpush1.msra.mxu0 %v489
    %734 = vmatprep.subr.mxu0 %v486
    %735 = vmatpush1.msra.mxu0 %v485
    %736 = vmatprep.subr.mxu0 %v482
    %737 = vmatpush1.msra.mxu0 %v481
    %738 = vmatprep.subr.mxu0 %v478
    %739 = vmatpush1.msra.mxu0 %v477
    %740 = vmatprep.subr.mxu0 %v474
    %741 = vmatpush1.msra.mxu0 %v473
    %742 = vmatprep.subr.mxu0 %v470
    %743 = vmatpush1.msra.mxu0 %v469
    %744 = vmatprep.subr.mxu0 %v466
    %745 = vmatpush1.msra.mxu0 %v465
    %746 = vmatprep.subr.mxu0 0.0
    %747 = vmatpush2.msra.mxu0 0.0
    %748 = vmatprep.subr.mxu0 0.0
    %749 = vmatpush2.msra.mxu0 0.0
    %750 = vmatprep.subr.mxu0 0.0
    %751 = vmatpush2.msra.mxu0 0.0
    %752 = vmatprep.subr.mxu0 0.0
    %753 = vmatpush2.msra.mxu0 0.0
    %754 = vmatprep.subr.mxu0 0.0
    %755 = vmatpush2.msra.mxu0 0.0
    %756 = vmatprep.subr.mxu0 0.0
    %757 = vmatpush2.msra.mxu0 0.0
    %758 = vmatprep.subr.mxu0 0.0
    %759 = vmatpush2.msra.mxu0 0.0
    %760 = vmatprep.subr.mxu0 0.0
    %761 = vmatpush2.msra.mxu0 0.0
    %762 = vmatprep.subr.mxu0 0.0
    %763 = vmatpush2.msra.mxu0 0.0
    %764 = vmatprep.subr.mxu0 0.0
    %765 = vmatpush2.msra.mxu0 0.0
    %766 = vmatprep.subr.mxu0 0.0
    %767 = vmatpush2.msra.mxu0 0.0
    %768 = vmatprep.subr.mxu0 0.0
    %769 = vmatpush2.msra.mxu0 0.0
    %770 = vmatprep.subr.mxu0 0.0
    %771 = vmatpush2.msra.mxu0 0.0
    %772 = vmatprep.subr.mxu0 0.0
    %773 = vmatpush2.msra.mxu0 0.0
    %774 = vmatprep.subr.mxu0 0.0
    %775 = vmatpush2.msra.mxu0 0.0
    %776 = vmatprep.subr.mxu0 0.0
    %777 = vmatpush2.msra.mxu0 0.0
    %778 = vmatprep.mubr.f32.mxu0 0.0
    %779 = vmatmul.mubr.f32.gmra.mxu0 0.0
    %v780 = vpop.f32.mrf.mxu0
    %v781 = vadd.f32 0.0, %v780
    %v782 = vpop.f32.mrf.mxu0
    %v783 = vadd.f32 0.0, %v782
    %784 = vdwg.mxu0
    %v785 = vadd.f32 %v639, %v710
    %v786 = vadd.f32 %v640, %v712
    %v787 = vadd.f32 %v641, %v781
    %v788 = vadd.f32 %v642, %v783
    %v789 = vxor.u32 %v785, 2147483648
    %v790 = vmul.f32 %v789, 1.442695
    %v791 = vpow.pop %v790
    %v792 = vadd.f32 %v791, 1.0
    %v793 = vrcp.pop %v792
    %v794 = vmul.f32 1.0, %v793
    %v795 = vxor.u32 %v786, 2147483648
    %v796 = vmul.f32 %v795, 1.442695
    %v797 = vpow.pop %v796
    %v798 = vadd.f32 %v797, 1.0
    %v799 = vrcp.pop %v798
    %v800 = vmul.f32 1.0, %v799
    %v801 = vtanh.pop %v787
    %v802 = vxor.u32 %v788, 2147483648
    %v803 = vmul.f32 %v802, 1.442695
    %v804 = vpow.pop %v803
    %v805 = vadd.f32 %v804, 1.0
    %v806 = vrcp.pop %v805
    %v807 = vmul.f32 1.0, %v806
    %v808 = vmul.f32 %v800, 0.0
    %v809 = vmul.f32 %v794, %v801
    %v810 = vadd.f32 %v808, %v809
    %v811 = vtanh.pop %v810
    %v812 = vmul.f32 %v807, %v811
    %813 = vst [vmem:[#allocation3] sm:$0x3] %v812
    %s814 = scalar_lea.vmem [#allocation2], 48
    %v815 = vld [vmem:[%s814] sm:$0xff]
    %s816 = scalar_lea.vmem [#allocation2], 8
    %v817 = vld [vmem:[%s816] sm:$0xff]
    %v819 = vcombine.high %v815, %v815
    %v821 = vunpack.c.l.s4 1983009808
    %v822 = vunpack.c.0.s8 %v821
    %v823 = vlaneseq
    %v824 = vshrl.u32 %v823, 7
    %v825 = vsub.s32 %v822, %v824
    %v826 = vrot.slane %v815, %v825
    %v828 = vunpack.c.l.s4 1983009808
    %v829 = vunpack.c.0.s8 %v828
    %v830 = vlaneseq
    %v831 = vshrl.u32 %v830, 7
    %v832 = vsub.s32 %v829, %v831
    %v833 = vrot.slane %v819, %v832
    %v834 = vcombine.high %v826, %v826
    %v835 = vcombine.high %v833, %v833
    %v841 = vcombine.high %v817, %v817
    %v843 = vunpack.c.l.s4 1983009808
    %v844 = vunpack.c.0.s8 %v843
    %v845 = vlaneseq
    %v846 = vshrl.u32 %v845, 7
    %v847 = vsub.s32 %v844, %v846
    %v848 = vrot.slane %v817, %v847
    %v850 = vunpack.c.l.s4 1983009808
    %v851 = vunpack.c.0.s8 %v850
    %v852 = vlaneseq
    %v853 = vshrl.u32 %v852, 7
    %v854 = vsub.s32 %v851, %v853
    %v855 = vrot.slane %v841, %v854
    %v856 = vcombine.high %v848, %v848
    %v857 = vcombine.high %v855, %v855
    %v862 = vsel %vm588, %v826, %v848
    %v863 = vsel %vm589, %v834, %v856
    %v864 = vsel %vm590, %v833, %v855
    %v865 = vsel %vm591, %v835, %v857
    %866 = vmatprep.subr.mxu0 %v524
    %867 = vmatpush1.msra.mxu0 %v523
    %868 = vmatprep.subr.mxu0 %v520
    %869 = vmatpush1.msra.mxu0 %v519
    %870 = vmatprep.subr.mxu0 %v516
    %871 = vmatpush1.msra.mxu0 %v515
    %872 = vmatprep.subr.mxu0 %v512
    %873 = vmatpush1.msra.mxu0 %v511
    %874 = vmatprep.subr.mxu0 %v508
    %875 = vmatpush1.msra.mxu0 %v507
    %876 = vmatprep.subr.mxu0 %v504
    %877 = vmatpush1.msra.mxu0 %v503
    %878 = vmatprep.subr.mxu0 %v500
    %879 = vmatpush1.msra.mxu0 %v499
    %880 = vmatprep.subr.mxu0 %v496
    %881 = vmatpush1.msra.mxu0 %v495
    %882 = vmatprep.subr.mxu0 %v492
    %883 = vmatpush1.msra.mxu0 %v491
    %884 = vmatprep.subr.mxu0 %v488
    %885 = vmatpush1.msra.mxu0 %v487
    %886 = vmatprep.subr.mxu0 %v484
    %887 = vmatpush1.msra.mxu0 %v483
    %888 = vmatprep.subr.mxu0 %v480
    %889 = vmatpush1.msra.mxu0 %v479
    %890 = vmatprep.subr.mxu0 %v476
    %891 = vmatpush1.msra.mxu0 %v475
    %892 = vmatprep.subr.mxu0 %v472
    %893 = vmatpush1.msra.mxu0 %v471
    %894 = vmatprep.subr.mxu0 %v468
    %895 = vmatpush1.msra.mxu0 %v467
    %896 = vmatprep.subr.mxu0 %v464
    %897 = vmatpush1.msra.mxu0 %v463
    %898 = vmatprep.subr.mxu0 0.0
    %899 = vmatpush2.msra.mxu0 0.0
    %900 = vmatprep.subr.mxu0 0.0
    %901 = vmatpush2.msra.mxu0 0.0
    %902 = vmatprep.subr.mxu0 0.0
    %903 = vmatpush2.msra.mxu0 0.0
    %904 = vmatprep.subr.mxu0 0.0
    %905 = vmatpush2.msra.mxu0 0.0
    %906 = vmatprep.subr.mxu0 0.0
    %907 = vmatpush2.msra.mxu0 0.0
    %908 = vmatprep.subr.mxu0 0.0
    %909 = vmatpush2.msra.mxu0 0.0
    %910 = vmatprep.subr.mxu0 0.0
    %911 = vmatpush2.msra.mxu0 0.0
    %912 = vmatprep.subr.mxu0 0.0
    %913 = vmatpush2.msra.mxu0 0.0
    %914 = vmatprep.subr.mxu0 0.0
    %915 = vmatpush2.msra.mxu0 0.0
    %916 = vmatprep.subr.mxu0 0.0
    %917 = vmatpush2.msra.mxu0 0.0
    %918 = vmatprep.subr.mxu0 0.0
    %919 = vmatpush2.msra.mxu0 0.0
    %920 = vmatprep.subr.mxu0 0.0
    %921 = vmatpush2.msra.mxu0 0.0
    %922 = vmatprep.subr.mxu0 0.0
    %923 = vmatpush2.msra.mxu0 0.0
    %924 = vmatprep.subr.mxu0 0.0
    %925 = vmatpush2.msra.mxu0 0.0
    %926 = vmatprep.subr.mxu0 0.0
    %927 = vmatpush2.msra.mxu0 0.0
    %928 = vmatprep.subr.mxu0 0.0
    %929 = vmatpush2.msra.mxu0 0.0
    %930 = vmatprep.mubr.f32.mxu0 0.0
    %931 = vmatmul.mubr.f32.gmra.mxu0 %v812
    %v932 = vpop.f32.mrf.mxu0
    %v933 = vadd.f32 0.0, %v932
    %v934 = vpop.f32.mrf.mxu0
    %v935 = vadd.f32 0.0, %v934
    %936 = vdwg.mxu0
    %937 = vmatprep.subr.mxu0 %v526
    %938 = vmatpush1.msra.mxu0 %v525
    %939 = vmatprep.subr.mxu0 %v522
    %940 = vmatpush1.msra.mxu0 %v521
    %941 = vmatprep.subr.mxu0 %v518
    %942 = vmatpush1.msra.mxu0 %v517
    %943 = vmatprep.subr.mxu0 %v514
    %944 = vmatpush1.msra.mxu0 %v513
    %945 = vmatprep.subr.mxu0 %v510
    %946 = vmatpush1.msra.mxu0 %v509
    %947 = vmatprep.subr.mxu0 %v506
    %948 = vmatpush1.msra.mxu0 %v505
    %949 = vmatprep.subr.mxu0 %v502
    %950 = vmatpush1.msra.mxu0 %v501
    %951 = vmatprep.subr.mxu0 %v498
    %952 = vmatpush1.msra.mxu0 %v497
    %953 = vmatprep.subr.mxu0 %v494
    %954 = vmatpush1.msra.mxu0 %v493
    %955 = vmatprep.subr.mxu0 %v490
    %956 = vmatpush1.msra.mxu0 %v489
    %957 = vmatprep.subr.mxu0 %v486
    %958 = vmatpush1.msra.mxu0 %v485
    %959 = vmatprep.subr.mxu0 %v482
    %960 = vmatpush1.msra.mxu0 %v481
    %961 = vmatprep.subr.mxu0 %v478
    %962 = vmatpush1.msra.mxu0 %v477
    %963 = vmatprep.subr.mxu0 %v474
    %964 = vmatpush1.msra.mxu0 %v473
    %965 = vmatprep.subr.mxu0 %v470
    %966 = vmatpush1.msra.mxu0 %v469
    %967 = vmatprep.subr.mxu0 %v466
    %968 = vmatpush1.msra.mxu0 %v465
    %969 = vmatprep.subr.mxu0 0.0
    %970 = vmatpush2.msra.mxu0 0.0
    %971 = vmatprep.subr.mxu0 0.0
    %972 = vmatpush2.msra.mxu0 0.0
    %973 = vmatprep.subr.mxu0 0.0
    %974 = vmatpush2.msra.mxu0 0.0
    %975 = vmatprep.subr.mxu0 0.0
    %976 = vmatpush2.msra.mxu0 0.0
    %977 = vmatprep.subr.mxu0 0.0
    %978 = vmatpush2.msra.mxu0 0.0
    %979 = vmatprep.subr.mxu0 0.0
    %980 = vmatpush2.msra.mxu0 0.0
    %981 = vmatprep.subr.mxu0 0.0
    %982 = vmatpush2.msra.mxu0 0.0
    %983 = vmatprep.subr.mxu0 0.0
    %984 = vmatpush2.msra.mxu0 0.0
    %985 = vmatprep.subr.mxu0 0.0
    %986 = vmatpush2.msra.mxu0 0.0
    %987 = vmatprep.subr.mxu0 0.0
    %988 = vmatpush2.msra.mxu0 0.0
    %989 = vmatprep.subr.mxu0 0.0
    %990 = vmatpush2.msra.mxu0 0.0
    %991 = vmatprep.subr.mxu0 0.0
    %992 = vmatpush2.msra.mxu0 0.0
    %993 = vmatprep.subr.mxu0 0.0
    %994 = vmatpush2.msra.mxu0 0.0
    %995 = vmatprep.subr.mxu0 0.0
    %996 = vmatpush2.msra.mxu0 0.0
    %997 = vmatprep.subr.mxu0 0.0
    %998 = vmatpush2.msra.mxu0 0.0
    %999 = vmatprep.subr.mxu0 0.0
    %1000 = vmatpush2.msra.mxu0 0.0
    %1001 = vmatprep.mubr.f32.mxu0 0.0
    %1002 = vmatmul.mubr.f32.gmra.mxu0 %v812
    %v1003 = vpop.f32.mrf.mxu0
    %v1004 = vadd.f32 0.0, %v1003
    %v1005 = vpop.f32.mrf.mxu0
    %v1006 = vadd.f32 0.0, %v1005
    %1007 = vdwg.mxu0
    %v1008 = vadd.f32 %v862, %v933
    %v1009 = vadd.f32 %v863, %v935
    %v1010 = vadd.f32 %v864, %v1004
    %v1011 = vadd.f32 %v865, %v1006
    %v1012 = vxor.u32 %v1008, 2147483648
    %v1013 = vmul.f32 %v1012, 1.442695
    %v1014 = vpow.pop %v1013
    %v1015 = vadd.f32 %v1014, 1.0
    %v1016 = vrcp.pop %v1015
    %v1017 = vmul.f32 1.0, %v1016
    %v1018 = vxor.u32 %v1009, 2147483648
    %v1019 = vmul.f32 %v1018, 1.442695
    %v1020 = vpow.pop %v1019
    %v1021 = vadd.f32 %v1020, 1.0
    %v1022 = vrcp.pop %v1021
    %v1023 = vmul.f32 1.0, %v1022
    %v1024 = vtanh.pop %v1010
    %v1025 = vxor.u32 %v1011, 2147483648
    %v1026 = vmul.f32 %v1025, 1.442695
    %v1027 = vpow.pop %v1026
    %v1028 = vadd.f32 %v1027, 1.0
    %v1029 = vrcp.pop %v1028
    %v1030 = vmul.f32 1.0, %v1029
    %v1031 = vmul.f32 %v1023, %v810
    %v1032 = vmul.f32 %v1017, %v1024
    %v1033 = vadd.f32 %v1031, %v1032
    %v1034 = vtanh.pop %v1033
    %v1035 = vmul.f32 %v1030, %v1034
    %s1036 = scalar_lea.vmem [#allocation3], 2
    %1037 = vst [vmem:[%s1036] sm:$0x3] %v1035
    %s1038 = scalar_lea.vmem [#allocation2], 40
    %v1039 = vld [vmem:[%s1038] sm:$0xff]
    %s1040 = scalar_lea.vmem [#allocation2], 16
    %v1041 = vld [vmem:[%s1040] sm:$0xff]
    %v1043 = vcombine.high %v1039, %v1039
    %v1045 = vunpack.c.l.s4 1983009808
    %v1046 = vunpack.c.0.s8 %v1045
    %v1047 = vlaneseq
    %v1048 = vshrl.u32 %v1047, 7
    %v1049 = vsub.s32 %v1046, %v1048
    %v1050 = vrot.slane %v1039, %v1049
    %v1052 = vunpack.c.l.s4 1983009808
    %v1053 = vunpack.c.0.s8 %v1052
    %v1054 = vlaneseq
    %v1055 = vshrl.u32 %v1054, 7
    %v1056 = vsub.s32 %v1053, %v1055
    %v1057 = vrot.slane %v1043, %v1056
    %v1058 = vcombine.high %v1050, %v1050
    %v1059 = vcombine.high %v1057, %v1057
    %v1065 = vcombine.high %v1041, %v1041
    %v1067 = vunpack.c.l.s4 1983009808
    %v1068 = vunpack.c.0.s8 %v1067
    %v1069 = vlaneseq
    %v1070 = vshrl.u32 %v1069, 7
    %v1071 = vsub.s32 %v1068, %v1070
    %v1072 = vrot.slane %v1041, %v1071
    %v1074 = vunpack.c.l.s4 1983009808
    %v1075 = vunpack.c.0.s8 %v1074
    %v1076 = vlaneseq
    %v1077 = vshrl.u32 %v1076, 7
    %v1078 = vsub.s32 %v1075, %v1077
    %v1079 = vrot.slane %v1065, %v1078
    %v1080 = vcombine.high %v1072, %v1072
    %v1081 = vcombine.high %v1079, %v1079
    %v1086 = vsel %vm588, %v1050, %v1072
    %v1087 = vsel %vm589, %v1058, %v1080
    %v1088 = vsel %vm590, %v1057, %v1079
    %v1089 = vsel %vm591, %v1059, %v1081
    %1090 = vmatprep.subr.mxu0 %v524
    %1091 = vmatpush1.msra.mxu0 %v523
    %1092 = vmatprep.subr.mxu0 %v520
    %1093 = vmatpush1.msra.mxu0 %v519
    %1094 = vmatprep.subr.mxu0 %v516
    %1095 = vmatpush1.msra.mxu0 %v515
    %1096 = vmatprep.subr.mxu0 %v512
    %1097 = vmatpush1.msra.mxu0 %v511
    %1098 = vmatprep.subr.mxu0 %v508
    %1099 = vmatpush1.msra.mxu0 %v507
    %1100 = vmatprep.subr.mxu0 %v504
    %1101 = vmatpush1.msra.mxu0 %v503
    %1102 = vmatprep.subr.mxu0 %v500
    %1103 = vmatpush1.msra.mxu0 %v499
    %1104 = vmatprep.subr.mxu0 %v496
    %1105 = vmatpush1.msra.mxu0 %v495
    %1106 = vmatprep.subr.mxu0 %v492
    %1107 = vmatpush1.msra.mxu0 %v491
    %1108 = vmatprep.subr.mxu0 %v488
    %1109 = vmatpush1.msra.mxu0 %v487
    %1110 = vmatprep.subr.mxu0 %v484
    %1111 = vmatpush1.msra.mxu0 %v483
    %1112 = vmatprep.subr.mxu0 %v480
    %1113 = vmatpush1.msra.mxu0 %v479
    %1114 = vmatprep.subr.mxu0 %v476
    %1115 = vmatpush1.msra.mxu0 %v475
    %1116 = vmatprep.subr.mxu0 %v472
    %1117 = vmatpush1.msra.mxu0 %v471
    %1118 = vmatprep.subr.mxu0 %v468
    %1119 = vmatpush1.msra.mxu0 %v467
    %1120 = vmatprep.subr.mxu0 %v464
    %1121 = vmatpush1.msra.mxu0 %v463
    %1122 = vmatprep.subr.mxu0 0.0
    %1123 = vmatpush2.msra.mxu0 0.0
    %1124 = vmatprep.subr.mxu0 0.0
    %1125 = vmatpush2.msra.mxu0 0.0
    %1126 = vmatprep.subr.mxu0 0.0
    %1127 = vmatpush2.msra.mxu0 0.0
    %1128 = vmatprep.subr.mxu0 0.0
    %1129 = vmatpush2.msra.mxu0 0.0
    %1130 = vmatprep.subr.mxu0 0.0
    %1131 = vmatpush2.msra.mxu0 0.0
    %1132 = vmatprep.subr.mxu0 0.0
    %1133 = vmatpush2.msra.mxu0 0.0
    %1134 = vmatprep.subr.mxu0 0.0
    %1135 = vmatpush2.msra.mxu0 0.0
    %1136 = vmatprep.subr.mxu0 0.0
    %1137 = vmatpush2.msra.mxu0 0.0
    %1138 = vmatprep.subr.mxu0 0.0
    %1139 = vmatpush2.msra.mxu0 0.0
    %1140 = vmatprep.subr.mxu0 0.0
    %1141 = vmatpush2.msra.mxu0 0.0
    %1142 = vmatprep.subr.mxu0 0.0
    %1143 = vmatpush2.msra.mxu0 0.0
    %1144 = vmatprep.subr.mxu0 0.0
    %1145 = vmatpush2.msra.mxu0 0.0
    %1146 = vmatprep.subr.mxu0 0.0
    %1147 = vmatpush2.msra.mxu0 0.0
    %1148 = vmatprep.subr.mxu0 0.0
    %1149 = vmatpush2.msra.mxu0 0.0
    %1150 = vmatprep.subr.mxu0 0.0
    %1151 = vmatpush2.msra.mxu0 0.0
    %1152 = vmatprep.subr.mxu0 0.0
    %1153 = vmatpush2.msra.mxu0 0.0
    %1154 = vmatprep.mubr.f32.mxu0 0.0
    %1155 = vmatmul.mubr.f32.gmra.mxu0 %v1035
    %v1156 = vpop.f32.mrf.mxu0
    %v1157 = vadd.f32 0.0, %v1156
    %v1158 = vpop.f32.mrf.mxu0
    %v1159 = vadd.f32 0.0, %v1158
    %1160 = vdwg.mxu0
    %1161 = vmatprep.subr.mxu0 %v526
    %1162 = vmatpush1.msra.mxu0 %v525
    %1163 = vmatprep.subr.mxu0 %v522
    %1164 = vmatpush1.msra.mxu0 %v521
    %1165 = vmatprep.subr.mxu0 %v518
    %1166 = vmatpush1.msra.mxu0 %v517
    %1167 = vmatprep.subr.mxu0 %v514
    %1168 = vmatpush1.msra.mxu0 %v513
    %1169 = vmatprep.subr.mxu0 %v510
    %1170 = vmatpush1.msra.mxu0 %v509
    %1171 = vmatprep.subr.mxu0 %v506
    %1172 = vmatpush1.msra.mxu0 %v505
    %1173 = vmatprep.subr.mxu0 %v502
    %1174 = vmatpush1.msra.mxu0 %v501
    %1175 = vmatprep.subr.mxu0 %v498
    %1176 = vmatpush1.msra.mxu0 %v497
    %1177 = vmatprep.subr.mxu0 %v494
    %1178 = vmatpush1.msra.mxu0 %v493
    %1179 = vmatprep.subr.mxu0 %v490
    %1180 = vmatpush1.msra.mxu0 %v489
    %1181 = vmatprep.subr.mxu0 %v486
    %1182 = vmatpush1.msra.mxu0 %v485
    %1183 = vmatprep.subr.mxu0 %v482
    %1184 = vmatpush1.msra.mxu0 %v481
    %1185 = vmatprep.subr.mxu0 %v478
    %1186 = vmatpush1.msra.mxu0 %v477
    %1187 = vmatprep.subr.mxu0 %v474
    %1188 = vmatpush1.msra.mxu0 %v473
    %1189 = vmatprep.subr.mxu0 %v470
    %1190 = vmatpush1.msra.mxu0 %v469
    %1191 = vmatprep.subr.mxu0 %v466
    %1192 = vmatpush1.msra.mxu0 %v465
    %1193 = vmatprep.subr.mxu0 0.0
    %1194 = vmatpush2.msra.mxu0 0.0
    %1195 = vmatprep.subr.mxu0 0.0
    %1196 = vmatpush2.msra.mxu0 0.0
    %1197 = vmatprep.subr.mxu0 0.0
    %1198 = vmatpush2.msra.mxu0 0.0
    %1199 = vmatprep.subr.mxu0 0.0
    %1200 = vmatpush2.msra.mxu0 0.0
    %1201 = vmatprep.subr.mxu0 0.0
    %1202 = vmatpush2.msra.mxu0 0.0
    %1203 = vmatprep.subr.mxu0 0.0
    %1204 = vmatpush2.msra.mxu0 0.0
    %1205 = vmatprep.subr.mxu0 0.0
    %1206 = vmatpush2.msra.mxu0 0.0
    %1207 = vmatprep.subr.mxu0 0.0
    %1208 = vmatpush2.msra.mxu0 0.0
    %1209 = vmatprep.subr.mxu0 0.0
    %1210 = vmatpush2.msra.mxu0 0.0
    %1211 = vmatprep.subr.mxu0 0.0
    %1212 = vmatpush2.msra.mxu0 0.0
    %1213 = vmatprep.subr.mxu0 0.0
    %1214 = vmatpush2.msra.mxu0 0.0
    %1215 = vmatprep.subr.mxu0 0.0
    %1216 = vmatpush2.msra.mxu0 0.0
    %1217 = vmatprep.subr.mxu0 0.0
    %1218 = vmatpush2.msra.mxu0 0.0
    %1219 = vmatprep.subr.mxu0 0.0
    %1220 = vmatpush2.msra.mxu0 0.0
    %1221 = vmatprep.subr.mxu0 0.0
    %1222 = vmatpush2.msra.mxu0 0.0
    %1223 = vmatprep.subr.mxu0 0.0
    %1224 = vmatpush2.msra.mxu0 0.0
    %1225 = vmatprep.mubr.f32.mxu0 0.0
    %1226 = vmatmul.mubr.f32.gmra.mxu0 %v1035
    %v1227 = vpop.f32.mrf.mxu0
    %v1228 = vadd.f32 0.0, %v1227
    %v1229 = vpop.f32.mrf.mxu0
    %v1230 = vadd.f32 0.0, %v1229
    %1231 = vdwg.mxu0
    %v1232 = vadd.f32 %v1086, %v1157
    %v1233 = vadd.f32 %v1087, %v1159
    %v1234 = vadd.f32 %v1088, %v1228
    %v1235 = vadd.f32 %v1089, %v1230
    %v1236 = vxor.u32 %v1232, 2147483648
    %v1237 = vmul.f32 %v1236, 1.442695
    %v1238 = vpow.pop %v1237
    %v1239 = vadd.f32 %v1238, 1.0
    %v1240 = vrcp.pop %v1239
    %v1241 = vmul.f32 1.0, %v1240
    %v1242 = vxor.u32 %v1233, 2147483648
    %v1243 = vmul.f32 %v1242, 1.442695
    %v1244 = vpow.pop %v1243
    %v1245 = vadd.f32 %v1244, 1.0
    %v1246 = vrcp.pop %v1245
    %v1247 = vmul.f32 1.0, %v1246
    %v1248 = vtanh.pop %v1234
    %v1249 = vxor.u32 %v1235, 2147483648
    %v1250 = vmul.f32 %v1249, 1.442695
    %v1251 = vpow.pop %v1250
    %v1252 = vadd.f32 %v1251, 1.0
    %v1253 = vrcp.pop %v1252
    %v1254 = vmul.f32 1.0, %v1253
    %v1255 = vmul.f32 %v1247, %v1033
    %v1256 = vmul.f32 %v1241, %v1248
    %v1257 = vadd.f32 %v1255, %v1256
    %v1258 = vtanh.pop %v1257
    %v1259 = vmul.f32 %v1254, %v1258
    %s1260 = scalar_lea.vmem [#allocation3], 4
    %1261 = vst [vmem:[%s1260] sm:$0x3] %v1259
    %s1262 = scalar_lea.vmem [#allocation2], 32
    %v1263 = vld [vmem:[%s1262] sm:$0xff]
    %s1264 = scalar_lea.vmem [#allocation2], 24
    %v1265 = vld [vmem:[%s1264] sm:$0xff]
    %v1267 = vcombine.high %v1263, %v1263
    %v1269 = vunpack.c.l.s4 1983009808
    %v1270 = vunpack.c.0.s8 %v1269
    %v1271 = vlaneseq
    %v1272 = vshrl.u32 %v1271, 7
    %v1273 = vsub.s32 %v1270, %v1272
    %v1274 = vrot.slane %v1263, %v1273
    %v1276 = vunpack.c.l.s4 1983009808
    %v1277 = vunpack.c.0.s8 %v1276
    %v1278 = vlaneseq
    %v1279 = vshrl.u32 %v1278, 7
    %v1280 = vsub.s32 %v1277, %v1279
    %v1281 = vrot.slane %v1267, %v1280
    %v1282 = vcombine.high %v1274, %v1274
    %v1283 = vcombine.high %v1281, %v1281
    %v1289 = vcombine.high %v1265, %v1265
    %v1291 = vunpack.c.l.s4 1983009808
    %v1292 = vunpack.c.0.s8 %v1291
    %v1293 = vlaneseq
    %v1294 = vshrl.u32 %v1293, 7
    %v1295 = vsub.s32 %v1292, %v1294
    %v1296 = vrot.slane %v1265, %v1295
    %v1298 = vunpack.c.l.s4 1983009808
    %v1299 = vunpack.c.0.s8 %v1298
    %v1300 = vlaneseq
    %v1301 = vshrl.u32 %v1300, 7
    %v1302 = vsub.s32 %v1299, %v1301
    %v1303 = vrot.slane %v1289, %v1302
    %v1304 = vcombine.high %v1296, %v1296
    %v1305 = vcombine.high %v1303, %v1303
    %v1310 = vsel %vm588, %v1274, %v1296
    %v1311 = vsel %vm589, %v1282, %v1304
    %v1312 = vsel %vm590, %v1281, %v1303
    %v1313 = vsel %vm591, %v1283, %v1305
    %1314 = vmatprep.subr.mxu0 %v524
    %1315 = vmatpush1.msra.mxu0 %v523
    %1316 = vmatprep.subr.mxu0 %v520
    %1317 = vmatpush1.msra.mxu0 %v519
    %1318 = vmatprep.subr.mxu0 %v516
    %1319 = vmatpush1.msra.mxu0 %v515
    %1320 = vmatprep.subr.mxu0 %v512
    %1321 = vmatpush1.msra.mxu0 %v511
    %1322 = vmatprep.subr.mxu0 %v508
    %1323 = vmatpush1.msra.mxu0 %v507
    %1324 = vmatprep.subr.mxu0 %v504
    %1325 = vmatpush1.msra.mxu0 %v503
    %1326 = vmatprep.subr.mxu0 %v500
    %1327 = vmatpush1.msra.mxu0 %v499
    %1328 = vmatprep.subr.mxu0 %v496
    %1329 = vmatpush1.msra.mxu0 %v495
    %1330 = vmatprep.subr.mxu0 %v492
    %1331 = vmatpush1.msra.mxu0 %v491
    %1332 = vmatprep.subr.mxu0 %v488
    %1333 = vmatpush1.msra.mxu0 %v487
    %1334 = vmatprep.subr.mxu0 %v484
    %1335 = vmatpush1.msra.mxu0 %v483
    %1336 = vmatprep.subr.mxu0 %v480
    %1337 = vmatpush1.msra.mxu0 %v479
    %1338 = vmatprep.subr.mxu0 %v476
    %1339 = vmatpush1.msra.mxu0 %v475
    %1340 = vmatprep.subr.mxu0 %v472
    %1341 = vmatpush1.msra.mxu0 %v471
    %1342 = vmatprep.subr.mxu0 %v468
    %1343 = vmatpush1.msra.mxu0 %v467
    %1344 = vmatprep.subr.mxu0 %v464
    %1345 = vmatpush1.msra.mxu0 %v463
    %1346 = vmatprep.subr.mxu0 0.0
    %1347 = vmatpush2.msra.mxu0 0.0
    %1348 = vmatprep.subr.mxu0 0.0
    %1349 = vmatpush2.msra.mxu0 0.0
    %1350 = vmatprep.subr.mxu0 0.0
    %1351 = vmatpush2.msra.mxu0 0.0
    %1352 = vmatprep.subr.mxu0 0.0
    %1353 = vmatpush2.msra.mxu0 0.0
    %1354 = vmatprep.subr.mxu0 0.0
    %1355 = vmatpush2.msra.mxu0 0.0
    %1356 = vmatprep.subr.mxu0 0.0
    %1357 = vmatpush2.msra.mxu0 0.0
    %1358 = vmatprep.subr.mxu0 0.0
    %1359 = vmatpush2.msra.mxu0 0.0
    %1360 = vmatprep.subr.mxu0 0.0
    %1361 = vmatpush2.msra.mxu0 0.0
    %1362 = vmatprep.subr.mxu0 0.0
    %1363 = vmatpush2.msra.mxu0 0.0
    %1364 = vmatprep.subr.mxu0 0.0
    %1365 = vmatpush2.msra.mxu0 0.0
    %1366 = vmatprep.subr.mxu0 0.0
    %1367 = vmatpush2.msra.mxu0 0.0
    %1368 = vmatprep.subr.mxu0 0.0
    %1369 = vmatpush2.msra.mxu0 0.0
    %1370 = vmatprep.subr.mxu0 0.0
    %1371 = vmatpush2.msra.mxu0 0.0
    %1372 = vmatprep.subr.mxu0 0.0
    %1373 = vmatpush2.msra.mxu0 0.0
    %1374 = vmatprep.subr.mxu0 0.0
    %1375 = vmatpush2.msra.mxu0 0.0
    %1376 = vmatprep.subr.mxu0 0.0
    %1377 = vmatpush2.msra.mxu0 0.0
    %1378 = vmatprep.mubr.f32.mxu0 0.0
    %1379 = vmatmul.mubr.f32.gmra.mxu0 %v1259
    %v1380 = vpop.f32.mrf.mxu0
    %v1381 = vadd.f32 0.0, %v1380
    %v1382 = vpop.f32.mrf.mxu0
    %v1383 = vadd.f32 0.0, %v1382
    %1384 = vdwg.mxu0
    %1385 = vmatprep.subr.mxu0 %v526
    %1386 = vmatpush1.msra.mxu0 %v525
    %1387 = vmatprep.subr.mxu0 %v522
    %1388 = vmatpush1.msra.mxu0 %v521
    %1389 = vmatprep.subr.mxu0 %v518
    %1390 = vmatpush1.msra.mxu0 %v517
    %1391 = vmatprep.subr.mxu0 %v514
    %1392 = vmatpush1.msra.mxu0 %v513
    %1393 = vmatprep.subr.mxu0 %v510
    %1394 = vmatpush1.msra.mxu0 %v509
    %1395 = vmatprep.subr.mxu0 %v506
    %1396 = vmatpush1.msra.mxu0 %v505
    %1397 = vmatprep.subr.mxu0 %v502
    %1398 = vmatpush1.msra.mxu0 %v501
    %1399 = vmatprep.subr.mxu0 %v498
    %1400 = vmatpush1.msra.mxu0 %v497
    %1401 = vmatprep.subr.mxu0 %v494
    %1402 = vmatpush1.msra.mxu0 %v493
    %1403 = vmatprep.subr.mxu0 %v490
    %1404 = vmatpush1.msra.mxu0 %v489
    %1405 = vmatprep.subr.mxu0 %v486
    %1406 = vmatpush1.msra.mxu0 %v485
    %1407 = vmatprep.subr.mxu0 %v482
    %1408 = vmatpush1.msra.mxu0 %v481
    %1409 = vmatprep.subr.mxu0 %v478
    %1410 = vmatpush1.msra.mxu0 %v477
    %1411 = vmatprep.subr.mxu0 %v474
    %1412 = vmatpush1.msra.mxu0 %v473
    %1413 = vmatprep.subr.mxu0 %v470
    %1414 = vmatpush1.msra.mxu0 %v469
    %1415 = vmatprep.subr.mxu0 %v466
    %1416 = vmatpush1.msra.mxu0 %v465
    %1417 = vmatprep.subr.mxu0 0.0
    %1418 = vmatpush2.msra.mxu0 0.0
    %1419 = vmatprep.subr.mxu0 0.0
    %1420 = vmatpush2.msra.mxu0 0.0
    %1421 = vmatprep.subr.mxu0 0.0
    %1422 = vmatpush2.msra.mxu0 0.0
    %1423 = vmatprep.subr.mxu0 0.0
    %1424 = vmatpush2.msra.mxu0 0.0
    %1425 = vmatprep.subr.mxu0 0.0
    %1426 = vmatpush2.msra.mxu0 0.0
    %1427 = vmatprep.subr.mxu0 0.0
    %1428 = vmatpush2.msra.mxu0 0.0
    %1429 = vmatprep.subr.mxu0 0.0
    %1430 = vmatpush2.msra.mxu0 0.0
    %1431 = vmatprep.subr.mxu0 0.0
    %1432 = vmatpush2.msra.mxu0 0.0
    %1433 = vmatprep.subr.mxu0 0.0
    %1434 = vmatpush2.msra.mxu0 0.0
    %1435 = vmatprep.subr.mxu0 0.0
    %1436 = vmatpush2.msra.mxu0 0.0
    %1437 = vmatprep.subr.mxu0 0.0
    %1438 = vmatpush2.msra.mxu0 0.0
    %1439 = vmatprep.subr.mxu0 0.0
    %1440 = vmatpush2.msra.mxu0 0.0
    %1441 = vmatprep.subr.mxu0 0.0
    %1442 = vmatpush2.msra.mxu0 0.0
    %1443 = vmatprep.subr.mxu0 0.0
    %1444 = vmatpush2.msra.mxu0 0.0
    %1445 = vmatprep.subr.mxu0 0.0
    %1446 = vmatpush2.msra.mxu0 0.0
    %1447 = vmatprep.subr.mxu0 0.0
    %1448 = vmatpush2.msra.mxu0 0.0
    %1449 = vmatprep.mubr.f32.mxu0 0.0
    %1450 = vmatmul.mubr.f32.gmra.mxu0 %v1259
    %v1451 = vpop.f32.mrf.mxu0
    %v1452 = vadd.f32 0.0, %v1451
    %v1453 = vpop.f32.mrf.mxu0
    %v1454 = vadd.f32 0.0, %v1453
    %1455 = vdwg.mxu0
    %v1456 = vadd.f32 %v1310, %v1381
    %v1457 = vadd.f32 %v1311, %v1383
    %v1458 = vadd.f32 %v1312, %v1452
    %v1459 = vadd.f32 %v1313, %v1454
    %v1460 = vxor.u32 %v1456, 2147483648
    %v1461 = vmul.f32 %v1460, 1.442695
    %v1462 = vpow.pop %v1461
    %v1463 = vadd.f32 %v1462, 1.0
    %v1464 = vrcp.pop %v1463
    %v1465 = vmul.f32 1.0, %v1464
    %v1466 = vxor.u32 %v1457, 2147483648
    %v1467 = vmul.f32 %v1466, 1.442695
    %v1468 = vpow.pop %v1467
    %v1469 = vadd.f32 %v1468, 1.0
    %v1470 = vrcp.pop %v1469
    %v1471 = vmul.f32 1.0, %v1470
    %v1472 = vtanh.pop %v1458
    %v1473 = vxor.u32 %v1459, 2147483648
    %v1474 = vmul.f32 %v1473, 1.442695
    %v1475 = vpow.pop %v1474
    %v1476 = vadd.f32 %v1475, 1.0
    %v1477 = vrcp.pop %v1476
    %v1478 = vmul.f32 1.0, %v1477
    %v1479 = vmul.f32 %v1471, %v1257
    %v1480 = vmul.f32 %v1465, %v1472
    %v1481 = vadd.f32 %v1479, %v1480
    %v1482 = vtanh.pop %v1481
    %v1483 = vmul.f32 %v1478, %v1482
    %s1484 = scalar_lea.vmem [#allocation3], 6
    %1485 = vst [vmem:[%s1484] sm:$0x3] %v1483
    %v1486 = vld [vmem:[%s1264] sm:$0xff]
    %v1487 = vld [vmem:[%s1262] sm:$0xff]
    %v1489 = vcombine.high %v1486, %v1486
    %v1491 = vunpack.c.l.s4 1983009808
    %v1492 = vunpack.c.0.s8 %v1491
    %v1493 = vlaneseq
    %v1494 = vshrl.u32 %v1493, 7
    %v1495 = vsub.s32 %v1492, %v1494
    %v1496 = vrot.slane %v1486, %v1495
    %v1498 = vunpack.c.l.s4 1983009808
    %v1499 = vunpack.c.0.s8 %v1498
    %v1500 = vlaneseq
    %v1501 = vshrl.u32 %v1500, 7
    %v1502 = vsub.s32 %v1499, %v1501
    %v1503 = vrot.slane %v1489, %v1502
    %v1504 = vcombine.high %v1496, %v1496
    %v1505 = vcombine.high %v1503, %v1503
    %v1511 = vcombine.high %v1487, %v1487
    %v1513 = vunpack.c.l.s4 1983009808
    %v1514 = vunpack.c.0.s8 %v1513
    %v1515 = vlaneseq
    %v1516 = vshrl.u32 %v1515, 7
    %v1517 = vsub.s32 %v1514, %v1516
    %v1518 = vrot.slane %v1487, %v1517
    %v1520 = vunpack.c.l.s4 1983009808
    %v1521 = vunpack.c.0.s8 %v1520
    %v1522 = vlaneseq
    %v1523 = vshrl.u32 %v1522, 7
    %v1524 = vsub.s32 %v1521, %v1523
    %v1525 = vrot.slane %v1511, %v1524
    %v1526 = vcombine.high %v1518, %v1518
    %v1527 = vcombine.high %v1525, %v1525
    %v1532 = vsel %vm588, %v1496, %v1518
    %v1533 = vsel %vm589, %v1504, %v1526
    %v1534 = vsel %vm590, %v1503, %v1525
    %v1535 = vsel %vm591, %v1505, %v1527
    %1536 = vmatprep.subr.mxu0 %v524
    %1537 = vmatpush1.msra.mxu0 %v523
    %1538 = vmatprep.subr.mxu0 %v520
    %1539 = vmatpush1.msra.mxu0 %v519
    %1540 = vmatprep.subr.mxu0 %v516
    %1541 = vmatpush1.msra.mxu0 %v515
    %1542 = vmatprep.subr.mxu0 %v512
    %1543 = vmatpush1.msra.mxu0 %v511
    %1544 = vmatprep.subr.mxu0 %v508
    %1545 = vmatpush1.msra.mxu0 %v507
    %1546 = vmatprep.subr.mxu0 %v504
    %1547 = vmatpush1.msra.mxu0 %v503
    %1548 = vmatprep.subr.mxu0 %v500
    %1549 = vmatpush1.msra.mxu0 %v499
    %1550 = vmatprep.subr.mxu0 %v496
    %1551 = vmatpush1.msra.mxu0 %v495
    %1552 = vmatprep.subr.mxu0 %v492
    %1553 = vmatpush1.msra.mxu0 %v491
    %1554 = vmatprep.subr.mxu0 %v488
    %1555 = vmatpush1.msra.mxu0 %v487
    %1556 = vmatprep.subr.mxu0 %v484
    %1557 = vmatpush1.msra.mxu0 %v483
    %1558 = vmatprep.subr.mxu0 %v480
    %1559 = vmatpush1.msra.mxu0 %v479
    %1560 = vmatprep.subr.mxu0 %v476
    %1561 = vmatpush1.msra.mxu0 %v475
    %1562 = vmatprep.subr.mxu0 %v472
    %1563 = vmatpush1.msra.mxu0 %v471
    %1564 = vmatprep.subr.mxu0 %v468
    %1565 = vmatpush1.msra.mxu0 %v467
    %1566 = vmatprep.subr.mxu0 %v464
    %1567 = vmatpush1.msra.mxu0 %v463
    %1568 = vmatprep.subr.mxu0 0.0
    %1569 = vmatpush2.msra.mxu0 0.0
    %1570 = vmatprep.subr.mxu0 0.0
    %1571 = vmatpush2.msra.mxu0 0.0
    %1572 = vmatprep.subr.mxu0 0.0
    %1573 = vmatpush2.msra.mxu0 0.0
    %1574 = vmatprep.subr.mxu0 0.0
    %1575 = vmatpush2.msra.mxu0 0.0
    %1576 = vmatprep.subr.mxu0 0.0
    %1577 = vmatpush2.msra.mxu0 0.0
    %1578 = vmatprep.subr.mxu0 0.0
    %1579 = vmatpush2.msra.mxu0 0.0
    %1580 = vmatprep.subr.mxu0 0.0
    %1581 = vmatpush2.msra.mxu0 0.0
    %1582 = vmatprep.subr.mxu0 0.0
    %1583 = vmatpush2.msra.mxu0 0.0
    %1584 = vmatprep.subr.mxu0 0.0
    %1585 = vmatpush2.msra.mxu0 0.0
    %1586 = vmatprep.subr.mxu0 0.0
    %1587 = vmatpush2.msra.mxu0 0.0
    %1588 = vmatprep.subr.mxu0 0.0
    %1589 = vmatpush2.msra.mxu0 0.0
    %1590 = vmatprep.subr.mxu0 0.0
    %1591 = vmatpush2.msra.mxu0 0.0
    %1592 = vmatprep.subr.mxu0 0.0
    %1593 = vmatpush2.msra.mxu0 0.0
    %1594 = vmatprep.subr.mxu0 0.0
    %1595 = vmatpush2.msra.mxu0 0.0
    %1596 = vmatprep.subr.mxu0 0.0
    %1597 = vmatpush2.msra.mxu0 0.0
    %1598 = vmatprep.subr.mxu0 0.0
    %1599 = vmatpush2.msra.mxu0 0.0
    %1600 = vmatprep.mubr.f32.mxu0 0.0
    %1601 = vmatmul.mubr.f32.gmra.mxu0 %v1483
    %v1602 = vpop.f32.mrf.mxu0
    %v1603 = vadd.f32 0.0, %v1602
    %v1604 = vpop.f32.mrf.mxu0
    %v1605 = vadd.f32 0.0, %v1604
    %1606 = vdwg.mxu0
    %1607 = vmatprep.subr.mxu0 %v526
    %1608 = vmatpush1.msra.mxu0 %v525
    %1609 = vmatprep.subr.mxu0 %v522
    %1610 = vmatpush1.msra.mxu0 %v521
    %1611 = vmatprep.subr.mxu0 %v518
    %1612 = vmatpush1.msra.mxu0 %v517
    %1613 = vmatprep.subr.mxu0 %v514
    %1614 = vmatpush1.msra.mxu0 %v513
    %1615 = vmatprep.subr.mxu0 %v510
    %1616 = vmatpush1.msra.mxu0 %v509
    %1617 = vmatprep.subr.mxu0 %v506
    %1618 = vmatpush1.msra.mxu0 %v505
    %1619 = vmatprep.subr.mxu0 %v502
    %1620 = vmatpush1.msra.mxu0 %v501
    %1621 = vmatprep.subr.mxu0 %v498
    %1622 = vmatpush1.msra.mxu0 %v497
    %1623 = vmatprep.subr.mxu0 %v494
    %1624 = vmatpush1.msra.mxu0 %v493
    %1625 = vmatprep.subr.mxu0 %v490
    %1626 = vmatpush1.msra.mxu0 %v489
    %1627 = vmatprep.subr.mxu0 %v486
    %1628 = vmatpush1.msra.mxu0 %v485
    %1629 = vmatprep.subr.mxu0 %v482
    %1630 = vmatpush1.msra.mxu0 %v481
    %1631 = vmatprep.subr.mxu0 %v478
    %1632 = vmatpush1.msra.mxu0 %v477
    %1633 = vmatprep.subr.mxu0 %v474
    %1634 = vmatpush1.msra.mxu0 %v473
    %1635 = vmatprep.subr.mxu0 %v470
    %1636 = vmatpush1.msra.mxu0 %v469
    %1637 = vmatprep.subr.mxu0 %v466
    %1638 = vmatpush1.msra.mxu0 %v465
    %1639 = vmatprep.subr.mxu0 0.0
    %1640 = vmatpush2.msra.mxu0 0.0
    %1641 = vmatprep.subr.mxu0 0.0
    %1642 = vmatpush2.msra.mxu0 0.0
    %1643 = vmatprep.subr.mxu0 0.0
    %1644 = vmatpush2.msra.mxu0 0.0
    %1645 = vmatprep.subr.mxu0 0.0
    %1646 = vmatpush2.msra.mxu0 0.0
    %1647 = vmatprep.subr.mxu0 0.0
    %1648 = vmatpush2.msra.mxu0 0.0
    %1649 = vmatprep.subr.mxu0 0.0
    %1650 = vmatpush2.msra.mxu0 0.0
    %1651 = vmatprep.subr.mxu0 0.0
    %1652 = vmatpush2.msra.mxu0 0.0
    %1653 = vmatprep.subr.mxu0 0.0
    %1654 = vmatpush2.msra.mxu0 0.0
    %1655 = vmatprep.subr.mxu0 0.0
    %1656 = vmatpush2.msra.mxu0 0.0
    %1657 = vmatprep.subr.mxu0 0.0
    %1658 = vmatpush2.msra.mxu0 0.0
    %1659 = vmatprep.subr.mxu0 0.0
    %1660 = vmatpush2.msra.mxu0 0.0
    %1661 = vmatprep.subr.mxu0 0.0
    %1662 = vmatpush2.msra.mxu0 0.0
    %1663 = vmatprep.subr.mxu0 0.0
    %1664 = vmatpush2.msra.mxu0 0.0
    %1665 = vmatprep.subr.mxu0 0.0
    %1666 = vmatpush2.msra.mxu0 0.0
    %1667 = vmatprep.subr.mxu0 0.0
    %1668 = vmatpush2.msra.mxu0 0.0
    %1669 = vmatprep.subr.mxu0 0.0
    %1670 = vmatpush2.msra.mxu0 0.0
    %1671 = vmatprep.mubr.f32.mxu0 0.0
    %1672 = vmatmul.mubr.f32.gmra.mxu0 %v1483
    %v1673 = vpop.f32.mrf.mxu0
    %v1674 = vadd.f32 0.0, %v1673
    %v1675 = vpop.f32.mrf.mxu0
    %v1676 = vadd.f32 0.0, %v1675
    %1677 = vdwg.mxu0
    %v1678 = vadd.f32 %v1532, %v1603
    %v1679 = vadd.f32 %v1533, %v1605
    %v1680 = vadd.f32 %v1534, %v1674
    %v1681 = vadd.f32 %v1535, %v1676
    %v1682 = vxor.u32 %v1678, 2147483648
    %v1683 = vmul.f32 %v1682, 1.442695
    %v1684 = vpow.pop %v1683
    %v1685 = vadd.f32 %v1684, 1.0
    %v1686 = vrcp.pop %v1685
    %v1687 = vmul.f32 1.0, %v1686
    %v1688 = vxor.u32 %v1679, 2147483648
    %v1689 = vmul.f32 %v1688, 1.442695
    %v1690 = vpow.pop %v1689
    %v1691 = vadd.f32 %v1690, 1.0
    %v1692 = vrcp.pop %v1691
    %v1693 = vmul.f32 1.0, %v1692
    %v1694 = vtanh.pop %v1680
    %v1695 = vxor.u32 %v1681, 2147483648
    %v1696 = vmul.f32 %v1695, 1.442695
    %v1697 = vpow.pop %v1696
    %v1698 = vadd.f32 %v1697, 1.0
    %v1699 = vrcp.pop %v1698
    %v1700 = vmul.f32 1.0, %v1699
    %v1701 = vmul.f32 %v1693, %v1481
    %v1702 = vmul.f32 %v1687, %v1694
    %v1703 = vadd.f32 %v1701, %v1702
    %v1704 = vtanh.pop %v1703
    %v1705 = vmul.f32 %v1700, %v1704
    %s1706 = scalar_lea.vmem [#allocation3], 8
    %1707 = vst [vmem:[%s1706] sm:$0x3] %v1705
    %v1708 = vld [vmem:[%s1040] sm:$0xff]
    %v1709 = vld [vmem:[%s1038] sm:$0xff]
    %v1711 = vcombine.high %v1708, %v1708
    %v1713 = vunpack.c.l.s4 1983009808
    %v1714 = vunpack.c.0.s8 %v1713
    %v1715 = vlaneseq
    %v1716 = vshrl.u32 %v1715, 7
    %v1717 = vsub.s32 %v1714, %v1716
    %v1718 = vrot.slane %v1708, %v1717
    %v1720 = vunpack.c.l.s4 1983009808
    %v1721 = vunpack.c.0.s8 %v1720
    %v1722 = vlaneseq
    %v1723 = vshrl.u32 %v1722, 7
    %v1724 = vsub.s32 %v1721, %v1723
    %v1725 = vrot.slane %v1711, %v1724
    %v1726 = vcombine.high %v1718, %v1718
    %v1727 = vcombine.high %v1725, %v1725
    %v1733 = vcombine.high %v1709, %v1709
    %v1735 = vunpack.c.l.s4 1983009808
    %v1736 = vunpack.c.0.s8 %v1735
    %v1737 = vlaneseq
    %v1738 = vshrl.u32 %v1737, 7
    %v1739 = vsub.s32 %v1736, %v1738
    %v1740 = vrot.slane %v1709, %v1739
    %v1742 = vunpack.c.l.s4 1983009808
    %v1743 = vunpack.c.0.s8 %v1742
    %v1744 = vlaneseq
    %v1745 = vshrl.u32 %v1744, 7
    %v1746 = vsub.s32 %v1743, %v1745
    %v1747 = vrot.slane %v1733, %v1746
    %v1748 = vcombine.high %v1740, %v1740
    %v1749 = vcombine.high %v1747, %v1747
    %v1754 = vsel %vm588, %v1718, %v1740
    %v1755 = vsel %vm589, %v1726, %v1748
    %v1756 = vsel %vm590, %v1725, %v1747
    %v1757 = vsel %vm591, %v1727, %v1749
    %1758 = vmatprep.subr.mxu0 %v524
    %1759 = vmatpush1.msra.mxu0 %v523
    %1760 = vmatprep.subr.mxu0 %v520
    %1761 = vmatpush1.msra.mxu0 %v519
    %1762 = vmatprep.subr.mxu0 %v516
    %1763 = vmatpush1.msra.mxu0 %v515
    %1764 = vmatprep.subr.mxu0 %v512
    %1765 = vmatpush1.msra.mxu0 %v511
    %1766 = vmatprep.subr.mxu0 %v508
    %1767 = vmatpush1.msra.mxu0 %v507
    %1768 = vmatprep.subr.mxu0 %v504
    %1769 = vmatpush1.msra.mxu0 %v503
    %1770 = vmatprep.subr.mxu0 %v500
    %1771 = vmatpush1.msra.mxu0 %v499
    %1772 = vmatprep.subr.mxu0 %v496
    %1773 = vmatpush1.msra.mxu0 %v495
    %1774 = vmatprep.subr.mxu0 %v492
    %1775 = vmatpush1.msra.mxu0 %v491
    %1776 = vmatprep.subr.mxu0 %v488
    %1777 = vmatpush1.msra.mxu0 %v487
    %1778 = vmatprep.subr.mxu0 %v484
    %1779 = vmatpush1.msra.mxu0 %v483
    %1780 = vmatprep.subr.mxu0 %v480
    %1781 = vmatpush1.msra.mxu0 %v479
    %1782 = vmatprep.subr.mxu0 %v476
    %1783 = vmatpush1.msra.mxu0 %v475
    %1784 = vmatprep.subr.mxu0 %v472
    %1785 = vmatpush1.msra.mxu0 %v471
    %1786 = vmatprep.subr.mxu0 %v468
    %1787 = vmatpush1.msra.mxu0 %v467
    %1788 = vmatprep.subr.mxu0 %v464
    %1789 = vmatpush1.msra.mxu0 %v463
    %1790 = vmatprep.subr.mxu0 0.0
    %1791 = vmatpush2.msra.mxu0 0.0
    %1792 = vmatprep.subr.mxu0 0.0
    %1793 = vmatpush2.msra.mxu0 0.0
    %1794 = vmatprep.subr.mxu0 0.0
    %1795 = vmatpush2.msra.mxu0 0.0
    %1796 = vmatprep.subr.mxu0 0.0
    %1797 = vmatpush2.msra.mxu0 0.0
    %1798 = vmatprep.subr.mxu0 0.0
    %1799 = vmatpush2.msra.mxu0 0.0
    %1800 = vmatprep.subr.mxu0 0.0
    %1801 = vmatpush2.msra.mxu0 0.0
    %1802 = vmatprep.subr.mxu0 0.0
    %1803 = vmatpush2.msra.mxu0 0.0
    %1804 = vmatprep.subr.mxu0 0.0
    %1805 = vmatpush2.msra.mxu0 0.0
    %1806 = vmatprep.subr.mxu0 0.0
    %1807 = vmatpush2.msra.mxu0 0.0
    %1808 = vmatprep.subr.mxu0 0.0
    %1809 = vmatpush2.msra.mxu0 0.0
    %1810 = vmatprep.subr.mxu0 0.0
    %1811 = vmatpush2.msra.mxu0 0.0
    %1812 = vmatprep.subr.mxu0 0.0
    %1813 = vmatpush2.msra.mxu0 0.0
    %1814 = vmatprep.subr.mxu0 0.0
    %1815 = vmatpush2.msra.mxu0 0.0
    %1816 = vmatprep.subr.mxu0 0.0
    %1817 = vmatpush2.msra.mxu0 0.0
    %1818 = vmatprep.subr.mxu0 0.0
    %1819 = vmatpush2.msra.mxu0 0.0
    %1820 = vmatprep.subr.mxu0 0.0
    %1821 = vmatpush2.msra.mxu0 0.0
    %1822 = vmatprep.mubr.f32.mxu0 0.0
    %1823 = vmatmul.mubr.f32.gmra.mxu0 %v1705
    %v1824 = vpop.f32.mrf.mxu0
    %v1825 = vadd.f32 0.0, %v1824
    %v1826 = vpop.f32.mrf.mxu0
    %v1827 = vadd.f32 0.0, %v1826
    %1828 = vdwg.mxu0
    %1829 = vmatprep.subr.mxu0 %v526
    %1830 = vmatpush1.msra.mxu0 %v525
    %1831 = vmatprep.subr.mxu0 %v522
    %1832 = vmatpush1.msra.mxu0 %v521
    %1833 = vmatprep.subr.mxu0 %v518
    %1834 = vmatpush1.msra.mxu0 %v517
    %1835 = vmatprep.subr.mxu0 %v514
    %1836 = vmatpush1.msra.mxu0 %v513
    %1837 = vmatprep.subr.mxu0 %v510
    %1838 = vmatpush1.msra.mxu0 %v509
    %1839 = vmatprep.subr.mxu0 %v506
    %1840 = vmatpush1.msra.mxu0 %v505
    %1841 = vmatprep.subr.mxu0 %v502
    %1842 = vmatpush1.msra.mxu0 %v501
    %1843 = vmatprep.subr.mxu0 %v498
    %1844 = vmatpush1.msra.mxu0 %v497
    %1845 = vmatprep.subr.mxu0 %v494
    %1846 = vmatpush1.msra.mxu0 %v493
    %1847 = vmatprep.subr.mxu0 %v490
    %1848 = vmatpush1.msra.mxu0 %v489
    %1849 = vmatprep.subr.mxu0 %v486
    %1850 = vmatpush1.msra.mxu0 %v485
    %1851 = vmatprep.subr.mxu0 %v482
    %1852 = vmatpush1.msra.mxu0 %v481
    %1853 = vmatprep.subr.mxu0 %v478
    %1854 = vmatpush1.msra.mxu0 %v477
    %1855 = vmatprep.subr.mxu0 %v474
    %1856 = vmatpush1.msra.mxu0 %v473
    %1857 = vmatprep.subr.mxu0 %v470
    %1858 = vmatpush1.msra.mxu0 %v469
    %1859 = vmatprep.subr.mxu0 %v466
    %1860 = vmatpush1.msra.mxu0 %v465
    %1861 = vmatprep.subr.mxu0 0.0
    %1862 = vmatpush2.msra.mxu0 0.0
    %1863 = vmatprep.subr.mxu0 0.0
    %1864 = vmatpush2.msra.mxu0 0.0
    %1865 = vmatprep.subr.mxu0 0.0
    %1866 = vmatpush2.msra.mxu0 0.0
    %1867 = vmatprep.subr.mxu0 0.0
    %1868 = vmatpush2.msra.mxu0 0.0
    %1869 = vmatprep.subr.mxu0 0.0
    %1870 = vmatpush2.msra.mxu0 0.0
    %1871 = vmatprep.subr.mxu0 0.0
    %1872 = vmatpush2.msra.mxu0 0.0
    %1873 = vmatprep.subr.mxu0 0.0
    %1874 = vmatpush2.msra.mxu0 0.0
    %1875 = vmatprep.subr.mxu0 0.0
    %1876 = vmatpush2.msra.mxu0 0.0
    %1877 = vmatprep.subr.mxu0 0.0
    %1878 = vmatpush2.msra.mxu0 0.0
    %1879 = vmatprep.subr.mxu0 0.0
    %1880 = vmatpush2.msra.mxu0 0.0
    %1881 = vmatprep.subr.mxu0 0.0
    %1882 = vmatpush2.msra.mxu0 0.0
    %1883 = vmatprep.subr.mxu0 0.0
    %1884 = vmatpush2.msra.mxu0 0.0
    %1885 = vmatprep.subr.mxu0 0.0
    %1886 = vmatpush2.msra.mxu0 0.0
    %1887 = vmatprep.subr.mxu0 0.0
    %1888 = vmatpush2.msra.mxu0 0.0
    %1889 = vmatprep.subr.mxu0 0.0
    %1890 = vmatpush2.msra.mxu0 0.0
    %1891 = vmatprep.subr.mxu0 0.0
    %1892 = vmatpush2.msra.mxu0 0.0
    %1893 = vmatprep.mubr.f32.mxu0 0.0
    %1894 = vmatmul.mubr.f32.gmra.mxu0 %v1705
    %v1895 = vpop.f32.mrf.mxu0
    %v1896 = vadd.f32 0.0, %v1895
    %v1897 = vpop.f32.mrf.mxu0
    %v1898 = vadd.f32 0.0, %v1897
    %1899 = vdwg.mxu0
    %v1900 = vadd.f32 %v1754, %v1825
    %v1901 = vadd.f32 %v1755, %v1827
    %v1902 = vadd.f32 %v1756, %v1896
    %v1903 = vadd.f32 %v1757, %v1898
    %v1904 = vxor.u32 %v1900, 2147483648
    %v1905 = vmul.f32 %v1904, 1.442695
    %v1906 = vpow.pop %v1905
    %v1907 = vadd.f32 %v1906, 1.0
    %v1908 = vrcp.pop %v1907
    %v1909 = vmul.f32 1.0, %v1908
    %v1910 = vxor.u32 %v1901, 2147483648
    %v1911 = vmul.f32 %v1910, 1.442695
    %v1912 = vpow.pop %v1911
    %v1913 = vadd.f32 %v1912, 1.0
    %v1914 = vrcp.pop %v1913
    %v1915 = vmul.f32 1.0, %v1914
    %v1916 = vtanh.pop %v1902
    %v1917 = vxor.u32 %v1903, 2147483648
    %v1918 = vmul.f32 %v1917, 1.442695
    %v1919 = vpow.pop %v1918
    %v1920 = vadd.f32 %v1919, 1.0
    %v1921 = vrcp.pop %v1920
    %v1922 = vmul.f32 1.0, %v1921
    %v1923 = vmul.f32 %v1915, %v1703
    %v1924 = vmul.f32 %v1909, %v1916
    %v1925 = vadd.f32 %v1923, %v1924
    %v1926 = vtanh.pop %v1925
    %v1927 = vmul.f32 %v1922, %v1926
    %s1928 = scalar_lea.vmem [#allocation3], 10
    %1929 = vst [vmem:[%s1928] sm:$0x3] %v1927
    %v1930 = vld [vmem:[%s816] sm:$0xff]
    %v1931 = vld [vmem:[%s814] sm:$0xff]
    %v1933 = vcombine.high %v1930, %v1930
    %v1935 = vunpack.c.l.s4 1983009808
    %v1936 = vunpack.c.0.s8 %v1935
    %v1937 = vlaneseq
    %v1938 = vshrl.u32 %v1937, 7
    %v1939 = vsub.s32 %v1936, %v1938
    %v1940 = vrot.slane %v1930, %v1939
    %v1942 = vunpack.c.l.s4 1983009808
    %v1943 = vunpack.c.0.s8 %v1942
    %v1944 = vlaneseq
    %v1945 = vshrl.u32 %v1944, 7
    %v1946 = vsub.s32 %v1943, %v1945
    %v1947 = vrot.slane %v1933, %v1946
    %v1948 = vcombine.high %v1940, %v1940
    %v1949 = vcombine.high %v1947, %v1947
    %v1955 = vcombine.high %v1931, %v1931
    %v1957 = vunpack.c.l.s4 1983009808
    %v1958 = vunpack.c.0.s8 %v1957
    %v1959 = vlaneseq
    %v1960 = vshrl.u32 %v1959, 7
    %v1961 = vsub.s32 %v1958, %v1960
    %v1962 = vrot.slane %v1931, %v1961
    %v1964 = vunpack.c.l.s4 1983009808
    %v1965 = vunpack.c.0.s8 %v1964
    %v1966 = vlaneseq
    %v1967 = vshrl.u32 %v1966, 7
    %v1968 = vsub.s32 %v1965, %v1967
    %v1969 = vrot.slane %v1955, %v1968
    %v1970 = vcombine.high %v1962, %v1962
    %v1971 = vcombine.high %v1969, %v1969
    %v1976 = vsel %vm588, %v1940, %v1962
    %v1977 = vsel %vm589, %v1948, %v1970
    %v1978 = vsel %vm590, %v1947, %v1969
    %v1979 = vsel %vm591, %v1949, %v1971
    %1980 = vmatprep.subr.mxu0 %v524
    %1981 = vmatpush1.msra.mxu0 %v523
    %1982 = vmatprep.subr.mxu0 %v520
    %1983 = vmatpush1.msra.mxu0 %v519
    %1984 = vmatprep.subr.mxu0 %v516
    %1985 = vmatpush1.msra.mxu0 %v515
    %1986 = vmatprep.subr.mxu0 %v512
    %1987 = vmatpush1.msra.mxu0 %v511
    %1988 = vmatprep.subr.mxu0 %v508
    %1989 = vmatpush1.msra.mxu0 %v507
    %1990 = vmatprep.subr.mxu0 %v504
    %1991 = vmatpush1.msra.mxu0 %v503
    %1992 = vmatprep.subr.mxu0 %v500
    %1993 = vmatpush1.msra.mxu0 %v499
    %1994 = vmatprep.subr.mxu0 %v496
    %1995 = vmatpush1.msra.mxu0 %v495
    %1996 = vmatprep.subr.mxu0 %v492
    %1997 = vmatpush1.msra.mxu0 %v491
    %1998 = vmatprep.subr.mxu0 %v488
    %1999 = vmatpush1.msra.mxu0 %v487
    %2000 = vmatprep.subr.mxu0 %v484
    %2001 = vmatpush1.msra.mxu0 %v483
    %2002 = vmatprep.subr.mxu0 %v480
    %2003 = vmatpush1.msra.mxu0 %v479
    %2004 = vmatprep.subr.mxu0 %v476
    %2005 = vmatpush1.msra.mxu0 %v475
    %2006 = vmatprep.subr.mxu0 %v472
    %2007 = vmatpush1.msra.mxu0 %v471
    %2008 = vmatprep.subr.mxu0 %v468
    %2009 = vmatpush1.msra.mxu0 %v467
    %2010 = vmatprep.subr.mxu0 %v464
    %2011 = vmatpush1.msra.mxu0 %v463
    %2012 = vmatprep.subr.mxu0 0.0
    %2013 = vmatpush2.msra.mxu0 0.0
    %2014 = vmatprep.subr.mxu0 0.0
    %2015 = vmatpush2.msra.mxu0 0.0
    %2016 = vmatprep.subr.mxu0 0.0
    %2017 = vmatpush2.msra.mxu0 0.0
    %2018 = vmatprep.subr.mxu0 0.0
    %2019 = vmatpush2.msra.mxu0 0.0
    %2020 = vmatprep.subr.mxu0 0.0
    %2021 = vmatpush2.msra.mxu0 0.0
    %2022 = vmatprep.subr.mxu0 0.0
    %2023 = vmatpush2.msra.mxu0 0.0
    %2024 = vmatprep.subr.mxu0 0.0
    %2025 = vmatpush2.msra.mxu0 0.0
    %2026 = vmatprep.subr.mxu0 0.0
    %2027 = vmatpush2.msra.mxu0 0.0
    %2028 = vmatprep.subr.mxu0 0.0
    %2029 = vmatpush2.msra.mxu0 0.0
    %2030 = vmatprep.subr.mxu0 0.0
    %2031 = vmatpush2.msra.mxu0 0.0
    %2032 = vmatprep.subr.mxu0 0.0
    %2033 = vmatpush2.msra.mxu0 0.0
    %2034 = vmatprep.subr.mxu0 0.0
    %2035 = vmatpush2.msra.mxu0 0.0
    %2036 = vmatprep.subr.mxu0 0.0
    %2037 = vmatpush2.msra.mxu0 0.0
    %2038 = vmatprep.subr.mxu0 0.0
    %2039 = vmatpush2.msra.mxu0 0.0
    %2040 = vmatprep.subr.mxu0 0.0
    %2041 = vmatpush2.msra.mxu0 0.0
    %2042 = vmatprep.subr.mxu0 0.0
    %2043 = vmatpush2.msra.mxu0 0.0
    %2044 = vmatprep.mubr.f32.mxu0 0.0
    %2045 = vmatmul.mubr.f32.gmra.mxu0 %v1927
    %v2046 = vpop.f32.mrf.mxu0
    %v2047 = vadd.f32 0.0, %v2046
    %v2048 = vpop.f32.mrf.mxu0
    %v2049 = vadd.f32 0.0, %v2048
    %2050 = vdwg.mxu0
    %2051 = vmatprep.subr.mxu0 %v526
    %2052 = vmatpush1.msra.mxu0 %v525
    %2053 = vmatprep.subr.mxu0 %v522
    %2054 = vmatpush1.msra.mxu0 %v521
    %2055 = vmatprep.subr.mxu0 %v518
    %2056 = vmatpush1.msra.mxu0 %v517
    %2057 = vmatprep.subr.mxu0 %v514
    %2058 = vmatpush1.msra.mxu0 %v513
    %2059 = vmatprep.subr.mxu0 %v510
    %2060 = vmatpush1.msra.mxu0 %v509
    %2061 = vmatprep.subr.mxu0 %v506
    %2062 = vmatpush1.msra.mxu0 %v505
    %2063 = vmatprep.subr.mxu0 %v502
    %2064 = vmatpush1.msra.mxu0 %v501
    %2065 = vmatprep.subr.mxu0 %v498
    %2066 = vmatpush1.msra.mxu0 %v497
    %2067 = vmatprep.subr.mxu0 %v494
    %2068 = vmatpush1.msra.mxu0 %v493
    %2069 = vmatprep.subr.mxu0 %v490
    %2070 = vmatpush1.msra.mxu0 %v489
    %2071 = vmatprep.subr.mxu0 %v486
    %2072 = vmatpush1.msra.mxu0 %v485
    %2073 = vmatprep.subr.mxu0 %v482
    %2074 = vmatpush1.msra.mxu0 %v481
    %2075 = vmatprep.subr.mxu0 %v478
    %2076 = vmatpush1.msra.mxu0 %v477
    %2077 = vmatprep.subr.mxu0 %v474
    %2078 = vmatpush1.msra.mxu0 %v473
    %2079 = vmatprep.subr.mxu0 %v470
    %2080 = vmatpush1.msra.mxu0 %v469
    %2081 = vmatprep.subr.mxu0 %v466
    %2082 = vmatpush1.msra.mxu0 %v465
    %2083 = vmatprep.subr.mxu0 0.0
    %2084 = vmatpush2.msra.mxu0 0.0
    %2085 = vmatprep.subr.mxu0 0.0
    %2086 = vmatpush2.msra.mxu0 0.0
    %2087 = vmatprep.subr.mxu0 0.0
    %2088 = vmatpush2.msra.mxu0 0.0
    %2089 = vmatprep.subr.mxu0 0.0
    %2090 = vmatpush2.msra.mxu0 0.0
    %2091 = vmatprep.subr.mxu0 0.0
    %2092 = vmatpush2.msra.mxu0 0.0
    %2093 = vmatprep.subr.mxu0 0.0
    %2094 = vmatpush2.msra.mxu0 0.0
    %2095 = vmatprep.subr.mxu0 0.0
    %2096 = vmatpush2.msra.mxu0 0.0
    %2097 = vmatprep.subr.mxu0 0.0
    %2098 = vmatpush2.msra.mxu0 0.0
    %2099 = vmatprep.subr.mxu0 0.0
    %2100 = vmatpush2.msra.mxu0 0.0
    %2101 = vmatprep.subr.mxu0 0.0
    %2102 = vmatpush2.msra.mxu0 0.0
    %2103 = vmatprep.subr.mxu0 0.0
    %2104 = vmatpush2.msra.mxu0 0.0
    %2105 = vmatprep.subr.mxu0 0.0
    %2106 = vmatpush2.msra.mxu0 0.0
    %2107 = vmatprep.subr.mxu0 0.0
    %2108 = vmatpush2.msra.mxu0 0.0
    %2109 = vmatprep.subr.mxu0 0.0
    %2110 = vmatpush2.msra.mxu0 0.0
    %2111 = vmatprep.subr.mxu0 0.0
    %2112 = vmatpush2.msra.mxu0 0.0
    %2113 = vmatprep.subr.mxu0 0.0
    %2114 = vmatpush2.msra.mxu0 0.0
    %2115 = vmatprep.mubr.f32.mxu0 0.0
    %2116 = vmatmul.mubr.f32.gmra.mxu0 %v1927
    %v2117 = vpop.f32.mrf.mxu0
    %v2118 = vadd.f32 0.0, %v2117
    %v2119 = vpop.f32.mrf.mxu0
    %v2120 = vadd.f32 0.0, %v2119
    %2121 = vdwg.mxu0
    %v2122 = vadd.f32 %v1976, %v2047
    %v2123 = vadd.f32 %v1977, %v2049
    %v2124 = vadd.f32 %v1978, %v2118
    %v2125 = vadd.f32 %v1979, %v2120
    %v2126 = vxor.u32 %v2122, 2147483648
    %v2127 = vmul.f32 %v2126, 1.442695
    %v2128 = vpow.pop %v2127
    %v2129 = vadd.f32 %v2128, 1.0
    %v2130 = vrcp.pop %v2129
    %v2131 = vmul.f32 1.0, %v2130
    %v2132 = vxor.u32 %v2123, 2147483648
    %v2133 = vmul.f32 %v2132, 1.442695
    %v2134 = vpow.pop %v2133
    %v2135 = vadd.f32 %v2134, 1.0
    %v2136 = vrcp.pop %v2135
    %v2137 = vmul.f32 1.0, %v2136
    %v2138 = vtanh.pop %v2124
    %v2139 = vxor.u32 %v2125, 2147483648
    %v2140 = vmul.f32 %v2139, 1.442695
    %v2141 = vpow.pop %v2140
    %v2142 = vadd.f32 %v2141, 1.0
    %v2143 = vrcp.pop %v2142
    %v2144 = vmul.f32 1.0, %v2143
    %v2145 = vmul.f32 %v2137, %v1925
    %v2146 = vmul.f32 %v2131, %v2138
    %v2147 = vadd.f32 %v2145, %v2146
    %v2148 = vtanh.pop %v2147
    %v2149 = vmul.f32 %v2144, %v2148
    %s2150 = scalar_lea.vmem [#allocation3], 12
    %2151 = vst [vmem:[%s2150] sm:$0x3] %v2149
    %v2152 = vld [vmem:[#allocation2] sm:$0xff]
    %v2153 = vld [vmem:[%s592] sm:$0xff]
    %v2155 = vcombine.high %v2152, %v2152
    %v2157 = vunpack.c.l.s4 1983009808
    %v2158 = vunpack.c.0.s8 %v2157
    %v2159 = vlaneseq
    %v2160 = vshrl.u32 %v2159, 7
    %v2161 = vsub.s32 %v2158, %v2160
    %v2162 = vrot.slane %v2152, %v2161
    %v2164 = vunpack.c.l.s4 1983009808
    %v2165 = vunpack.c.0.s8 %v2164
    %v2166 = vlaneseq
    %v2167 = vshrl.u32 %v2166, 7
    %v2168 = vsub.s32 %v2165, %v2167
    %v2169 = vrot.slane %v2155, %v2168
    %v2170 = vcombine.high %v2162, %v2162
    %v2171 = vcombine.high %v2169, %v2169
    %v2177 = vcombine.high %v2153, %v2153
    %v2179 = vunpack.c.l.s4 1983009808
    %v2180 = vunpack.c.0.s8 %v2179
    %v2181 = vlaneseq
    %v2182 = vshrl.u32 %v2181, 7
    %v2183 = vsub.s32 %v2180, %v2182
    %v2184 = vrot.slane %v2153, %v2183
    %v2186 = vunpack.c.l.s4 1983009808
    %v2187 = vunpack.c.0.s8 %v2186
    %v2188 = vlaneseq
    %v2189 = vshrl.u32 %v2188, 7
    %v2190 = vsub.s32 %v2187, %v2189
    %v2191 = vrot.slane %v2177, %v2190
    %v2192 = vcombine.high %v2184, %v2184
    %v2193 = vcombine.high %v2191, %v2191
    %v2198 = vsel %vm588, %v2162, %v2184
    %v2199 = vsel %vm589, %v2170, %v2192
    %v2200 = vsel %vm590, %v2169, %v2191
    %v2201 = vsel %vm591, %v2171, %v2193
    %2202 = vmatprep.subr.mxu0 %v524
    %2203 = vmatpush1.msra.mxu0 %v523
    %2204 = vmatprep.subr.mxu0 %v520
    %2205 = vmatpush1.msra.mxu0 %v519
    %2206 = vmatprep.subr.mxu0 %v516
    %2207 = vmatpush1.msra.mxu0 %v515
    %2208 = vmatprep.subr.mxu0 %v512
    %2209 = vmatpush1.msra.mxu0 %v511
    %2210 = vmatprep.subr.mxu0 %v508
    %2211 = vmatpush1.msra.mxu0 %v507
    %2212 = vmatprep.subr.mxu0 %v504
    %2213 = vmatpush1.msra.mxu0 %v503
    %2214 = vmatprep.subr.mxu0 %v500
    %2215 = vmatpush1.msra.mxu0 %v499
    %2216 = vmatprep.subr.mxu0 %v496
    %2217 = vmatpush1.msra.mxu0 %v495
    %2218 = vmatprep.subr.mxu0 %v492
    %2219 = vmatpush1.msra.mxu0 %v491
    %2220 = vmatprep.subr.mxu0 %v488
    %2221 = vmatpush1.msra.mxu0 %v487
    %2222 = vmatprep.subr.mxu0 %v484
    %2223 = vmatpush1.msra.mxu0 %v483
    %2224 = vmatprep.subr.mxu0 %v480
    %2225 = vmatpush1.msra.mxu0 %v479
    %2226 = vmatprep.subr.mxu0 %v476
    %2227 = vmatpush1.msra.mxu0 %v475
    %2228 = vmatprep.subr.mxu0 %v472
    %2229 = vmatpush1.msra.mxu0 %v471
    %2230 = vmatprep.subr.mxu0 %v468
    %2231 = vmatpush1.msra.mxu0 %v467
    %2232 = vmatprep.subr.mxu0 %v464
    %2233 = vmatpush1.msra.mxu0 %v463
    %2234 = vmatprep.subr.mxu0 0.0
    %2235 = vmatpush2.msra.mxu0 0.0
    %2236 = vmatprep.subr.mxu0 0.0
    %2237 = vmatpush2.msra.mxu0 0.0
    %2238 = vmatprep.subr.mxu0 0.0
    %2239 = vmatpush2.msra.mxu0 0.0
    %2240 = vmatprep.subr.mxu0 0.0
    %2241 = vmatpush2.msra.mxu0 0.0
    %2242 = vmatprep.subr.mxu0 0.0
    %2243 = vmatpush2.msra.mxu0 0.0
    %2244 = vmatprep.subr.mxu0 0.0
    %2245 = vmatpush2.msra.mxu0 0.0
    %2246 = vmatprep.subr.mxu0 0.0
    %2247 = vmatpush2.msra.mxu0 0.0
    %2248 = vmatprep.subr.mxu0 0.0
    %2249 = vmatpush2.msra.mxu0 0.0
    %2250 = vmatprep.subr.mxu0 0.0
    %2251 = vmatpush2.msra.mxu0 0.0
    %2252 = vmatprep.subr.mxu0 0.0
    %2253 = vmatpush2.msra.mxu0 0.0
    %2254 = vmatprep.subr.mxu0 0.0
    %2255 = vmatpush2.msra.mxu0 0.0
    %2256 = vmatprep.subr.mxu0 0.0
    %2257 = vmatpush2.msra.mxu0 0.0
    %2258 = vmatprep.subr.mxu0 0.0
    %2259 = vmatpush2.msra.mxu0 0.0
    %2260 = vmatprep.subr.mxu0 0.0
    %2261 = vmatpush2.msra.mxu0 0.0
    %2262 = vmatprep.subr.mxu0 0.0
    %2263 = vmatpush2.msra.mxu0 0.0
    %2264 = vmatprep.subr.mxu0 0.0
    %2265 = vmatpush2.msra.mxu0 0.0
    %2266 = vmatprep.mubr.f32.mxu0 0.0
    %2267 = vmatmul.mubr.f32.gmra.mxu0 %v2149
    %v2268 = vpop.f32.mrf.mxu0
    %v2269 = vadd.f32 0.0, %v2268
    %v2270 = vpop.f32.mrf.mxu0
    %v2271 = vadd.f32 0.0, %v2270
    %2272 = vdwg.mxu0
    %2273 = vmatprep.subr.mxu0 %v526
    %2274 = vmatpush1.msra.mxu0 %v525
    %2275 = vmatprep.subr.mxu0 %v522
    %2276 = vmatpush1.msra.mxu0 %v521
    %2277 = vmatprep.subr.mxu0 %v518
    %2278 = vmatpush1.msra.mxu0 %v517
    %2279 = vmatprep.subr.mxu0 %v514
    %2280 = vmatpush1.msra.mxu0 %v513
    %2281 = vmatprep.subr.mxu0 %v510
    %2282 = vmatpush1.msra.mxu0 %v509
    %2283 = vmatprep.subr.mxu0 %v506
    %2284 = vmatpush1.msra.mxu0 %v505
    %2285 = vmatprep.subr.mxu0 %v502
    %2286 = vmatpush1.msra.mxu0 %v501
    %2287 = vmatprep.subr.mxu0 %v498
    %2288 = vmatpush1.msra.mxu0 %v497
    %2289 = vmatprep.subr.mxu0 %v494
    %2290 = vmatpush1.msra.mxu0 %v493
    %2291 = vmatprep.subr.mxu0 %v490
    %2292 = vmatpush1.msra.mxu0 %v489
    %2293 = vmatprep.subr.mxu0 %v486
    %2294 = vmatpush1.msra.mxu0 %v485
    %2295 = vmatprep.subr.mxu0 %v482
    %2296 = vmatpush1.msra.mxu0 %v481
    %2297 = vmatprep.subr.mxu0 %v478
    %2298 = vmatpush1.msra.mxu0 %v477
    %2299 = vmatprep.subr.mxu0 %v474
    %2300 = vmatpush1.msra.mxu0 %v473
    %2301 = vmatprep.subr.mxu0 %v470
    %2302 = vmatpush1.msra.mxu0 %v469
    %2303 = vmatprep.subr.mxu0 %v466
    %2304 = vmatpush1.msra.mxu0 %v465
    %2305 = vmatprep.subr.mxu0 0.0
    %2306 = vmatpush2.msra.mxu0 0.0
    %2307 = vmatprep.subr.mxu0 0.0
    %2308 = vmatpush2.msra.mxu0 0.0
    %2309 = vmatprep.subr.mxu0 0.0
    %2310 = vmatpush2.msra.mxu0 0.0
    %2311 = vmatprep.subr.mxu0 0.0
    %2312 = vmatpush2.msra.mxu0 0.0
    %2313 = vmatprep.subr.mxu0 0.0
    %2314 = vmatpush2.msra.mxu0 0.0
    %2315 = vmatprep.subr.mxu0 0.0
    %2316 = vmatpush2.msra.mxu0 0.0
    %2317 = vmatprep.subr.mxu0 0.0
    %2318 = vmatpush2.msra.mxu0 0.0
    %2319 = vmatprep.subr.mxu0 0.0
    %2320 = vmatpush2.msra.mxu0 0.0
    %2321 = vmatprep.subr.mxu0 0.0
    %2322 = vmatpush2.msra.mxu0 0.0
    %2323 = vmatprep.subr.mxu0 0.0
    %2324 = vmatpush2.msra.mxu0 0.0
    %2325 = vmatprep.subr.mxu0 0.0
    %2326 = vmatpush2.msra.mxu0 0.0
    %2327 = vmatprep.subr.mxu0 0.0
    %2328 = vmatpush2.msra.mxu0 0.0
    %2329 = vmatprep.subr.mxu0 0.0
    %2330 = vmatpush2.msra.mxu0 0.0
    %2331 = vmatprep.subr.mxu0 0.0
    %2332 = vmatpush2.msra.mxu0 0.0
    %2333 = vmatprep.subr.mxu0 0.0
    %2334 = vmatpush2.msra.mxu0 0.0
    %2335 = vmatprep.subr.mxu0 0.0
    %2336 = vmatpush2.msra.mxu0 0.0
    %2337 = vmatprep.mubr.f32.mxu0 0.0
    %2338 = vmatmul.mubr.f32.gmra.mxu0 %v2149
    %v2339 = vpop.f32.mrf.mxu0
    %v2340 = vadd.f32 0.0, %v2339
    %v2341 = vpop.f32.mrf.mxu0
    %v2342 = vadd.f32 0.0, %v2341
    %2343 = vdwg.mxu0
    %v2344 = vadd.f32 %v2198, %v2269
    %v2345 = vadd.f32 %v2199, %v2271
    %v2346 = vadd.f32 %v2200, %v2340
    %v2347 = vadd.f32 %v2201, %v2342
    %v2348 = vxor.u32 %v2344, 2147483648
    %v2349 = vmul.f32 %v2348, 1.442695
    %v2350 = vpow.pop %v2349
    %v2351 = vadd.f32 %v2350, 1.0
    %v2352 = vrcp.pop %v2351
    %v2353 = vmul.f32 1.0, %v2352
    %v2354 = vxor.u32 %v2345, 2147483648
    %v2355 = vmul.f32 %v2354, 1.442695
    %v2356 = vpow.pop %v2355
    %v2357 = vadd.f32 %v2356, 1.0
    %v2358 = vrcp.pop %v2357
    %v2359 = vmul.f32 1.0, %v2358
    %v2360 = vtanh.pop %v2346
    %v2361 = vxor.u32 %v2347, 2147483648
    %v2362 = vmul.f32 %v2361, 1.442695
    %v2363 = vpow.pop %v2362
    %v2364 = vadd.f32 %v2363, 1.0
    %v2365 = vrcp.pop %v2364
    %v2366 = vmul.f32 1.0, %v2365
    %v2367 = vmul.f32 %v2359, %v2147
    %v2368 = vmul.f32 %v2353, %v2360
    %v2369 = vadd.f32 %v2367, %v2368
    %v2370 = vtanh.pop %v2369
    %v2371 = vmul.f32 %v2366, %v2370
    %s2372 = scalar_lea.vmem [#allocation3], 14
    %2373 = vst [vmem:[%s2372] sm:$0x3] %v2371
    %v2374 = vld [vmem:[#allocation3] sm:$0x3]
    %v2375 = vld [vmem:[#allocation3 + $0x2] sm:$0x3]
    %v2376 = vld [vmem:[#allocation3 + $0x4] sm:$0x3]
    %v2377 = vld [vmem:[#allocation3 + $0x6] sm:$0x3]
    %v2378 = vld [vmem:[#allocation3 + $0x8] sm:$0x3]
    %v2379 = vld [vmem:[#allocation3 + $0xa] sm:$0x3]
    %v2380 = vld [vmem:[#allocation3 + $0xc] sm:$0x3]
    %v2381 = vld [vmem:[#allocation3 + $0xe] sm:$0x3]
    %vm2382 = vcmp.lt.s32.totalorder %v528, 32
    %v2383 = vsel %vm2382, %v2374, %v2381
    %v2384 = vsel %vm2382, %v2375, %v2380
    %v2385 = vsel %vm2382, %v2376, %v2379
    %v2386 = vsel %vm2382, %v2377, %v2378
    %v2387 = vsel %vm2382, %v2378, %v2377
    %v2388 = vsel %vm2382, %v2379, %v2376
    %v2389 = vsel %vm2382, %v2380, %v2375
    %v2390 = vsel %vm2382, %v2381, %v2374
    %v2391 = vld [vmem:[%s6] sm:$0xff]
    %v2392 = vld [vmem:[%s6 + $0x8] sm:$0xff]
    %v2393 = vld [vmem:[%s6 + $0x10] sm:$0xff]
    %v2394 = vld [vmem:[%s6 + $0x18] sm:$0xff]
    %v2395 = vld [vmem:[%s6 + $0x20] sm:$0xff]
    %v2396 = vld [vmem:[%s6 + $0x28] sm:$0xff]
    %v2397 = vld [vmem:[%s6 + $0x30] sm:$0xff]
    %v2398 = vld [vmem:[%s6 + $0x38] sm:$0xff]
    %v2399 = vld [vmem:[%s6 + $0x40] sm:$0xff]
    %v2400 = vld [vmem:[%s6 + $0x48] sm:$0xff]
    %v2401 = vld [vmem:[%s6 + $0x50] sm:$0xff]
    %v2402 = vld [vmem:[%s6 + $0x58] sm:$0xff]
    %v2403 = vld [vmem:[%s6 + $0x60] sm:$0xff]
    %v2404 = vld [vmem:[%s6 + $0x68] sm:$0xff]
    %v2405 = vld [vmem:[%s6 + $0x70] sm:$0xff]
    %v2406 = vld [vmem:[%s6 + $0x78] sm:$0xff]
    %v2407 = vld [vmem:[%s7] sm:$0x1]
    %v2409 = vlaneseq
    %v2410 = vshrl.u32 %v2409, 7
    %v2411 = vsub.s32 0, %v2410
    %v2412 = vrot.slane %v2407, %v2411
    %v2421 = vcombine.low %v2383, %v2384
    %v2422 = vcombine.low %v2385, %v2386
    %v2424 = vunpack.c.l.s4 1983009808
    %v2425 = vunpack.c.0.s8 %v2424
    %v2426 = vlaneseq
    %v2427 = vshrl.u32 %v2426, 7
    %v2428 = vsub.s32 %v2425, %v2427
    %v2429 = vrot.slane %v2421, %v2428
    %v2431 = vunpack.c.l.s4 1983009808
    %v2432 = vunpack.c.0.s8 %v2431
    %v2433 = vlaneseq
    %v2434 = vshrl.u32 %v2433, 7
    %v2435 = vsub.s32 %v2432, %v2434
    %v2436 = vrot.slane %v2422, %v2435
    %v2437 = vcombine.low %v2429, %v2436
    %v2438 = vcombine.low %v2387, %v2388
    %v2439 = vcombine.low %v2389, %v2390
    %v2441 = vunpack.c.l.s4 1983009808
    %v2442 = vunpack.c.0.s8 %v2441
    %v2443 = vlaneseq
    %v2444 = vshrl.u32 %v2443, 7
    %v2445 = vsub.s32 %v2442, %v2444
    %v2446 = vrot.slane %v2438, %v2445
    %v2448 = vunpack.c.l.s4 1983009808
    %v2449 = vunpack.c.0.s8 %v2448
    %v2450 = vlaneseq
    %v2451 = vshrl.u32 %v2450, 7
    %v2452 = vsub.s32 %v2449, %v2451
    %v2453 = vrot.slane %v2439, %v2452
    %v2454 = vcombine.low %v2446, %v2453
    %v2457 = vcombine.low %v2412, %v2412
    %v2459 = vunpack.c.l.s4 1983009808
    %v2460 = vunpack.c.0.s8 %v2459
    %v2461 = vlaneseq
    %v2462 = vshrl.u32 %v2461, 7
    %v2463 = vsub.s32 %v2460, %v2462
    %v2464 = vrot.slane %v2457, %v2463
    %v2465 = vcombine.low %v2464, %v2464
    %2467 = vmatprep.subr.mxu0 0.0
    %2468 = vmatpush1.msra.mxu0 %v2406
    %2469 = vmatprep.subr.mxu0 0.0
    %2470 = vmatpush1.msra.mxu0 %v2405
    %2471 = vmatprep.subr.mxu0 0.0
    %2472 = vmatpush1.msra.mxu0 %v2404
    %2473 = vmatprep.subr.mxu0 0.0
    %2474 = vmatpush1.msra.mxu0 %v2403
    %2475 = vmatprep.subr.mxu0 0.0
    %2476 = vmatpush1.msra.mxu0 %v2402
    %2477 = vmatprep.subr.mxu0 0.0
    %2478 = vmatpush1.msra.mxu0 %v2401
    %2479 = vmatprep.subr.mxu0 0.0
    %2480 = vmatpush1.msra.mxu0 %v2400
    %2481 = vmatprep.subr.mxu0 0.0
    %2482 = vmatpush1.msra.mxu0 %v2399
    %2483 = vmatprep.subr.mxu0 0.0
    %2484 = vmatpush1.msra.mxu0 %v2398
    %2485 = vmatprep.subr.mxu0 0.0
    %2486 = vmatpush1.msra.mxu0 %v2397
    %2487 = vmatprep.subr.mxu0 0.0
    %2488 = vmatpush1.msra.mxu0 %v2396
    %2489 = vmatprep.subr.mxu0 0.0
    %2490 = vmatpush1.msra.mxu0 %v2395
    %2491 = vmatprep.subr.mxu0 0.0
    %2492 = vmatpush1.msra.mxu0 %v2394
    %2493 = vmatprep.subr.mxu0 0.0
    %2494 = vmatpush1.msra.mxu0 %v2393
    %2495 = vmatprep.subr.mxu0 0.0
    %2496 = vmatpush1.msra.mxu0 %v2392
    %2497 = vmatprep.subr.mxu0 0.0
    %2498 = vmatpush1.msra.mxu0 %v2391
    %2499 = vmatprep.subr.mxu0 0.0
    %2500 = vmatpush2.msra.mxu0 0.0
    %2501 = vmatprep.subr.mxu0 0.0
    %2502 = vmatpush2.msra.mxu0 0.0
    %2503 = vmatprep.subr.mxu0 0.0
    %2504 = vmatpush2.msra.mxu0 0.0
    %2505 = vmatprep.subr.mxu0 0.0
    %2506 = vmatpush2.msra.mxu0 0.0
    %2507 = vmatprep.subr.mxu0 0.0
    %2508 = vmatpush2.msra.mxu0 0.0
    %2509 = vmatprep.subr.mxu0 0.0
    %2510 = vmatpush2.msra.mxu0 0.0
    %2511 = vmatprep.subr.mxu0 0.0
    %2512 = vmatpush2.msra.mxu0 0.0
    %2513 = vmatprep.subr.mxu0 0.0
    %2514 = vmatpush2.msra.mxu0 0.0
    %2515 = vmatprep.subr.mxu0 0.0
    %2516 = vmatpush2.msra.mxu0 0.0
    %2517 = vmatprep.subr.mxu0 0.0
    %2518 = vmatpush2.msra.mxu0 0.0
    %2519 = vmatprep.subr.mxu0 0.0
    %2520 = vmatpush2.msra.mxu0 0.0
    %2521 = vmatprep.subr.mxu0 0.0
    %2522 = vmatpush2.msra.mxu0 0.0
    %2523 = vmatprep.subr.mxu0 0.0
    %2524 = vmatpush2.msra.mxu0 0.0
    %2525 = vmatprep.subr.mxu0 0.0
    %2526 = vmatpush2.msra.mxu0 0.0
    %2527 = vmatprep.subr.mxu0 0.0
    %2528 = vmatpush2.msra.mxu0 0.0
    %2529 = vmatprep.subr.mxu0 0.0
    %2530 = vmatpush2.msra.mxu0 0.0
    %2531 = vmatprep.mubr.f32.mxu0 0.0
    %2532 = vmatmul.mubr.f32.gmra.mxu0 %v2437
    %v2533 = vpop.f32.mrf.mxu0
    %v2534 = vadd.f32 %v2465, %v2533
    %v2535 = vpop.f32.mrf.mxu0
    %2536 = vmatprep.mubr.f32.mxu0 0.0
    %2537 = vmatmul.mubr.f32.gmra.mxu0 %v2454
    %v2538 = vpop.f32.mrf.mxu0
    %v2539 = vadd.f32 %v2465, %v2538
    %v2540 = vpop.f32.mrf.mxu0
    %2541 = vdwg.mxu0
    %v2544 = vcombine.high %v2534, %v2534
    %v2546 = vunpack.c.l.s4 1983009808
    %v2547 = vunpack.c.0.s8 %v2546
    %v2548 = vlaneseq
    %v2549 = vshrl.u32 %v2548, 7
    %v2550 = vsub.s32 %v2547, %v2549
    %v2551 = vrot.slane %v2534, %v2550
    %v2553 = vunpack.c.l.s4 1983009808
    %v2554 = vunpack.c.0.s8 %v2553
    %v2555 = vlaneseq
    %v2556 = vshrl.u32 %v2555, 7
    %v2557 = vsub.s32 %v2554, %v2556
    %v2558 = vrot.slane %v2544, %v2557
    %v2559 = vcombine.high %v2551, %v2551
    %v2560 = vcombine.high %v2558, %v2558
    %v2561 = vcombine.high %v2539, %v2539
    %v2563 = vunpack.c.l.s4 1983009808
    %v2564 = vunpack.c.0.s8 %v2563
    %v2565 = vlaneseq
    %v2566 = vshrl.u32 %v2565, 7
    %v2567 = vsub.s32 %v2564, %v2566
    %v2568 = vrot.slane %v2539, %v2567
    %v2570 = vunpack.c.l.s4 1983009808
    %v2571 = vunpack.c.0.s8 %v2570
    %v2572 = vlaneseq
    %v2573 = vshrl.u32 %v2572, 7
    %v2574 = vsub.s32 %v2571, %v2573
    %v2575 = vrot.slane %v2561, %v2574
    %v2576 = vcombine.high %v2568, %v2568
    %v2577 = vcombine.high %v2575, %v2575
    %vm2586 = vcmask 254976
    %2587 = vst.msk [vmem:[#allocation4] sm:$0x3] %vm2586, %v2551
    %2588 = vst.msk [vmem:[#allocation4 + $0x2] sm:$0x3] %vm2586, %v2559
    %2589 = vst.msk [vmem:[#allocation4 + $0x4] sm:$0x3] %vm2586, %v2558
    %2590 = vst.msk [vmem:[#allocation4 + $0x6] sm:$0x3] %vm2586, %v2560
    %2591 = vst.msk [vmem:[#allocation4 + $0x8] sm:$0x3] %vm2586, %v2568
    %2592 = vst.msk [vmem:[#allocation4 + $0xa] sm:$0x3] %vm2586, %v2576
    %2593 = vst.msk [vmem:[#allocation4 + $0xc] sm:$0x3] %vm2586, %v2575
    %2594 = vst.msk [vmem:[#allocation4 + $0xe] sm:$0x3] %vm2586, %v2577
    %v2596 = vunpack.c.l.s4 1983009808
    %v2597 = vunpack.c.0.s8 %v2596
    %v2598 = vlaneseq
    %v2599 = vshrl.u32 %v2598, 7
    %v2600 = vsub.s32 %v2597, %v2599
    %v2601 = vrot.slane %v2551, %v2600
    %v2603 = vunpack.c.l.s4 1983009808
    %v2604 = vunpack.c.0.s8 %v2603
    %v2605 = vlaneseq
    %v2606 = vshrl.u32 %v2605, 7
    %v2607 = vsub.s32 %v2604, %v2606
    %v2608 = vrot.slane %v2559, %v2607
    %v2610 = vunpack.c.l.s4 1983009808
    %v2611 = vunpack.c.0.s8 %v2610
    %v2612 = vlaneseq
    %v2613 = vshrl.u32 %v2612, 7
    %v2614 = vsub.s32 %v2611, %v2613
    %v2615 = vrot.slane %v2558, %v2614
    %v2617 = vunpack.c.l.s4 1983009808
    %v2618 = vunpack.c.0.s8 %v2617
    %v2619 = vlaneseq
    %v2620 = vshrl.u32 %v2619, 7
    %v2621 = vsub.s32 %v2618, %v2620
    %v2622 = vrot.slane %v2560, %v2621
    %v2624 = vunpack.c.l.s4 1983009808
    %v2625 = vunpack.c.0.s8 %v2624
    %v2626 = vlaneseq
    %v2627 = vshrl.u32 %v2626, 7
    %v2628 = vsub.s32 %v2625, %v2627
    %v2629 = vrot.slane %v2568, %v2628
    %v2631 = vunpack.c.l.s4 1983009808
    %v2632 = vunpack.c.0.s8 %v2631
    %v2633 = vlaneseq
    %v2634 = vshrl.u32 %v2633, 7
    %v2635 = vsub.s32 %v2632, %v2634
    %v2636 = vrot.slane %v2576, %v2635
    %v2638 = vunpack.c.l.s4 1983009808
    %v2639 = vunpack.c.0.s8 %v2638
    %v2640 = vlaneseq
    %v2641 = vshrl.u32 %v2640, 7
    %v2642 = vsub.s32 %v2639, %v2641
    %v2643 = vrot.slane %v2575, %v2642
    %v2645 = vunpack.c.l.s4 1983009808
    %v2646 = vunpack.c.0.s8 %v2645
    %v2647 = vlaneseq
    %v2648 = vshrl.u32 %v2647, 7
    %v2649 = vsub.s32 %v2646, %v2648
    %v2650 = vrot.slane %v2577, %v2649
    %2651 = vrot.lane.b32.xlu0 %v2601, 96
    %v2652 = vpop.permute.xlu0 %2651
    %2653 = vrot.lane.b32.xlu0 %v2608, 96
    %v2654 = vpop.permute.xlu0 %2653
    %2655 = vrot.lane.b32.xlu0 %v2615, 96
    %v2656 = vpop.permute.xlu0 %2655
    %2657 = vrot.lane.b32.xlu0 %v2622, 96
    %v2658 = vpop.permute.xlu0 %2657
    %2659 = vrot.lane.b32.xlu0 %v2629, 96
    %v2660 = vpop.permute.xlu0 %2659
    %2661 = vrot.lane.b32.xlu0 %v2636, 96
    %v2662 = vpop.permute.xlu0 %2661
    %2663 = vrot.lane.b32.xlu0 %v2643, 96
    %v2664 = vpop.permute.xlu0 %2663
    %2665 = vrot.lane.b32.xlu0 %v2650, 96
    %v2666 = vpop.permute.xlu0 %2665
    %2675 = vst.msk [vmem:[#allocation5] sm:$0x3] %vm2586, %v2652
    %2676 = vst.msk [vmem:[#allocation5 + $0x2] sm:$0x3] %vm2586, %v2654
    %2677 = vst.msk [vmem:[#allocation5 + $0x4] sm:$0x3] %vm2586, %v2656
    %2678 = vst.msk [vmem:[#allocation5 + $0x6] sm:$0x3] %vm2586, %v2658
    %2679 = vst.msk [vmem:[#allocation5 + $0x8] sm:$0x3] %vm2586, %v2660
    %2680 = vst.msk [vmem:[#allocation5 + $0xa] sm:$0x3] %vm2586, %v2662
    %2681 = vst.msk [vmem:[#allocation5 + $0xc] sm:$0x3] %vm2586, %v2664
    %2682 = vst.msk [vmem:[#allocation5 + $0xe] sm:$0x3] %vm2586, %v2666
    %v2683 = vld [vmem:[%s8] sm:$0x1f]
    %v2684 = vld [vmem:[%s9] sm:$0xff]
    %v2685 = vld [vmem:[%s9 + $0x8] sm:$0xff]
    %v2686 = vld [vmem:[%s9 + $0x10] sm:$0xff]
    %v2687 = vld [vmem:[%s9 + $0x18] sm:$0xff]
    %v2688 = vld [vmem:[%s11] sm:$0x1f]
    %v2689 = vld [vmem:[%s12] sm:$0xff]
    %v2690 = vld [vmem:[%s12 + $0x8] sm:$0xff]
    %v2691 = vld [vmem:[%s12 + $0x10] sm:$0xff]
    %v2692 = vld [vmem:[%s12 + $0x18] sm:$0xff]
    %v2693 = vld [vmem:[%s10] sm:$0x1]
    %v2695 = vlaneseq
    %v2696 = vshrl.u32 %v2695, 7
    %v2697 = vsub.s32 0, %v2696
    %v2698 = vrot.slane %v2693, %v2697
    %v2700 = vld [vmem:[%s13] sm:$0x1]
    %v2702 = vlaneseq
    %v2703 = vshrl.u32 %v2702, 7
    %v2704 = vsub.s32 0, %v2703
    %v2705 = vrot.slane %v2700, %v2704
    %v2707 = vld [vmem:[#allocation4] sm:$0x3]
    %vm2708 = vcmask 39936
    %v2710 = vsel %vm2708, 0.0, 0
    %vm2712 = vcmask 1044480
    %v2714 = vsel %vm2712, %v2683, 0
    %2716 = vmatprep.subr.mxu0 0.0
    %2717 = vmatpush1.msra.mxu0 0.0
    %2718 = vmatprep.subr.mxu0 0.0
    %2719 = vmatpush1.msra.mxu0 0.0
    %2720 = vmatprep.subr.mxu0 0.0
    %2721 = vmatpush1.msra.mxu0 0.0
    %2722 = vmatprep.subr.mxu0 0.0
    %2723 = vmatpush1.msra.mxu0 0.0
    %2724 = vmatprep.subr.mxu0 0.0
    %2725 = vmatpush1.msra.mxu0 0.0
    %2726 = vmatprep.subr.mxu0 0.0
    %2727 = vmatpush1.msra.mxu0 0.0
    %2728 = vmatprep.subr.mxu0 0.0
    %2729 = vmatpush1.msra.mxu0 0.0
    %2730 = vmatprep.subr.mxu0 0.0
    %2731 = vmatpush1.msra.mxu0 0.0
    %2732 = vmatprep.subr.mxu0 0.0
    %2733 = vmatpush1.msra.mxu0 0.0
    %2734 = vmatprep.subr.mxu0 0.0
    %2735 = vmatpush1.msra.mxu0 0.0
    %2736 = vmatprep.subr.mxu0 0.0
    %2737 = vmatpush1.msra.mxu0 0.0
    %2738 = vmatprep.subr.mxu0 0.0
    %2739 = vmatpush1.msra.mxu0 0.0
    %2740 = vmatprep.subr.mxu0 0.0
    %2741 = vmatpush1.msra.mxu0 0.0
    %2742 = vmatprep.subr.mxu0 0.0
    %2743 = vmatpush1.msra.mxu0 0.0
    %2744 = vmatprep.subr.mxu0 0.0
    %2745 = vmatpush1.msra.mxu0 0.0
    %2746 = vmatprep.subr.mxu0 0.0
    %2747 = vmatpush1.msra.mxu0 %v2714
    %2748 = vmatprep.subr.mxu0 0.0
    %2749 = vmatpush2.msra.mxu0 0.0
    %2750 = vmatprep.subr.mxu0 0.0
    %2751 = vmatpush2.msra.mxu0 0.0
    %2752 = vmatprep.subr.mxu0 0.0
    %2753 = vmatpush2.msra.mxu0 0.0
    %2754 = vmatprep.subr.mxu0 0.0
    %2755 = vmatpush2.msra.mxu0 0.0
    %2756 = vmatprep.subr.mxu0 0.0
    %2757 = vmatpush2.msra.mxu0 0.0
    %2758 = vmatprep.subr.mxu0 0.0
    %2759 = vmatpush2.msra.mxu0 0.0
    %2760 = vmatprep.subr.mxu0 0.0
    %2761 = vmatpush2.msra.mxu0 0.0
    %2762 = vmatprep.subr.mxu0 0.0
    %2763 = vmatpush2.msra.mxu0 0.0
    %2764 = vmatprep.subr.mxu0 0.0
    %2765 = vmatpush2.msra.mxu0 0.0
    %2766 = vmatprep.subr.mxu0 0.0
    %2767 = vmatpush2.msra.mxu0 0.0
    %2768 = vmatprep.subr.mxu0 0.0
    %2769 = vmatpush2.msra.mxu0 0.0
    %2770 = vmatprep.subr.mxu0 0.0
    %2771 = vmatpush2.msra.mxu0 0.0
    %2772 = vmatprep.subr.mxu0 0.0
    %2773 = vmatpush2.msra.mxu0 0.0
    %2774 = vmatprep.subr.mxu0 0.0
    %2775 = vmatpush2.msra.mxu0 0.0
    %2776 = vmatprep.subr.mxu0 0.0
    %2777 = vmatpush2.msra.mxu0 0.0
    %2778 = vmatprep.subr.mxu0 0.0
    %2779 = vmatpush2.msra.mxu0 0.0
    %2780 = vmatprep.mubr.f32.mxu0 0.0
    %2781 = vmatmul.mubr.f32.gmra.mxu0 %v2710
    %v2782 = vpop.f32.mrf.mxu0
    %v2783 = vadd.f32 0.0, %v2782
    %v2784 = vpop.f32.mrf.mxu0
    %2785 = vdwg.mxu0
    %v2786 = vadd.f32 %v2707, %v2783
    %v2787 = vmax.f32 %v2786, 0.0
    %vm2788 = vcmask 261120
    %v2790 = vsel %vm2788, %v2787, 0
    %2792 = vmatprep.subr.mxu0 0.0
    %2793 = vmatpush1.msra.mxu0 0.0
    %2794 = vmatprep.subr.mxu0 0.0
    %2795 = vmatpush1.msra.mxu0 0.0
    %2796 = vmatprep.subr.mxu0 0.0
    %2797 = vmatpush1.msra.mxu0 0.0
    %2798 = vmatprep.subr.mxu0 0.0
    %2799 = vmatpush1.msra.mxu0 0.0
    %2800 = vmatprep.subr.mxu0 0.0
    %2801 = vmatpush1.msra.mxu0 0.0
    %2802 = vmatprep.subr.mxu0 0.0
    %2803 = vmatpush1.msra.mxu0 0.0
    %2804 = vmatprep.subr.mxu0 0.0
    %2805 = vmatpush1.msra.mxu0 0.0
    %2806 = vmatprep.subr.mxu0 0.0
    %2807 = vmatpush1.msra.mxu0 0.0
    %2808 = vmatprep.subr.mxu0 0.0
    %2809 = vmatpush1.msra.mxu0 0.0
    %2810 = vmatprep.subr.mxu0 0.0
    %2811 = vmatpush1.msra.mxu0 0.0
    %2812 = vmatprep.subr.mxu0 0.0
    %2813 = vmatpush1.msra.mxu0 0.0
    %2814 = vmatprep.subr.mxu0 0.0
    %2815 = vmatpush1.msra.mxu0 0.0
    %2816 = vmatprep.subr.mxu0 0.0
    %2817 = vmatpush1.msra.mxu0 %v2687
    %2818 = vmatprep.subr.mxu0 0.0
    %2819 = vmatpush1.msra.mxu0 %v2686
    %2820 = vmatprep.subr.mxu0 0.0
    %2821 = vmatpush1.msra.mxu0 %v2685
    %2822 = vmatprep.subr.mxu0 0.0
    %2823 = vmatpush1.msra.mxu0 %v2684
    %2824 = vmatprep.subr.mxu0 0.0
    %2825 = vmatpush2.msra.mxu0 0.0
    %2826 = vmatprep.subr.mxu0 0.0
    %2827 = vmatpush2.msra.mxu0 0.0
    %2828 = vmatprep.subr.mxu0 0.0
    %2829 = vmatpush2.msra.mxu0 0.0
    %2830 = vmatprep.subr.mxu0 0.0
    %2831 = vmatpush2.msra.mxu0 0.0
    %2832 = vmatprep.subr.mxu0 0.0
    %2833 = vmatpush2.msra.mxu0 0.0
    %2834 = vmatprep.subr.mxu0 0.0
    %2835 = vmatpush2.msra.mxu0 0.0
    %2836 = vmatprep.subr.mxu0 0.0
    %2837 = vmatpush2.msra.mxu0 0.0
    %2838 = vmatprep.subr.mxu0 0.0
    %2839 = vmatpush2.msra.mxu0 0.0
    %2840 = vmatprep.subr.mxu0 0.0
    %2841 = vmatpush2.msra.mxu0 0.0
    %2842 = vmatprep.subr.mxu0 0.0
    %2843 = vmatpush2.msra.mxu0 0.0
    %2844 = vmatprep.subr.mxu0 0.0
    %2845 = vmatpush2.msra.mxu0 0.0
    %2846 = vmatprep.subr.mxu0 0.0
    %2847 = vmatpush2.msra.mxu0 0.0
    %2848 = vmatprep.subr.mxu0 0.0
    %2849 = vmatpush2.msra.mxu0 0.0
    %2850 = vmatprep.subr.mxu0 0.0
    %2851 = vmatpush2.msra.mxu0 0.0
    %2852 = vmatprep.subr.mxu0 0.0
    %2853 = vmatpush2.msra.mxu0 0.0
    %2854 = vmatprep.subr.mxu0 0.0
    %2855 = vmatpush2.msra.mxu0 0.0
    %2856 = vmatprep.mubr.f32.mxu0 0.0
    %2857 = vmatmul.mubr.f32.gmra.mxu0 %v2790
    %v2858 = vpop.f32.mrf.mxu0
    %v2859 = vadd.f32 %v2698, %v2858
    %v2860 = vpop.f32.mrf.mxu0
    %2861 = vdwg.mxu0
    %v2862 = vld [vmem:[%s1] sm:$0x3]
    %v2863 = vadd.f32 %v2859, %v2862
    %vm2864 = vcmask 17408
    %v2865 = vsel %vm2864, %v2863, -inf
    %2866 = vmax.xlane.f32.xlu0 %v2865
    %v2867 = vpop.xlane.xlu0 %2866
    %v2868 = vsub.f32 %v2863, %v2867
    %v2869 = vmul.f32 %v2868, 1.442695
    %v2870 = vpow.pop %v2869
    %v2871 = vsel %vm2864, %v2870, 0.0
    %2872 = vadd.xlane.f32.xlu0 %v2871
    %v2873 = vpop.xlane.xlu0 %2872
    %v2874 = vrcp.pop %v2873
    %v2875 = vmul.f32 %v2870, %v2874
    %vm2876 = vcmask 23552
    %v2877 = vsel %vm2876, %v2875, 0.0
    %v2878 = vld [vmem:[#allocation5] sm:$0x3]
    %v2880 = vsel %vm2708, %v2877, 0
    %v2883 = vsel %vm2712, %v2688, 0
    %2885 = vmatprep.subr.mxu0 0.0
    %2886 = vmatpush1.msra.mxu0 0.0
    %2887 = vmatprep.subr.mxu0 0.0
    %2888 = vmatpush1.msra.mxu0 0.0
    %2889 = vmatprep.subr.mxu0 0.0
    %2890 = vmatpush1.msra.mxu0 0.0
    %2891 = vmatprep.subr.mxu0 0.0
    %2892 = vmatpush1.msra.mxu0 0.0
    %2893 = vmatprep.subr.mxu0 0.0
    %2894 = vmatpush1.msra.mxu0 0.0
    %2895 = vmatprep.subr.mxu0 0.0
    %2896 = vmatpush1.msra.mxu0 0.0
    %2897 = vmatprep.subr.mxu0 0.0
    %2898 = vmatpush1.msra.mxu0 0.0
    %2899 = vmatprep.subr.mxu0 0.0
    %2900 = vmatpush1.msra.mxu0 0.0
    %2901 = vmatprep.subr.mxu0 0.0
    %2902 = vmatpush1.msra.mxu0 0.0
    %2903 = vmatprep.subr.mxu0 0.0
    %2904 = vmatpush1.msra.mxu0 0.0
    %2905 = vmatprep.subr.mxu0 0.0
    %2906 = vmatpush1.msra.mxu0 0.0
    %2907 = vmatprep.subr.mxu0 0.0
    %2908 = vmatpush1.msra.mxu0 0.0
    %2909 = vmatprep.subr.mxu0 0.0
    %2910 = vmatpush1.msra.mxu0 0.0
    %2911 = vmatprep.subr.mxu0 0.0
    %2912 = vmatpush1.msra.mxu0 0.0
    %2913 = vmatprep.subr.mxu0 0.0
    %2914 = vmatpush1.msra.mxu0 0.0
    %2915 = vmatprep.subr.mxu0 0.0
    %2916 = vmatpush1.msra.mxu0 %v2883
    %2917 = vmatprep.subr.mxu0 0.0
    %2918 = vmatpush2.msra.mxu0 0.0
    %2919 = vmatprep.subr.mxu0 0.0
    %2920 = vmatpush2.msra.mxu0 0.0
    %2921 = vmatprep.subr.mxu0 0.0
    %2922 = vmatpush2.msra.mxu0 0.0
    %2923 = vmatprep.subr.mxu0 0.0
    %2924 = vmatpush2.msra.mxu0 0.0
    %2925 = vmatprep.subr.mxu0 0.0
    %2926 = vmatpush2.msra.mxu0 0.0
    %2927 = vmatprep.subr.mxu0 0.0
    %2928 = vmatpush2.msra.mxu0 0.0
    %2929 = vmatprep.subr.mxu0 0.0
    %2930 = vmatpush2.msra.mxu0 0.0
    %2931 = vmatprep.subr.mxu0 0.0
    %2932 = vmatpush2.msra.mxu0 0.0
    %2933 = vmatprep.subr.mxu0 0.0
    %2934 = vmatpush2.msra.mxu0 0.0
    %2935 = vmatprep.subr.mxu0 0.0
    %2936 = vmatpush2.msra.mxu0 0.0
    %2937 = vmatprep.subr.mxu0 0.0
    %2938 = vmatpush2.msra.mxu0 0.0
    %2939 = vmatprep.subr.mxu0 0.0
    %2940 = vmatpush2.msra.mxu0 0.0
    %2941 = vmatprep.subr.mxu0 0.0
    %2942 = vmatpush2.msra.mxu0 0.0
    %2943 = vmatprep.subr.mxu0 0.0
    %2944 = vmatpush2.msra.mxu0 0.0
    %2945 = vmatprep.subr.mxu0 0.0
    %2946 = vmatpush2.msra.mxu0 0.0
    %2947 = vmatprep.subr.mxu0 0.0
    %2948 = vmatpush2.msra.mxu0 0.0
    %2949 = vmatprep.mubr.f32.mxu0 0.0
    %2950 = vmatmul.mubr.f32.gmra.mxu0 %v2880
    %v2951 = vpop.f32.mrf.mxu0
    %v2952 = vadd.f32 0.0, %v2951
    %v2953 = vpop.f32.mrf.mxu0
    %2954 = vdwg.mxu0
    %v2955 = vadd.f32 %v2878, %v2952
    %v2956 = vmax.f32 %v2955, 0.0
    %v2958 = vsel %vm2788, %v2956, 0
    %2960 = vmatprep.subr.mxu0 0.0
    %2961 = vmatpush1.msra.mxu0 0.0
    %2962 = vmatprep.subr.mxu0 0.0
    %2963 = vmatpush1.msra.mxu0 0.0
    %2964 = vmatprep.subr.mxu0 0.0
    %2965 = vmatpush1.msra.mxu0 0.0
    %2966 = vmatprep.subr.mxu0 0.0
    %2967 = vmatpush1.msra.mxu0 0.0
    %2968 = vmatprep.subr.mxu0 0.0
    %2969 = vmatpush1.msra.mxu0 0.0
    %2970 = vmatprep.subr.mxu0 0.0
    %2971 = vmatpush1.msra.mxu0 0.0
    %2972 = vmatprep.subr.mxu0 0.0
    %2973 = vmatpush1.msra.mxu0 0.0
    %2974 = vmatprep.subr.mxu0 0.0
    %2975 = vmatpush1.msra.mxu0 0.0
    %2976 = vmatprep.subr.mxu0 0.0
    %2977 = vmatpush1.msra.mxu0 0.0
    %2978 = vmatprep.subr.mxu0 0.0
    %2979 = vmatpush1.msra.mxu0 0.0
    %2980 = vmatprep.subr.mxu0 0.0
    %2981 = vmatpush1.msra.mxu0 0.0
    %2982 = vmatprep.subr.mxu0 0.0
    %2983 = vmatpush1.msra.mxu0 0.0
    %2984 = vmatprep.subr.mxu0 0.0
    %2985 = vmatpush1.msra.mxu0 %v2692
    %2986 = vmatprep.subr.mxu0 0.0
    %2987 = vmatpush1.msra.mxu0 %v2691
    %2988 = vmatprep.subr.mxu0 0.0
    %2989 = vmatpush1.msra.mxu0 %v2690
    %2990 = vmatprep.subr.mxu0 0.0
    %2991 = vmatpush1.msra.mxu0 %v2689
    %2992 = vmatprep.subr.mxu0 0.0
    %2993 = vmatpush2.msra.mxu0 0.0
    %2994 = vmatprep.subr.mxu0 0.0
    %2995 = vmatpush2.msra.mxu0 0.0
    %2996 = vmatprep.subr.mxu0 0.0
    %2997 = vmatpush2.msra.mxu0 0.0
    %2998 = vmatprep.subr.mxu0 0.0
    %2999 = vmatpush2.msra.mxu0 0.0
    %3000 = vmatprep.subr.mxu0 0.0
    %3001 = vmatpush2.msra.mxu0 0.0
    %3002 = vmatprep.subr.mxu0 0.0
    %3003 = vmatpush2.msra.mxu0 0.0
    %3004 = vmatprep.subr.mxu0 0.0
    %3005 = vmatpush2.msra.mxu0 0.0
    %3006 = vmatprep.subr.mxu0 0.0
    %3007 = vmatpush2.msra.mxu0 0.0
    %3008 = vmatprep.subr.mxu0 0.0
    %3009 = vmatpush2.msra.mxu0 0.0
    %3010 = vmatprep.subr.mxu0 0.0
    %3011 = vmatpush2.msra.mxu0 0.0
    %3012 = vmatprep.subr.mxu0 0.0
    %3013 = vmatpush2.msra.mxu0 0.0
    %3014 = vmatprep.subr.mxu0 0.0
    %3015 = vmatpush2.msra.mxu0 0.0
    %3016 = vmatprep.subr.mxu0 0.0
    %3017 = vmatpush2.msra.mxu0 0.0
    %3018 = vmatprep.subr.mxu0 0.0
    %3019 = vmatpush2.msra.mxu0 0.0
    %3020 = vmatprep.subr.mxu0 0.0
    %3021 = vmatpush2.msra.mxu0 0.0
    %3022 = vmatprep.subr.mxu0 0.0
    %3023 = vmatpush2.msra.mxu0 0.0
    %3024 = vmatprep.mubr.f32.mxu0 0.0
    %3025 = vmatmul.mubr.f32.gmra.mxu0 %v2958
    %v3026 = vpop.f32.mrf.mxu0
    %v3027 = vadd.f32 %v2705, %v3026
    %v3028 = vpop.f32.mrf.mxu0
    %3029 = vdwg.mxu0
    %v3030 = vmul.f32 %v3027, 0.5
    %v3031 = vmul.f32 %v3030, 1.442695
    %v3032 = vpow.pop %v3031
    %v3033 = vld [vmem:[%s2] sm:$0x3]
    %3035 = vrot.lane.b32.xlu0 %v3033, 2
    %v3036 = vpop.permute.xlu0 %3035
    %v3038 = vmul.f32 %v3032, %v3036
    %3040 = vrot.lane.b32.xlu0 %v3038, 126
    %v3041 = vpop.permute.xlu0 %3040
    %v3043 = vadd.f32 %v3027, %v3041
    %3045 = vrot.lane.b32.xlu0 %v2875, 3
    %v3046 = vpop.permute.xlu0 %3045
    %3049 = vrot.lane.b32.xlu0 %v3027, 6
    %v3050 = vpop.permute.xlu0 %3049
    %3053 = vrot.lane.b32.xlu0 %v3043, 10
    %v3054 = vpop.permute.xlu0 %3053
    %v3056 = vsel %vm2876, %v2859, %v3046
    %vm3057 = vcmask 48128
    %v3058 = vsel %vm3057, %v3056, %v3050
    %vm3059 = vcmask 80896
    %v3060 = vsel %vm3059, %v3058, %v3054
    %vm3061 = vcmask 91136
    %3062 = vst.msk [vmem:[#allocation9] sm:$0x3] %vm3061, %v3060
    %3063 = vrot.lane.b32.xlu0 %v3043, 3
    %v3064 = vpop.permute.xlu0 %3063
    %v3066 = vsel %vm2876, %v2875, %v3064
    %s3067 = scalar_lea.vmem [#allocation4], 2
    %v3068 = vld [vmem:[%s3067] sm:$0x3]
    %v3070 = vsel %vm2708, %v3066, 0
    %3072 = vmatprep.subr.mxu0 0.0
    %3073 = vmatpush1.msra.mxu0 0.0
    %3074 = vmatprep.subr.mxu0 0.0
    %3075 = vmatpush1.msra.mxu0 0.0
    %3076 = vmatprep.subr.mxu0 0.0
    %3077 = vmatpush1.msra.mxu0 0.0
    %3078 = vmatprep.subr.mxu0 0.0
    %3079 = vmatpush1.msra.mxu0 0.0
    %3080 = vmatprep.subr.mxu0 0.0
    %3081 = vmatpush1.msra.mxu0 0.0
    %3082 = vmatprep.subr.mxu0 0.0
    %3083 = vmatpush1.msra.mxu0 0.0
    %3084 = vmatprep.subr.mxu0 0.0
    %3085 = vmatpush1.msra.mxu0 0.0
    %3086 = vmatprep.subr.mxu0 0.0
    %3087 = vmatpush1.msra.mxu0 0.0
    %3088 = vmatprep.subr.mxu0 0.0
    %3089 = vmatpush1.msra.mxu0 0.0
    %3090 = vmatprep.subr.mxu0 0.0
    %3091 = vmatpush1.msra.mxu0 0.0
    %3092 = vmatprep.subr.mxu0 0.0
    %3093 = vmatpush1.msra.mxu0 0.0
    %3094 = vmatprep.subr.mxu0 0.0
    %3095 = vmatpush1.msra.mxu0 0.0
    %3096 = vmatprep.subr.mxu0 0.0
    %3097 = vmatpush1.msra.mxu0 0.0
    %3098 = vmatprep.subr.mxu0 0.0
    %3099 = vmatpush1.msra.mxu0 0.0
    %3100 = vmatprep.subr.mxu0 0.0
    %3101 = vmatpush1.msra.mxu0 0.0
    %3102 = vmatprep.subr.mxu0 0.0
    %3103 = vmatpush1.msra.mxu0 %v2714
    %3104 = vmatprep.subr.mxu0 0.0
    %3105 = vmatpush2.msra.mxu0 0.0
    %3106 = vmatprep.subr.mxu0 0.0
    %3107 = vmatpush2.msra.mxu0 0.0
    %3108 = vmatprep.subr.mxu0 0.0
    %3109 = vmatpush2.msra.mxu0 0.0
    %3110 = vmatprep.subr.mxu0 0.0
    %3111 = vmatpush2.msra.mxu0 0.0
    %3112 = vmatprep.subr.mxu0 0.0
    %3113 = vmatpush2.msra.mxu0 0.0
    %3114 = vmatprep.subr.mxu0 0.0
    %3115 = vmatpush2.msra.mxu0 0.0
    %3116 = vmatprep.subr.mxu0 0.0
    %3117 = vmatpush2.msra.mxu0 0.0
    %3118 = vmatprep.subr.mxu0 0.0
    %3119 = vmatpush2.msra.mxu0 0.0
    %3120 = vmatprep.subr.mxu0 0.0
    %3121 = vmatpush2.msra.mxu0 0.0
    %3122 = vmatprep.subr.mxu0 0.0
    %3123 = vmatpush2.msra.mxu0 0.0
    %3124 = vmatprep.subr.mxu0 0.0
    %3125 = vmatpush2.msra.mxu0 0.0
    %3126 = vmatprep.subr.mxu0 0.0
    %3127 = vmatpush2.msra.mxu0 0.0
    %3128 = vmatprep.subr.mxu0 0.0
    %3129 = vmatpush2.msra.mxu0 0.0
    %3130 = vmatprep.subr.mxu0 0.0
    %3131 = vmatpush2.msra.mxu0 0.0
    %3132 = vmatprep.subr.mxu0 0.0
    %3133 = vmatpush2.msra.mxu0 0.0
    %3134 = vmatprep.subr.mxu0 0.0
    %3135 = vmatpush2.msra.mxu0 0.0
    %3136 = vmatprep.mubr.f32.mxu0 0.0
    %3137 = vmatmul.mubr.f32.gmra.mxu0 %v3070
    %v3138 = vpop.f32.mrf.mxu0
    %v3139 = vadd.f32 0.0, %v3138
    %v3140 = vpop.f32.mrf.mxu0
    %3141 = vdwg.mxu0
    %v3142 = vadd.f32 %v3068, %v3139
    %v3143 = vmax.f32 %v3142, 0.0
    %v3145 = vsel %vm2788, %v3143, 0
    %3147 = vmatprep.subr.mxu0 0.0
    %3148 = vmatpush1.msra.mxu0 0.0
    %3149 = vmatprep.subr.mxu0 0.0
    %3150 = vmatpush1.msra.mxu0 0.0
    %3151 = vmatprep.subr.mxu0 0.0
    %3152 = vmatpush1.msra.mxu0 0.0
    %3153 = vmatprep.subr.mxu0 0.0
    %3154 = vmatpush1.msra.mxu0 0.0
    %3155 = vmatprep.subr.mxu0 0.0
    %3156 = vmatpush1.msra.mxu0 0.0
    %3157 = vmatprep.subr.mxu0 0.0
    %3158 = vmatpush1.msra.mxu0 0.0
    %3159 = vmatprep.subr.mxu0 0.0
    %3160 = vmatpush1.msra.mxu0 0.0
    %3161 = vmatprep.subr.mxu0 0.0
    %3162 = vmatpush1.msra.mxu0 0.0
    %3163 = vmatprep.subr.mxu0 0.0
    %3164 = vmatpush1.msra.mxu0 0.0
    %3165 = vmatprep.subr.mxu0 0.0
    %3166 = vmatpush1.msra.mxu0 0.0
    %3167 = vmatprep.subr.mxu0 0.0
    %3168 = vmatpush1.msra.mxu0 0.0
    %3169 = vmatprep.subr.mxu0 0.0
    %3170 = vmatpush1.msra.mxu0 0.0
    %3171 = vmatprep.subr.mxu0 0.0
    %3172 = vmatpush1.msra.mxu0 %v2687
    %3173 = vmatprep.subr.mxu0 0.0
    %3174 = vmatpush1.msra.mxu0 %v2686
    %3175 = vmatprep.subr.mxu0 0.0
    %3176 = vmatpush1.msra.mxu0 %v2685
    %3177 = vmatprep.subr.mxu0 0.0
    %3178 = vmatpush1.msra.mxu0 %v2684
    %3179 = vmatprep.subr.mxu0 0.0
    %3180 = vmatpush2.msra.mxu0 0.0
    %3181 = vmatprep.subr.mxu0 0.0
    %3182 = vmatpush2.msra.mxu0 0.0
    %3183 = vmatprep.subr.mxu0 0.0
    %3184 = vmatpush2.msra.mxu0 0.0
    %3185 = vmatprep.subr.mxu0 0.0
    %3186 = vmatpush2.msra.mxu0 0.0
    %3187 = vmatprep.subr.mxu0 0.0
    %3188 = vmatpush2.msra.mxu0 0.0
    %3189 = vmatprep.subr.mxu0 0.0
    %3190 = vmatpush2.msra.mxu0 0.0
    %3191 = vmatprep.subr.mxu0 0.0
    %3192 = vmatpush2.msra.mxu0 0.0
    %3193 = vmatprep.subr.mxu0 0.0
    %3194 = vmatpush2.msra.mxu0 0.0
    %3195 = vmatprep.subr.mxu0 0.0
    %3196 = vmatpush2.msra.mxu0 0.0
    %3197 = vmatprep.subr.mxu0 0.0
    %3198 = vmatpush2.msra.mxu0 0.0
    %3199 = vmatprep.subr.mxu0 0.0
    %3200 = vmatpush2.msra.mxu0 0.0
    %3201 = vmatprep.subr.mxu0 0.0
    %3202 = vmatpush2.msra.mxu0 0.0
    %3203 = vmatprep.subr.mxu0 0.0
    %3204 = vmatpush2.msra.mxu0 0.0
    %3205 = vmatprep.subr.mxu0 0.0
    %3206 = vmatpush2.msra.mxu0 0.0
    %3207 = vmatprep.subr.mxu0 0.0
    %3208 = vmatpush2.msra.mxu0 0.0
    %3209 = vmatprep.subr.mxu0 0.0
    %3210 = vmatpush2.msra.mxu0 0.0
    %3211 = vmatprep.mubr.f32.mxu0 0.0
    %3212 = vmatmul.mubr.f32.gmra.mxu0 %v3145
    %v3213 = vpop.f32.mrf.mxu0
    %v3214 = vadd.f32 %v2698, %v3213
    %v3215 = vpop.f32.mrf.mxu0
    %3216 = vdwg.mxu0
    %s3217 = scalar_lea.vmem %s1, 2
    %v3218 = vld [vmem:[%s3217] sm:$0x3]
    %v3219 = vadd.f32 %v3214, %v3218
    %v3220 = vsel %vm2864, %v3219, -inf
    %3221 = vmax.xlane.f32.xlu0 %v3220
    %v3222 = vpop.xlane.xlu0 %3221
    %v3223 = vsub.f32 %v3219, %v3222
    %v3224 = vmul.f32 %v3223, 1.442695
    %v3225 = vpow.pop %v3224
    %v3226 = vsel %vm2864, %v3225, 0.0
    %3227 = vadd.xlane.f32.xlu0 %v3226
    %v3228 = vpop.xlane.xlu0 %3227
    %v3229 = vrcp.pop %v3228
    %v3230 = vmul.f32 %v3225, %v3229
    %v3231 = vsel %vm2876, %v3230, %v3066
    %s3232 = scalar_lea.vmem [#allocation5], 2
    %v3233 = vld [vmem:[%s3232] sm:$0x3]
    %v3235 = vsel %vm2708, %v3231, 0
    %3237 = vmatprep.subr.mxu0 0.0
    %3238 = vmatpush1.msra.mxu0 0.0
    %3239 = vmatprep.subr.mxu0 0.0
    %3240 = vmatpush1.msra.mxu0 0.0
    %3241 = vmatprep.subr.mxu0 0.0
    %3242 = vmatpush1.msra.mxu0 0.0
    %3243 = vmatprep.subr.mxu0 0.0
    %3244 = vmatpush1.msra.mxu0 0.0
    %3245 = vmatprep.subr.mxu0 0.0
    %3246 = vmatpush1.msra.mxu0 0.0
    %3247 = vmatprep.subr.mxu0 0.0
    %3248 = vmatpush1.msra.mxu0 0.0
    %3249 = vmatprep.subr.mxu0 0.0
    %3250 = vmatpush1.msra.mxu0 0.0
    %3251 = vmatprep.subr.mxu0 0.0
    %3252 = vmatpush1.msra.mxu0 0.0
    %3253 = vmatprep.subr.mxu0 0.0
    %3254 = vmatpush1.msra.mxu0 0.0
    %3255 = vmatprep.subr.mxu0 0.0
    %3256 = vmatpush1.msra.mxu0 0.0
    %3257 = vmatprep.subr.mxu0 0.0
    %3258 = vmatpush1.msra.mxu0 0.0
    %3259 = vmatprep.subr.mxu0 0.0
    %3260 = vmatpush1.msra.mxu0 0.0
    %3261 = vmatprep.subr.mxu0 0.0
    %3262 = vmatpush1.msra.mxu0 0.0
    %3263 = vmatprep.subr.mxu0 0.0
    %3264 = vmatpush1.msra.mxu0 0.0
    %3265 = vmatprep.subr.mxu0 0.0
    %3266 = vmatpush1.msra.mxu0 0.0
    %3267 = vmatprep.subr.mxu0 0.0
    %3268 = vmatpush1.msra.mxu0 %v2883
    %3269 = vmatprep.subr.mxu0 0.0
    %3270 = vmatpush2.msra.mxu0 0.0
    %3271 = vmatprep.subr.mxu0 0.0
    %3272 = vmatpush2.msra.mxu0 0.0
    %3273 = vmatprep.subr.mxu0 0.0
    %3274 = vmatpush2.msra.mxu0 0.0
    %3275 = vmatprep.subr.mxu0 0.0
    %3276 = vmatpush2.msra.mxu0 0.0
    %3277 = vmatprep.subr.mxu0 0.0
    %3278 = vmatpush2.msra.mxu0 0.0
    %3279 = vmatprep.subr.mxu0 0.0
    %3280 = vmatpush2.msra.mxu0 0.0
    %3281 = vmatprep.subr.mxu0 0.0
    %3282 = vmatpush2.msra.mxu0 0.0
    %3283 = vmatprep.subr.mxu0 0.0
    %3284 = vmatpush2.msra.mxu0 0.0
    %3285 = vmatprep.subr.mxu0 0.0
    %3286 = vmatpush2.msra.mxu0 0.0
    %3287 = vmatprep.subr.mxu0 0.0
    %3288 = vmatpush2.msra.mxu0 0.0
    %3289 = vmatprep.subr.mxu0 0.0
    %3290 = vmatpush2.msra.mxu0 0.0
    %3291 = vmatprep.subr.mxu0 0.0
    %3292 = vmatpush2.msra.mxu0 0.0
    %3293 = vmatprep.subr.mxu0 0.0
    %3294 = vmatpush2.msra.mxu0 0.0
    %3295 = vmatprep.subr.mxu0 0.0
    %3296 = vmatpush2.msra.mxu0 0.0
    %3297 = vmatprep.subr.mxu0 0.0
    %3298 = vmatpush2.msra.mxu0 0.0
    %3299 = vmatprep.subr.mxu0 0.0
    %3300 = vmatpush2.msra.mxu0 0.0
    %3301 = vmatprep.mubr.f32.mxu0 0.0
    %3302 = vmatmul.mubr.f32.gmra.mxu0 %v3235
    %v3303 = vpop.f32.mrf.mxu0
    %v3304 = vadd.f32 0.0, %v3303
    %v3305 = vpop.f32.mrf.mxu0
    %3306 = vdwg.mxu0
    %v3307 = vadd.f32 %v3233, %v3304
    %v3308 = vmax.f32 %v3307, 0.0
    %v3310 = vsel %vm2788, %v3308, 0
    %3312 = vmatprep.subr.mxu0 0.0
    %3313 = vmatpush1.msra.mxu0 0.0
    %3314 = vmatprep.subr.mxu0 0.0
    %3315 = vmatpush1.msra.mxu0 0.0
    %3316 = vmatprep.subr.mxu0 0.0
    %3317 = vmatpush1.msra.mxu0 0.0
    %3318 = vmatprep.subr.mxu0 0.0
    %3319 = vmatpush1.msra.mxu0 0.0
    %3320 = vmatprep.subr.mxu0 0.0
    %3321 = vmatpush1.msra.mxu0 0.0
    %3322 = vmatprep.subr.mxu0 0.0
    %3323 = vmatpush1.msra.mxu0 0.0
    %3324 = vmatprep.subr.mxu0 0.0
    %3325 = vmatpush1.msra.mxu0 0.0
    %3326 = vmatprep.subr.mxu0 0.0
    %3327 = vmatpush1.msra.mxu0 0.0
    %3328 = vmatprep.subr.mxu0 0.0
    %3329 = vmatpush1.msra.mxu0 0.0
    %3330 = vmatprep.subr.mxu0 0.0
    %3331 = vmatpush1.msra.mxu0 0.0
    %3332 = vmatprep.subr.mxu0 0.0
    %3333 = vmatpush1.msra.mxu0 0.0
    %3334 = vmatprep.subr.mxu0 0.0
    %3335 = vmatpush1.msra.mxu0 0.0
    %3336 = vmatprep.subr.mxu0 0.0
    %3337 = vmatpush1.msra.mxu0 %v2692
    %3338 = vmatprep.subr.mxu0 0.0
    %3339 = vmatpush1.msra.mxu0 %v2691
    %3340 = vmatprep.subr.mxu0 0.0
    %3341 = vmatpush1.msra.mxu0 %v2690
    %3342 = vmatprep.subr.mxu0 0.0
    %3343 = vmatpush1.msra.mxu0 %v2689
    %3344 = vmatprep.subr.mxu0 0.0
    %3345 = vmatpush2.msra.mxu0 0.0
    %3346 = vmatprep.subr.mxu0 0.0
    %3347 = vmatpush2.msra.mxu0 0.0
    %3348 = vmatprep.subr.mxu0 0.0
    %3349 = vmatpush2.msra.mxu0 0.0
    %3350 = vmatprep.subr.mxu0 0.0
    %3351 = vmatpush2.msra.mxu0 0.0
    %3352 = vmatprep.subr.mxu0 0.0
    %3353 = vmatpush2.msra.mxu0 0.0
    %3354 = vmatprep.subr.mxu0 0.0
    %3355 = vmatpush2.msra.mxu0 0.0
    %3356 = vmatprep.subr.mxu0 0.0
    %3357 = vmatpush2.msra.mxu0 0.0
    %3358 = vmatprep.subr.mxu0 0.0
    %3359 = vmatpush2.msra.mxu0 0.0
    %3360 = vmatprep.subr.mxu0 0.0
    %3361 = vmatpush2.msra.mxu0 0.0
    %3362 = vmatprep.subr.mxu0 0.0
    %3363 = vmatpush2.msra.mxu0 0.0
    %3364 = vmatprep.subr.mxu0 0.0
    %3365 = vmatpush2.msra.mxu0 0.0
    %3366 = vmatprep.subr.mxu0 0.0
    %3367 = vmatpush2.msra.mxu0 0.0
    %3368 = vmatprep.subr.mxu0 0.0
    %3369 = vmatpush2.msra.mxu0 0.0
    %3370 = vmatprep.subr.mxu0 0.0
    %3371 = vmatpush2.msra.mxu0 0.0
    %3372 = vmatprep.subr.mxu0 0.0
    %3373 = vmatpush2.msra.mxu0 0.0
    %3374 = vmatprep.subr.mxu0 0.0
    %3375 = vmatpush2.msra.mxu0 0.0
    %3376 = vmatprep.mubr.f32.mxu0 0.0
    %3377 = vmatmul.mubr.f32.gmra.mxu0 %v3310
    %v3378 = vpop.f32.mrf.mxu0
    %v3379 = vadd.f32 %v2705, %v3378
    %v3380 = vpop.f32.mrf.mxu0
    %3381 = vdwg.mxu0
    %v3382 = vmul.f32 %v3379, 0.5
    %v3383 = vmul.f32 %v3382, 1.442695
    %v3384 = vpow.pop %v3383
    %s3385 = scalar_lea.vmem %s2, 2
    %v3386 = vld [vmem:[%s3385] sm:$0x3]
    %3388 = vrot.lane.b32.xlu0 %v3386, 2
    %v3389 = vpop.permute.xlu0 %3388
    %v3391 = vmul.f32 %v3384, %v3389
    %3393 = vrot.lane.b32.xlu0 %v3391, 126
    %v3394 = vpop.permute.xlu0 %3393
    %v3396 = vadd.f32 %v3379, %v3394
    %3398 = vrot.lane.b32.xlu0 %v3230, 3
    %v3399 = vpop.permute.xlu0 %3398
    %3402 = vrot.lane.b32.xlu0 %v3379, 6
    %v3403 = vpop.permute.xlu0 %3402
    %3406 = vrot.lane.b32.xlu0 %v3396, 10
    %v3407 = vpop.permute.xlu0 %3406
    %v3409 = vsel %vm2876, %v3214, %v3399
    %v3410 = vsel %vm3057, %v3409, %v3403
    %v3411 = vsel %vm3059, %v3410, %v3407
    %s3412 = scalar_lea.vmem [#allocation9], 2
    %3413 = vst.msk [vmem:[%s3412] sm:$0x3] %vm3061, %v3411
    %3414 = vrot.lane.b32.xlu0 %v3396, 3
    %v3415 = vpop.permute.xlu0 %3414
    %v3417 = vsel %vm2876, %v3230, %v3415
    %s3418 = scalar_lea.vmem [#allocation4], 4
    %v3419 = vld [vmem:[%s3418] sm:$0x3]
    %v3421 = vsel %vm2708, %v3417, 0
    %3423 = vmatprep.subr.mxu0 0.0
    %3424 = vmatpush1.msra.mxu0 0.0
    %3425 = vmatprep.subr.mxu0 0.0
    %3426 = vmatpush1.msra.mxu0 0.0
    %3427 = vmatprep.subr.mxu0 0.0
    %3428 = vmatpush1.msra.mxu0 0.0
    %3429 = vmatprep.subr.mxu0 0.0
    %3430 = vmatpush1.msra.mxu0 0.0
    %3431 = vmatprep.subr.mxu0 0.0
    %3432 = vmatpush1.msra.mxu0 0.0
    %3433 = vmatprep.subr.mxu0 0.0
    %3434 = vmatpush1.msra.mxu0 0.0
    %3435 = vmatprep.subr.mxu0 0.0
    %3436 = vmatpush1.msra.mxu0 0.0
    %3437 = vmatprep.subr.mxu0 0.0
    %3438 = vmatpush1.msra.mxu0 0.0
    %3439 = vmatprep.subr.mxu0 0.0
    %3440 = vmatpush1.msra.mxu0 0.0
    %3441 = vmatprep.subr.mxu0 0.0
    %3442 = vmatpush1.msra.mxu0 0.0
    %3443 = vmatprep.subr.mxu0 0.0
    %3444 = vmatpush1.msra.mxu0 0.0
    %3445 = vmatprep.subr.mxu0 0.0
    %3446 = vmatpush1.msra.mxu0 0.0
    %3447 = vmatprep.subr.mxu0 0.0
    %3448 = vmatpush1.msra.mxu0 0.0
    %3449 = vmatprep.subr.mxu0 0.0
    %3450 = vmatpush1.msra.mxu0 0.0
    %3451 = vmatprep.subr.mxu0 0.0
    %3452 = vmatpush1.msra.mxu0 0.0
    %3453 = vmatprep.subr.mxu0 0.0
    %3454 = vmatpush1.msra.mxu0 %v2714
    %3455 = vmatprep.subr.mxu0 0.0
    %3456 = vmatpush2.msra.mxu0 0.0
    %3457 = vmatprep.subr.mxu0 0.0
    %3458 = vmatpush2.msra.mxu0 0.0
    %3459 = vmatprep.subr.mxu0 0.0
    %3460 = vmatpush2.msra.mxu0 0.0
    %3461 = vmatprep.subr.mxu0 0.0
    %3462 = vmatpush2.msra.mxu0 0.0
    %3463 = vmatprep.subr.mxu0 0.0
    %3464 = vmatpush2.msra.mxu0 0.0
    %3465 = vmatprep.subr.mxu0 0.0
    %3466 = vmatpush2.msra.mxu0 0.0
    %3467 = vmatprep.subr.mxu0 0.0
    %3468 = vmatpush2.msra.mxu0 0.0
    %3469 = vmatprep.subr.mxu0 0.0
    %3470 = vmatpush2.msra.mxu0 0.0
    %3471 = vmatprep.subr.mxu0 0.0
    %3472 = vmatpush2.msra.mxu0 0.0
    %3473 = vmatprep.subr.mxu0 0.0
    %3474 = vmatpush2.msra.mxu0 0.0
    %3475 = vmatprep.subr.mxu0 0.0
    %3476 = vmatpush2.msra.mxu0 0.0
    %3477 = vmatprep.subr.mxu0 0.0
    %3478 = vmatpush2.msra.mxu0 0.0
    %3479 = vmatprep.subr.mxu0 0.0
    %3480 = vmatpush2.msra.mxu0 0.0
    %3481 = vmatprep.subr.mxu0 0.0
    %3482 = vmatpush2.msra.mxu0 0.0
    %3483 = vmatprep.subr.mxu0 0.0
    %3484 = vmatpush2.msra.mxu0 0.0
    %3485 = vmatprep.subr.mxu0 0.0
    %3486 = vmatpush2.msra.mxu0 0.0
    %3487 = vmatprep.mubr.f32.mxu0 0.0
    %3488 = vmatmul.mubr.f32.gmra.mxu0 %v3421
    %v3489 = vpop.f32.mrf.mxu0
    %v3490 = vadd.f32 0.0, %v3489
    %v3491 = vpop.f32.mrf.mxu0
    %3492 = vdwg.mxu0
    %v3493 = vadd.f32 %v3419, %v3490
    %v3494 = vmax.f32 %v3493, 0.0
    %v3496 = vsel %vm2788, %v3494, 0
    %3498 = vmatprep.subr.mxu0 0.0
    %3499 = vmatpush1.msra.mxu0 0.0
    %3500 = vmatprep.subr.mxu0 0.0
    %3501 = vmatpush1.msra.mxu0 0.0
    %3502 = vmatprep.subr.mxu0 0.0
    %3503 = vmatpush1.msra.mxu0 0.0
    %3504 = vmatprep.subr.mxu0 0.0
    %3505 = vmatpush1.msra.mxu0 0.0
    %3506 = vmatprep.subr.mxu0 0.0
    %3507 = vmatpush1.msra.mxu0 0.0
    %3508 = vmatprep.subr.mxu0 0.0
    %3509 = vmatpush1.msra.mxu0 0.0
    %3510 = vmatprep.subr.mxu0 0.0
    %3511 = vmatpush1.msra.mxu0 0.0
    %3512 = vmatprep.subr.mxu0 0.0
    %3513 = vmatpush1.msra.mxu0 0.0
    %3514 = vmatprep.subr.mxu0 0.0
    %3515 = vmatpush1.msra.mxu0 0.0
    %3516 = vmatprep.subr.mxu0 0.0
    %3517 = vmatpush1.msra.mxu0 0.0
    %3518 = vmatprep.subr.mxu0 0.0
    %3519 = vmatpush1.msra.mxu0 0.0
    %3520 = vmatprep.subr.mxu0 0.0
    %3521 = vmatpush1.msra.mxu0 0.0
    %3522 = vmatprep.subr.mxu0 0.0
    %3523 = vmatpush1.msra.mxu0 %v2687
    %3524 = vmatprep.subr.mxu0 0.0
    %3525 = vmatpush1.msra.mxu0 %v2686
    %3526 = vmatprep.subr.mxu0 0.0
    %3527 = vmatpush1.msra.mxu0 %v2685
    %3528 = vmatprep.subr.mxu0 0.0
    %3529 = vmatpush1.msra.mxu0 %v2684
    %3530 = vmatprep.subr.mxu0 0.0
    %3531 = vmatpush2.msra.mxu0 0.0
    %3532 = vmatprep.subr.mxu0 0.0
    %3533 = vmatpush2.msra.mxu0 0.0
    %3534 = vmatprep.subr.mxu0 0.0
    %3535 = vmatpush2.msra.mxu0 0.0
    %3536 = vmatprep.subr.mxu0 0.0
    %3537 = vmatpush2.msra.mxu0 0.0
    %3538 = vmatprep.subr.mxu0 0.0
    %3539 = vmatpush2.msra.mxu0 0.0
    %3540 = vmatprep.subr.mxu0 0.0
    %3541 = vmatpush2.msra.mxu0 0.0
    %3542 = vmatprep.subr.mxu0 0.0
    %3543 = vmatpush2.msra.mxu0 0.0
    %3544 = vmatprep.subr.mxu0 0.0
    %3545 = vmatpush2.msra.mxu0 0.0
    %3546 = vmatprep.subr.mxu0 0.0
    %3547 = vmatpush2.msra.mxu0 0.0
    %3548 = vmatprep.subr.mxu0 0.0
    %3549 = vmatpush2.msra.mxu0 0.0
    %3550 = vmatprep.subr.mxu0 0.0
    %3551 = vmatpush2.msra.mxu0 0.0
    %3552 = vmatprep.subr.mxu0 0.0
    %3553 = vmatpush2.msra.mxu0 0.0
    %3554 = vmatprep.subr.mxu0 0.0
    %3555 = vmatpush2.msra.mxu0 0.0
    %3556 = vmatprep.subr.mxu0 0.0
    %3557 = vmatpush2.msra.mxu0 0.0
    %3558 = vmatprep.subr.mxu0 0.0
    %3559 = vmatpush2.msra.mxu0 0.0
    %3560 = vmatprep.subr.mxu0 0.0
    %3561 = vmatpush2.msra.mxu0 0.0
    %3562 = vmatprep.mubr.f32.mxu0 0.0
    %3563 = vmatmul.mubr.f32.gmra.mxu0 %v3496
    %v3564 = vpop.f32.mrf.mxu0
    %v3565 = vadd.f32 %v2698, %v3564
    %v3566 = vpop.f32.mrf.mxu0
    %3567 = vdwg.mxu0
    %s3568 = scalar_lea.vmem %s1, 4
    %v3569 = vld [vmem:[%s3568] sm:$0x3]
    %v3570 = vadd.f32 %v3565, %v3569
    %v3571 = vsel %vm2864, %v3570, -inf
    %3572 = vmax.xlane.f32.xlu0 %v3571
    %v3573 = vpop.xlane.xlu0 %3572
    %v3574 = vsub.f32 %v3570, %v3573
    %v3575 = vmul.f32 %v3574, 1.442695
    %v3576 = vpow.pop %v3575
    %v3577 = vsel %vm2864, %v3576, 0.0
    %3578 = vadd.xlane.f32.xlu0 %v3577
    %v3579 = vpop.xlane.xlu0 %3578
    %v3580 = vrcp.pop %v3579
    %v3581 = vmul.f32 %v3576, %v3580
    %v3582 = vsel %vm2876, %v3581, %v3417
    %s3583 = scalar_lea.vmem [#allocation5], 4
    %v3584 = vld [vmem:[%s3583] sm:$0x3]
    %v3586 = vsel %vm2708, %v3582, 0
    %3588 = vmatprep.subr.mxu0 0.0
    %3589 = vmatpush1.msra.mxu0 0.0
    %3590 = vmatprep.subr.mxu0 0.0
    %3591 = vmatpush1.msra.mxu0 0.0
    %3592 = vmatprep.subr.mxu0 0.0
    %3593 = vmatpush1.msra.mxu0 0.0
    %3594 = vmatprep.subr.mxu0 0.0
    %3595 = vmatpush1.msra.mxu0 0.0
    %3596 = vmatprep.subr.mxu0 0.0
    %3597 = vmatpush1.msra.mxu0 0.0
    %3598 = vmatprep.subr.mxu0 0.0
    %3599 = vmatpush1.msra.mxu0 0.0
    %3600 = vmatprep.subr.mxu0 0.0
    %3601 = vmatpush1.msra.mxu0 0.0
    %3602 = vmatprep.subr.mxu0 0.0
    %3603 = vmatpush1.msra.mxu0 0.0
    %3604 = vmatprep.subr.mxu0 0.0
    %3605 = vmatpush1.msra.mxu0 0.0
    %3606 = vmatprep.subr.mxu0 0.0
    %3607 = vmatpush1.msra.mxu0 0.0
    %3608 = vmatprep.subr.mxu0 0.0
    %3609 = vmatpush1.msra.mxu0 0.0
    %3610 = vmatprep.subr.mxu0 0.0
    %3611 = vmatpush1.msra.mxu0 0.0
    %3612 = vmatprep.subr.mxu0 0.0
    %3613 = vmatpush1.msra.mxu0 0.0
    %3614 = vmatprep.subr.mxu0 0.0
    %3615 = vmatpush1.msra.mxu0 0.0
    %3616 = vmatprep.subr.mxu0 0.0
    %3617 = vmatpush1.msra.mxu0 0.0
    %3618 = vmatprep.subr.mxu0 0.0
    %3619 = vmatpush1.msra.mxu0 %v2883
    %3620 = vmatprep.subr.mxu0 0.0
    %3621 = vmatpush2.msra.mxu0 0.0
    %3622 = vmatprep.subr.mxu0 0.0
    %3623 = vmatpush2.msra.mxu0 0.0
    %3624 = vmatprep.subr.mxu0 0.0
    %3625 = vmatpush2.msra.mxu0 0.0
    %3626 = vmatprep.subr.mxu0 0.0
    %3627 = vmatpush2.msra.mxu0 0.0
    %3628 = vmatprep.subr.mxu0 0.0
    %3629 = vmatpush2.msra.mxu0 0.0
    %3630 = vmatprep.subr.mxu0 0.0
    %3631 = vmatpush2.msra.mxu0 0.0
    %3632 = vmatprep.subr.mxu0 0.0
    %3633 = vmatpush2.msra.mxu0 0.0
    %3634 = vmatprep.subr.mxu0 0.0
    %3635 = vmatpush2.msra.mxu0 0.0
    %3636 = vmatprep.subr.mxu0 0.0
    %3637 = vmatpush2.msra.mxu0 0.0
    %3638 = vmatprep.subr.mxu0 0.0
    %3639 = vmatpush2.msra.mxu0 0.0
    %3640 = vmatprep.subr.mxu0 0.0
    %3641 = vmatpush2.msra.mxu0 0.0
    %3642 = vmatprep.subr.mxu0 0.0
    %3643 = vmatpush2.msra.mxu0 0.0
    %3644 = vmatprep.subr.mxu0 0.0
    %3645 = vmatpush2.msra.mxu0 0.0
    %3646 = vmatprep.subr.mxu0 0.0
    %3647 = vmatpush2.msra.mxu0 0.0
    %3648 = vmatprep.subr.mxu0 0.0
    %3649 = vmatpush2.msra.mxu0 0.0
    %3650 = vmatprep.subr.mxu0 0.0
    %3651 = vmatpush2.msra.mxu0 0.0
    %3652 = vmatprep.mubr.f32.mxu0 0.0
    %3653 = vmatmul.mubr.f32.gmra.mxu0 %v3586
    %v3654 = vpop.f32.mrf.mxu0
    %v3655 = vadd.f32 0.0, %v3654
    %v3656 = vpop.f32.mrf.mxu0
    %3657 = vdwg.mxu0
    %v3658 = vadd.f32 %v3584, %v3655
    %v3659 = vmax.f32 %v3658, 0.0
    %v3661 = vsel %vm2788, %v3659, 0
    %3663 = vmatprep.subr.mxu0 0.0
    %3664 = vmatpush1.msra.mxu0 0.0
    %3665 = vmatprep.subr.mxu0 0.0
    %3666 = vmatpush1.msra.mxu0 0.0
    %3667 = vmatprep.subr.mxu0 0.0
    %3668 = vmatpush1.msra.mxu0 0.0
    %3669 = vmatprep.subr.mxu0 0.0
    %3670 = vmatpush1.msra.mxu0 0.0
    %3671 = vmatprep.subr.mxu0 0.0
    %3672 = vmatpush1.msra.mxu0 0.0
    %3673 = vmatprep.subr.mxu0 0.0
    %3674 = vmatpush1.msra.mxu0 0.0
    %3675 = vmatprep.subr.mxu0 0.0
    %3676 = vmatpush1.msra.mxu0 0.0
    %3677 = vmatprep.subr.mxu0 0.0
    %3678 = vmatpush1.msra.mxu0 0.0
    %3679 = vmatprep.subr.mxu0 0.0
    %3680 = vmatpush1.msra.mxu0 0.0
    %3681 = vmatprep.subr.mxu0 0.0
    %3682 = vmatpush1.msra.mxu0 0.0
    %3683 = vmatprep.subr.mxu0 0.0
    %3684 = vmatpush1.msra.mxu0 0.0
    %3685 = vmatprep.subr.mxu0 0.0
    %3686 = vmatpush1.msra.mxu0 0.0
    %3687 = vmatprep.subr.mxu0 0.0
    %3688 = vmatpush1.msra.mxu0 %v2692
    %3689 = vmatprep.subr.mxu0 0.0
    %3690 = vmatpush1.msra.mxu0 %v2691
    %3691 = vmatprep.subr.mxu0 0.0
    %3692 = vmatpush1.msra.mxu0 %v2690
    %3693 = vmatprep.subr.mxu0 0.0
    %3694 = vmatpush1.msra.mxu0 %v2689
    %3695 = vmatprep.subr.mxu0 0.0
    %3696 = vmatpush2.msra.mxu0 0.0
    %3697 = vmatprep.subr.mxu0 0.0
    %3698 = vmatpush2.msra.mxu0 0.0
    %3699 = vmatprep.subr.mxu0 0.0
    %3700 = vmatpush2.msra.mxu0 0.0
    %3701 = vmatprep.subr.mxu0 0.0
    %3702 = vmatpush2.msra.mxu0 0.0
    %3703 = vmatprep.subr.mxu0 0.0
    %3704 = vmatpush2.msra.mxu0 0.0
    %3705 = vmatprep.subr.mxu0 0.0
    %3706 = vmatpush2.msra.mxu0 0.0
    %3707 = vmatprep.subr.mxu0 0.0
    %3708 = vmatpush2.msra.mxu0 0.0
    %3709 = vmatprep.subr.mxu0 0.0
    %3710 = vmatpush2.msra.mxu0 0.0
    %3711 = vmatprep.subr.mxu0 0.0
    %3712 = vmatpush2.msra.mxu0 0.0
    %3713 = vmatprep.subr.mxu0 0.0
    %3714 = vmatpush2.msra.mxu0 0.0
    %3715 = vmatprep.subr.mxu0 0.0
    %3716 = vmatpush2.msra.mxu0 0.0
    %3717 = vmatprep.subr.mxu0 0.0
    %3718 = vmatpush2.msra.mxu0 0.0
    %3719 = vmatprep.subr.mxu0 0.0
    %3720 = vmatpush2.msra.mxu0 0.0
    %3721 = vmatprep.subr.mxu0 0.0
    %3722 = vmatpush2.msra.mxu0 0.0
    %3723 = vmatprep.subr.mxu0 0.0
    %3724 = vmatpush2.msra.mxu0 0.0
    %3725 = vmatprep.subr.mxu0 0.0
    %3726 = vmatpush2.msra.mxu0 0.0
    %3727 = vmatprep.mubr.f32.mxu0 0.0
    %3728 = vmatmul.mubr.f32.gmra.mxu0 %v3661
    %v3729 = vpop.f32.mrf.mxu0
    %v3730 = vadd.f32 %v2705, %v3729
    %v3731 = vpop.f32.mrf.mxu0
    %3732 = vdwg.mxu0
    %v3733 = vmul.f32 %v3730, 0.5
    %v3734 = vmul.f32 %v3733, 1.442695
    %v3735 = vpow.pop %v3734
    %s3736 = scalar_lea.vmem %s2, 4
    %v3737 = vld [vmem:[%s3736] sm:$0x3]
    %3739 = vrot.lane.b32.xlu0 %v3737, 2
    %v3740 = vpop.permute.xlu0 %3739
    %v3742 = vmul.f32 %v3735, %v3740
    %3744 = vrot.lane.b32.xlu0 %v3742, 126
    %v3745 = vpop.permute.xlu0 %3744
    %v3747 = vadd.f32 %v3730, %v3745
    %3749 = vrot.lane.b32.xlu0 %v3581, 3
    %v3750 = vpop.permute.xlu0 %3749
    %3753 = vrot.lane.b32.xlu0 %v3730, 6
    %v3754 = vpop.permute.xlu0 %3753
    %3757 = vrot.lane.b32.xlu0 %v3747, 10
    %v3758 = vpop.permute.xlu0 %3757
    %v3760 = vsel %vm2876, %v3565, %v3750
    %v3761 = vsel %vm3057, %v3760, %v3754
    %v3762 = vsel %vm3059, %v3761, %v3758
    %s3763 = scalar_lea.vmem [#allocation9], 4
    %3764 = vst.msk [vmem:[%s3763] sm:$0x3] %vm3061, %v3762
    %3765 = vrot.lane.b32.xlu0 %v3747, 3
    %v3766 = vpop.permute.xlu0 %3765
    %v3768 = vsel %vm2876, %v3581, %v3766
    %s3769 = scalar_lea.vmem [#allocation4], 6
    %v3770 = vld [vmem:[%s3769] sm:$0x3]
    %v3772 = vsel %vm2708, %v3768, 0
    %3774 = vmatprep.subr.mxu0 0.0
    %3775 = vmatpush1.msra.mxu0 0.0
    %3776 = vmatprep.subr.mxu0 0.0
    %3777 = vmatpush1.msra.mxu0 0.0
    %3778 = vmatprep.subr.mxu0 0.0
    %3779 = vmatpush1.msra.mxu0 0.0
    %3780 = vmatprep.subr.mxu0 0.0
    %3781 = vmatpush1.msra.mxu0 0.0
    %3782 = vmatprep.subr.mxu0 0.0
    %3783 = vmatpush1.msra.mxu0 0.0
    %3784 = vmatprep.subr.mxu0 0.0
    %3785 = vmatpush1.msra.mxu0 0.0
    %3786 = vmatprep.subr.mxu0 0.0
    %3787 = vmatpush1.msra.mxu0 0.0
    %3788 = vmatprep.subr.mxu0 0.0
    %3789 = vmatpush1.msra.mxu0 0.0
    %3790 = vmatprep.subr.mxu0 0.0
    %3791 = vmatpush1.msra.mxu0 0.0
    %3792 = vmatprep.subr.mxu0 0.0
    %3793 = vmatpush1.msra.mxu0 0.0
    %3794 = vmatprep.subr.mxu0 0.0
    %3795 = vmatpush1.msra.mxu0 0.0
    %3796 = vmatprep.subr.mxu0 0.0
    %3797 = vmatpush1.msra.mxu0 0.0
    %3798 = vmatprep.subr.mxu0 0.0
    %3799 = vmatpush1.msra.mxu0 0.0
    %3800 = vmatprep.subr.mxu0 0.0
    %3801 = vmatpush1.msra.mxu0 0.0
    %3802 = vmatprep.subr.mxu0 0.0
    %3803 = vmatpush1.msra.mxu0 0.0
    %3804 = vmatprep.subr.mxu0 0.0
    %3805 = vmatpush1.msra.mxu0 %v2714
    %3806 = vmatprep.subr.mxu0 0.0
    %3807 = vmatpush2.msra.mxu0 0.0
    %3808 = vmatprep.subr.mxu0 0.0
    %3809 = vmatpush2.msra.mxu0 0.0
    %3810 = vmatprep.subr.mxu0 0.0
    %3811 = vmatpush2.msra.mxu0 0.0
    %3812 = vmatprep.subr.mxu0 0.0
    %3813 = vmatpush2.msra.mxu0 0.0
    %3814 = vmatprep.subr.mxu0 0.0
    %3815 = vmatpush2.msra.mxu0 0.0
    %3816 = vmatprep.subr.mxu0 0.0
    %3817 = vmatpush2.msra.mxu0 0.0
    %3818 = vmatprep.subr.mxu0 0.0
    %3819 = vmatpush2.msra.mxu0 0.0
    %3820 = vmatprep.subr.mxu0 0.0
    %3821 = vmatpush2.msra.mxu0 0.0
    %3822 = vmatprep.subr.mxu0 0.0
    %3823 = vmatpush2.msra.mxu0 0.0
    %3824 = vmatprep.subr.mxu0 0.0
    %3825 = vmatpush2.msra.mxu0 0.0
    %3826 = vmatprep.subr.mxu0 0.0
    %3827 = vmatpush2.msra.mxu0 0.0
    %3828 = vmatprep.subr.mxu0 0.0
    %3829 = vmatpush2.msra.mxu0 0.0
    %3830 = vmatprep.subr.mxu0 0.0
    %3831 = vmatpush2.msra.mxu0 0.0
    %3832 = vmatprep.subr.mxu0 0.0
    %3833 = vmatpush2.msra.mxu0 0.0
    %3834 = vmatprep.subr.mxu0 0.0
    %3835 = vmatpush2.msra.mxu0 0.0
    %3836 = vmatprep.subr.mxu0 0.0
    %3837 = vmatpush2.msra.mxu0 0.0
    %3838 = vmatprep.mubr.f32.mxu0 0.0
    %3839 = vmatmul.mubr.f32.gmra.mxu0 %v3772
    %v3840 = vpop.f32.mrf.mxu0
    %v3841 = vadd.f32 0.0, %v3840
    %v3842 = vpop.f32.mrf.mxu0
    %3843 = vdwg.mxu0
    %v3844 = vadd.f32 %v3770, %v3841
    %v3845 = vmax.f32 %v3844, 0.0
    %v3847 = vsel %vm2788, %v3845, 0
    %3849 = vmatprep.subr.mxu0 0.0
    %3850 = vmatpush1.msra.mxu0 0.0
    %3851 = vmatprep.subr.mxu0 0.0
    %3852 = vmatpush1.msra.mxu0 0.0
    %3853 = vmatprep.subr.mxu0 0.0
    %3854 = vmatpush1.msra.mxu0 0.0
    %3855 = vmatprep.subr.mxu0 0.0
    %3856 = vmatpush1.msra.mxu0 0.0
    %3857 = vmatprep.subr.mxu0 0.0
    %3858 = vmatpush1.msra.mxu0 0.0
    %3859 = vmatprep.subr.mxu0 0.0
    %3860 = vmatpush1.msra.mxu0 0.0
    %3861 = vmatprep.subr.mxu0 0.0
    %3862 = vmatpush1.msra.mxu0 0.0
    %3863 = vmatprep.subr.mxu0 0.0
    %3864 = vmatpush1.msra.mxu0 0.0
    %3865 = vmatprep.subr.mxu0 0.0
    %3866 = vmatpush1.msra.mxu0 0.0
    %3867 = vmatprep.subr.mxu0 0.0
    %3868 = vmatpush1.msra.mxu0 0.0
    %3869 = vmatprep.subr.mxu0 0.0
    %3870 = vmatpush1.msra.mxu0 0.0
    %3871 = vmatprep.subr.mxu0 0.0
    %3872 = vmatpush1.msra.mxu0 0.0
    %3873 = vmatprep.subr.mxu0 0.0
    %3874 = vmatpush1.msra.mxu0 %v2687
    %3875 = vmatprep.subr.mxu0 0.0
    %3876 = vmatpush1.msra.mxu0 %v2686
    %3877 = vmatprep.subr.mxu0 0.0
    %3878 = vmatpush1.msra.mxu0 %v2685
    %3879 = vmatprep.subr.mxu0 0.0
    %3880 = vmatpush1.msra.mxu0 %v2684
    %3881 = vmatprep.subr.mxu0 0.0
    %3882 = vmatpush2.msra.mxu0 0.0
    %3883 = vmatprep.subr.mxu0 0.0
    %3884 = vmatpush2.msra.mxu0 0.0
    %3885 = vmatprep.subr.mxu0 0.0
    %3886 = vmatpush2.msra.mxu0 0.0
    %3887 = vmatprep.subr.mxu0 0.0
    %3888 = vmatpush2.msra.mxu0 0.0
    %3889 = vmatprep.subr.mxu0 0.0
    %3890 = vmatpush2.msra.mxu0 0.0
    %3891 = vmatprep.subr.mxu0 0.0
    %3892 = vmatpush2.msra.mxu0 0.0
    %3893 = vmatprep.subr.mxu0 0.0
    %3894 = vmatpush2.msra.mxu0 0.0
    %3895 = vmatprep.subr.mxu0 0.0
    %3896 = vmatpush2.msra.mxu0 0.0
    %3897 = vmatprep.subr.mxu0 0.0
    %3898 = vmatpush2.msra.mxu0 0.0
    %3899 = vmatprep.subr.mxu0 0.0
    %3900 = vmatpush2.msra.mxu0 0.0
    %3901 = vmatprep.subr.mxu0 0.0
    %3902 = vmatpush2.msra.mxu0 0.0
    %3903 = vmatprep.subr.mxu0 0.0
    %3904 = vmatpush2.msra.mxu0 0.0
    %3905 = vmatprep.subr.mxu0 0.0
    %3906 = vmatpush2.msra.mxu0 0.0
    %3907 = vmatprep.subr.mxu0 0.0
    %3908 = vmatpush2.msra.mxu0 0.0
    %3909 = vmatprep.subr.mxu0 0.0
    %3910 = vmatpush2.msra.mxu0 0.0
    %3911 = vmatprep.subr.mxu0 0.0
    %3912 = vmatpush2.msra.mxu0 0.0
    %3913 = vmatprep.mubr.f32.mxu0 0.0
    %3914 = vmatmul.mubr.f32.gmra.mxu0 %v3847
    %v3915 = vpop.f32.mrf.mxu0
    %v3916 = vadd.f32 %v2698, %v3915
    %v3917 = vpop.f32.mrf.mxu0
    %3918 = vdwg.mxu0
    %s3919 = scalar_lea.vmem %s1, 6
    %v3920 = vld [vmem:[%s3919] sm:$0x3]
    %v3921 = vadd.f32 %v3916, %v3920
    %v3922 = vsel %vm2864, %v3921, -inf
    %3923 = vmax.xlane.f32.xlu0 %v3922
    %v3924 = vpop.xlane.xlu0 %3923
    %v3925 = vsub.f32 %v3921, %v3924
    %v3926 = vmul.f32 %v3925, 1.442695
    %v3927 = vpow.pop %v3926
    %v3928 = vsel %vm2864, %v3927, 0.0
    %3929 = vadd.xlane.f32.xlu0 %v3928
    %v3930 = vpop.xlane.xlu0 %3929
    %v3931 = vrcp.pop %v3930
    %v3932 = vmul.f32 %v3927, %v3931
    %v3933 = vsel %vm2876, %v3932, %v3768
    %s3934 = scalar_lea.vmem [#allocation5], 6
    %v3935 = vld [vmem:[%s3934] sm:$0x3]
    %v3937 = vsel %vm2708, %v3933, 0
    %3939 = vmatprep.subr.mxu0 0.0
    %3940 = vmatpush1.msra.mxu0 0.0
    %3941 = vmatprep.subr.mxu0 0.0
    %3942 = vmatpush1.msra.mxu0 0.0
    %3943 = vmatprep.subr.mxu0 0.0
    %3944 = vmatpush1.msra.mxu0 0.0
    %3945 = vmatprep.subr.mxu0 0.0
    %3946 = vmatpush1.msra.mxu0 0.0
    %3947 = vmatprep.subr.mxu0 0.0
    %3948 = vmatpush1.msra.mxu0 0.0
    %3949 = vmatprep.subr.mxu0 0.0
    %3950 = vmatpush1.msra.mxu0 0.0
    %3951 = vmatprep.subr.mxu0 0.0
    %3952 = vmatpush1.msra.mxu0 0.0
    %3953 = vmatprep.subr.mxu0 0.0
    %3954 = vmatpush1.msra.mxu0 0.0
    %3955 = vmatprep.subr.mxu0 0.0
    %3956 = vmatpush1.msra.mxu0 0.0
    %3957 = vmatprep.subr.mxu0 0.0
    %3958 = vmatpush1.msra.mxu0 0.0
    %3959 = vmatprep.subr.mxu0 0.0
    %3960 = vmatpush1.msra.mxu0 0.0
    %3961 = vmatprep.subr.mxu0 0.0
    %3962 = vmatpush1.msra.mxu0 0.0
    %3963 = vmatprep.subr.mxu0 0.0
    %3964 = vmatpush1.msra.mxu0 0.0
    %3965 = vmatprep.subr.mxu0 0.0
    %3966 = vmatpush1.msra.mxu0 0.0
    %3967 = vmatprep.subr.mxu0 0.0
    %3968 = vmatpush1.msra.mxu0 0.0
    %3969 = vmatprep.subr.mxu0 0.0
    %3970 = vmatpush1.msra.mxu0 %v2883
    %3971 = vmatprep.subr.mxu0 0.0
    %3972 = vmatpush2.msra.mxu0 0.0
    %3973 = vmatprep.subr.mxu0 0.0
    %3974 = vmatpush2.msra.mxu0 0.0
    %3975 = vmatprep.subr.mxu0 0.0
    %3976 = vmatpush2.msra.mxu0 0.0
    %3977 = vmatprep.subr.mxu0 0.0
    %3978 = vmatpush2.msra.mxu0 0.0
    %3979 = vmatprep.subr.mxu0 0.0
    %3980 = vmatpush2.msra.mxu0 0.0
    %3981 = vmatprep.subr.mxu0 0.0
    %3982 = vmatpush2.msra.mxu0 0.0
    %3983 = vmatprep.subr.mxu0 0.0
    %3984 = vmatpush2.msra.mxu0 0.0
    %3985 = vmatprep.subr.mxu0 0.0
    %3986 = vmatpush2.msra.mxu0 0.0
    %3987 = vmatprep.subr.mxu0 0.0
    %3988 = vmatpush2.msra.mxu0 0.0
    %3989 = vmatprep.subr.mxu0 0.0
    %3990 = vmatpush2.msra.mxu0 0.0
    %3991 = vmatprep.subr.mxu0 0.0
    %3992 = vmatpush2.msra.mxu0 0.0
    %3993 = vmatprep.subr.mxu0 0.0
    %3994 = vmatpush2.msra.mxu0 0.0
    %3995 = vmatprep.subr.mxu0 0.0
    %3996 = vmatpush2.msra.mxu0 0.0
    %3997 = vmatprep.subr.mxu0 0.0
    %3998 = vmatpush2.msra.mxu0 0.0
    %3999 = vmatprep.subr.mxu0 0.0
    %4000 = vmatpush2.msra.mxu0 0.0
    %4001 = vmatprep.subr.mxu0 0.0
    %4002 = vmatpush2.msra.mxu0 0.0
    %4003 = vmatprep.mubr.f32.mxu0 0.0
    %4004 = vmatmul.mubr.f32.gmra.mxu0 %v3937
    %v4005 = vpop.f32.mrf.mxu0
    %v4006 = vadd.f32 0.0, %v4005
    %v4007 = vpop.f32.mrf.mxu0
    %4008 = vdwg.mxu0
    %v4009 = vadd.f32 %v3935, %v4006
    %v4010 = vmax.f32 %v4009, 0.0
    %v4012 = vsel %vm2788, %v4010, 0
    %4014 = vmatprep.subr.mxu0 0.0
    %4015 = vmatpush1.msra.mxu0 0.0
    %4016 = vmatprep.subr.mxu0 0.0
    %4017 = vmatpush1.msra.mxu0 0.0
    %4018 = vmatprep.subr.mxu0 0.0
    %4019 = vmatpush1.msra.mxu0 0.0
    %4020 = vmatprep.subr.mxu0 0.0
    %4021 = vmatpush1.msra.mxu0 0.0
    %4022 = vmatprep.subr.mxu0 0.0
    %4023 = vmatpush1.msra.mxu0 0.0
    %4024 = vmatprep.subr.mxu0 0.0
    %4025 = vmatpush1.msra.mxu0 0.0
    %4026 = vmatprep.subr.mxu0 0.0
    %4027 = vmatpush1.msra.mxu0 0.0
    %4028 = vmatprep.subr.mxu0 0.0
    %4029 = vmatpush1.msra.mxu0 0.0
    %4030 = vmatprep.subr.mxu0 0.0
    %4031 = vmatpush1.msra.mxu0 0.0
    %4032 = vmatprep.subr.mxu0 0.0
    %4033 = vmatpush1.msra.mxu0 0.0
    %4034 = vmatprep.subr.mxu0 0.0
    %4035 = vmatpush1.msra.mxu0 0.0
    %4036 = vmatprep.subr.mxu0 0.0
    %4037 = vmatpush1.msra.mxu0 0.0
    %4038 = vmatprep.subr.mxu0 0.0
    %4039 = vmatpush1.msra.mxu0 %v2692
    %4040 = vmatprep.subr.mxu0 0.0
    %4041 = vmatpush1.msra.mxu0 %v2691
    %4042 = vmatprep.subr.mxu0 0.0
    %4043 = vmatpush1.msra.mxu0 %v2690
    %4044 = vmatprep.subr.mxu0 0.0
    %4045 = vmatpush1.msra.mxu0 %v2689
    %4046 = vmatprep.subr.mxu0 0.0
    %4047 = vmatpush2.msra.mxu0 0.0
    %4048 = vmatprep.subr.mxu0 0.0
    %4049 = vmatpush2.msra.mxu0 0.0
    %4050 = vmatprep.subr.mxu0 0.0
    %4051 = vmatpush2.msra.mxu0 0.0
    %4052 = vmatprep.subr.mxu0 0.0
    %4053 = vmatpush2.msra.mxu0 0.0
    %4054 = vmatprep.subr.mxu0 0.0
    %4055 = vmatpush2.msra.mxu0 0.0
    %4056 = vmatprep.subr.mxu0 0.0
    %4057 = vmatpush2.msra.mxu0 0.0
    %4058 = vmatprep.subr.mxu0 0.0
    %4059 = vmatpush2.msra.mxu0 0.0
    %4060 = vmatprep.subr.mxu0 0.0
    %4061 = vmatpush2.msra.mxu0 0.0
    %4062 = vmatprep.subr.mxu0 0.0
    %4063 = vmatpush2.msra.mxu0 0.0
    %4064 = vmatprep.subr.mxu0 0.0
    %4065 = vmatpush2.msra.mxu0 0.0
    %4066 = vmatprep.subr.mxu0 0.0
    %4067 = vmatpush2.msra.mxu0 0.0
    %4068 = vmatprep.subr.mxu0 0.0
    %4069 = vmatpush2.msra.mxu0 0.0
    %4070 = vmatprep.subr.mxu0 0.0
    %4071 = vmatpush2.msra.mxu0 0.0
    %4072 = vmatprep.subr.mxu0 0.0
    %4073 = vmatpush2.msra.mxu0 0.0
    %4074 = vmatprep.subr.mxu0 0.0
    %4075 = vmatpush2.msra.mxu0 0.0
    %4076 = vmatprep.subr.mxu0 0.0
    %4077 = vmatpush2.msra.mxu0 0.0
    %4078 = vmatprep.mubr.f32.mxu0 0.0
    %4079 = vmatmul.mubr.f32.gmra.mxu0 %v4012
    %v4080 = vpop.f32.mrf.mxu0
    %v4081 = vadd.f32 %v2705, %v4080
    %v4082 = vpop.f32.mrf.mxu0
    %4083 = vdwg.mxu0
    %v4084 = vmul.f32 %v4081, 0.5
    %v4085 = vmul.f32 %v4084, 1.442695
    %v4086 = vpow.pop %v4085
    %s4087 = scalar_lea.vmem %s2, 6
    %v4088 = vld [vmem:[%s4087] sm:$0x3]
    %4090 = vrot.lane.b32.xlu0 %v4088, 2
    %v4091 = vpop.permute.xlu0 %4090
    %v4093 = vmul.f32 %v4086, %v4091
    %4095 = vrot.lane.b32.xlu0 %v4093, 126
    %v4096 = vpop.permute.xlu0 %4095
    %v4098 = vadd.f32 %v4081, %v4096
    %4100 = vrot.lane.b32.xlu0 %v3932, 3
    %v4101 = vpop.permute.xlu0 %4100
    %4104 = vrot.lane.b32.xlu0 %v4081, 6
    %v4105 = vpop.permute.xlu0 %4104
    %4108 = vrot.lane.b32.xlu0 %v4098, 10
    %v4109 = vpop.permute.xlu0 %4108
    %v4111 = vsel %vm2876, %v3916, %v4101
    %v4112 = vsel %vm3057, %v4111, %v4105
    %v4113 = vsel %vm3059, %v4112, %v4109
    %s4114 = scalar_lea.vmem [#allocation9], 6
    %4115 = vst.msk [vmem:[%s4114] sm:$0x3] %vm3061, %v4113
    %4116 = vrot.lane.b32.xlu0 %v4098, 3
    %v4117 = vpop.permute.xlu0 %4116
    %v4119 = vsel %vm2876, %v3932, %v4117
    %s4120 = scalar_lea.vmem [#allocation4], 8
    %v4121 = vld [vmem:[%s4120] sm:$0x3]
    %v4123 = vsel %vm2708, %v4119, 0
    %4125 = vmatprep.subr.mxu0 0.0
    %4126 = vmatpush1.msra.mxu0 0.0
    %4127 = vmatprep.subr.mxu0 0.0
    %4128 = vmatpush1.msra.mxu0 0.0
    %4129 = vmatprep.subr.mxu0 0.0
    %4130 = vmatpush1.msra.mxu0 0.0
    %4131 = vmatprep.subr.mxu0 0.0
    %4132 = vmatpush1.msra.mxu0 0.0
    %4133 = vmatprep.subr.mxu0 0.0
    %4134 = vmatpush1.msra.mxu0 0.0
    %4135 = vmatprep.subr.mxu0 0.0
    %4136 = vmatpush1.msra.mxu0 0.0
    %4137 = vmatprep.subr.mxu0 0.0
    %4138 = vmatpush1.msra.mxu0 0.0
    %4139 = vmatprep.subr.mxu0 0.0
    %4140 = vmatpush1.msra.mxu0 0.0
    %4141 = vmatprep.subr.mxu0 0.0
    %4142 = vmatpush1.msra.mxu0 0.0
    %4143 = vmatprep.subr.mxu0 0.0
    %4144 = vmatpush1.msra.mxu0 0.0
    %4145 = vmatprep.subr.mxu0 0.0
    %4146 = vmatpush1.msra.mxu0 0.0
    %4147 = vmatprep.subr.mxu0 0.0
    %4148 = vmatpush1.msra.mxu0 0.0
    %4149 = vmatprep.subr.mxu0 0.0
    %4150 = vmatpush1.msra.mxu0 0.0
    %4151 = vmatprep.subr.mxu0 0.0
    %4152 = vmatpush1.msra.mxu0 0.0
    %4153 = vmatprep.subr.mxu0 0.0
    %4154 = vmatpush1.msra.mxu0 0.0
    %4155 = vmatprep.subr.mxu0 0.0
    %4156 = vmatpush1.msra.mxu0 %v2714
    %4157 = vmatprep.subr.mxu0 0.0
    %4158 = vmatpush2.msra.mxu0 0.0
    %4159 = vmatprep.subr.mxu0 0.0
    %4160 = vmatpush2.msra.mxu0 0.0
    %4161 = vmatprep.subr.mxu0 0.0
    %4162 = vmatpush2.msra.mxu0 0.0
    %4163 = vmatprep.subr.mxu0 0.0
    %4164 = vmatpush2.msra.mxu0 0.0
    %4165 = vmatprep.subr.mxu0 0.0
    %4166 = vmatpush2.msra.mxu0 0.0
    %4167 = vmatprep.subr.mxu0 0.0
    %4168 = vmatpush2.msra.mxu0 0.0
    %4169 = vmatprep.subr.mxu0 0.0
    %4170 = vmatpush2.msra.mxu0 0.0
    %4171 = vmatprep.subr.mxu0 0.0
    %4172 = vmatpush2.msra.mxu0 0.0
    %4173 = vmatprep.subr.mxu0 0.0
    %4174 = vmatpush2.msra.mxu0 0.0
    %4175 = vmatprep.subr.mxu0 0.0
    %4176 = vmatpush2.msra.mxu0 0.0
    %4177 = vmatprep.subr.mxu0 0.0
    %4178 = vmatpush2.msra.mxu0 0.0
    %4179 = vmatprep.subr.mxu0 0.0
    %4180 = vmatpush2.msra.mxu0 0.0
    %4181 = vmatprep.subr.mxu0 0.0
    %4182 = vmatpush2.msra.mxu0 0.0
    %4183 = vmatprep.subr.mxu0 0.0
    %4184 = vmatpush2.msra.mxu0 0.0
    %4185 = vmatprep.subr.mxu0 0.0
    %4186 = vmatpush2.msra.mxu0 0.0
    %4187 = vmatprep.subr.mxu0 0.0
    %4188 = vmatpush2.msra.mxu0 0.0
    %4189 = vmatprep.mubr.f32.mxu0 0.0
    %4190 = vmatmul.mubr.f32.gmra.mxu0 %v4123
    %v4191 = vpop.f32.mrf.mxu0
    %v4192 = vadd.f32 0.0, %v4191
    %v4193 = vpop.f32.mrf.mxu0
    %4194 = vdwg.mxu0
    %v4195 = vadd.f32 %v4121, %v4192
    %v4196 = vmax.f32 %v4195, 0.0
    %v4198 = vsel %vm2788, %v4196, 0
    %4200 = vmatprep.subr.mxu0 0.0
    %4201 = vmatpush1.msra.mxu0 0.0
    %4202 = vmatprep.subr.mxu0 0.0
    %4203 = vmatpush1.msra.mxu0 0.0
    %4204 = vmatprep.subr.mxu0 0.0
    %4205 = vmatpush1.msra.mxu0 0.0
    %4206 = vmatprep.subr.mxu0 0.0
    %4207 = vmatpush1.msra.mxu0 0.0
    %4208 = vmatprep.subr.mxu0 0.0
    %4209 = vmatpush1.msra.mxu0 0.0
    %4210 = vmatprep.subr.mxu0 0.0
    %4211 = vmatpush1.msra.mxu0 0.0
    %4212 = vmatprep.subr.mxu0 0.0
    %4213 = vmatpush1.msra.mxu0 0.0
    %4214 = vmatprep.subr.mxu0 0.0
    %4215 = vmatpush1.msra.mxu0 0.0
    %4216 = vmatprep.subr.mxu0 0.0
    %4217 = vmatpush1.msra.mxu0 0.0
    %4218 = vmatprep.subr.mxu0 0.0
    %4219 = vmatpush1.msra.mxu0 0.0
    %4220 = vmatprep.subr.mxu0 0.0
    %4221 = vmatpush1.msra.mxu0 0.0
    %4222 = vmatprep.subr.mxu0 0.0
    %4223 = vmatpush1.msra.mxu0 0.0
    %4224 = vmatprep.subr.mxu0 0.0
    %4225 = vmatpush1.msra.mxu0 %v2687
    %4226 = vmatprep.subr.mxu0 0.0
    %4227 = vmatpush1.msra.mxu0 %v2686
    %4228 = vmatprep.subr.mxu0 0.0
    %4229 = vmatpush1.msra.mxu0 %v2685
    %4230 = vmatprep.subr.mxu0 0.0
    %4231 = vmatpush1.msra.mxu0 %v2684
    %4232 = vmatprep.subr.mxu0 0.0
    %4233 = vmatpush2.msra.mxu0 0.0
    %4234 = vmatprep.subr.mxu0 0.0
    %4235 = vmatpush2.msra.mxu0 0.0
    %4236 = vmatprep.subr.mxu0 0.0
    %4237 = vmatpush2.msra.mxu0 0.0
    %4238 = vmatprep.subr.mxu0 0.0
    %4239 = vmatpush2.msra.mxu0 0.0
    %4240 = vmatprep.subr.mxu0 0.0
    %4241 = vmatpush2.msra.mxu0 0.0
    %4242 = vmatprep.subr.mxu0 0.0
    %4243 = vmatpush2.msra.mxu0 0.0
    %4244 = vmatprep.subr.mxu0 0.0
    %4245 = vmatpush2.msra.mxu0 0.0
    %4246 = vmatprep.subr.mxu0 0.0
    %4247 = vmatpush2.msra.mxu0 0.0
    %4248 = vmatprep.subr.mxu0 0.0
    %4249 = vmatpush2.msra.mxu0 0.0
    %4250 = vmatprep.subr.mxu0 0.0
    %4251 = vmatpush2.msra.mxu0 0.0
    %4252 = vmatprep.subr.mxu0 0.0
    %4253 = vmatpush2.msra.mxu0 0.0
    %4254 = vmatprep.subr.mxu0 0.0
    %4255 = vmatpush2.msra.mxu0 0.0
    %4256 = vmatprep.subr.mxu0 0.0
    %4257 = vmatpush2.msra.mxu0 0.0
    %4258 = vmatprep.subr.mxu0 0.0
    %4259 = vmatpush2.msra.mxu0 0.0
    %4260 = vmatprep.subr.mxu0 0.0
    %4261 = vmatpush2.msra.mxu0 0.0
    %4262 = vmatprep.subr.mxu0 0.0
    %4263 = vmatpush2.msra.mxu0 0.0
    %4264 = vmatprep.mubr.f32.mxu0 0.0
    %4265 = vmatmul.mubr.f32.gmra.mxu0 %v4198
    %v4266 = vpop.f32.mrf.mxu0
    %v4267 = vadd.f32 %v2698, %v4266
    %v4268 = vpop.f32.mrf.mxu0
    %4269 = vdwg.mxu0
    %s4270 = scalar_lea.vmem %s1, 8
    %v4271 = vld [vmem:[%s4270] sm:$0x3]
    %v4272 = vadd.f32 %v4267, %v4271
    %v4273 = vsel %vm2864, %v4272, -inf
    %4274 = vmax.xlane.f32.xlu0 %v4273
    %v4275 = vpop.xlane.xlu0 %4274
    %v4276 = vsub.f32 %v4272, %v4275
    %v4277 = vmul.f32 %v4276, 1.442695
    %v4278 = vpow.pop %v4277
    %v4279 = vsel %vm2864, %v4278, 0.0
    %4280 = vadd.xlane.f32.xlu0 %v4279
    %v4281 = vpop.xlane.xlu0 %4280
    %v4282 = vrcp.pop %v4281
    %v4283 = vmul.f32 %v4278, %v4282
    %v4284 = vsel %vm2876, %v4283, %v4119
    %s4285 = scalar_lea.vmem [#allocation5], 8
    %v4286 = vld [vmem:[%s4285] sm:$0x3]
    %v4288 = vsel %vm2708, %v4284, 0
    %4290 = vmatprep.subr.mxu0 0.0
    %4291 = vmatpush1.msra.mxu0 0.0
    %4292 = vmatprep.subr.mxu0 0.0
    %4293 = vmatpush1.msra.mxu0 0.0
    %4294 = vmatprep.subr.mxu0 0.0
    %4295 = vmatpush1.msra.mxu0 0.0
    %4296 = vmatprep.subr.mxu0 0.0
    %4297 = vmatpush1.msra.mxu0 0.0
    %4298 = vmatprep.subr.mxu0 0.0
    %4299 = vmatpush1.msra.mxu0 0.0
    %4300 = vmatprep.subr.mxu0 0.0
    %4301 = vmatpush1.msra.mxu0 0.0
    %4302 = vmatprep.subr.mxu0 0.0
    %4303 = vmatpush1.msra.mxu0 0.0
    %4304 = vmatprep.subr.mxu0 0.0
    %4305 = vmatpush1.msra.mxu0 0.0
    %4306 = vmatprep.subr.mxu0 0.0
    %4307 = vmatpush1.msra.mxu0 0.0
    %4308 = vmatprep.subr.mxu0 0.0
    %4309 = vmatpush1.msra.mxu0 0.0
    %4310 = vmatprep.subr.mxu0 0.0
    %4311 = vmatpush1.msra.mxu0 0.0
    %4312 = vmatprep.subr.mxu0 0.0
    %4313 = vmatpush1.msra.mxu0 0.0
    %4314 = vmatprep.subr.mxu0 0.0
    %4315 = vmatpush1.msra.mxu0 0.0
    %4316 = vmatprep.subr.mxu0 0.0
    %4317 = vmatpush1.msra.mxu0 0.0
    %4318 = vmatprep.subr.mxu0 0.0
    %4319 = vmatpush1.msra.mxu0 0.0
    %4320 = vmatprep.subr.mxu0 0.0
    %4321 = vmatpush1.msra.mxu0 %v2883
    %4322 = vmatprep.subr.mxu0 0.0
    %4323 = vmatpush2.msra.mxu0 0.0
    %4324 = vmatprep.subr.mxu0 0.0
    %4325 = vmatpush2.msra.mxu0 0.0
    %4326 = vmatprep.subr.mxu0 0.0
    %4327 = vmatpush2.msra.mxu0 0.0
    %4328 = vmatprep.subr.mxu0 0.0
    %4329 = vmatpush2.msra.mxu0 0.0
    %4330 = vmatprep.subr.mxu0 0.0
    %4331 = vmatpush2.msra.mxu0 0.0
    %4332 = vmatprep.subr.mxu0 0.0
    %4333 = vmatpush2.msra.mxu0 0.0
    %4334 = vmatprep.subr.mxu0 0.0
    %4335 = vmatpush2.msra.mxu0 0.0
    %4336 = vmatprep.subr.mxu0 0.0
    %4337 = vmatpush2.msra.mxu0 0.0
    %4338 = vmatprep.subr.mxu0 0.0
    %4339 = vmatpush2.msra.mxu0 0.0
    %4340 = vmatprep.subr.mxu0 0.0
    %4341 = vmatpush2.msra.mxu0 0.0
    %4342 = vmatprep.subr.mxu0 0.0
    %4343 = vmatpush2.msra.mxu0 0.0
    %4344 = vmatprep.subr.mxu0 0.0
    %4345 = vmatpush2.msra.mxu0 0.0
    %4346 = vmatprep.subr.mxu0 0.0
    %4347 = vmatpush2.msra.mxu0 0.0
    %4348 = vmatprep.subr.mxu0 0.0
    %4349 = vmatpush2.msra.mxu0 0.0
    %4350 = vmatprep.subr.mxu0 0.0
    %4351 = vmatpush2.msra.mxu0 0.0
    %4352 = vmatprep.subr.mxu0 0.0
    %4353 = vmatpush2.msra.mxu0 0.0
    %4354 = vmatprep.mubr.f32.mxu0 0.0
    %4355 = vmatmul.mubr.f32.gmra.mxu0 %v4288
    %v4356 = vpop.f32.mrf.mxu0
    %v4357 = vadd.f32 0.0, %v4356
    %v4358 = vpop.f32.mrf.mxu0
    %4359 = vdwg.mxu0
    %v4360 = vadd.f32 %v4286, %v4357
    %v4361 = vmax.f32 %v4360, 0.0
    %v4363 = vsel %vm2788, %v4361, 0
    %4365 = vmatprep.subr.mxu0 0.0
    %4366 = vmatpush1.msra.mxu0 0.0
    %4367 = vmatprep.subr.mxu0 0.0
    %4368 = vmatpush1.msra.mxu0 0.0
    %4369 = vmatprep.subr.mxu0 0.0
    %4370 = vmatpush1.msra.mxu0 0.0
    %4371 = vmatprep.subr.mxu0 0.0
    %4372 = vmatpush1.msra.mxu0 0.0
    %4373 = vmatprep.subr.mxu0 0.0
    %4374 = vmatpush1.msra.mxu0 0.0
    %4375 = vmatprep.subr.mxu0 0.0
    %4376 = vmatpush1.msra.mxu0 0.0
    %4377 = vmatprep.subr.mxu0 0.0
    %4378 = vmatpush1.msra.mxu0 0.0
    %4379 = vmatprep.subr.mxu0 0.0
    %4380 = vmatpush1.msra.mxu0 0.0
    %4381 = vmatprep.subr.mxu0 0.0
    %4382 = vmatpush1.msra.mxu0 0.0
    %4383 = vmatprep.subr.mxu0 0.0
    %4384 = vmatpush1.msra.mxu0 0.0
    %4385 = vmatprep.subr.mxu0 0.0
    %4386 = vmatpush1.msra.mxu0 0.0
    %4387 = vmatprep.subr.mxu0 0.0
    %4388 = vmatpush1.msra.mxu0 0.0
    %4389 = vmatprep.subr.mxu0 0.0
    %4390 = vmatpush1.msra.mxu0 %v2692
    %4391 = vmatprep.subr.mxu0 0.0
    %4392 = vmatpush1.msra.mxu0 %v2691
    %4393 = vmatprep.subr.mxu0 0.0
    %4394 = vmatpush1.msra.mxu0 %v2690
    %4395 = vmatprep.subr.mxu0 0.0
    %4396 = vmatpush1.msra.mxu0 %v2689
    %4397 = vmatprep.subr.mxu0 0.0
    %4398 = vmatpush2.msra.mxu0 0.0
    %4399 = vmatprep.subr.mxu0 0.0
    %4400 = vmatpush2.msra.mxu0 0.0
    %4401 = vmatprep.subr.mxu0 0.0
    %4402 = vmatpush2.msra.mxu0 0.0
    %4403 = vmatprep.subr.mxu0 0.0
    %4404 = vmatpush2.msra.mxu0 0.0
    %4405 = vmatprep.subr.mxu0 0.0
    %4406 = vmatpush2.msra.mxu0 0.0
    %4407 = vmatprep.subr.mxu0 0.0
    %4408 = vmatpush2.msra.mxu0 0.0
    %4409 = vmatprep.subr.mxu0 0.0
    %4410 = vmatpush2.msra.mxu0 0.0
    %4411 = vmatprep.subr.mxu0 0.0
    %4412 = vmatpush2.msra.mxu0 0.0
    %4413 = vmatprep.subr.mxu0 0.0
    %4414 = vmatpush2.msra.mxu0 0.0
    %4415 = vmatprep.subr.mxu0 0.0
    %4416 = vmatpush2.msra.mxu0 0.0
    %4417 = vmatprep.subr.mxu0 0.0
    %4418 = vmatpush2.msra.mxu0 0.0
    %4419 = vmatprep.subr.mxu0 0.0
    %4420 = vmatpush2.msra.mxu0 0.0
    %4421 = vmatprep.subr.mxu0 0.0
    %4422 = vmatpush2.msra.mxu0 0.0
    %4423 = vmatprep.subr.mxu0 0.0
    %4424 = vmatpush2.msra.mxu0 0.0
    %4425 = vmatprep.subr.mxu0 0.0
    %4426 = vmatpush2.msra.mxu0 0.0
    %4427 = vmatprep.subr.mxu0 0.0
    %4428 = vmatpush2.msra.mxu0 0.0
    %4429 = vmatprep.mubr.f32.mxu0 0.0
    %4430 = vmatmul.mubr.f32.gmra.mxu0 %v4363
    %v4431 = vpop.f32.mrf.mxu0
    %v4432 = vadd.f32 %v2705, %v4431
    %v4433 = vpop.f32.mrf.mxu0
    %4434 = vdwg.mxu0
    %v4435 = vmul.f32 %v4432, 0.5
    %v4436 = vmul.f32 %v4435, 1.442695
    %v4437 = vpow.pop %v4436
    %s4438 = scalar_lea.vmem %s2, 8
    %v4439 = vld [vmem:[%s4438] sm:$0x3]
    %4441 = vrot.lane.b32.xlu0 %v4439, 2
    %v4442 = vpop.permute.xlu0 %4441
    %v4444 = vmul.f32 %v4437, %v4442
    %4446 = vrot.lane.b32.xlu0 %v4444, 126
    %v4447 = vpop.permute.xlu0 %4446
    %v4449 = vadd.f32 %v4432, %v4447
    %4451 = vrot.lane.b32.xlu0 %v4283, 3
    %v4452 = vpop.permute.xlu0 %4451
    %4455 = vrot.lane.b32.xlu0 %v4432, 6
    %v4456 = vpop.permute.xlu0 %4455
    %4459 = vrot.lane.b32.xlu0 %v4449, 10
    %v4460 = vpop.permute.xlu0 %4459
    %v4462 = vsel %vm2876, %v4267, %v4452
    %v4463 = vsel %vm3057, %v4462, %v4456
    %v4464 = vsel %vm3059, %v4463, %v4460
    %s4465 = scalar_lea.vmem [#allocation9], 8
    %4466 = vst.msk [vmem:[%s4465] sm:$0x3] %vm3061, %v4464
    %4467 = vrot.lane.b32.xlu0 %v4449, 3
    %v4468 = vpop.permute.xlu0 %4467
    %v4470 = vsel %vm2876, %v4283, %v4468
    %s4471 = scalar_lea.vmem [#allocation4], 10
    %v4472 = vld [vmem:[%s4471] sm:$0x3]
    %v4474 = vsel %vm2708, %v4470, 0
    %4476 = vmatprep.subr.mxu0 0.0
    %4477 = vmatpush1.msra.mxu0 0.0
    %4478 = vmatprep.subr.mxu0 0.0
    %4479 = vmatpush1.msra.mxu0 0.0
    %4480 = vmatprep.subr.mxu0 0.0
    %4481 = vmatpush1.msra.mxu0 0.0
    %4482 = vmatprep.subr.mxu0 0.0
    %4483 = vmatpush1.msra.mxu0 0.0
    %4484 = vmatprep.subr.mxu0 0.0
    %4485 = vmatpush1.msra.mxu0 0.0
    %4486 = vmatprep.subr.mxu0 0.0
    %4487 = vmatpush1.msra.mxu0 0.0
    %4488 = vmatprep.subr.mxu0 0.0
    %4489 = vmatpush1.msra.mxu0 0.0
    %4490 = vmatprep.subr.mxu0 0.0
    %4491 = vmatpush1.msra.mxu0 0.0
    %4492 = vmatprep.subr.mxu0 0.0
    %4493 = vmatpush1.msra.mxu0 0.0
    %4494 = vmatprep.subr.mxu0 0.0
    %4495 = vmatpush1.msra.mxu0 0.0
    %4496 = vmatprep.subr.mxu0 0.0
    %4497 = vmatpush1.msra.mxu0 0.0
    %4498 = vmatprep.subr.mxu0 0.0
    %4499 = vmatpush1.msra.mxu0 0.0
    %4500 = vmatprep.subr.mxu0 0.0
    %4501 = vmatpush1.msra.mxu0 0.0
    %4502 = vmatprep.subr.mxu0 0.0
    %4503 = vmatpush1.msra.mxu0 0.0
    %4504 = vmatprep.subr.mxu0 0.0
    %4505 = vmatpush1.msra.mxu0 0.0
    %4506 = vmatprep.subr.mxu0 0.0
    %4507 = vmatpush1.msra.mxu0 %v2714
    %4508 = vmatprep.subr.mxu0 0.0
    %4509 = vmatpush2.msra.mxu0 0.0
    %4510 = vmatprep.subr.mxu0 0.0
    %4511 = vmatpush2.msra.mxu0 0.0
    %4512 = vmatprep.subr.mxu0 0.0
    %4513 = vmatpush2.msra.mxu0 0.0
    %4514 = vmatprep.subr.mxu0 0.0
    %4515 = vmatpush2.msra.mxu0 0.0
    %4516 = vmatprep.subr.mxu0 0.0
    %4517 = vmatpush2.msra.mxu0 0.0
    %4518 = vmatprep.subr.mxu0 0.0
    %4519 = vmatpush2.msra.mxu0 0.0
    %4520 = vmatprep.subr.mxu0 0.0
    %4521 = vmatpush2.msra.mxu0 0.0
    %4522 = vmatprep.subr.mxu0 0.0
    %4523 = vmatpush2.msra.mxu0 0.0
    %4524 = vmatprep.subr.mxu0 0.0
    %4525 = vmatpush2.msra.mxu0 0.0
    %4526 = vmatprep.subr.mxu0 0.0
    %4527 = vmatpush2.msra.mxu0 0.0
    %4528 = vmatprep.subr.mxu0 0.0
    %4529 = vmatpush2.msra.mxu0 0.0
    %4530 = vmatprep.subr.mxu0 0.0
    %4531 = vmatpush2.msra.mxu0 0.0
    %4532 = vmatprep.subr.mxu0 0.0
    %4533 = vmatpush2.msra.mxu0 0.0
    %4534 = vmatprep.subr.mxu0 0.0
    %4535 = vmatpush2.msra.mxu0 0.0
    %4536 = vmatprep.subr.mxu0 0.0
    %4537 = vmatpush2.msra.mxu0 0.0
    %4538 = vmatprep.subr.mxu0 0.0
    %4539 = vmatpush2.msra.mxu0 0.0
    %4540 = vmatprep.mubr.f32.mxu0 0.0
    %4541 = vmatmul.mubr.f32.gmra.mxu0 %v4474
    %v4542 = vpop.f32.mrf.mxu0
    %v4543 = vadd.f32 0.0, %v4542
    %v4544 = vpop.f32.mrf.mxu0
    %4545 = vdwg.mxu0
    %v4546 = vadd.f32 %v4472, %v4543
    %v4547 = vmax.f32 %v4546, 0.0
    %v4549 = vsel %vm2788, %v4547, 0
    %4551 = vmatprep.subr.mxu0 0.0
    %4552 = vmatpush1.msra.mxu0 0.0
    %4553 = vmatprep.subr.mxu0 0.0
    %4554 = vmatpush1.msra.mxu0 0.0
    %4555 = vmatprep.subr.mxu0 0.0
    %4556 = vmatpush1.msra.mxu0 0.0
    %4557 = vmatprep.subr.mxu0 0.0
    %4558 = vmatpush1.msra.mxu0 0.0
    %4559 = vmatprep.subr.mxu0 0.0
    %4560 = vmatpush1.msra.mxu0 0.0
    %4561 = vmatprep.subr.mxu0 0.0
    %4562 = vmatpush1.msra.mxu0 0.0
    %4563 = vmatprep.subr.mxu0 0.0
    %4564 = vmatpush1.msra.mxu0 0.0
    %4565 = vmatprep.subr.mxu0 0.0
    %4566 = vmatpush1.msra.mxu0 0.0
    %4567 = vmatprep.subr.mxu0 0.0
    %4568 = vmatpush1.msra.mxu0 0.0
    %4569 = vmatprep.subr.mxu0 0.0
    %4570 = vmatpush1.msra.mxu0 0.0
    %4571 = vmatprep.subr.mxu0 0.0
    %4572 = vmatpush1.msra.mxu0 0.0
    %4573 = vmatprep.subr.mxu0 0.0
    %4574 = vmatpush1.msra.mxu0 0.0
    %4575 = vmatprep.subr.mxu0 0.0
    %4576 = vmatpush1.msra.mxu0 %v2687
    %4577 = vmatprep.subr.mxu0 0.0
    %4578 = vmatpush1.msra.mxu0 %v2686
    %4579 = vmatprep.subr.mxu0 0.0
    %4580 = vmatpush1.msra.mxu0 %v2685
    %4581 = vmatprep.subr.mxu0 0.0
    %4582 = vmatpush1.msra.mxu0 %v2684
    %4583 = vmatprep.subr.mxu0 0.0
    %4584 = vmatpush2.msra.mxu0 0.0
    %4585 = vmatprep.subr.mxu0 0.0
    %4586 = vmatpush2.msra.mxu0 0.0
    %4587 = vmatprep.subr.mxu0 0.0
    %4588 = vmatpush2.msra.mxu0 0.0
    %4589 = vmatprep.subr.mxu0 0.0
    %4590 = vmatpush2.msra.mxu0 0.0
    %4591 = vmatprep.subr.mxu0 0.0
    %4592 = vmatpush2.msra.mxu0 0.0
    %4593 = vmatprep.subr.mxu0 0.0
    %4594 = vmatpush2.msra.mxu0 0.0
    %4595 = vmatprep.subr.mxu0 0.0
    %4596 = vmatpush2.msra.mxu0 0.0
    %4597 = vmatprep.subr.mxu0 0.0
    %4598 = vmatpush2.msra.mxu0 0.0
    %4599 = vmatprep.subr.mxu0 0.0
    %4600 = vmatpush2.msra.mxu0 0.0
    %4601 = vmatprep.subr.mxu0 0.0
    %4602 = vmatpush2.msra.mxu0 0.0
    %4603 = vmatprep.subr.mxu0 0.0
    %4604 = vmatpush2.msra.mxu0 0.0
    %4605 = vmatprep.subr.mxu0 0.0
    %4606 = vmatpush2.msra.mxu0 0.0
    %4607 = vmatprep.subr.mxu0 0.0
    %4608 = vmatpush2.msra.mxu0 0.0
    %4609 = vmatprep.subr.mxu0 0.0
    %4610 = vmatpush2.msra.mxu0 0.0
    %4611 = vmatprep.subr.mxu0 0.0
    %4612 = vmatpush2.msra.mxu0 0.0
    %4613 = vmatprep.subr.mxu0 0.0
    %4614 = vmatpush2.msra.mxu0 0.0
    %4615 = vmatprep.mubr.f32.mxu0 0.0
    %4616 = vmatmul.mubr.f32.gmra.mxu0 %v4549
    %v4617 = vpop.f32.mrf.mxu0
    %v4618 = vadd.f32 %v2698, %v4617
    %v4619 = vpop.f32.mrf.mxu0
    %4620 = vdwg.mxu0
    %s4621 = scalar_lea.vmem %s1, 10
    %v4622 = vld [vmem:[%s4621] sm:$0x3]
    %v4623 = vadd.f32 %v4618, %v4622
    %v4624 = vsel %vm2864, %v4623, -inf
    %4625 = vmax.xlane.f32.xlu0 %v4624
    %v4626 = vpop.xlane.xlu0 %4625
    %v4627 = vsub.f32 %v4623, %v4626
    %v4628 = vmul.f32 %v4627, 1.442695
    %v4629 = vpow.pop %v4628
    %v4630 = vsel %vm2864, %v4629, 0.0
    %4631 = vadd.xlane.f32.xlu0 %v4630
    %v4632 = vpop.xlane.xlu0 %4631
    %v4633 = vrcp.pop %v4632
    %v4634 = vmul.f32 %v4629, %v4633
    %v4635 = vsel %vm2876, %v4634, %v4470
    %s4636 = scalar_lea.vmem [#allocation5], 10
    %v4637 = vld [vmem:[%s4636] sm:$0x3]
    %v4639 = vsel %vm2708, %v4635, 0
    %4641 = vmatprep.subr.mxu0 0.0
    %4642 = vmatpush1.msra.mxu0 0.0
    %4643 = vmatprep.subr.mxu0 0.0
    %4644 = vmatpush1.msra.mxu0 0.0
    %4645 = vmatprep.subr.mxu0 0.0
    %4646 = vmatpush1.msra.mxu0 0.0
    %4647 = vmatprep.subr.mxu0 0.0
    %4648 = vmatpush1.msra.mxu0 0.0
    %4649 = vmatprep.subr.mxu0 0.0
    %4650 = vmatpush1.msra.mxu0 0.0
    %4651 = vmatprep.subr.mxu0 0.0
    %4652 = vmatpush1.msra.mxu0 0.0
    %4653 = vmatprep.subr.mxu0 0.0
    %4654 = vmatpush1.msra.mxu0 0.0
    %4655 = vmatprep.subr.mxu0 0.0
    %4656 = vmatpush1.msra.mxu0 0.0
    %4657 = vmatprep.subr.mxu0 0.0
    %4658 = vmatpush1.msra.mxu0 0.0
    %4659 = vmatprep.subr.mxu0 0.0
    %4660 = vmatpush1.msra.mxu0 0.0
    %4661 = vmatprep.subr.mxu0 0.0
    %4662 = vmatpush1.msra.mxu0 0.0
    %4663 = vmatprep.subr.mxu0 0.0
    %4664 = vmatpush1.msra.mxu0 0.0
    %4665 = vmatprep.subr.mxu0 0.0
    %4666 = vmatpush1.msra.mxu0 0.0
    %4667 = vmatprep.subr.mxu0 0.0
    %4668 = vmatpush1.msra.mxu0 0.0
    %4669 = vmatprep.subr.mxu0 0.0
    %4670 = vmatpush1.msra.mxu0 0.0
    %4671 = vmatprep.subr.mxu0 0.0
    %4672 = vmatpush1.msra.mxu0 %v2883
    %4673 = vmatprep.subr.mxu0 0.0
    %4674 = vmatpush2.msra.mxu0 0.0
    %4675 = vmatprep.subr.mxu0 0.0
    %4676 = vmatpush2.msra.mxu0 0.0
    %4677 = vmatprep.subr.mxu0 0.0
    %4678 = vmatpush2.msra.mxu0 0.0
    %4679 = vmatprep.subr.mxu0 0.0
    %4680 = vmatpush2.msra.mxu0 0.0
    %4681 = vmatprep.subr.mxu0 0.0
    %4682 = vmatpush2.msra.mxu0 0.0
    %4683 = vmatprep.subr.mxu0 0.0
    %4684 = vmatpush2.msra.mxu0 0.0
    %4685 = vmatprep.subr.mxu0 0.0
    %4686 = vmatpush2.msra.mxu0 0.0
    %4687 = vmatprep.subr.mxu0 0.0
    %4688 = vmatpush2.msra.mxu0 0.0
    %4689 = vmatprep.subr.mxu0 0.0
    %4690 = vmatpush2.msra.mxu0 0.0
    %4691 = vmatprep.subr.mxu0 0.0
    %4692 = vmatpush2.msra.mxu0 0.0
    %4693 = vmatprep.subr.mxu0 0.0
    %4694 = vmatpush2.msra.mxu0 0.0
    %4695 = vmatprep.subr.mxu0 0.0
    %4696 = vmatpush2.msra.mxu0 0.0
    %4697 = vmatprep.subr.mxu0 0.0
    %4698 = vmatpush2.msra.mxu0 0.0
    %4699 = vmatprep.subr.mxu0 0.0
    %4700 = vmatpush2.msra.mxu0 0.0
    %4701 = vmatprep.subr.mxu0 0.0
    %4702 = vmatpush2.msra.mxu0 0.0
    %4703 = vmatprep.subr.mxu0 0.0
    %4704 = vmatpush2.msra.mxu0 0.0
    %4705 = vmatprep.mubr.f32.mxu0 0.0
    %4706 = vmatmul.mubr.f32.gmra.mxu0 %v4639
    %v4707 = vpop.f32.mrf.mxu0
    %v4708 = vadd.f32 0.0, %v4707
    %v4709 = vpop.f32.mrf.mxu0
    %4710 = vdwg.mxu0
    %v4711 = vadd.f32 %v4637, %v4708
    %v4712 = vmax.f32 %v4711, 0.0
    %v4714 = vsel %vm2788, %v4712, 0
    %4716 = vmatprep.subr.mxu0 0.0
    %4717 = vmatpush1.msra.mxu0 0.0
    %4718 = vmatprep.subr.mxu0 0.0
    %4719 = vmatpush1.msra.mxu0 0.0
    %4720 = vmatprep.subr.mxu0 0.0
    %4721 = vmatpush1.msra.mxu0 0.0
    %4722 = vmatprep.subr.mxu0 0.0
    %4723 = vmatpush1.msra.mxu0 0.0
    %4724 = vmatprep.subr.mxu0 0.0
    %4725 = vmatpush1.msra.mxu0 0.0
    %4726 = vmatprep.subr.mxu0 0.0
    %4727 = vmatpush1.msra.mxu0 0.0
    %4728 = vmatprep.subr.mxu0 0.0
    %4729 = vmatpush1.msra.mxu0 0.0
    %4730 = vmatprep.subr.mxu0 0.0
    %4731 = vmatpush1.msra.mxu0 0.0
    %4732 = vmatprep.subr.mxu0 0.0
    %4733 = vmatpush1.msra.mxu0 0.0
    %4734 = vmatprep.subr.mxu0 0.0
    %4735 = vmatpush1.msra.mxu0 0.0
    %4736 = vmatprep.subr.mxu0 0.0
    %4737 = vmatpush1.msra.mxu0 0.0
    %4738 = vmatprep.subr.mxu0 0.0
    %4739 = vmatpush1.msra.mxu0 0.0
    %4740 = vmatprep.subr.mxu0 0.0
    %4741 = vmatpush1.msra.mxu0 %v2692
    %4742 = vmatprep.subr.mxu0 0.0
    %4743 = vmatpush1.msra.mxu0 %v2691
    %4744 = vmatprep.subr.mxu0 0.0
    %4745 = vmatpush1.msra.mxu0 %v2690
    %4746 = vmatprep.subr.mxu0 0.0
    %4747 = vmatpush1.msra.mxu0 %v2689
    %4748 = vmatprep.subr.mxu0 0.0
    %4749 = vmatpush2.msra.mxu0 0.0
    %4750 = vmatprep.subr.mxu0 0.0
    %4751 = vmatpush2.msra.mxu0 0.0
    %4752 = vmatprep.subr.mxu0 0.0
    %4753 = vmatpush2.msra.mxu0 0.0
    %4754 = vmatprep.subr.mxu0 0.0
    %4755 = vmatpush2.msra.mxu0 0.0
    %4756 = vmatprep.subr.mxu0 0.0
    %4757 = vmatpush2.msra.mxu0 0.0
    %4758 = vmatprep.subr.mxu0 0.0
    %4759 = vmatpush2.msra.mxu0 0.0
    %4760 = vmatprep.subr.mxu0 0.0
    %4761 = vmatpush2.msra.mxu0 0.0
    %4762 = vmatprep.subr.mxu0 0.0
    %4763 = vmatpush2.msra.mxu0 0.0
    %4764 = vmatprep.subr.mxu0 0.0
    %4765 = vmatpush2.msra.mxu0 0.0
    %4766 = vmatprep.subr.mxu0 0.0
    %4767 = vmatpush2.msra.mxu0 0.0
    %4768 = vmatprep.subr.mxu0 0.0
    %4769 = vmatpush2.msra.mxu0 0.0
    %4770 = vmatprep.subr.mxu0 0.0
    %4771 = vmatpush2.msra.mxu0 0.0
    %4772 = vmatprep.subr.mxu0 0.0
    %4773 = vmatpush2.msra.mxu0 0.0
    %4774 = vmatprep.subr.mxu0 0.0
    %4775 = vmatpush2.msra.mxu0 0.0
    %4776 = vmatprep.subr.mxu0 0.0
    %4777 = vmatpush2.msra.mxu0 0.0
    %4778 = vmatprep.subr.mxu0 0.0
    %4779 = vmatpush2.msra.mxu0 0.0
    %4780 = vmatprep.mubr.f32.mxu0 0.0
    %4781 = vmatmul.mubr.f32.gmra.mxu0 %v4714
    %v4782 = vpop.f32.mrf.mxu0
    %v4783 = vadd.f32 %v2705, %v4782
    %v4784 = vpop.f32.mrf.mxu0
    %4785 = vdwg.mxu0
    %v4786 = vmul.f32 %v4783, 0.5
    %v4787 = vmul.f32 %v4786, 1.442695
    %v4788 = vpow.pop %v4787
    %s4789 = scalar_lea.vmem %s2, 10
    %v4790 = vld [vmem:[%s4789] sm:$0x3]
    %4792 = vrot.lane.b32.xlu0 %v4790, 2
    %v4793 = vpop.permute.xlu0 %4792
    %v4795 = vmul.f32 %v4788, %v4793
    %4797 = vrot.lane.b32.xlu0 %v4795, 126
    %v4798 = vpop.permute.xlu0 %4797
    %v4800 = vadd.f32 %v4783, %v4798
    %4802 = vrot.lane.b32.xlu0 %v4634, 3
    %v4803 = vpop.permute.xlu0 %4802
    %4806 = vrot.lane.b32.xlu0 %v4783, 6
    %v4807 = vpop.permute.xlu0 %4806
    %4810 = vrot.lane.b32.xlu0 %v4800, 10
    %v4811 = vpop.permute.xlu0 %4810
    %v4813 = vsel %vm2876, %v4618, %v4803
    %v4814 = vsel %vm3057, %v4813, %v4807
    %v4815 = vsel %vm3059, %v4814, %v4811
    %s4816 = scalar_lea.vmem [#allocation9], 10
    %4817 = vst.msk [vmem:[%s4816] sm:$0x3] %vm3061, %v4815
    %4818 = vrot.lane.b32.xlu0 %v4800, 3
    %v4819 = vpop.permute.xlu0 %4818
    %v4821 = vsel %vm2876, %v4634, %v4819
    %s4822 = scalar_lea.vmem [#allocation4], 12
    %v4823 = vld [vmem:[%s4822] sm:$0x3]
    %v4825 = vsel %vm2708, %v4821, 0
    %4827 = vmatprep.subr.mxu0 0.0
    %4828 = vmatpush1.msra.mxu0 0.0
    %4829 = vmatprep.subr.mxu0 0.0
    %4830 = vmatpush1.msra.mxu0 0.0
    %4831 = vmatprep.subr.mxu0 0.0
    %4832 = vmatpush1.msra.mxu0 0.0
    %4833 = vmatprep.subr.mxu0 0.0
    %4834 = vmatpush1.msra.mxu0 0.0
    %4835 = vmatprep.subr.mxu0 0.0
    %4836 = vmatpush1.msra.mxu0 0.0
    %4837 = vmatprep.subr.mxu0 0.0
    %4838 = vmatpush1.msra.mxu0 0.0
    %4839 = vmatprep.subr.mxu0 0.0
    %4840 = vmatpush1.msra.mxu0 0.0
    %4841 = vmatprep.subr.mxu0 0.0
    %4842 = vmatpush1.msra.mxu0 0.0
    %4843 = vmatprep.subr.mxu0 0.0
    %4844 = vmatpush1.msra.mxu0 0.0
    %4845 = vmatprep.subr.mxu0 0.0
    %4846 = vmatpush1.msra.mxu0 0.0
    %4847 = vmatprep.subr.mxu0 0.0
    %4848 = vmatpush1.msra.mxu0 0.0
    %4849 = vmatprep.subr.mxu0 0.0
    %4850 = vmatpush1.msra.mxu0 0.0
    %4851 = vmatprep.subr.mxu0 0.0
    %4852 = vmatpush1.msra.mxu0 0.0
    %4853 = vmatprep.subr.mxu0 0.0
    %4854 = vmatpush1.msra.mxu0 0.0
    %4855 = vmatprep.subr.mxu0 0.0
    %4856 = vmatpush1.msra.mxu0 0.0
    %4857 = vmatprep.subr.mxu0 0.0
    %4858 = vmatpush1.msra.mxu0 %v2714
    %4859 = vmatprep.subr.mxu0 0.0
    %4860 = vmatpush2.msra.mxu0 0.0
    %4861 = vmatprep.subr.mxu0 0.0
    %4862 = vmatpush2.msra.mxu0 0.0
    %4863 = vmatprep.subr.mxu0 0.0
    %4864 = vmatpush2.msra.mxu0 0.0
    %4865 = vmatprep.subr.mxu0 0.0
    %4866 = vmatpush2.msra.mxu0 0.0
    %4867 = vmatprep.subr.mxu0 0.0
    %4868 = vmatpush2.msra.mxu0 0.0
    %4869 = vmatprep.subr.mxu0 0.0
    %4870 = vmatpush2.msra.mxu0 0.0
    %4871 = vmatprep.subr.mxu0 0.0
    %4872 = vmatpush2.msra.mxu0 0.0
    %4873 = vmatprep.subr.mxu0 0.0
    %4874 = vmatpush2.msra.mxu0 0.0
    %4875 = vmatprep.subr.mxu0 0.0
    %4876 = vmatpush2.msra.mxu0 0.0
    %4877 = vmatprep.subr.mxu0 0.0
    %4878 = vmatpush2.msra.mxu0 0.0
    %4879 = vmatprep.subr.mxu0 0.0
    %4880 = vmatpush2.msra.mxu0 0.0
    %4881 = vmatprep.subr.mxu0 0.0
    %4882 = vmatpush2.msra.mxu0 0.0
    %4883 = vmatprep.subr.mxu0 0.0
    %4884 = vmatpush2.msra.mxu0 0.0
    %4885 = vmatprep.subr.mxu0 0.0
    %4886 = vmatpush2.msra.mxu0 0.0
    %4887 = vmatprep.subr.mxu0 0.0
    %4888 = vmatpush2.msra.mxu0 0.0
    %4889 = vmatprep.subr.mxu0 0.0
    %4890 = vmatpush2.msra.mxu0 0.0
    %4891 = vmatprep.mubr.f32.mxu0 0.0
    %4892 = vmatmul.mubr.f32.gmra.mxu0 %v4825
    %v4893 = vpop.f32.mrf.mxu0
    %v4894 = vadd.f32 0.0, %v4893
    %v4895 = vpop.f32.mrf.mxu0
    %4896 = vdwg.mxu0
    %v4897 = vadd.f32 %v4823, %v4894
    %v4898 = vmax.f32 %v4897, 0.0
    %v4900 = vsel %vm2788, %v4898, 0
    %4902 = vmatprep.subr.mxu0 0.0
    %4903 = vmatpush1.msra.mxu0 0.0
    %4904 = vmatprep.subr.mxu0 0.0
    %4905 = vmatpush1.msra.mxu0 0.0
    %4906 = vmatprep.subr.mxu0 0.0
    %4907 = vmatpush1.msra.mxu0 0.0
    %4908 = vmatprep.subr.mxu0 0.0
    %4909 = vmatpush1.msra.mxu0 0.0
    %4910 = vmatprep.subr.mxu0 0.0
    %4911 = vmatpush1.msra.mxu0 0.0
    %4912 = vmatprep.subr.mxu0 0.0
    %4913 = vmatpush1.msra.mxu0 0.0
    %4914 = vmatprep.subr.mxu0 0.0
    %4915 = vmatpush1.msra.mxu0 0.0
    %4916 = vmatprep.subr.mxu0 0.0
    %4917 = vmatpush1.msra.mxu0 0.0
    %4918 = vmatprep.subr.mxu0 0.0
    %4919 = vmatpush1.msra.mxu0 0.0
    %4920 = vmatprep.subr.mxu0 0.0
    %4921 = vmatpush1.msra.mxu0 0.0
    %4922 = vmatprep.subr.mxu0 0.0
    %4923 = vmatpush1.msra.mxu0 0.0
    %4924 = vmatprep.subr.mxu0 0.0
    %4925 = vmatpush1.msra.mxu0 0.0
    %4926 = vmatprep.subr.mxu0 0.0
    %4927 = vmatpush1.msra.mxu0 %v2687
    %4928 = vmatprep.subr.mxu0 0.0
    %4929 = vmatpush1.msra.mxu0 %v2686
    %4930 = vmatprep.subr.mxu0 0.0
    %4931 = vmatpush1.msra.mxu0 %v2685
    %4932 = vmatprep.subr.mxu0 0.0
    %4933 = vmatpush1.msra.mxu0 %v2684
    %4934 = vmatprep.subr.mxu0 0.0
    %4935 = vmatpush2.msra.mxu0 0.0
    %4936 = vmatprep.subr.mxu0 0.0
    %4937 = vmatpush2.msra.mxu0 0.0
    %4938 = vmatprep.subr.mxu0 0.0
    %4939 = vmatpush2.msra.mxu0 0.0
    %4940 = vmatprep.subr.mxu0 0.0
    %4941 = vmatpush2.msra.mxu0 0.0
    %4942 = vmatprep.subr.mxu0 0.0
    %4943 = vmatpush2.msra.mxu0 0.0
    %4944 = vmatprep.subr.mxu0 0.0
    %4945 = vmatpush2.msra.mxu0 0.0
    %4946 = vmatprep.subr.mxu0 0.0
    %4947 = vmatpush2.msra.mxu0 0.0
    %4948 = vmatprep.subr.mxu0 0.0
    %4949 = vmatpush2.msra.mxu0 0.0
    %4950 = vmatprep.subr.mxu0 0.0
    %4951 = vmatpush2.msra.mxu0 0.0
    %4952 = vmatprep.subr.mxu0 0.0
    %4953 = vmatpush2.msra.mxu0 0.0
    %4954 = vmatprep.subr.mxu0 0.0
    %4955 = vmatpush2.msra.mxu0 0.0
    %4956 = vmatprep.subr.mxu0 0.0
    %4957 = vmatpush2.msra.mxu0 0.0
    %4958 = vmatprep.subr.mxu0 0.0
    %4959 = vmatpush2.msra.mxu0 0.0
    %4960 = vmatprep.subr.mxu0 0.0
    %4961 = vmatpush2.msra.mxu0 0.0
    %4962 = vmatprep.subr.mxu0 0.0
    %4963 = vmatpush2.msra.mxu0 0.0
    %4964 = vmatprep.subr.mxu0 0.0
    %4965 = vmatpush2.msra.mxu0 0.0
    %4966 = vmatprep.mubr.f32.mxu0 0.0
    %4967 = vmatmul.mubr.f32.gmra.mxu0 %v4900
    %v4968 = vpop.f32.mrf.mxu0
    %v4969 = vadd.f32 %v2698, %v4968
    %v4970 = vpop.f32.mrf.mxu0
    %4971 = vdwg.mxu0
    %s4972 = scalar_lea.vmem %s1, 12
    %v4973 = vld [vmem:[%s4972] sm:$0x3]
    %v4974 = vadd.f32 %v4969, %v4973
    %v4975 = vsel %vm2864, %v4974, -inf
    %4976 = vmax.xlane.f32.xlu0 %v4975
    %v4977 = vpop.xlane.xlu0 %4976
    %v4978 = vsub.f32 %v4974, %v4977
    %v4979 = vmul.f32 %v4978, 1.442695
    %v4980 = vpow.pop %v4979
    %v4981 = vsel %vm2864, %v4980, 0.0
    %4982 = vadd.xlane.f32.xlu0 %v4981
    %v4983 = vpop.xlane.xlu0 %4982
    %v4984 = vrcp.pop %v4983
    %v4985 = vmul.f32 %v4980, %v4984
    %v4986 = vsel %vm2876, %v4985, %v4821
    %s4987 = scalar_lea.vmem [#allocation5], 12
    %v4988 = vld [vmem:[%s4987] sm:$0x3]
    %v4990 = vsel %vm2708, %v4986, 0
    %4992 = vmatprep.subr.mxu0 0.0
    %4993 = vmatpush1.msra.mxu0 0.0
    %4994 = vmatprep.subr.mxu0 0.0
    %4995 = vmatpush1.msra.mxu0 0.0
    %4996 = vmatprep.subr.mxu0 0.0
    %4997 = vmatpush1.msra.mxu0 0.0
    %4998 = vmatprep.subr.mxu0 0.0
    %4999 = vmatpush1.msra.mxu0 0.0
    %5000 = vmatprep.subr.mxu0 0.0
    %5001 = vmatpush1.msra.mxu0 0.0
    %5002 = vmatprep.subr.mxu0 0.0
    %5003 = vmatpush1.msra.mxu0 0.0
    %5004 = vmatprep.subr.mxu0 0.0
    %5005 = vmatpush1.msra.mxu0 0.0
    %5006 = vmatprep.subr.mxu0 0.0
    %5007 = vmatpush1.msra.mxu0 0.0
    %5008 = vmatprep.subr.mxu0 0.0
    %5009 = vmatpush1.msra.mxu0 0.0
    %5010 = vmatprep.subr.mxu0 0.0
    %5011 = vmatpush1.msra.mxu0 0.0
    %5012 = vmatprep.subr.mxu0 0.0
    %5013 = vmatpush1.msra.mxu0 0.0
    %5014 = vmatprep.subr.mxu0 0.0
    %5015 = vmatpush1.msra.mxu0 0.0
    %5016 = vmatprep.subr.mxu0 0.0
    %5017 = vmatpush1.msra.mxu0 0.0
    %5018 = vmatprep.subr.mxu0 0.0
    %5019 = vmatpush1.msra.mxu0 0.0
    %5020 = vmatprep.subr.mxu0 0.0
    %5021 = vmatpush1.msra.mxu0 0.0
    %5022 = vmatprep.subr.mxu0 0.0
    %5023 = vmatpush1.msra.mxu0 %v2883
    %5024 = vmatprep.subr.mxu0 0.0
    %5025 = vmatpush2.msra.mxu0 0.0
    %5026 = vmatprep.subr.mxu0 0.0
    %5027 = vmatpush2.msra.mxu0 0.0
    %5028 = vmatprep.subr.mxu0 0.0
    %5029 = vmatpush2.msra.mxu0 0.0
    %5030 = vmatprep.subr.mxu0 0.0
    %5031 = vmatpush2.msra.mxu0 0.0
    %5032 = vmatprep.subr.mxu0 0.0
    %5033 = vmatpush2.msra.mxu0 0.0
    %5034 = vmatprep.subr.mxu0 0.0
    %5035 = vmatpush2.msra.mxu0 0.0
    %5036 = vmatprep.subr.mxu0 0.0
    %5037 = vmatpush2.msra.mxu0 0.0
    %5038 = vmatprep.subr.mxu0 0.0
    %5039 = vmatpush2.msra.mxu0 0.0
    %5040 = vmatprep.subr.mxu0 0.0
    %5041 = vmatpush2.msra.mxu0 0.0
    %5042 = vmatprep.subr.mxu0 0.0
    %5043 = vmatpush2.msra.mxu0 0.0
    %5044 = vmatprep.subr.mxu0 0.0
    %5045 = vmatpush2.msra.mxu0 0.0
    %5046 = vmatprep.subr.mxu0 0.0
    %5047 = vmatpush2.msra.mxu0 0.0
    %5048 = vmatprep.subr.mxu0 0.0
    %5049 = vmatpush2.msra.mxu0 0.0
    %5050 = vmatprep.subr.mxu0 0.0
    %5051 = vmatpush2.msra.mxu0 0.0
    %5052 = vmatprep.subr.mxu0 0.0
    %5053 = vmatpush2.msra.mxu0 0.0
    %5054 = vmatprep.subr.mxu0 0.0
    %5055 = vmatpush2.msra.mxu0 0.0
    %5056 = vmatprep.mubr.f32.mxu0 0.0
    %5057 = vmatmul.mubr.f32.gmra.mxu0 %v4990
    %v5058 = vpop.f32.mrf.mxu0
    %v5059 = vadd.f32 0.0, %v5058
    %v5060 = vpop.f32.mrf.mxu0
    %5061 = vdwg.mxu0
    %v5062 = vadd.f32 %v4988, %v5059
    %v5063 = vmax.f32 %v5062, 0.0
    %v5065 = vsel %vm2788, %v5063, 0
    %5067 = vmatprep.subr.mxu0 0.0
    %5068 = vmatpush1.msra.mxu0 0.0
    %5069 = vmatprep.subr.mxu0 0.0
    %5070 = vmatpush1.msra.mxu0 0.0
    %5071 = vmatprep.subr.mxu0 0.0
    %5072 = vmatpush1.msra.mxu0 0.0
    %5073 = vmatprep.subr.mxu0 0.0
    %5074 = vmatpush1.msra.mxu0 0.0
    %5075 = vmatprep.subr.mxu0 0.0
    %5076 = vmatpush1.msra.mxu0 0.0
    %5077 = vmatprep.subr.mxu0 0.0
    %5078 = vmatpush1.msra.mxu0 0.0
    %5079 = vmatprep.subr.mxu0 0.0
    %5080 = vmatpush1.msra.mxu0 0.0
    %5081 = vmatprep.subr.mxu0 0.0
    %5082 = vmatpush1.msra.mxu0 0.0
    %5083 = vmatprep.subr.mxu0 0.0
    %5084 = vmatpush1.msra.mxu0 0.0
    %5085 = vmatprep.subr.mxu0 0.0
    %5086 = vmatpush1.msra.mxu0 0.0
    %5087 = vmatprep.subr.mxu0 0.0
    %5088 = vmatpush1.msra.mxu0 0.0
    %5089 = vmatprep.subr.mxu0 0.0
    %5090 = vmatpush1.msra.mxu0 0.0
    %5091 = vmatprep.subr.mxu0 0.0
    %5092 = vmatpush1.msra.mxu0 %v2692
    %5093 = vmatprep.subr.mxu0 0.0
    %5094 = vmatpush1.msra.mxu0 %v2691
    %5095 = vmatprep.subr.mxu0 0.0
    %5096 = vmatpush1.msra.mxu0 %v2690
    %5097 = vmatprep.subr.mxu0 0.0
    %5098 = vmatpush1.msra.mxu0 %v2689
    %5099 = vmatprep.subr.mxu0 0.0
    %5100 = vmatpush2.msra.mxu0 0.0
    %5101 = vmatprep.subr.mxu0 0.0
    %5102 = vmatpush2.msra.mxu0 0.0
    %5103 = vmatprep.subr.mxu0 0.0
    %5104 = vmatpush2.msra.mxu0 0.0
    %5105 = vmatprep.subr.mxu0 0.0
    %5106 = vmatpush2.msra.mxu0 0.0
    %5107 = vmatprep.subr.mxu0 0.0
    %5108 = vmatpush2.msra.mxu0 0.0
    %5109 = vmatprep.subr.mxu0 0.0
    %5110 = vmatpush2.msra.mxu0 0.0
    %5111 = vmatprep.subr.mxu0 0.0
    %5112 = vmatpush2.msra.mxu0 0.0
    %5113 = vmatprep.subr.mxu0 0.0
    %5114 = vmatpush2.msra.mxu0 0.0
    %5115 = vmatprep.subr.mxu0 0.0
    %5116 = vmatpush2.msra.mxu0 0.0
    %5117 = vmatprep.subr.mxu0 0.0
    %5118 = vmatpush2.msra.mxu0 0.0
    %5119 = vmatprep.subr.mxu0 0.0
    %5120 = vmatpush2.msra.mxu0 0.0
    %5121 = vmatprep.subr.mxu0 0.0
    %5122 = vmatpush2.msra.mxu0 0.0
    %5123 = vmatprep.subr.mxu0 0.0
    %5124 = vmatpush2.msra.mxu0 0.0
    %5125 = vmatprep.subr.mxu0 0.0
    %5126 = vmatpush2.msra.mxu0 0.0
    %5127 = vmatprep.subr.mxu0 0.0
    %5128 = vmatpush2.msra.mxu0 0.0
    %5129 = vmatprep.subr.mxu0 0.0
    %5130 = vmatpush2.msra.mxu0 0.0
    %5131 = vmatprep.mubr.f32.mxu0 0.0
    %5132 = vmatmul.mubr.f32.gmra.mxu0 %v5065
    %v5133 = vpop.f32.mrf.mxu0
    %v5134 = vadd.f32 %v2705, %v5133
    %v5135 = vpop.f32.mrf.mxu0
    %5136 = vdwg.mxu0
    %v5137 = vmul.f32 %v5134, 0.5
    %v5138 = vmul.f32 %v5137, 1.442695
    %v5139 = vpow.pop %v5138
    %s5140 = scalar_lea.vmem %s2, 12
    %v5141 = vld [vmem:[%s5140] sm:$0x3]
    %5143 = vrot.lane.b32.xlu0 %v5141, 2
    %v5144 = vpop.permute.xlu0 %5143
    %v5146 = vmul.f32 %v5139, %v5144
    %5148 = vrot.lane.b32.xlu0 %v5146, 126
    %v5149 = vpop.permute.xlu0 %5148
    %v5151 = vadd.f32 %v5134, %v5149
    %5153 = vrot.lane.b32.xlu0 %v4985, 3
    %v5154 = vpop.permute.xlu0 %5153
    %5157 = vrot.lane.b32.xlu0 %v5134, 6
    %v5158 = vpop.permute.xlu0 %5157
    %5161 = vrot.lane.b32.xlu0 %v5151, 10
    %v5162 = vpop.permute.xlu0 %5161
    %v5164 = vsel %vm2876, %v4969, %v5154
    %v5165 = vsel %vm3057, %v5164, %v5158
    %v5166 = vsel %vm3059, %v5165, %v5162
    %s5167 = scalar_lea.vmem [#allocation9], 12
    %5168 = vst.msk [vmem:[%s5167] sm:$0x3] %vm3061, %v5166
    %5169 = vrot.lane.b32.xlu0 %v5151, 3
    %v5170 = vpop.permute.xlu0 %5169
    %v5172 = vsel %vm2876, %v4985, %v5170
    %s5173 = scalar_lea.vmem [#allocation4], 14
    %v5174 = vld [vmem:[%s5173] sm:$0x3]
    %v5176 = vsel %vm2708, %v5172, 0
    %5178 = vmatprep.subr.mxu0 0.0
    %5179 = vmatpush1.msra.mxu0 0.0
    %5180 = vmatprep.subr.mxu0 0.0
    %5181 = vmatpush1.msra.mxu0 0.0
    %5182 = vmatprep.subr.mxu0 0.0
    %5183 = vmatpush1.msra.mxu0 0.0
    %5184 = vmatprep.subr.mxu0 0.0
    %5185 = vmatpush1.msra.mxu0 0.0
    %5186 = vmatprep.subr.mxu0 0.0
    %5187 = vmatpush1.msra.mxu0 0.0
    %5188 = vmatprep.subr.mxu0 0.0
    %5189 = vmatpush1.msra.mxu0 0.0
    %5190 = vmatprep.subr.mxu0 0.0
    %5191 = vmatpush1.msra.mxu0 0.0
    %5192 = vmatprep.subr.mxu0 0.0
    %5193 = vmatpush1.msra.mxu0 0.0
    %5194 = vmatprep.subr.mxu0 0.0
    %5195 = vmatpush1.msra.mxu0 0.0
    %5196 = vmatprep.subr.mxu0 0.0
    %5197 = vmatpush1.msra.mxu0 0.0
    %5198 = vmatprep.subr.mxu0 0.0
    %5199 = vmatpush1.msra.mxu0 0.0
    %5200 = vmatprep.subr.mxu0 0.0
    %5201 = vmatpush1.msra.mxu0 0.0
    %5202 = vmatprep.subr.mxu0 0.0
    %5203 = vmatpush1.msra.mxu0 0.0
    %5204 = vmatprep.subr.mxu0 0.0
    %5205 = vmatpush1.msra.mxu0 0.0
    %5206 = vmatprep.subr.mxu0 0.0
    %5207 = vmatpush1.msra.mxu0 0.0
    %5208 = vmatprep.subr.mxu0 0.0
    %5209 = vmatpush1.msra.mxu0 %v2714
    %5210 = vmatprep.subr.mxu0 0.0
    %5211 = vmatpush2.msra.mxu0 0.0
    %5212 = vmatprep.subr.mxu0 0.0
    %5213 = vmatpush2.msra.mxu0 0.0
    %5214 = vmatprep.subr.mxu0 0.0
    %5215 = vmatpush2.msra.mxu0 0.0
    %5216 = vmatprep.subr.mxu0 0.0
    %5217 = vmatpush2.msra.mxu0 0.0
    %5218 = vmatprep.subr.mxu0 0.0
    %5219 = vmatpush2.msra.mxu0 0.0
    %5220 = vmatprep.subr.mxu0 0.0
    %5221 = vmatpush2.msra.mxu0 0.0
    %5222 = vmatprep.subr.mxu0 0.0
    %5223 = vmatpush2.msra.mxu0 0.0
    %5224 = vmatprep.subr.mxu0 0.0
    %5225 = vmatpush2.msra.mxu0 0.0
    %5226 = vmatprep.subr.mxu0 0.0
    %5227 = vmatpush2.msra.mxu0 0.0
    %5228 = vmatprep.subr.mxu0 0.0
    %5229 = vmatpush2.msra.mxu0 0.0
    %5230 = vmatprep.subr.mxu0 0.0
    %5231 = vmatpush2.msra.mxu0 0.0
    %5232 = vmatprep.subr.mxu0 0.0
    %5233 = vmatpush2.msra.mxu0 0.0
    %5234 = vmatprep.subr.mxu0 0.0
    %5235 = vmatpush2.msra.mxu0 0.0
    %5236 = vmatprep.subr.mxu0 0.0
    %5237 = vmatpush2.msra.mxu0 0.0
    %5238 = vmatprep.subr.mxu0 0.0
    %5239 = vmatpush2.msra.mxu0 0.0
    %5240 = vmatprep.subr.mxu0 0.0
    %5241 = vmatpush2.msra.mxu0 0.0
    %5242 = vmatprep.mubr.f32.mxu0 0.0
    %5243 = vmatmul.mubr.f32.gmra.mxu0 %v5176
    %v5244 = vpop.f32.mrf.mxu0
    %v5245 = vadd.f32 0.0, %v5244
    %v5246 = vpop.f32.mrf.mxu0
    %5247 = vdwg.mxu0
    %v5248 = vadd.f32 %v5174, %v5245
    %v5249 = vmax.f32 %v5248, 0.0
    %v5251 = vsel %vm2788, %v5249, 0
    %5253 = vmatprep.subr.mxu0 0.0
    %5254 = vmatpush1.msra.mxu0 0.0
    %5255 = vmatprep.subr.mxu0 0.0
    %5256 = vmatpush1.msra.mxu0 0.0
    %5257 = vmatprep.subr.mxu0 0.0
    %5258 = vmatpush1.msra.mxu0 0.0
    %5259 = vmatprep.subr.mxu0 0.0
    %5260 = vmatpush1.msra.mxu0 0.0
    %5261 = vmatprep.subr.mxu0 0.0
    %5262 = vmatpush1.msra.mxu0 0.0
    %5263 = vmatprep.subr.mxu0 0.0
    %5264 = vmatpush1.msra.mxu0 0.0
    %5265 = vmatprep.subr.mxu0 0.0
    %5266 = vmatpush1.msra.mxu0 0.0
    %5267 = vmatprep.subr.mxu0 0.0
    %5268 = vmatpush1.msra.mxu0 0.0
    %5269 = vmatprep.subr.mxu0 0.0
    %5270 = vmatpush1.msra.mxu0 0.0
    %5271 = vmatprep.subr.mxu0 0.0
    %5272 = vmatpush1.msra.mxu0 0.0
    %5273 = vmatprep.subr.mxu0 0.0
    %5274 = vmatpush1.msra.mxu0 0.0
    %5275 = vmatprep.subr.mxu0 0.0
    %5276 = vmatpush1.msra.mxu0 0.0
    %5277 = vmatprep.subr.mxu0 0.0
    %5278 = vmatpush1.msra.mxu0 %v2687
    %5279 = vmatprep.subr.mxu0 0.0
    %5280 = vmatpush1.msra.mxu0 %v2686
    %5281 = vmatprep.subr.mxu0 0.0
    %5282 = vmatpush1.msra.mxu0 %v2685
    %5283 = vmatprep.subr.mxu0 0.0
    %5284 = vmatpush1.msra.mxu0 %v2684
    %5285 = vmatprep.subr.mxu0 0.0
    %5286 = vmatpush2.msra.mxu0 0.0
    %5287 = vmatprep.subr.mxu0 0.0
    %5288 = vmatpush2.msra.mxu0 0.0
    %5289 = vmatprep.subr.mxu0 0.0
    %5290 = vmatpush2.msra.mxu0 0.0
    %5291 = vmatprep.subr.mxu0 0.0
    %5292 = vmatpush2.msra.mxu0 0.0
    %5293 = vmatprep.subr.mxu0 0.0
    %5294 = vmatpush2.msra.mxu0 0.0
    %5295 = vmatprep.subr.mxu0 0.0
    %5296 = vmatpush2.msra.mxu0 0.0
    %5297 = vmatprep.subr.mxu0 0.0
    %5298 = vmatpush2.msra.mxu0 0.0
    %5299 = vmatprep.subr.mxu0 0.0
    %5300 = vmatpush2.msra.mxu0 0.0
    %5301 = vmatprep.subr.mxu0 0.0
    %5302 = vmatpush2.msra.mxu0 0.0
    %5303 = vmatprep.subr.mxu0 0.0
    %5304 = vmatpush2.msra.mxu0 0.0
    %5305 = vmatprep.subr.mxu0 0.0
    %5306 = vmatpush2.msra.mxu0 0.0
    %5307 = vmatprep.subr.mxu0 0.0
    %5308 = vmatpush2.msra.mxu0 0.0
    %5309 = vmatprep.subr.mxu0 0.0
    %5310 = vmatpush2.msra.mxu0 0.0
    %5311 = vmatprep.subr.mxu0 0.0
    %5312 = vmatpush2.msra.mxu0 0.0
    %5313 = vmatprep.subr.mxu0 0.0
    %5314 = vmatpush2.msra.mxu0 0.0
    %5315 = vmatprep.subr.mxu0 0.0
    %5316 = vmatpush2.msra.mxu0 0.0
    %5317 = vmatprep.mubr.f32.mxu0 0.0
    %5318 = vmatmul.mubr.f32.gmra.mxu0 %v5251
    %v5319 = vpop.f32.mrf.mxu0
    %v5320 = vadd.f32 %v2698, %v5319
    %v5321 = vpop.f32.mrf.mxu0
    %5322 = vdwg.mxu0
    %s5323 = scalar_lea.vmem %s1, 14
    %v5324 = vld [vmem:[%s5323] sm:$0x3]
    %v5325 = vadd.f32 %v5320, %v5324
    %v5326 = vsel %vm2864, %v5325, -inf
    %5327 = vmax.xlane.f32.xlu0 %v5326
    %v5328 = vpop.xlane.xlu0 %5327
    %v5329 = vsub.f32 %v5325, %v5328
    %v5330 = vmul.f32 %v5329, 1.442695
    %v5331 = vpow.pop %v5330
    %v5332 = vsel %vm2864, %v5331, 0.0
    %5333 = vadd.xlane.f32.xlu0 %v5332
    %v5334 = vpop.xlane.xlu0 %5333
    %v5335 = vrcp.pop %v5334
    %v5336 = vmul.f32 %v5331, %v5335
    %v5337 = vsel %vm2876, %v5336, %v5172
    %s5338 = scalar_lea.vmem [#allocation5], 14
    %v5339 = vld [vmem:[%s5338] sm:$0x3]
    %v5341 = vsel %vm2708, %v5337, 0
    %5343 = vmatprep.subr.mxu0 0.0
    %5344 = vmatpush1.msra.mxu0 0.0
    %5345 = vmatprep.subr.mxu0 0.0
    %5346 = vmatpush1.msra.mxu0 0.0
    %5347 = vmatprep.subr.mxu0 0.0
    %5348 = vmatpush1.msra.mxu0 0.0
    %5349 = vmatprep.subr.mxu0 0.0
    %5350 = vmatpush1.msra.mxu0 0.0
    %5351 = vmatprep.subr.mxu0 0.0
    %5352 = vmatpush1.msra.mxu0 0.0
    %5353 = vmatprep.subr.mxu0 0.0
    %5354 = vmatpush1.msra.mxu0 0.0
    %5355 = vmatprep.subr.mxu0 0.0
    %5356 = vmatpush1.msra.mxu0 0.0
    %5357 = vmatprep.subr.mxu0 0.0
    %5358 = vmatpush1.msra.mxu0 0.0
    %5359 = vmatprep.subr.mxu0 0.0
    %5360 = vmatpush1.msra.mxu0 0.0
    %5361 = vmatprep.subr.mxu0 0.0
    %5362 = vmatpush1.msra.mxu0 0.0
    %5363 = vmatprep.subr.mxu0 0.0
    %5364 = vmatpush1.msra.mxu0 0.0
    %5365 = vmatprep.subr.mxu0 0.0
    %5366 = vmatpush1.msra.mxu0 0.0
    %5367 = vmatprep.subr.mxu0 0.0
    %5368 = vmatpush1.msra.mxu0 0.0
    %5369 = vmatprep.subr.mxu0 0.0
    %5370 = vmatpush1.msra.mxu0 0.0
    %5371 = vmatprep.subr.mxu0 0.0
    %5372 = vmatpush1.msra.mxu0 0.0
    %5373 = vmatprep.subr.mxu0 0.0
    %5374 = vmatpush1.msra.mxu0 %v2883
    %5375 = vmatprep.subr.mxu0 0.0
    %5376 = vmatpush2.msra.mxu0 0.0
    %5377 = vmatprep.subr.mxu0 0.0
    %5378 = vmatpush2.msra.mxu0 0.0
    %5379 = vmatprep.subr.mxu0 0.0
    %5380 = vmatpush2.msra.mxu0 0.0
    %5381 = vmatprep.subr.mxu0 0.0
    %5382 = vmatpush2.msra.mxu0 0.0
    %5383 = vmatprep.subr.mxu0 0.0
    %5384 = vmatpush2.msra.mxu0 0.0
    %5385 = vmatprep.subr.mxu0 0.0
    %5386 = vmatpush2.msra.mxu0 0.0
    %5387 = vmatprep.subr.mxu0 0.0
    %5388 = vmatpush2.msra.mxu0 0.0
    %5389 = vmatprep.subr.mxu0 0.0
    %5390 = vmatpush2.msra.mxu0 0.0
    %5391 = vmatprep.subr.mxu0 0.0
    %5392 = vmatpush2.msra.mxu0 0.0
    %5393 = vmatprep.subr.mxu0 0.0
    %5394 = vmatpush2.msra.mxu0 0.0
    %5395 = vmatprep.subr.mxu0 0.0
    %5396 = vmatpush2.msra.mxu0 0.0
    %5397 = vmatprep.subr.mxu0 0.0
    %5398 = vmatpush2.msra.mxu0 0.0
    %5399 = vmatprep.subr.mxu0 0.0
    %5400 = vmatpush2.msra.mxu0 0.0
    %5401 = vmatprep.subr.mxu0 0.0
    %5402 = vmatpush2.msra.mxu0 0.0
    %5403 = vmatprep.subr.mxu0 0.0
    %5404 = vmatpush2.msra.mxu0 0.0
    %5405 = vmatprep.subr.mxu0 0.0
    %5406 = vmatpush2.msra.mxu0 0.0
    %5407 = vmatprep.mubr.f32.mxu0 0.0
    %5408 = vmatmul.mubr.f32.gmra.mxu0 %v5341
    %v5409 = vpop.f32.mrf.mxu0
    %v5410 = vadd.f32 0.0, %v5409
    %v5411 = vpop.f32.mrf.mxu0
    %5412 = vdwg.mxu0
    %v5413 = vadd.f32 %v5339, %v5410
    %v5414 = vmax.f32 %v5413, 0.0
    %v5416 = vsel %vm2788, %v5414, 0
    %5418 = vmatprep.subr.mxu0 0.0
    %5419 = vmatpush1.msra.mxu0 0.0
    %5420 = vmatprep.subr.mxu0 0.0
    %5421 = vmatpush1.msra.mxu0 0.0
    %5422 = vmatprep.subr.mxu0 0.0
    %5423 = vmatpush1.msra.mxu0 0.0
    %5424 = vmatprep.subr.mxu0 0.0
    %5425 = vmatpush1.msra.mxu0 0.0
    %5426 = vmatprep.subr.mxu0 0.0
    %5427 = vmatpush1.msra.mxu0 0.0
    %5428 = vmatprep.subr.mxu0 0.0
    %5429 = vmatpush1.msra.mxu0 0.0
    %5430 = vmatprep.subr.mxu0 0.0
    %5431 = vmatpush1.msra.mxu0 0.0
    %5432 = vmatprep.subr.mxu0 0.0
    %5433 = vmatpush1.msra.mxu0 0.0
    %5434 = vmatprep.subr.mxu0 0.0
    %5435 = vmatpush1.msra.mxu0 0.0
    %5436 = vmatprep.subr.mxu0 0.0
    %5437 = vmatpush1.msra.mxu0 0.0
    %5438 = vmatprep.subr.mxu0 0.0
    %5439 = vmatpush1.msra.mxu0 0.0
    %5440 = vmatprep.subr.mxu0 0.0
    %5441 = vmatpush1.msra.mxu0 0.0
    %5442 = vmatprep.subr.mxu0 0.0
    %5443 = vmatpush1.msra.mxu0 %v2692
    %5444 = vmatprep.subr.mxu0 0.0
    %5445 = vmatpush1.msra.mxu0 %v2691
    %5446 = vmatprep.subr.mxu0 0.0
    %5447 = vmatpush1.msra.mxu0 %v2690
    %5448 = vmatprep.subr.mxu0 0.0
    %5449 = vmatpush1.msra.mxu0 %v2689
    %5450 = vmatprep.subr.mxu0 0.0
    %5451 = vmatpush2.msra.mxu0 0.0
    %5452 = vmatprep.subr.mxu0 0.0
    %5453 = vmatpush2.msra.mxu0 0.0
    %5454 = vmatprep.subr.mxu0 0.0
    %5455 = vmatpush2.msra.mxu0 0.0
    %5456 = vmatprep.subr.mxu0 0.0
    %5457 = vmatpush2.msra.mxu0 0.0
    %5458 = vmatprep.subr.mxu0 0.0
    %5459 = vmatpush2.msra.mxu0 0.0
    %5460 = vmatprep.subr.mxu0 0.0
    %5461 = vmatpush2.msra.mxu0 0.0
    %5462 = vmatprep.subr.mxu0 0.0
    %5463 = vmatpush2.msra.mxu0 0.0
    %5464 = vmatprep.subr.mxu0 0.0
    %5465 = vmatpush2.msra.mxu0 0.0
    %5466 = vmatprep.subr.mxu0 0.0
    %5467 = vmatpush2.msra.mxu0 0.0
    %5468 = vmatprep.subr.mxu0 0.0
    %5469 = vmatpush2.msra.mxu0 0.0
    %5470 = vmatprep.subr.mxu0 0.0
    %5471 = vmatpush2.msra.mxu0 0.0
    %5472 = vmatprep.subr.mxu0 0.0
    %5473 = vmatpush2.msra.mxu0 0.0
    %5474 = vmatprep.subr.mxu0 0.0
    %5475 = vmatpush2.msra.mxu0 0.0
    %5476 = vmatprep.subr.mxu0 0.0
    %5477 = vmatpush2.msra.mxu0 0.0
    %5478 = vmatprep.subr.mxu0 0.0
    %5479 = vmatpush2.msra.mxu0 0.0
    %5480 = vmatprep.subr.mxu0 0.0
    %5481 = vmatpush2.msra.mxu0 0.0
    %5482 = vmatprep.mubr.f32.mxu0 0.0
    %5483 = vmatmul.mubr.f32.gmra.mxu0 %v5416
    %v5484 = vpop.f32.mrf.mxu0
    %v5485 = vadd.f32 %v2705, %v5484
    %v5486 = vpop.f32.mrf.mxu0
    %5487 = vdwg.mxu0
    %v5488 = vmul.f32 %v5485, 0.5
    %v5489 = vmul.f32 %v5488, 1.442695
    %v5490 = vpow.pop %v5489
    %s5491 = scalar_lea.vmem %s2, 14
    %v5492 = vld [vmem:[%s5491] sm:$0x3]
    %5494 = vrot.lane.b32.xlu0 %v5492, 2
    %v5495 = vpop.permute.xlu0 %5494
    %v5497 = vmul.f32 %v5490, %v5495
    %5499 = vrot.lane.b32.xlu0 %v5497, 126
    %v5500 = vpop.permute.xlu0 %5499
    %v5502 = vadd.f32 %v5485, %v5500
    %5504 = vrot.lane.b32.xlu0 %v5336, 3
    %v5505 = vpop.permute.xlu0 %5504
    %5508 = vrot.lane.b32.xlu0 %v5485, 6
    %v5509 = vpop.permute.xlu0 %5508
    %5512 = vrot.lane.b32.xlu0 %v5502, 10
    %v5513 = vpop.permute.xlu0 %5512
    %v5515 = vsel %vm2876, %v5320, %v5505
    %v5516 = vsel %vm3057, %v5515, %v5509
    %v5517 = vsel %vm3059, %v5516, %v5513
    %s5518 = scalar_lea.vmem [#allocation9], 14
    %5519 = vst.msk [vmem:[%s5518] sm:$0x3] %vm3061, %v5517
    %v5520 = vld [vmem:[#allocation9] sm:$0x3]
    %v5521 = vld [vmem:[#allocation9 + $0x2] sm:$0x3]
    %v5522 = vld [vmem:[#allocation9 + $0x4] sm:$0x3]
    %v5523 = vld [vmem:[#allocation9 + $0x6] sm:$0x3]
    %v5524 = vld [vmem:[#allocation9 + $0x8] sm:$0x3]
    %v5525 = vld [vmem:[#allocation9 + $0xa] sm:$0x3]
    %v5526 = vld [vmem:[#allocation9 + $0xc] sm:$0x3]
    %v5527 = vld [vmem:[#allocation9 + $0xe] sm:$0x3]
    %v5528 = vld [vmem:[%s14] sm:$0x3]
    %v5529 = vld [vmem:[%s15] sm:$0x1]
    %v5530 = vld [vmem:[%s16] sm:$0x3]
    %v5531 = vld [vmem:[%s17] sm:$0x7]
    %v5532 = vld [vmem:[%s18] sm:$0x3]
    %v5533 = vld [vmem:[%s19] sm:$0x7]
    %v5535 = vlaneseq
    %v5536 = vshrl.u32 %v5535, 7
    %v5537 = vsub.s32 0, %v5536
    %v5538 = vrot.slane %v5529, %v5537
    %v5547 = vcombine.low %v5520, %v5521
    %v5548 = vcombine.low %v5522, %v5523
    %v5550 = vunpack.c.l.s4 1983009808
    %v5551 = vunpack.c.0.s8 %v5550
    %v5552 = vlaneseq
    %v5553 = vshrl.u32 %v5552, 7
    %v5554 = vsub.s32 %v5551, %v5553
    %v5555 = vrot.slane %v5547, %v5554
    %v5557 = vunpack.c.l.s4 1983009808
    %v5558 = vunpack.c.0.s8 %v5557
    %v5559 = vlaneseq
    %v5560 = vshrl.u32 %v5559, 7
    %v5561 = vsub.s32 %v5558, %v5560
    %v5562 = vrot.slane %v5548, %v5561
    %v5563 = vcombine.low %v5555, %v5562
    %v5564 = vcombine.low %v5524, %v5525
    %v5565 = vcombine.low %v5526, %v5527
    %v5567 = vunpack.c.l.s4 1983009808
    %v5568 = vunpack.c.0.s8 %v5567
    %v5569 = vlaneseq
    %v5570 = vshrl.u32 %v5569, 7
    %v5571 = vsub.s32 %v5568, %v5570
    %v5572 = vrot.slane %v5564, %v5571
    %v5574 = vunpack.c.l.s4 1983009808
    %v5575 = vunpack.c.0.s8 %v5574
    %v5576 = vlaneseq
    %v5577 = vshrl.u32 %v5576, 7
    %v5578 = vsub.s32 %v5575, %v5577
    %v5579 = vrot.slane %v5565, %v5578
    %v5580 = vcombine.low %v5572, %v5579
    %5581 = vrot.lane.b32.xlu0 %v5563, 118
    %v5582 = vpop.permute.xlu0 %5581
    %5583 = vrot.lane.b32.xlu0 %v5580, 118
    %v5584 = vpop.permute.xlu0 %5583
    %v5585 = vcombine.low %v5538, %v5538
    %v5587 = vunpack.c.l.s4 1983009808
    %v5588 = vunpack.c.0.s8 %v5587
    %v5589 = vlaneseq
    %v5590 = vshrl.u32 %v5589, 7
    %v5591 = vsub.s32 %v5588, %v5590
    %v5592 = vrot.slane %v5585, %v5591
    %v5593 = vcombine.low %v5592, %v5592
    %vm5595 = vcmask 15360
    %v5596 = vsel %vm5595, %v5582, 0
    %v5598 = vsel %vm5595, %v5584, 0
    %vm5600 = vcmask 1041408
    %v5602 = vsel %vm5600, %v5528, 0
    %5604 = vmatprep.subr.mxu0 0.0
    %5605 = vmatpush1.msra.mxu0 0.0
    %5606 = vmatprep.subr.mxu0 0.0
    %5607 = vmatpush1.msra.mxu0 0.0
    %5608 = vmatprep.subr.mxu0 0.0
    %5609 = vmatpush1.msra.mxu0 0.0
    %5610 = vmatprep.subr.mxu0 0.0
    %5611 = vmatpush1.msra.mxu0 0.0
    %5612 = vmatprep.subr.mxu0 0.0
    %5613 = vmatpush1.msra.mxu0 0.0
    %5614 = vmatprep.subr.mxu0 0.0
    %5615 = vmatpush1.msra.mxu0 0.0
    %5616 = vmatprep.subr.mxu0 0.0
    %5617 = vmatpush1.msra.mxu0 0.0
    %5618 = vmatprep.subr.mxu0 0.0
    %5619 = vmatpush1.msra.mxu0 0.0
    %5620 = vmatprep.subr.mxu0 0.0
    %5621 = vmatpush1.msra.mxu0 0.0
    %5622 = vmatprep.subr.mxu0 0.0
    %5623 = vmatpush1.msra.mxu0 0.0
    %5624 = vmatprep.subr.mxu0 0.0
    %5625 = vmatpush1.msra.mxu0 0.0
    %5626 = vmatprep.subr.mxu0 0.0
    %5627 = vmatpush1.msra.mxu0 0.0
    %5628 = vmatprep.subr.mxu0 0.0
    %5629 = vmatpush1.msra.mxu0 0.0
    %5630 = vmatprep.subr.mxu0 0.0
    %5631 = vmatpush1.msra.mxu0 0.0
    %5632 = vmatprep.subr.mxu0 0.0
    %5633 = vmatpush1.msra.mxu0 0.0
    %5634 = vmatprep.subr.mxu0 0.0
    %5635 = vmatpush1.msra.mxu0 %v5602
    %5636 = vmatprep.subr.mxu0 0.0
    %5637 = vmatpush2.msra.mxu0 0.0
    %5638 = vmatprep.subr.mxu0 0.0
    %5639 = vmatpush2.msra.mxu0 0.0
    %5640 = vmatprep.subr.mxu0 0.0
    %5641 = vmatpush2.msra.mxu0 0.0
    %5642 = vmatprep.subr.mxu0 0.0
    %5643 = vmatpush2.msra.mxu0 0.0
    %5644 = vmatprep.subr.mxu0 0.0
    %5645 = vmatpush2.msra.mxu0 0.0
    %5646 = vmatprep.subr.mxu0 0.0
    %5647 = vmatpush2.msra.mxu0 0.0
    %5648 = vmatprep.subr.mxu0 0.0
    %5649 = vmatpush2.msra.mxu0 0.0
    %5650 = vmatprep.subr.mxu0 0.0
    %5651 = vmatpush2.msra.mxu0 0.0
    %5652 = vmatprep.subr.mxu0 0.0
    %5653 = vmatpush2.msra.mxu0 0.0
    %5654 = vmatprep.subr.mxu0 0.0
    %5655 = vmatpush2.msra.mxu0 0.0
    %5656 = vmatprep.subr.mxu0 0.0
    %5657 = vmatpush2.msra.mxu0 0.0
    %5658 = vmatprep.subr.mxu0 0.0
    %5659 = vmatpush2.msra.mxu0 0.0
    %5660 = vmatprep.subr.mxu0 0.0
    %5661 = vmatpush2.msra.mxu0 0.0
    %5662 = vmatprep.subr.mxu0 0.0
    %5663 = vmatpush2.msra.mxu0 0.0
    %5664 = vmatprep.subr.mxu0 0.0
    %5665 = vmatpush2.msra.mxu0 0.0
    %5666 = vmatprep.subr.mxu0 0.0
    %5667 = vmatpush2.msra.mxu0 0.0
    %5668 = vmatprep.mubr.f32.mxu0 0.0
    %5669 = vmatmul.mubr.f32.gmra.mxu0 %v5596
    %v5670 = vpop.f32.mrf.mxu0
    %v5671 = vadd.f32 %v5593, %v5670
    %v5672 = vpop.f32.mrf.mxu0
    %5673 = vmatprep.mubr.f32.mxu0 0.0
    %5674 = vmatmul.mubr.f32.gmra.mxu0 %v5598
    %v5675 = vpop.f32.mrf.mxu0
    %v5676 = vadd.f32 %v5593, %v5675
    %v5677 = vpop.f32.mrf.mxu0
    %5678 = vdwg.mxu0
    %v5681 = vcombine.high %v5671, %v5671
    %v5683 = vunpack.c.l.s4 1983009808
    %v5684 = vunpack.c.0.s8 %v5683
    %v5685 = vlaneseq
    %v5686 = vshrl.u32 %v5685, 7
    %v5687 = vsub.s32 %v5684, %v5686
    %v5688 = vrot.slane %v5671, %v5687
    %v5690 = vunpack.c.l.s4 1983009808
    %v5691 = vunpack.c.0.s8 %v5690
    %v5692 = vlaneseq
    %v5693 = vshrl.u32 %v5692, 7
    %v5694 = vsub.s32 %v5691, %v5693
    %v5695 = vrot.slane %v5681, %v5694
    %v5696 = vcombine.high %v5688, %v5688
    %v5697 = vcombine.high %v5695, %v5695
    %v5698 = vcombine.high %v5676, %v5676
    %v5700 = vunpack.c.l.s4 1983009808
    %v5701 = vunpack.c.0.s8 %v5700
    %v5702 = vlaneseq
    %v5703 = vshrl.u32 %v5702, 7
    %v5704 = vsub.s32 %v5701, %v5703
    %v5705 = vrot.slane %v5676, %v5704
    %v5707 = vunpack.c.l.s4 1983009808
    %v5708 = vunpack.c.0.s8 %v5707
    %v5709 = vlaneseq
    %v5710 = vshrl.u32 %v5709, 7
    %v5711 = vsub.s32 %v5708, %v5710
    %v5712 = vrot.slane %v5698, %v5711
    %v5713 = vcombine.high %v5705, %v5705
    %v5714 = vcombine.high %v5712, %v5712
    %vm5723 = vcmask 25600
    %5724 = vst.msk [vmem:[%s21] sm:$0x3] %vm5723, %v5688
    %5725 = vst.msk [vmem:[%s21 + $0x2] sm:$0x3] %vm5723, %v5696
    %5726 = vst.msk [vmem:[%s21 + $0x4] sm:$0x3] %vm5723, %v5695
    %5727 = vst.msk [vmem:[%s21 + $0x6] sm:$0x3] %vm5723, %v5697
    %5728 = vst.msk [vmem:[%s21 + $0x8] sm:$0x3] %vm5723, %v5705
    %5729 = vst.msk [vmem:[%s21 + $0xa] sm:$0x3] %vm5723, %v5713
    %5730 = vst.msk [vmem:[%s21 + $0xc] sm:$0x3] %vm5723, %v5712
    %5731 = vst.msk [vmem:[%s21 + $0xe] sm:$0x3] %vm5723, %v5714
    %v5733 = vunpack.c.l.s4 1983009808
    %v5734 = vunpack.c.0.s8 %v5733
    %v5735 = vlaneseq
    %v5736 = vshrl.u32 %v5735, 7
    %v5737 = vsub.s32 %v5734, %v5736
    %v5738 = vrot.slane %v5526, %v5737
    %v5739 = vcombine.low %v5572, %v5738
    %5740 = vrot.lane.b32.xlu0 %v5739, 118
    %v5741 = vpop.permute.xlu0 %5740
    %v5742 = vsel %vm5595, %v5741, 0
    %v5745 = vsel %vm5600, %v5530, 0
    %5747 = vmatprep.subr.mxu0 0.0
    %5748 = vmatpush1.msra.mxu0 0.0
    %5749 = vmatprep.subr.mxu0 0.0
    %5750 = vmatpush1.msra.mxu0 0.0
    %5751 = vmatprep.subr.mxu0 0.0
    %5752 = vmatpush1.msra.mxu0 0.0
    %5753 = vmatprep.subr.mxu0 0.0
    %5754 = vmatpush1.msra.mxu0 0.0
    %5755 = vmatprep.subr.mxu0 0.0
    %5756 = vmatpush1.msra.mxu0 0.0
    %5757 = vmatprep.subr.mxu0 0.0
    %5758 = vmatpush1.msra.mxu0 0.0
    %5759 = vmatprep.subr.mxu0 0.0
    %5760 = vmatpush1.msra.mxu0 0.0
    %5761 = vmatprep.subr.mxu0 0.0
    %5762 = vmatpush1.msra.mxu0 0.0
    %5763 = vmatprep.subr.mxu0 0.0
    %5764 = vmatpush1.msra.mxu0 0.0
    %5765 = vmatprep.subr.mxu0 0.0
    %5766 = vmatpush1.msra.mxu0 0.0
    %5767 = vmatprep.subr.mxu0 0.0
    %5768 = vmatpush1.msra.mxu0 0.0
    %5769 = vmatprep.subr.mxu0 0.0
    %5770 = vmatpush1.msra.mxu0 0.0
    %5771 = vmatprep.subr.mxu0 0.0
    %5772 = vmatpush1.msra.mxu0 0.0
    %5773 = vmatprep.subr.mxu0 0.0
    %5774 = vmatpush1.msra.mxu0 0.0
    %5775 = vmatprep.subr.mxu0 0.0
    %5776 = vmatpush1.msra.mxu0 0.0
    %5777 = vmatprep.subr.mxu0 0.0
    %5778 = vmatpush1.msra.mxu0 %v5745
    %5779 = vmatprep.subr.mxu0 0.0
    %5780 = vmatpush2.msra.mxu0 0.0
    %5781 = vmatprep.subr.mxu0 0.0
    %5782 = vmatpush2.msra.mxu0 0.0
    %5783 = vmatprep.subr.mxu0 0.0
    %5784 = vmatpush2.msra.mxu0 0.0
    %5785 = vmatprep.subr.mxu0 0.0
    %5786 = vmatpush2.msra.mxu0 0.0
    %5787 = vmatprep.subr.mxu0 0.0
    %5788 = vmatpush2.msra.mxu0 0.0
    %5789 = vmatprep.subr.mxu0 0.0
    %5790 = vmatpush2.msra.mxu0 0.0
    %5791 = vmatprep.subr.mxu0 0.0
    %5792 = vmatpush2.msra.mxu0 0.0
    %5793 = vmatprep.subr.mxu0 0.0
    %5794 = vmatpush2.msra.mxu0 0.0
    %5795 = vmatprep.subr.mxu0 0.0
    %5796 = vmatpush2.msra.mxu0 0.0
    %5797 = vmatprep.subr.mxu0 0.0
    %5798 = vmatpush2.msra.mxu0 0.0
    %5799 = vmatprep.subr.mxu0 0.0
    %5800 = vmatpush2.msra.mxu0 0.0
    %5801 = vmatprep.subr.mxu0 0.0
    %5802 = vmatpush2.msra.mxu0 0.0
    %5803 = vmatprep.subr.mxu0 0.0
    %5804 = vmatpush2.msra.mxu0 0.0
    %5805 = vmatprep.subr.mxu0 0.0
    %5806 = vmatpush2.msra.mxu0 0.0
    %5807 = vmatprep.subr.mxu0 0.0
    %5808 = vmatpush2.msra.mxu0 0.0
    %5809 = vmatprep.subr.mxu0 0.0
    %5810 = vmatpush2.msra.mxu0 0.0
    %5811 = vmatprep.mubr.f32.mxu0 0.0
    %5812 = vmatmul.mubr.f32.gmra.mxu0 %v5596
    %v5813 = vpop.f32.mrf.mxu0
    %v5814 = vadd.f32 0.0, %v5813
    %v5815 = vpop.f32.mrf.mxu0
    %5816 = vmatprep.mubr.f32.mxu0 0.0
    %5817 = vmatmul.mubr.f32.gmra.mxu0 %v5742
    %v5818 = vpop.f32.mrf.mxu0
    %v5819 = vadd.f32 0.0, %v5818
    %v5820 = vpop.f32.mrf.mxu0
    %5821 = vdwg.mxu0
    %v5824 = vcombine.high %v5814, %v5814
    %v5826 = vunpack.c.l.s4 1983009808
    %v5827 = vunpack.c.0.s8 %v5826
    %v5828 = vlaneseq
    %v5829 = vshrl.u32 %v5828, 7
    %v5830 = vsub.s32 %v5827, %v5829
    %v5831 = vrot.slane %v5814, %v5830
    %v5833 = vunpack.c.l.s4 1983009808
    %v5834 = vunpack.c.0.s8 %v5833
    %v5835 = vlaneseq
    %v5836 = vshrl.u32 %v5835, 7
    %v5837 = vsub.s32 %v5834, %v5836
    %v5838 = vrot.slane %v5824, %v5837
    %v5839 = vcombine.high %v5831, %v5831
    %v5840 = vcombine.high %v5838, %v5838
    %v5841 = vcombine.high %v5819, %v5819
    %v5843 = vunpack.c.l.s4 1983009808
    %v5844 = vunpack.c.0.s8 %v5843
    %v5845 = vlaneseq
    %v5846 = vshrl.u32 %v5845, 7
    %v5847 = vsub.s32 %v5844, %v5846
    %v5848 = vrot.slane %v5819, %v5847
    %v5850 = vunpack.c.l.s4 1983009808
    %v5851 = vunpack.c.0.s8 %v5850
    %v5852 = vlaneseq
    %v5853 = vshrl.u32 %v5852, 7
    %v5854 = vsub.s32 %v5851, %v5853
    %v5855 = vrot.slane %v5841, %v5854
    %v5856 = vcombine.high %v5848, %v5848
    %v5865 = vsel %vm5600, %v5532, 0
    %5867 = vmatprep.subr.mxu0 0.0
    %5868 = vmatpush1.msra.mxu0 0.0
    %5869 = vmatprep.subr.mxu0 0.0
    %5870 = vmatpush1.msra.mxu0 0.0
    %5871 = vmatprep.subr.mxu0 0.0
    %5872 = vmatpush1.msra.mxu0 0.0
    %5873 = vmatprep.subr.mxu0 0.0
    %5874 = vmatpush1.msra.mxu0 0.0
    %5875 = vmatprep.subr.mxu0 0.0
    %5876 = vmatpush1.msra.mxu0 0.0
    %5877 = vmatprep.subr.mxu0 0.0
    %5878 = vmatpush1.msra.mxu0 0.0
    %5879 = vmatprep.subr.mxu0 0.0
    %5880 = vmatpush1.msra.mxu0 0.0
    %5881 = vmatprep.subr.mxu0 0.0
    %5882 = vmatpush1.msra.mxu0 0.0
    %5883 = vmatprep.subr.mxu0 0.0
    %5884 = vmatpush1.msra.mxu0 0.0
    %5885 = vmatprep.subr.mxu0 0.0
    %5886 = vmatpush1.msra.mxu0 0.0
    %5887 = vmatprep.subr.mxu0 0.0
    %5888 = vmatpush1.msra.mxu0 0.0
    %5889 = vmatprep.subr.mxu0 0.0
    %5890 = vmatpush1.msra.mxu0 0.0
    %5891 = vmatprep.subr.mxu0 0.0
    %5892 = vmatpush1.msra.mxu0 0.0
    %5893 = vmatprep.subr.mxu0 0.0
    %5894 = vmatpush1.msra.mxu0 0.0
    %5895 = vmatprep.subr.mxu0 0.0
    %5896 = vmatpush1.msra.mxu0 0.0
    %5897 = vmatprep.subr.mxu0 0.0
    %5898 = vmatpush1.msra.mxu0 %v5865
    %5899 = vmatprep.subr.mxu0 0.0
    %5900 = vmatpush2.msra.mxu0 0.0
    %5901 = vmatprep.subr.mxu0 0.0
    %5902 = vmatpush2.msra.mxu0 0.0
    %5903 = vmatprep.subr.mxu0 0.0
    %5904 = vmatpush2.msra.mxu0 0.0
    %5905 = vmatprep.subr.mxu0 0.0
    %5906 = vmatpush2.msra.mxu0 0.0
    %5907 = vmatprep.subr.mxu0 0.0
    %5908 = vmatpush2.msra.mxu0 0.0
    %5909 = vmatprep.subr.mxu0 0.0
    %5910 = vmatpush2.msra.mxu0 0.0
    %5911 = vmatprep.subr.mxu0 0.0
    %5912 = vmatpush2.msra.mxu0 0.0
    %5913 = vmatprep.subr.mxu0 0.0
    %5914 = vmatpush2.msra.mxu0 0.0
    %5915 = vmatprep.subr.mxu0 0.0
    %5916 = vmatpush2.msra.mxu0 0.0
    %5917 = vmatprep.subr.mxu0 0.0
    %5918 = vmatpush2.msra.mxu0 0.0
    %5919 = vmatprep.subr.mxu0 0.0
    %5920 = vmatpush2.msra.mxu0 0.0
    %5921 = vmatprep.subr.mxu0 0.0
    %5922 = vmatpush2.msra.mxu0 0.0
    %5923 = vmatprep.subr.mxu0 0.0
    %5924 = vmatpush2.msra.mxu0 0.0
    %5925 = vmatprep.subr.mxu0 0.0
    %5926 = vmatpush2.msra.mxu0 0.0
    %5927 = vmatprep.subr.mxu0 0.0
    %5928 = vmatpush2.msra.mxu0 0.0
    %5929 = vmatprep.subr.mxu0 0.0
    %5930 = vmatpush2.msra.mxu0 0.0
    %5931 = vmatprep.mubr.f32.mxu0 0.0
    %5932 = vmatmul.mubr.f32.gmra.mxu0 %v5596
    %v5933 = vpop.f32.mrf.mxu0
    %v5934 = vadd.f32 0.0, %v5933
    %v5935 = vpop.f32.mrf.mxu0
    %5936 = vmatprep.mubr.f32.mxu0 0.0
    %5937 = vmatmul.mubr.f32.gmra.mxu0 %v5742
    %v5938 = vpop.f32.mrf.mxu0
    %v5939 = vadd.f32 0.0, %v5938
    %v5940 = vpop.f32.mrf.mxu0
    %5941 = vdwg.mxu0
    %v5944 = vcombine.high %v5934, %v5934
    %v5946 = vunpack.c.l.s4 1983009808
    %v5947 = vunpack.c.0.s8 %v5946
    %v5948 = vlaneseq
    %v5949 = vshrl.u32 %v5948, 7
    %v5950 = vsub.s32 %v5947, %v5949
    %v5951 = vrot.slane %v5934, %v5950
    %v5953 = vunpack.c.l.s4 1983009808
    %v5954 = vunpack.c.0.s8 %v5953
    %v5955 = vlaneseq
    %v5956 = vshrl.u32 %v5955, 7
    %v5957 = vsub.s32 %v5954, %v5956
    %v5958 = vrot.slane %v5944, %v5957
    %v5959 = vcombine.high %v5951, %v5951
    %v5960 = vcombine.high %v5958, %v5958
    %v5961 = vcombine.high %v5939, %v5939
    %v5963 = vunpack.c.l.s4 1983009808
    %v5964 = vunpack.c.0.s8 %v5963
    %v5965 = vlaneseq
    %v5966 = vshrl.u32 %v5965, 7
    %v5967 = vsub.s32 %v5964, %v5966
    %v5968 = vrot.slane %v5939, %v5967
    %v5970 = vunpack.c.l.s4 1983009808
    %v5971 = vunpack.c.0.s8 %v5970
    %v5972 = vlaneseq
    %v5973 = vshrl.u32 %v5972, 7
    %v5974 = vsub.s32 %v5971, %v5973
    %v5975 = vrot.slane %v5961, %v5974
    %v5976 = vcombine.high %v5968, %v5968
    %5984 = vset.pattern.permute.xlu0 3
    %5985 = vperm.xlu0 %5984, %v5521
    %v5986 = vpop.permute.xlu0 %5985
    %5988 = vset.pattern.permute.xlu0 3
    %5989 = vperm.xlu0 %5988, %v5522
    %v5990 = vpop.permute.xlu0 %5989
    %5992 = vset.pattern.permute.xlu0 3
    %5993 = vperm.xlu0 %5992, %v5523
    %v5994 = vpop.permute.xlu0 %5993
    %5996 = vset.pattern.permute.xlu0 3
    %5997 = vperm.xlu0 %5996, %v5524
    %v5998 = vpop.permute.xlu0 %5997
    %6000 = vset.pattern.permute.xlu0 3
    %6001 = vperm.xlu0 %6000, %v5525
    %v6002 = vpop.permute.xlu0 %6001
    %6004 = vset.pattern.permute.xlu0 3
    %6005 = vperm.xlu0 %6004, %v5526
    %v6006 = vpop.permute.xlu0 %6005
    %6008 = vset.pattern.permute.xlu0 3
    %6009 = vperm.xlu0 %6008, %v5527
    %v6010 = vpop.permute.xlu0 %6009
    %v6012 = vmul.f32 %v5831, %v5986
    %v6013 = vmul.f32 %v5839, %v5990
    %v6014 = vmul.f32 %v5838, %v5994
    %v6015 = vmul.f32 %v5840, %v5998
    %v6016 = vmul.f32 %v5848, %v6002
    %v6017 = vmul.f32 %v5856, %v6006
    %v6018 = vmul.f32 %v5855, %v6010
    %v6019 = vcombine.low %v5521, %v5522
    %v6020 = vcombine.low %v5523, %v5524
    %v6022 = vunpack.c.l.s4 1983009808
    %v6023 = vunpack.c.0.s8 %v6022
    %v6024 = vlaneseq
    %v6025 = vshrl.u32 %v6024, 7
    %v6026 = vsub.s32 %v6023, %v6025
    %v6027 = vrot.slane %v6019, %v6026
    %v6029 = vunpack.c.l.s4 1983009808
    %v6030 = vunpack.c.0.s8 %v6029
    %v6031 = vlaneseq
    %v6032 = vshrl.u32 %v6031, 7
    %v6033 = vsub.s32 %v6030, %v6032
    %v6034 = vrot.slane %v6020, %v6033
    %v6035 = vcombine.low %v6027, %v6034
    %v6036 = vcombine.low %v5525, %v5526
    %v6038 = vunpack.c.l.s4 1983009808
    %v6039 = vunpack.c.0.s8 %v6038
    %v6040 = vlaneseq
    %v6041 = vshrl.u32 %v6040, 7
    %v6042 = vsub.s32 %v6039, %v6041
    %v6043 = vrot.slane %v6036, %v6042
    %v6045 = vunpack.c.l.s4 1983009808
    %v6046 = vunpack.c.0.s8 %v6045
    %v6047 = vlaneseq
    %v6048 = vshrl.u32 %v6047, 7
    %v6049 = vsub.s32 %v6046, %v6048
    %v6050 = vrot.slane %v5527, %v6049
    %v6051 = vcombine.low %v6043, %v6050
    %6052 = vrot.lane.b32.xlu0 %v6035, 125
    %v6053 = vpop.permute.xlu0 %6052
    %6054 = vrot.lane.b32.xlu0 %v6051, 125
    %v6055 = vpop.permute.xlu0 %6054
    %v6063 = vcombine.low %v6012, %v6013
    %v6064 = vcombine.low %v6014, %v6015
    %v6066 = vunpack.c.l.s4 1983009808
    %v6067 = vunpack.c.0.s8 %v6066
    %v6068 = vlaneseq
    %v6069 = vshrl.u32 %v6068, 7
    %v6070 = vsub.s32 %v6067, %v6069
    %v6071 = vrot.slane %v6063, %v6070
    %v6073 = vunpack.c.l.s4 1983009808
    %v6074 = vunpack.c.0.s8 %v6073
    %v6075 = vlaneseq
    %v6076 = vshrl.u32 %v6075, 7
    %v6077 = vsub.s32 %v6074, %v6076
    %v6078 = vrot.slane %v6064, %v6077
    %v6079 = vcombine.low %v6071, %v6078
    %v6080 = vcombine.low %v6016, %v6017
    %v6082 = vunpack.c.l.s4 1983009808
    %v6083 = vunpack.c.0.s8 %v6082
    %v6084 = vlaneseq
    %v6085 = vshrl.u32 %v6084, 7
    %v6086 = vsub.s32 %v6083, %v6085
    %v6087 = vrot.slane %v6080, %v6086
    %v6089 = vunpack.c.l.s4 1983009808
    %v6090 = vunpack.c.0.s8 %v6089
    %v6091 = vlaneseq
    %v6092 = vshrl.u32 %v6091, 7
    %v6093 = vsub.s32 %v6090, %v6092
    %v6094 = vrot.slane %v6018, %v6093
    %v6095 = vcombine.low %v6087, %v6094
    %v6098 = vsel %vm2876, %v6053, 0
    %v6100 = vsel %vm2876, %v6055, 0
    %vm6102 = vcmask 1042432
    %v6104 = vsel %vm6102, %v5531, 0
    %6106 = vmatprep.subr.mxu0 0.0
    %6107 = vmatpush1.msra.mxu0 0.0
    %6108 = vmatprep.subr.mxu0 0.0
    %6109 = vmatpush1.msra.mxu0 0.0
    %6110 = vmatprep.subr.mxu0 0.0
    %6111 = vmatpush1.msra.mxu0 0.0
    %6112 = vmatprep.subr.mxu0 0.0
    %6113 = vmatpush1.msra.mxu0 0.0
    %6114 = vmatprep.subr.mxu0 0.0
    %6115 = vmatpush1.msra.mxu0 0.0
    %6116 = vmatprep.subr.mxu0 0.0
    %6117 = vmatpush1.msra.mxu0 0.0
    %6118 = vmatprep.subr.mxu0 0.0
    %6119 = vmatpush1.msra.mxu0 0.0
    %6120 = vmatprep.subr.mxu0 0.0
    %6121 = vmatpush1.msra.mxu0 0.0
    %6122 = vmatprep.subr.mxu0 0.0
    %6123 = vmatpush1.msra.mxu0 0.0
    %6124 = vmatprep.subr.mxu0 0.0
    %6125 = vmatpush1.msra.mxu0 0.0
    %6126 = vmatprep.subr.mxu0 0.0
    %6127 = vmatpush1.msra.mxu0 0.0
    %6128 = vmatprep.subr.mxu0 0.0
    %6129 = vmatpush1.msra.mxu0 0.0
    %6130 = vmatprep.subr.mxu0 0.0
    %6131 = vmatpush1.msra.mxu0 0.0
    %6132 = vmatprep.subr.mxu0 0.0
    %6133 = vmatpush1.msra.mxu0 0.0
    %6134 = vmatprep.subr.mxu0 0.0
    %6135 = vmatpush1.msra.mxu0 0.0
    %6136 = vmatprep.subr.mxu0 0.0
    %6137 = vmatpush1.msra.mxu0 %v6104
    %6138 = vmatprep.subr.mxu0 0.0
    %6139 = vmatpush2.msra.mxu0 0.0
    %6140 = vmatprep.subr.mxu0 0.0
    %6141 = vmatpush2.msra.mxu0 0.0
    %6142 = vmatprep.subr.mxu0 0.0
    %6143 = vmatpush2.msra.mxu0 0.0
    %6144 = vmatprep.subr.mxu0 0.0
    %6145 = vmatpush2.msra.mxu0 0.0
    %6146 = vmatprep.subr.mxu0 0.0
    %6147 = vmatpush2.msra.mxu0 0.0
    %6148 = vmatprep.subr.mxu0 0.0
    %6149 = vmatpush2.msra.mxu0 0.0
    %6150 = vmatprep.subr.mxu0 0.0
    %6151 = vmatpush2.msra.mxu0 0.0
    %6152 = vmatprep.subr.mxu0 0.0
    %6153 = vmatpush2.msra.mxu0 0.0
    %6154 = vmatprep.subr.mxu0 0.0
    %6155 = vmatpush2.msra.mxu0 0.0
    %6156 = vmatprep.subr.mxu0 0.0
    %6157 = vmatpush2.msra.mxu0 0.0
    %6158 = vmatprep.subr.mxu0 0.0
    %6159 = vmatpush2.msra.mxu0 0.0
    %6160 = vmatprep.subr.mxu0 0.0
    %6161 = vmatpush2.msra.mxu0 0.0
    %6162 = vmatprep.subr.mxu0 0.0
    %6163 = vmatpush2.msra.mxu0 0.0
    %6164 = vmatprep.subr.mxu0 0.0
    %6165 = vmatpush2.msra.mxu0 0.0
    %6166 = vmatprep.subr.mxu0 0.0
    %6167 = vmatpush2.msra.mxu0 0.0
    %6168 = vmatprep.subr.mxu0 0.0
    %6169 = vmatpush2.msra.mxu0 0.0
    %6170 = vmatprep.mubr.f32.mxu0 0.0
    %6171 = vmatmul.mubr.f32.gmra.mxu0 %v6098
    %v6172 = vpop.f32.mrf.mxu0
    %v6173 = vadd.f32 %v6079, %v6172
    %v6174 = vpop.f32.mrf.mxu0
    %6175 = vmatprep.mubr.f32.mxu0 0.0
    %6176 = vmatmul.mubr.f32.gmra.mxu0 %v6100
    %v6177 = vpop.f32.mrf.mxu0
    %v6178 = vadd.f32 %v6095, %v6177
    %v6179 = vpop.f32.mrf.mxu0
    %6180 = vdwg.mxu0
    %v6183 = vcombine.high %v6173, %v6173
    %v6185 = vunpack.c.l.s4 1983009808
    %v6186 = vunpack.c.0.s8 %v6185
    %v6187 = vlaneseq
    %v6188 = vshrl.u32 %v6187, 7
    %v6189 = vsub.s32 %v6186, %v6188
    %v6190 = vrot.slane %v6173, %v6189
    %v6192 = vunpack.c.l.s4 1983009808
    %v6193 = vunpack.c.0.s8 %v6192
    %v6194 = vlaneseq
    %v6195 = vshrl.u32 %v6194, 7
    %v6196 = vsub.s32 %v6193, %v6195
    %v6197 = vrot.slane %v6183, %v6196
    %v6198 = vcombine.high %v6190, %v6190
    %v6199 = vcombine.high %v6197, %v6197
    %v6200 = vcombine.high %v6178, %v6178
    %v6202 = vunpack.c.l.s4 1983009808
    %v6203 = vunpack.c.0.s8 %v6202
    %v6204 = vlaneseq
    %v6205 = vshrl.u32 %v6204, 7
    %v6206 = vsub.s32 %v6203, %v6205
    %v6207 = vrot.slane %v6178, %v6206
    %v6209 = vunpack.c.l.s4 1983009808
    %v6210 = vunpack.c.0.s8 %v6209
    %v6211 = vlaneseq
    %v6212 = vshrl.u32 %v6211, 7
    %v6213 = vsub.s32 %v6210, %v6212
    %v6214 = vrot.slane %v6200, %v6213
    %v6215 = vcombine.high %v6207, %v6207
    %6223 = vset.pattern.permute.xlu0 3
    %6224 = vperm.xlu0 %6223, %v5520
    %v6225 = vpop.permute.xlu0 %6224
    %v6227 = vmul.f32 %v5951, %v6225
    %v6228 = vmul.f32 %v5959, %v5986
    %v6229 = vmul.f32 %v5958, %v5990
    %v6230 = vmul.f32 %v5960, %v5994
    %v6231 = vmul.f32 %v5968, %v5998
    %v6232 = vmul.f32 %v5976, %v6002
    %v6233 = vmul.f32 %v5975, %v6006
    %6234 = vrot.lane.b32.xlu0 %v5563, 125
    %v6235 = vpop.permute.xlu0 %6234
    %6236 = vrot.lane.b32.xlu0 %v5739, 125
    %v6237 = vpop.permute.xlu0 %6236
    %v6245 = vcombine.low %v6227, %v6228
    %v6246 = vcombine.low %v6229, %v6230
    %v6248 = vunpack.c.l.s4 1983009808
    %v6249 = vunpack.c.0.s8 %v6248
    %v6250 = vlaneseq
    %v6251 = vshrl.u32 %v6250, 7
    %v6252 = vsub.s32 %v6249, %v6251
    %v6253 = vrot.slane %v6245, %v6252
    %v6255 = vunpack.c.l.s4 1983009808
    %v6256 = vunpack.c.0.s8 %v6255
    %v6257 = vlaneseq
    %v6258 = vshrl.u32 %v6257, 7
    %v6259 = vsub.s32 %v6256, %v6258
    %v6260 = vrot.slane %v6246, %v6259
    %v6261 = vcombine.low %v6253, %v6260
    %v6262 = vcombine.low %v6231, %v6232
    %v6264 = vunpack.c.l.s4 1983009808
    %v6265 = vunpack.c.0.s8 %v6264
    %v6266 = vlaneseq
    %v6267 = vshrl.u32 %v6266, 7
    %v6268 = vsub.s32 %v6265, %v6267
    %v6269 = vrot.slane %v6262, %v6268
    %v6271 = vunpack.c.l.s4 1983009808
    %v6272 = vunpack.c.0.s8 %v6271
    %v6273 = vlaneseq
    %v6274 = vshrl.u32 %v6273, 7
    %v6275 = vsub.s32 %v6272, %v6274
    %v6276 = vrot.slane %v6233, %v6275
    %v6277 = vcombine.low %v6269, %v6276
    %v6280 = vsel %vm2876, %v6235, 0
    %v6282 = vsel %vm2876, %v6237, 0
    %v6285 = vsel %vm6102, %v5533, 0
    %6287 = vmatprep.subr.mxu0 0.0
    %6288 = vmatpush1.msra.mxu0 0.0
    %6289 = vmatprep.subr.mxu0 0.0
    %6290 = vmatpush1.msra.mxu0 0.0
    %6291 = vmatprep.subr.mxu0 0.0
    %6292 = vmatpush1.msra.mxu0 0.0
    %6293 = vmatprep.subr.mxu0 0.0
    %6294 = vmatpush1.msra.mxu0 0.0
    %6295 = vmatprep.subr.mxu0 0.0
    %6296 = vmatpush1.msra.mxu0 0.0
    %6297 = vmatprep.subr.mxu0 0.0
    %6298 = vmatpush1.msra.mxu0 0.0
    %6299 = vmatprep.subr.mxu0 0.0
    %6300 = vmatpush1.msra.mxu0 0.0
    %6301 = vmatprep.subr.mxu0 0.0
    %6302 = vmatpush1.msra.mxu0 0.0
    %6303 = vmatprep.subr.mxu0 0.0
    %6304 = vmatpush1.msra.mxu0 0.0
    %6305 = vmatprep.subr.mxu0 0.0
    %6306 = vmatpush1.msra.mxu0 0.0
    %6307 = vmatprep.subr.mxu0 0.0
    %6308 = vmatpush1.msra.mxu0 0.0
    %6309 = vmatprep.subr.mxu0 0.0
    %6310 = vmatpush1.msra.mxu0 0.0
    %6311 = vmatprep.subr.mxu0 0.0
    %6312 = vmatpush1.msra.mxu0 0.0
    %6313 = vmatprep.subr.mxu0 0.0
    %6314 = vmatpush1.msra.mxu0 0.0
    %6315 = vmatprep.subr.mxu0 0.0
    %6316 = vmatpush1.msra.mxu0 0.0
    %6317 = vmatprep.subr.mxu0 0.0
    %6318 = vmatpush1.msra.mxu0 %v6285
    %6319 = vmatprep.subr.mxu0 0.0
    %6320 = vmatpush2.msra.mxu0 0.0
    %6321 = vmatprep.subr.mxu0 0.0
    %6322 = vmatpush2.msra.mxu0 0.0
    %6323 = vmatprep.subr.mxu0 0.0
    %6324 = vmatpush2.msra.mxu0 0.0
    %6325 = vmatprep.subr.mxu0 0.0
    %6326 = vmatpush2.msra.mxu0 0.0
    %6327 = vmatprep.subr.mxu0 0.0
    %6328 = vmatpush2.msra.mxu0 0.0
    %6329 = vmatprep.subr.mxu0 0.0
    %6330 = vmatpush2.msra.mxu0 0.0
    %6331 = vmatprep.subr.mxu0 0.0
    %6332 = vmatpush2.msra.mxu0 0.0
    %6333 = vmatprep.subr.mxu0 0.0
    %6334 = vmatpush2.msra.mxu0 0.0
    %6335 = vmatprep.subr.mxu0 0.0
    %6336 = vmatpush2.msra.mxu0 0.0
    %6337 = vmatprep.subr.mxu0 0.0
    %6338 = vmatpush2.msra.mxu0 0.0
    %6339 = vmatprep.subr.mxu0 0.0
    %6340 = vmatpush2.msra.mxu0 0.0
    %6341 = vmatprep.subr.mxu0 0.0
    %6342 = vmatpush2.msra.mxu0 0.0
    %6343 = vmatprep.subr.mxu0 0.0
    %6344 = vmatpush2.msra.mxu0 0.0
    %6345 = vmatprep.subr.mxu0 0.0
    %6346 = vmatpush2.msra.mxu0 0.0
    %6347 = vmatprep.subr.mxu0 0.0
    %6348 = vmatpush2.msra.mxu0 0.0
    %6349 = vmatprep.subr.mxu0 0.0
    %6350 = vmatpush2.msra.mxu0 0.0
    %6351 = vmatprep.mubr.f32.mxu0 0.0
    %6352 = vmatmul.mubr.f32.gmra.mxu0 %v6280
    %v6353 = vpop.f32.mrf.mxu0
    %v6354 = vadd.f32 %v6261, %v6353
    %v6355 = vpop.f32.mrf.mxu0
    %6356 = vmatprep.mubr.f32.mxu0 0.0
    %6357 = vmatmul.mubr.f32.gmra.mxu0 %v6282
    %v6358 = vpop.f32.mrf.mxu0
    %v6359 = vadd.f32 %v6277, %v6358
    %v6360 = vpop.f32.mrf.mxu0
    %6361 = vdwg.mxu0
    %v6364 = vcombine.high %v6354, %v6354
    %v6366 = vunpack.c.l.s4 1983009808
    %v6367 = vunpack.c.0.s8 %v6366
    %v6368 = vlaneseq
    %v6369 = vshrl.u32 %v6368, 7
    %v6370 = vsub.s32 %v6367, %v6369
    %v6371 = vrot.slane %v6354, %v6370
    %v6373 = vunpack.c.l.s4 1983009808
    %v6374 = vunpack.c.0.s8 %v6373
    %v6375 = vlaneseq
    %v6376 = vshrl.u32 %v6375, 7
    %v6377 = vsub.s32 %v6374, %v6376
    %v6378 = vrot.slane %v6364, %v6377
    %v6379 = vcombine.high %v6371, %v6371
    %v6380 = vcombine.high %v6378, %v6378
    %v6381 = vcombine.high %v6359, %v6359
    %v6383 = vunpack.c.l.s4 1983009808
    %v6384 = vunpack.c.0.s8 %v6383
    %v6385 = vlaneseq
    %v6386 = vshrl.u32 %v6385, 7
    %v6387 = vsub.s32 %v6384, %v6386
    %v6388 = vrot.slane %v6359, %v6387
    %v6390 = vunpack.c.l.s4 1983009808
    %v6391 = vunpack.c.0.s8 %v6390
    %v6392 = vlaneseq
    %v6393 = vshrl.u32 %v6392, 7
    %v6394 = vsub.s32 %v6391, %v6393
    %v6395 = vrot.slane %v6381, %v6394
    %v6396 = vcombine.high %v6388, %v6388
    %6404 = vset.pattern.permute.xlu0 4
    %6405 = vperm.xlu0 %6404, %v5521
    %v6406 = vpop.permute.xlu0 %6405
    %6408 = vset.pattern.permute.xlu0 4
    %6409 = vperm.xlu0 %6408, %v5522
    %v6410 = vpop.permute.xlu0 %6409
    %6412 = vset.pattern.permute.xlu0 4
    %6413 = vperm.xlu0 %6412, %v5523
    %v6414 = vpop.permute.xlu0 %6413
    %6416 = vset.pattern.permute.xlu0 4
    %6417 = vperm.xlu0 %6416, %v5524
    %v6418 = vpop.permute.xlu0 %6417
    %6420 = vset.pattern.permute.xlu0 4
    %6421 = vperm.xlu0 %6420, %v5525
    %v6422 = vpop.permute.xlu0 %6421
    %6424 = vset.pattern.permute.xlu0 4
    %6425 = vperm.xlu0 %6424, %v5526
    %v6426 = vpop.permute.xlu0 %6425
    %6428 = vset.pattern.permute.xlu0 4
    %6429 = vperm.xlu0 %6428, %v5527
    %v6430 = vpop.permute.xlu0 %6429
    %v6432 = vmul.f32 %v5831, %v6406
    %v6433 = vmul.f32 %v5839, %v6410
    %v6434 = vmul.f32 %v5838, %v6414
    %v6435 = vmul.f32 %v5840, %v6418
    %v6436 = vmul.f32 %v5848, %v6422
    %v6437 = vmul.f32 %v5856, %v6426
    %v6438 = vmul.f32 %v5855, %v6430
    %6446 = vrot.lane.b32.xlu0 %v6432, 126
    %v6447 = vpop.permute.xlu0 %6446
    %6448 = vrot.lane.b32.xlu0 %v6433, 126
    %v6449 = vpop.permute.xlu0 %6448
    %6450 = vrot.lane.b32.xlu0 %v6434, 126
    %v6451 = vpop.permute.xlu0 %6450
    %6452 = vrot.lane.b32.xlu0 %v6435, 126
    %v6453 = vpop.permute.xlu0 %6452
    %6454 = vrot.lane.b32.xlu0 %v6436, 126
    %v6455 = vpop.permute.xlu0 %6454
    %6456 = vrot.lane.b32.xlu0 %v6437, 126
    %v6457 = vpop.permute.xlu0 %6456
    %6458 = vrot.lane.b32.xlu0 %v6438, 126
    %v6459 = vpop.permute.xlu0 %6458
    %v6467 = vadd.f32 %v6190, %v6447
    %v6468 = vadd.f32 %v6198, %v6449
    %v6469 = vadd.f32 %v6197, %v6451
    %v6470 = vadd.f32 %v6199, %v6453
    %v6471 = vadd.f32 %v6207, %v6455
    %v6472 = vadd.f32 %v6215, %v6457
    %v6473 = vadd.f32 %v6214, %v6459
    %6474 = vset.pattern.permute.xlu0 4
    %6475 = vperm.xlu0 %6474, %v5520
    %v6476 = vpop.permute.xlu0 %6475
    %v6478 = vmul.f32 %v5951, %v6476
    %v6479 = vmul.f32 %v5959, %v6406
    %v6480 = vmul.f32 %v5958, %v6410
    %v6481 = vmul.f32 %v5960, %v6414
    %v6482 = vmul.f32 %v5968, %v6418
    %v6483 = vmul.f32 %v5976, %v6422
    %v6484 = vmul.f32 %v5975, %v6426
    %6492 = vrot.lane.b32.xlu0 %v6478, 125
    %v6493 = vpop.permute.xlu0 %6492
    %6494 = vrot.lane.b32.xlu0 %v6479, 125
    %v6495 = vpop.permute.xlu0 %6494
    %6496 = vrot.lane.b32.xlu0 %v6480, 125
    %v6497 = vpop.permute.xlu0 %6496
    %6498 = vrot.lane.b32.xlu0 %v6481, 125
    %v6499 = vpop.permute.xlu0 %6498
    %6500 = vrot.lane.b32.xlu0 %v6482, 125
    %v6501 = vpop.permute.xlu0 %6500
    %6502 = vrot.lane.b32.xlu0 %v6483, 125
    %v6503 = vpop.permute.xlu0 %6502
    %6504 = vrot.lane.b32.xlu0 %v6484, 125
    %v6505 = vpop.permute.xlu0 %6504
    %v6513 = vadd.f32 %v6371, %v6493
    %v6514 = vadd.f32 %v6379, %v6495
    %v6515 = vadd.f32 %v6378, %v6497
    %v6516 = vadd.f32 %v6380, %v6499
    %v6517 = vadd.f32 %v6388, %v6501
    %v6518 = vadd.f32 %v6396, %v6503
    %v6519 = vadd.f32 %v6395, %v6505
    %6520 = vset.pattern.permute.xlu0 5
    %6521 = vperm.xlu0 %6520, %v5521
    %v6522 = vpop.permute.xlu0 %6521
    %6524 = vset.pattern.permute.xlu0 5
    %6525 = vperm.xlu0 %6524, %v5522
    %v6526 = vpop.permute.xlu0 %6525
    %6528 = vset.pattern.permute.xlu0 5
    %6529 = vperm.xlu0 %6528, %v5523
    %v6530 = vpop.permute.xlu0 %6529
    %6532 = vset.pattern.permute.xlu0 5
    %6533 = vperm.xlu0 %6532, %v5524
    %v6534 = vpop.permute.xlu0 %6533
    %6536 = vset.pattern.permute.xlu0 5
    %6537 = vperm.xlu0 %6536, %v5525
    %v6538 = vpop.permute.xlu0 %6537
    %6540 = vset.pattern.permute.xlu0 5
    %6541 = vperm.xlu0 %6540, %v5526
    %v6542 = vpop.permute.xlu0 %6541
    %6544 = vset.pattern.permute.xlu0 5
    %6545 = vperm.xlu0 %6544, %v5527
    %v6546 = vpop.permute.xlu0 %6545
    %v6548 = vmul.f32 %v5831, %v6522
    %v6549 = vmul.f32 %v5839, %v6526
    %v6550 = vmul.f32 %v5838, %v6530
    %v6551 = vmul.f32 %v5840, %v6534
    %v6552 = vmul.f32 %v5848, %v6538
    %v6553 = vmul.f32 %v5856, %v6542
    %v6554 = vmul.f32 %v5855, %v6546
    %6562 = vrot.lane.b32.xlu0 %v6548, 124
    %v6563 = vpop.permute.xlu0 %6562
    %6564 = vrot.lane.b32.xlu0 %v6549, 124
    %v6565 = vpop.permute.xlu0 %6564
    %6566 = vrot.lane.b32.xlu0 %v6550, 124
    %v6567 = vpop.permute.xlu0 %6566
    %6568 = vrot.lane.b32.xlu0 %v6551, 124
    %v6569 = vpop.permute.xlu0 %6568
    %6570 = vrot.lane.b32.xlu0 %v6552, 124
    %v6571 = vpop.permute.xlu0 %6570
    %6572 = vrot.lane.b32.xlu0 %v6553, 124
    %v6573 = vpop.permute.xlu0 %6572
    %6574 = vrot.lane.b32.xlu0 %v6554, 124
    %v6575 = vpop.permute.xlu0 %6574
    %v6583 = vadd.f32 %v6467, %v6563
    %v6584 = vadd.f32 %v6468, %v6565
    %v6585 = vadd.f32 %v6469, %v6567
    %v6586 = vadd.f32 %v6470, %v6569
    %v6587 = vadd.f32 %v6471, %v6571
    %v6588 = vadd.f32 %v6472, %v6573
    %v6589 = vadd.f32 %v6473, %v6575
    %6590 = vset.pattern.permute.xlu0 5
    %6591 = vperm.xlu0 %6590, %v5520
    %v6592 = vpop.permute.xlu0 %6591
    %v6594 = vmul.f32 %v5951, %v6592
    %v6595 = vmul.f32 %v5959, %v6522
    %v6596 = vmul.f32 %v5958, %v6526
    %v6597 = vmul.f32 %v5960, %v6530
    %v6598 = vmul.f32 %v5968, %v6534
    %v6599 = vmul.f32 %v5976, %v6538
    %v6600 = vmul.f32 %v5975, %v6542
    %6608 = vrot.lane.b32.xlu0 %v6594, 122
    %v6609 = vpop.permute.xlu0 %6608
    %6610 = vrot.lane.b32.xlu0 %v6595, 122
    %v6611 = vpop.permute.xlu0 %6610
    %6612 = vrot.lane.b32.xlu0 %v6596, 122
    %v6613 = vpop.permute.xlu0 %6612
    %6614 = vrot.lane.b32.xlu0 %v6597, 122
    %v6615 = vpop.permute.xlu0 %6614
    %6616 = vrot.lane.b32.xlu0 %v6598, 122
    %v6617 = vpop.permute.xlu0 %6616
    %6618 = vrot.lane.b32.xlu0 %v6599, 122
    %v6619 = vpop.permute.xlu0 %6618
    %6620 = vrot.lane.b32.xlu0 %v6600, 122
    %v6621 = vpop.permute.xlu0 %6620
    %v6629 = vadd.f32 %v6513, %v6609
    %v6630 = vadd.f32 %v6514, %v6611
    %v6631 = vadd.f32 %v6515, %v6613
    %v6632 = vadd.f32 %v6516, %v6615
    %v6633 = vadd.f32 %v6517, %v6617
    %v6634 = vadd.f32 %v6518, %v6619
    %v6635 = vadd.f32 %v6519, %v6621
    %v6636 = vsel %vm2864, %v6629, -inf
    %6637 = vmax.xlane.f32.xlu0 %v6636
    %v6638 = vpop.xlane.xlu0 %6637
    %v6639 = vsel %vm2864, %v6630, -inf
    %6640 = vmax.xlane.f32.xlu0 %v6639
    %v6641 = vpop.xlane.xlu0 %6640
    %v6642 = vsel %vm2864, %v6631, -inf
    %6643 = vmax.xlane.f32.xlu0 %v6642
    %v6644 = vpop.xlane.xlu0 %6643
    %v6645 = vsel %vm2864, %v6632, -inf
    %6646 = vmax.xlane.f32.xlu0 %v6645
    %v6647 = vpop.xlane.xlu0 %6646
    %v6648 = vsel %vm2864, %v6633, -inf
    %6649 = vmax.xlane.f32.xlu0 %v6648
    %v6650 = vpop.xlane.xlu0 %6649
    %v6651 = vsel %vm2864, %v6634, -inf
    %6652 = vmax.xlane.f32.xlu0 %v6651
    %v6653 = vpop.xlane.xlu0 %6652
    %v6654 = vsel %vm2864, %v6635, -inf
    %6655 = vmax.xlane.f32.xlu0 %v6654
    %v6656 = vpop.xlane.xlu0 %6655
    %v6657 = vsub.f32 %v6629, %v6638
    %v6658 = vsub.f32 %v6630, %v6641
    %v6659 = vsub.f32 %v6631, %v6644
    %v6660 = vsub.f32 %v6632, %v6647
    %v6661 = vsub.f32 %v6633, %v6650
    %v6662 = vsub.f32 %v6634, %v6653
    %v6663 = vsub.f32 %v6635, %v6656
    %v6664 = vmul.f32 %v6657, 1.442695
    %v6665 = vpow.pop %v6664
    %v6666 = vmul.f32 %v6658, 1.442695
    %v6667 = vpow.pop %v6666
    %v6668 = vmul.f32 %v6659, 1.442695
    %v6669 = vpow.pop %v6668
    %v6670 = vmul.f32 %v6660, 1.442695
    %v6671 = vpow.pop %v6670
    %v6672 = vmul.f32 %v6661, 1.442695
    %v6673 = vpow.pop %v6672
    %v6674 = vmul.f32 %v6662, 1.442695
    %v6675 = vpow.pop %v6674
    %v6676 = vmul.f32 %v6663, 1.442695
    %v6677 = vpow.pop %v6676
    %v6678 = vsel %vm2864, %v6665, 0.0
    %6679 = vadd.xlane.f32.xlu0 %v6678
    %v6680 = vpop.xlane.xlu0 %6679
    %v6681 = vsel %vm2864, %v6667, 0.0
    %6682 = vadd.xlane.f32.xlu0 %v6681
    %v6683 = vpop.xlane.xlu0 %6682
    %v6684 = vsel %vm2864, %v6669, 0.0
    %6685 = vadd.xlane.f32.xlu0 %v6684
    %v6686 = vpop.xlane.xlu0 %6685
    %v6687 = vsel %vm2864, %v6671, 0.0
    %6688 = vadd.xlane.f32.xlu0 %v6687
    %v6689 = vpop.xlane.xlu0 %6688
    %v6690 = vsel %vm2864, %v6673, 0.0
    %6691 = vadd.xlane.f32.xlu0 %v6690
    %v6692 = vpop.xlane.xlu0 %6691
    %v6693 = vsel %vm2864, %v6675, 0.0
    %6694 = vadd.xlane.f32.xlu0 %v6693
    %v6695 = vpop.xlane.xlu0 %6694
    %v6696 = vsel %vm2864, %v6677, 0.0
    %6697 = vadd.xlane.f32.xlu0 %v6696
    %v6698 = vpop.xlane.xlu0 %6697
    %v6699 = vrcp.pop %v6680
    %v6700 = vrcp.pop %v6683
    %v6701 = vrcp.pop %v6686
    %v6702 = vrcp.pop %v6689
    %v6703 = vrcp.pop %v6692
    %v6704 = vrcp.pop %v6695
    %v6705 = vrcp.pop %v6698
    %v6706 = vmul.f32 %v6665, %v6699
    %v6707 = vmul.f32 %v6667, %v6700
    %v6708 = vmul.f32 %v6669, %v6701
    %v6709 = vmul.f32 %v6671, %v6702
    %v6710 = vmul.f32 %v6673, %v6703
    %v6711 = vmul.f32 %v6675, %v6704
    %v6712 = vmul.f32 %v6677, %v6705
    %v6713 = vsel %vm2864, %v5521, -inf
    %6714 = vmax.xlane.f32.xlu0 %v6713
    %v6715 = vpop.xlane.xlu0 %6714
    %v6716 = vsel %vm2864, %v5522, -inf
    %6717 = vmax.xlane.f32.xlu0 %v6716
    %v6718 = vpop.xlane.xlu0 %6717
    %v6719 = vsel %vm2864, %v5523, -inf
    %6720 = vmax.xlane.f32.xlu0 %v6719
    %v6721 = vpop.xlane.xlu0 %6720
    %v6722 = vsel %vm2864, %v5524, -inf
    %6723 = vmax.xlane.f32.xlu0 %v6722
    %v6724 = vpop.xlane.xlu0 %6723
    %v6725 = vsel %vm2864, %v5525, -inf
    %6726 = vmax.xlane.f32.xlu0 %v6725
    %v6727 = vpop.xlane.xlu0 %6726
    %v6728 = vsel %vm2864, %v5526, -inf
    %6729 = vmax.xlane.f32.xlu0 %v6728
    %v6730 = vpop.xlane.xlu0 %6729
    %v6731 = vsel %vm2864, %v5527, -inf
    %6732 = vmax.xlane.f32.xlu0 %v6731
    %v6733 = vpop.xlane.xlu0 %6732
    %v6734 = vsub.f32 %v5521, %v6715
    %v6735 = vsub.f32 %v5522, %v6718
    %v6736 = vsub.f32 %v5523, %v6721
    %v6737 = vsub.f32 %v5524, %v6724
    %v6738 = vsub.f32 %v5525, %v6727
    %v6739 = vsub.f32 %v5526, %v6730
    %v6740 = vsub.f32 %v5527, %v6733
    %v6741 = vmul.f32 %v6734, 1.442695
    %v6742 = vpow.pop %v6741
    %v6743 = vmul.f32 %v6735, 1.442695
    %v6744 = vpow.pop %v6743
    %v6745 = vmul.f32 %v6736, 1.442695
    %v6746 = vpow.pop %v6745
    %v6747 = vmul.f32 %v6737, 1.442695
    %v6748 = vpow.pop %v6747
    %v6749 = vmul.f32 %v6738, 1.442695
    %v6750 = vpow.pop %v6749
    %v6751 = vmul.f32 %v6739, 1.442695
    %v6752 = vpow.pop %v6751
    %v6753 = vmul.f32 %v6740, 1.442695
    %v6754 = vpow.pop %v6753
    %v6755 = vsel %vm2864, %v6742, 0.0
    %6756 = vadd.xlane.f32.xlu0 %v6755
    %v6757 = vpop.xlane.xlu0 %6756
    %v6758 = vsel %vm2864, %v6744, 0.0
    %6759 = vadd.xlane.f32.xlu0 %v6758
    %v6760 = vpop.xlane.xlu0 %6759
    %v6761 = vsel %vm2864, %v6746, 0.0
    %6762 = vadd.xlane.f32.xlu0 %v6761
    %v6763 = vpop.xlane.xlu0 %6762
    %v6764 = vsel %vm2864, %v6748, 0.0
    %6765 = vadd.xlane.f32.xlu0 %v6764
    %v6766 = vpop.xlane.xlu0 %6765
    %v6767 = vsel %vm2864, %v6750, 0.0
    %6768 = vadd.xlane.f32.xlu0 %v6767
    %v6769 = vpop.xlane.xlu0 %6768
    %v6770 = vsel %vm2864, %v6752, 0.0
    %6771 = vadd.xlane.f32.xlu0 %v6770
    %v6772 = vpop.xlane.xlu0 %6771
    %v6773 = vsel %vm2864, %v6754, 0.0
    %6774 = vadd.xlane.f32.xlu0 %v6773
    %v6775 = vpop.xlane.xlu0 %6774
    %v6776 = vrcp.pop %v6757
    %v6777 = vrcp.pop %v6760
    %v6778 = vrcp.pop %v6763
    %v6779 = vrcp.pop %v6766
    %v6780 = vrcp.pop %v6769
    %v6781 = vrcp.pop %v6772
    %v6782 = vrcp.pop %v6775
    %v6783 = vmul.f32 %v6742, %v6776
    %v6784 = vmul.f32 %v6744, %v6777
    %v6785 = vmul.f32 %v6746, %v6778
    %v6786 = vmul.f32 %v6748, %v6779
    %v6787 = vmul.f32 %v6750, %v6780
    %v6788 = vmul.f32 %v6752, %v6781
    %v6789 = vmul.f32 %v6754, %v6782
    %v6790 = vld [vmem:[%s0] sm:$0x3]
    %v6791 = vld [vmem:[%s0 + $0x2] sm:$0x3]
    %v6792 = vld [vmem:[%s0 + $0x4] sm:$0x3]
    %v6793 = vld [vmem:[%s0 + $0x6] sm:$0x3]
    %v6794 = vld [vmem:[%s0 + $0x8] sm:$0x3]
    %v6795 = vld [vmem:[%s0 + $0xa] sm:$0x3]
    %v6796 = vld [vmem:[%s0 + $0xc] sm:$0x3]
    %v6797 = vld [vmem:[%s0 + $0xe] sm:$0x3]
    %v6798 = vsub.f32 %v5688, %v6790
    %v6799 = vsub.f32 %v5696, %v6791
    %v6800 = vsub.f32 %v5695, %v6792
    %v6801 = vsub.f32 %v5697, %v6793
    %v6802 = vsub.f32 %v5705, %v6794
    %v6803 = vsub.f32 %v5713, %v6795
    %v6804 = vsub.f32 %v5712, %v6796
    %v6805 = vsub.f32 %v5714, %v6797
    %v6806 = vmul.f32 %v6798, %v6798
    %v6807 = vmul.f32 %v6799, %v6799
    %v6808 = vmul.f32 %v6800, %v6800
    %v6809 = vmul.f32 %v6801, %v6801
    %v6810 = vmul.f32 %v6802, %v6802
    %v6811 = vmul.f32 %v6803, %v6803
    %v6812 = vmul.f32 %v6804, %v6804
    %v6813 = vmul.f32 %v6805, %v6805
    %v6814 = vrcp.pop 0.0002
    %v6815 = vmul.f32 %v6806, %v6814
    %v6816 = vmul.f32 %v6807, %v6814
    %v6817 = vmul.f32 %v6808, %v6814
    %v6818 = vmul.f32 %v6809, %v6814
    %v6819 = vmul.f32 %v6810, %v6814
    %v6820 = vmul.f32 %v6811, %v6814
    %v6821 = vmul.f32 %v6812, %v6814
    %v6822 = vmul.f32 %v6813, %v6814
    %v6823 = vsel %vm5723, %v6815, 0.0
    %v6824 = vsel %vm5723, %v6816, 0.0
    %v6825 = vadd.f32 %v6823, %v6824
    %v6826 = vsel %vm5723, %v6817, 0.0
    %v6827 = vadd.f32 %v6825, %v6826
    %v6828 = vsel %vm5723, %v6818, 0.0
    %v6829 = vadd.f32 %v6827, %v6828
    %v6830 = vsel %vm5723, %v6819, 0.0
    %v6831 = vadd.f32 %v6829, %v6830
    %v6832 = vsel %vm5723, %v6820, 0.0
    %v6833 = vadd.f32 %v6831, %v6832
    %v6834 = vsel %vm5723, %v6821, 0.0
    %v6835 = vadd.f32 %v6833, %v6834
    %v6836 = vsel %vm5723, %v6822, 0.0
    %v6837 = vadd.f32 %v6835, %v6836
    %6838 = vadd.xlane.f32.xlu0 %v6837
    %v6839 = vpop.xlane.xlu0 %6838
    %v6840 = vrot.slane %v6839, 4
    %v6841 = vadd.f32 %v6839, %v6840
    %v6842 = vrot.slane %v6841, 2
    %v6843 = vadd.f32 %v6841, %v6842
    %v6844 = vrot.slane %v6843, 1
    %v6845 = vadd.f32 %v6843, %v6844
    %s6846 = vtos %v6845
    %v6847 = vrcp.pop 16.0
    %s6848 = vtos %v6847
    %s6849 = smul.f32 %s6846, %s6848
    %v6850 = vadd.f32 %v6783, 1e-16
    %v6851 = vadd.f32 %v6784, 1e-16
    %v6852 = vadd.f32 %v6785, 1e-16
    %v6853 = vadd.f32 %v6786, 1e-16
    %v6854 = vadd.f32 %v6787, 1e-16
    %v6855 = vadd.f32 %v6788, 1e-16
    %v6856 = vadd.f32 %v6789, 1e-16
    %v6857 = vlog2.pop %v6850
    %v6858 = vmul.f32 %v6857, 0.6931472
    %v6859 = vlog2.pop %v6851
    %v6860 = vmul.f32 %v6859, 0.6931472
    %v6861 = vlog2.pop %v6852
    %v6862 = vmul.f32 %v6861, 0.6931472
    %v6863 = vlog2.pop %v6853
    %v6864 = vmul.f32 %v6863, 0.6931472
    %v6865 = vlog2.pop %v6854
    %v6866 = vmul.f32 %v6865, 0.6931472
    %v6867 = vlog2.pop %v6855
    %v6868 = vmul.f32 %v6867, 0.6931472
    %v6869 = vlog2.pop %v6856
    %v6870 = vmul.f32 %v6869, 0.6931472
    %v6871 = vadd.f32 %v6706, 1e-16
    %v6872 = vadd.f32 %v6707, 1e-16
    %v6873 = vadd.f32 %v6708, 1e-16
    %v6874 = vadd.f32 %v6709, 1e-16
    %v6875 = vadd.f32 %v6710, 1e-16
    %v6876 = vadd.f32 %v6711, 1e-16
    %v6877 = vadd.f32 %v6712, 1e-16
    %v6878 = vlog2.pop %v6871
    %v6879 = vmul.f32 %v6878, 0.6931472
    %v6880 = vlog2.pop %v6872
    %v6881 = vmul.f32 %v6880, 0.6931472
    %v6882 = vlog2.pop %v6873
    %v6883 = vmul.f32 %v6882, 0.6931472
    %v6884 = vlog2.pop %v6874
    %v6885 = vmul.f32 %v6884, 0.6931472
    %v6886 = vlog2.pop %v6875
    %v6887 = vmul.f32 %v6886, 0.6931472
    %v6888 = vlog2.pop %v6876
    %v6889 = vmul.f32 %v6888, 0.6931472
    %v6890 = vlog2.pop %v6877
    %v6891 = vmul.f32 %v6890, 0.6931472
    %v6892 = vsub.f32 %v6858, %v6879
    %v6893 = vsub.f32 %v6860, %v6881
    %v6894 = vsub.f32 %v6862, %v6883
    %v6895 = vsub.f32 %v6864, %v6885
    %v6896 = vsub.f32 %v6866, %v6887
    %v6897 = vsub.f32 %v6868, %v6889
    %v6898 = vsub.f32 %v6870, %v6891
    %v6899 = vmul.f32 %v6783, %v6892
    %v6900 = vmul.f32 %v6784, %v6893
    %v6901 = vmul.f32 %v6785, %v6894
    %v6902 = vmul.f32 %v6786, %v6895
    %v6903 = vmul.f32 %v6787, %v6896
    %v6904 = vmul.f32 %v6788, %v6897
    %v6905 = vmul.f32 %v6789, %v6898
    %v6906 = vsel %vm2864, %v6899, 0.0
    %v6907 = vsel %vm2864, %v6900, 0.0
    %v6908 = vadd.f32 %v6906, %v6907
    %v6909 = vsel %vm2864, %v6901, 0.0
    %v6910 = vadd.f32 %v6908, %v6909
    %v6911 = vsel %vm2864, %v6902, 0.0
    %v6912 = vadd.f32 %v6910, %v6911
    %v6913 = vsel %vm2864, %v6903, 0.0
    %v6914 = vadd.f32 %v6912, %v6913
    %v6915 = vsel %vm2864, %v6904, 0.0
    %v6916 = vadd.f32 %v6914, %v6915
    %v6917 = vsel %vm2864, %v6905, 0.0
    %v6918 = vadd.f32 %v6916, %v6917
    %6919 = vadd.xlane.f32.xlu0 %v6918
    %v6920 = vpop.xlane.xlu0 %6919
    %v6921 = vrot.slane %v6920, 4
    %v6922 = vadd.f32 %v6920, %v6921
    %v6923 = vrot.slane %v6922, 2
    %v6924 = vadd.f32 %v6922, %v6923
    %v6925 = vrot.slane %v6924, 1
    %v6926 = vadd.f32 %v6924, %v6925
    %s6927 = vtos %v6926
    %v6928 = vrcp.pop 2.0
    %s6929 = vtos %v6928
    %s6930 = smul.f32 %s6927, %s6929
    %v6931 = vadd.f32 %v5521, 1.0
    %v6932 = vadd.f32 %v5522, 1.0
    %v6933 = vadd.f32 %v5523, 1.0
    %v6934 = vadd.f32 %v5524, 1.0
    %v6935 = vadd.f32 %v5525, 1.0
    %v6936 = vadd.f32 %v5526, 1.0
    %v6937 = vadd.f32 %v5527, 1.0
    %v6938 = vsub.f32 %v6931, -9.2103405
    %v6939 = vsub.f32 %v6932, -9.2103405
    %v6940 = vsub.f32 %v6933, -9.2103405
    %v6941 = vsub.f32 %v6934, -9.2103405
    %v6942 = vsub.f32 %v6935, -9.2103405
    %v6943 = vsub.f32 %v6936, -9.2103405
    %v6944 = vsub.f32 %v6937, -9.2103405
    %v6953 = vunpack.c.l.s4 1983009808
    %v6954 = vunpack.c.0.s8 %v6953
    %v6955 = vlaneseq
    %v6956 = vshrl.u32 %v6955, 7
    %v6957 = vsub.s32 %v6954, %v6956
    %v6958 = vrot.slane %v6583, %v6957
    %v6960 = vunpack.c.l.s4 1983009808
    %v6961 = vunpack.c.0.s8 %v6960
    %v6962 = vlaneseq
    %v6963 = vshrl.u32 %v6962, 7
    %v6964 = vsub.s32 %v6961, %v6963
    %v6965 = vrot.slane %v6584, %v6964
    %v6967 = vunpack.c.l.s4 1983009808
    %v6968 = vunpack.c.0.s8 %v6967
    %v6969 = vlaneseq
    %v6970 = vshrl.u32 %v6969, 7
    %v6971 = vsub.s32 %v6968, %v6970
    %v6972 = vrot.slane %v6585, %v6971
    %v6974 = vunpack.c.l.s4 1983009808
    %v6975 = vunpack.c.0.s8 %v6974
    %v6976 = vlaneseq
    %v6977 = vshrl.u32 %v6976, 7
    %v6978 = vsub.s32 %v6975, %v6977
    %v6979 = vrot.slane %v6586, %v6978
    %v6981 = vunpack.c.l.s4 1983009808
    %v6982 = vunpack.c.0.s8 %v6981
    %v6983 = vlaneseq
    %v6984 = vshrl.u32 %v6983, 7
    %v6985 = vsub.s32 %v6982, %v6984
    %v6986 = vrot.slane %v6587, %v6985
    %v6988 = vunpack.c.l.s4 1983009808
    %v6989 = vunpack.c.0.s8 %v6988
    %v6990 = vlaneseq
    %v6991 = vshrl.u32 %v6990, 7
    %v6992 = vsub.s32 %v6989, %v6991
    %v6993 = vrot.slane %v6588, %v6992
    %v6995 = vunpack.c.l.s4 1983009808
    %v6996 = vunpack.c.0.s8 %v6995
    %v6997 = vlaneseq
    %v6998 = vshrl.u32 %v6997, 7
    %v6999 = vsub.s32 %v6996, %v6998
    %v7000 = vrot.slane %v6589, %v6999
    %7001 = vrot.lane.b32.xlu0 %v6958, 6
    %v7002 = vpop.permute.xlu0 %7001
    %7003 = vrot.lane.b32.xlu0 %v6965, 6
    %v7004 = vpop.permute.xlu0 %7003
    %7005 = vrot.lane.b32.xlu0 %v6972, 6
    %v7006 = vpop.permute.xlu0 %7005
    %7007 = vrot.lane.b32.xlu0 %v6979, 6
    %v7008 = vpop.permute.xlu0 %7007
    %7009 = vrot.lane.b32.xlu0 %v6986, 6
    %v7010 = vpop.permute.xlu0 %7009
    %7011 = vrot.lane.b32.xlu0 %v6993, 6
    %v7012 = vpop.permute.xlu0 %7011
    %7013 = vrot.lane.b32.xlu0 %v7000, 6
    %v7014 = vpop.permute.xlu0 %7013
    %v7022 = vsub.f32 %v5521, %v7002
    %v7023 = vsub.f32 %v5522, %v7004
    %v7024 = vsub.f32 %v5523, %v7006
    %v7025 = vsub.f32 %v5524, %v7008
    %v7026 = vsub.f32 %v5525, %v7010
    %v7027 = vsub.f32 %v5526, %v7012
    %v7028 = vsub.f32 %v5527, %v7014
    %v7029 = vmul.f32 %v7022, %v7022
    %v7030 = vmul.f32 %v7023, %v7023
    %v7031 = vmul.f32 %v7024, %v7024
    %v7032 = vmul.f32 %v7025, %v7025
    %v7033 = vmul.f32 %v7026, %v7026
    %v7034 = vmul.f32 %v7027, %v7027
    %v7035 = vmul.f32 %v7028, %v7028
    %v7036 = vmul.f32 %v5521, 1.442695
    %v7037 = vpow.pop %v7036
    %v7038 = vmul.f32 %v5522, 1.442695
    %v7039 = vpow.pop %v7038
    %v7040 = vmul.f32 %v5523, 1.442695
    %v7041 = vpow.pop %v7040
    %v7042 = vmul.f32 %v5524, 1.442695
    %v7043 = vpow.pop %v7042
    %v7044 = vmul.f32 %v5525, 1.442695
    %v7045 = vpow.pop %v7044
    %v7046 = vmul.f32 %v5526, 1.442695
    %v7047 = vpow.pop %v7046
    %v7048 = vmul.f32 %v5527, 1.442695
    %v7049 = vpow.pop %v7048
    %7057 = vrot.lane.b32.xlu0 %v7037, 126
    %v7058 = vpop.permute.xlu0 %7057
    %7059 = vrot.lane.b32.xlu0 %v7039, 126
    %v7060 = vpop.permute.xlu0 %7059
    %7061 = vrot.lane.b32.xlu0 %v7041, 126
    %v7062 = vpop.permute.xlu0 %7061
    %7063 = vrot.lane.b32.xlu0 %v7043, 126
    %v7064 = vpop.permute.xlu0 %7063
    %7065 = vrot.lane.b32.xlu0 %v7045, 126
    %v7066 = vpop.permute.xlu0 %7065
    %7067 = vrot.lane.b32.xlu0 %v7047, 126
    %v7068 = vpop.permute.xlu0 %7067
    %7069 = vrot.lane.b32.xlu0 %v7049, 126
    %v7070 = vpop.permute.xlu0 %7069
    %v7078 = vadd.f32 %v7029, %v7058
    %v7079 = vadd.f32 %v7030, %v7060
    %v7080 = vadd.f32 %v7031, %v7062
    %v7081 = vadd.f32 %v7032, %v7064
    %v7082 = vadd.f32 %v7033, %v7066
    %v7083 = vadd.f32 %v7034, %v7068
    %v7084 = vadd.f32 %v7035, %v7070
    %v7085 = vmul.f32 %v7078, 10000.001
    %v7086 = vmul.f32 %v7079, 10000.001
    %v7087 = vmul.f32 %v7080, 10000.001
    %v7088 = vmul.f32 %v7081, 10000.001
    %v7089 = vmul.f32 %v7082, 10000.001
    %v7090 = vmul.f32 %v7083, 10000.001
    %v7091 = vmul.f32 %v7084, 10000.001
    %7099 = vrot.lane.b32.xlu0 %v7085, 2
    %v7100 = vpop.permute.xlu0 %7099
    %7101 = vrot.lane.b32.xlu0 %v7086, 2
    %v7102 = vpop.permute.xlu0 %7101
    %7103 = vrot.lane.b32.xlu0 %v7087, 2
    %v7104 = vpop.permute.xlu0 %7103
    %7105 = vrot.lane.b32.xlu0 %v7088, 2
    %v7106 = vpop.permute.xlu0 %7105
    %7107 = vrot.lane.b32.xlu0 %v7089, 2
    %v7108 = vpop.permute.xlu0 %7107
    %7109 = vrot.lane.b32.xlu0 %v7090, 2
    %v7110 = vpop.permute.xlu0 %7109
    %7111 = vrot.lane.b32.xlu0 %v7091, 2
    %v7112 = vpop.permute.xlu0 %7111
    %v7120 = vsub.f32 %v6938, %v7100
    %v7121 = vsub.f32 %v6939, %v7102
    %v7122 = vsub.f32 %v6940, %v7104
    %v7123 = vsub.f32 %v6941, %v7106
    %v7124 = vsub.f32 %v6942, %v7108
    %v7125 = vsub.f32 %v6943, %v7110
    %v7126 = vsub.f32 %v6944, %v7112
    %7134 = vrot.lane.b32.xlu0 %v7120, 120
    %v7135 = vpop.permute.xlu0 %7134
    %7136 = vrot.lane.b32.xlu0 %v7121, 120
    %v7137 = vpop.permute.xlu0 %7136
    %7138 = vrot.lane.b32.xlu0 %v7122, 120
    %v7139 = vpop.permute.xlu0 %7138
    %7140 = vrot.lane.b32.xlu0 %v7123, 120
    %v7141 = vpop.permute.xlu0 %7140
    %7142 = vrot.lane.b32.xlu0 %v7124, 120
    %v7143 = vpop.permute.xlu0 %7142
    %7144 = vrot.lane.b32.xlu0 %v7125, 120
    %v7145 = vpop.permute.xlu0 %7144
    %7146 = vrot.lane.b32.xlu0 %v7126, 120
    %v7147 = vpop.permute.xlu0 %7146
    %vm7155 = vcmask 9216
    %v7156 = vsel %vm7155, %v7135, 0.0
    %v7157 = vsel %vm7155, %v7137, 0.0
    %v7158 = vadd.f32 %v7156, %v7157
    %v7159 = vsel %vm7155, %v7139, 0.0
    %v7160 = vadd.f32 %v7158, %v7159
    %v7161 = vsel %vm7155, %v7141, 0.0
    %v7162 = vadd.f32 %v7160, %v7161
    %v7163 = vsel %vm7155, %v7143, 0.0
    %v7164 = vadd.f32 %v7162, %v7163
    %v7165 = vsel %vm7155, %v7145, 0.0
    %v7166 = vadd.f32 %v7164, %v7165
    %v7167 = vsel %vm7155, %v7147, 0.0
    %v7168 = vadd.f32 %v7166, %v7167
    %7169 = vadd.xlane.f32.xlu0 %v7168
    %v7170 = vpop.xlane.xlu0 %7169
    %v7171 = vrot.slane %v7170, 4
    %v7172 = vadd.f32 %v7170, %v7171
    %v7173 = vrot.slane %v7172, 2
    %v7174 = vadd.f32 %v7172, %v7173
    %v7175 = vrot.slane %v7174, 1
    %v7176 = vadd.f32 %v7174, %v7175
    %s7177 = vtos %v7176
    %s7178 = smul.f32 %s7177, -0.5
    %v7179 = vrcp.pop 2.0
    %s7180 = vtos %v7179
    %s7181 = smul.f32 %s7178, %s7180
    %s7182 = sadd.f32 %s6930, %s7181
    %s7183 = sadd.f32 %s6849, %s7182
    %vm7184 = vcmp.eq.s32.totalorder %v528, 0
    %v7185 = vstv %s6849
    %v7186 = vsel %vm7184, %v7185, 0.0
    %vm7187 = vcmp.eq.s32.totalorder %v528, 1
    %v7188 = vstv %s7182
    %v7189 = vsel %vm7187, %v7188, 0.0
    %v7190 = vadd.f32 %v7186, %v7189
    %vm7191 = vcmp.eq.s32.totalorder %v528, 2
    %v7192 = vstv %s7183
    %v7193 = vsel %vm7191, %v7192, 0.0
    %v7194 = vadd.f32 %v7190, %v7193
    %vm7195 = vcmp.eq.s32.totalorder %v528, 3
    %v7196 = vsel %vm7195, %v7192, 0.0
    %v7197 = vadd.f32 %v7194, %v7196
    %vm7198 = vcmask 24576
    %7199 = vst.msk [vmem:[#allocation10] sm:$0x1] %vm7198, %v7197
    // Predicated region
    $region86: #{tpu_custom_call.1} parent=1 // pred_check
      _
    $region87: #{tpu_custom_call.1} parent=1 // pred_check_branch
      %7201 = sbr.rel (0) target = $region89
    $region88: #{tpu_custom_call.1} parent=1 // pred_region
      %s7203 = ssub.s32 256, 256
      %7204 = vsyncadd [#allocation8], %s7203
      %s7205 = sshll.u32 [#allocation9], 4
      %s7206 = int_to_ptr.vmem [resolvable:$true] %s7205
      %7211 = dma.vmem_to_hbm [thread:$0]  %s7206, 256, %s20, [#allocation8], 32, 32, 2
    $region89: #{tpu_custom_call.1} parent=1 // pred_fallthru
      _
    // Predicated region
    $region90: #{tpu_custom_call.1} parent=1 // pred_check
      _
    $region91: #{tpu_custom_call.1} parent=1 // pred_check_branch
      %7213 = sbr.rel (0) target = $region93
    $region92: #{tpu_custom_call.1} parent=1 // pred_region
      _
    $region93: #{tpu_custom_call.1} parent=1 // pred_fallthru
      _
    // Predicated region
    $region94: #{tpu_custom_call.1} parent=1 // pred_check
      _
    $region95: #{tpu_custom_call.1} parent=1 // pred_check_branch
      %7215 = sbr.rel (0) target = $region97
    $region96: #{tpu_custom_call.1} parent=1 // pred_region
      %s7217 = ssub.s32 16, 16
      %7218 = vsyncadd [#allocation11], %s7217
      %s7220 = sshll.u32 [#allocation10], 4
      %s7221 = int_to_ptr.vmem [resolvable:$true] %s7220
      %7223 = dma.vmem_to_hbm [thread:$0]  %s7221, 16, %s22, [#allocation11]
    $region97: #{tpu_custom_call.1} parent=1 // pred_fallthru
      _
    // Predicated region
    $region98: #{tpu_custom_call.1} parent=1 // pred_check
      _
    $region99: #{tpu_custom_call.1} parent=1 // pred_check_branch
      %7225 = sbr.rel (0) target = $region101
    $region100: #{tpu_custom_call.1} parent=1 // pred_region
      %7226 = dma.done [#allocation8], 256
    $region101: #{tpu_custom_call.1} parent=1 // pred_fallthru
      _
    // Predicated region
    $region102: #{tpu_custom_call.1} parent=1 // pred_check
      _
    $region103: #{tpu_custom_call.1} parent=1 // pred_check_branch
      %7228 = sbr.rel (0) target = $region105
    $region104: #{tpu_custom_call.1} parent=1 // pred_region
      _
    $region105: #{tpu_custom_call.1} parent=1 // pred_fallthru
      _
    // Predicated region
    $region106: #{tpu_custom_call.1} parent=1 // pred_check
      _
    $region107: #{tpu_custom_call.1} parent=1 // pred_check_branch
      %7230 = sbr.rel (0) target = $region109
    $region108: #{tpu_custom_call.1} parent=1 // pred_region
      %7231 = dma.done [#allocation11], 16
    $region109: #{tpu_custom_call.1} parent=1 // pred_fallthru
      _
    %7232 = vsyncpa [#allocation7], 1
    %7233 = vsyncpa [#allocation8], 1
    %7234 = vsyncpa [#allocation11], 1

</llo_original>
